<compile_context>
chip_gen: v7x
topology: tpu7x:2x2x1
jax: 0.10.0
libtpu: 0.0.40
codegen_flags: <defaults>
</compile_context>

<pallas_src>
import jax
import jax.numpy as jnp
from jax.experimental import pallas as pl
from jax.experimental.pallas import tpu as pltpu

# ----- model hyper-parameters (module defaults) -----
INP_D = 2                     # diffusion-network input dims
STATE_D = 2                   # conditioning state dims
IN_DIM = INP_D + STATE_D      # 4 after the (wrapper-side) concat
OUT_DIM = 2
OUT_PAD = 128                 # lane-dense padded output width (wrapper slices to OUT_DIM)
HIDDEN = 256
N_HIDDEN = 6                  # must be even -> 3 residual blocks
N_BLOCKS = N_HIDDEN // 2
BATCH = 256                   # demo batch


def _chip_policy():
    """Generation-dependent knobs derived from the local device kind.

    * v7x has 2 TensorCores per chip -> keep a >=2-step 'parallel' grid (TB=128).
    * v5e has no bf16 VPU/EUP -> keep mish math in fp32 there; v6e/v7x run the mish
      element math in bf16 (roughly halves work on the binding VPU/EUP unit).
    Unknown chip strings fall back to the conservative fp32 / single-core settings.
    """
    kind = jax.devices()[0].device_kind.lower()
    two_tc = ("v7" in kind) or ("7x" in kind)
    bf16_act = two_tc or ("v6" in kind)
    return two_tc, bf16_act


_TWO_TC, _BF16_ACT = _chip_policy()
TB = 128 if _TWO_TC else 256      # batch tile (see header comment)

# mish(x) = x * tanh(softplus(x)).  With t = exp(x):
#   tanh(log1p(t)) = ((1+t)^2 - 1) / ((1+t)^2 + 1) = (t^2 + 2t) / (t^2 + 2t + 2)
# -> one EUP exp + one EUP reciprocal/divide; the rest is VPU work.  For x >= 8,
# mish(x) == x to ~2e-7 relative, so we clamp there (also keeps exp small so the
# approx reciprocal's relative error translates into <~2e-3 absolute error).
_MISH_CLAMP = 8.0


def _mish_f32(x):
    t = jnp.exp(jnp.minimum(x, _MISH_CLAMP))
    p = t * (t + 2.0)
    r = p * pl.reciprocal(p + 2.0, approx=True)
    return jnp.where(x > _MISH_CLAMP, x, x * r)


def _mish_bf16(x):
    # Same reformulation with all element math in bf16 (v6e/v7x bf16 VPU/EUP).
    # A plain divide (EUP) keeps the bf16 lowering simple; output feeds the MXU as-is.
    xb = x.astype(jnp.bfloat16)
    t = jnp.exp(jnp.minimum(xb, _MISH_CLAMP))
    p = t * (t + 2.0)
    r = p / (p + 2.0)
    return jnp.where(xb > _MISH_CLAMP, xb, xb * r)


def _make_kernel(bf16_act):
    # mish variant that feeds a matmul: returns bf16 (MXU input dtype) either way.
    if bf16_act:
        mish_mm = _mish_bf16
    else:
        mish_mm = lambda x: _mish_f32(x).astype(jnp.bfloat16)

    def kernel(x_ref, w0_ref, b0_ref, w1_ref, b1_ref, w2_ref, b2_ref,
               wf_ref, bf_ref, out_ref):
        x = x_ref[...].astype(jnp.float32)        # (TB, IN_DIM)
        w0 = w0_ref[...]                          # (IN_DIM, HIDDEN) fp32 (tiny)

        # First linear (K = 4): 4 VPU broadcast-MACs instead of a near-empty MXU pass.
        h = b0_ref[...]                           # (1, HIDDEN) -> broadcasts to (TB, HIDDEN)
        for k in range(IN_DIM):
            h = h + x[:, k:k + 1] * w0[k:k + 1, :]
        h = _mish_f32(h)                          # fp32 residual carrier

        def mm(a_bf16, w, b):
            # bf16 MXU inputs, fp32 accumulation; bias add in fp32.
            return jnp.dot(a_bf16, w, preferred_element_type=jnp.float32) + b

        # Pre-activation residual blocks (static unroll, N_BLOCKS = 3).
        for i in range(N_BLOCKS):
            h_in = h
            a = mm(mish_mm(h), w1_ref[i], b1_ref[i])
            a = mm(mish_mm(a), w2_ref[i], b2_ref[i])
            h = a + h_in                          # residual add stays fp32

        # Final projection into a lane-dense (TB, OUT_PAD) block (unmasked stores).
        out_ref[...] = mm(h.astype(jnp.bfloat16), wf_ref[...],
                          bf_ref[...]).astype(out_ref.dtype)

    return kernel


_KERNEL = _make_kernel(_BF16_ACT)


@jax.jit
def residual_mlp_forward(inp, state, params):
    w0, b0, w1, b1, w2, b2, wf, bf = params
    B = inp.shape[0]
    # Fold torch.cat into the wrapper (4 KB, fused by XLA) -> single lane-contiguous
    # (TB, IN_DIM) input block, one fewer DMA descriptor per grid step.
    x = jnp.concatenate([inp.astype(jnp.float32), state.astype(jnp.float32)], axis=-1)
    Bp = TB * pl.cdiv(B, TB)
    if Bp != B:  # static under jit; rows are independent so zero-padding is safe
        x = jnp.pad(x, ((0, Bp - B), (0, 0)))

    flops = 2 * Bp * HIDDEN * (IN_DIM + 2 * N_BLOCKS * HIDDEN + OUT_PAD)
    transcendentals = 2 * (1 + 2 * N_BLOCKS) * Bp * HIDDEN   # exp + rcp/div per mish elem
    bytes_accessed = (sum(int(a.size) * a.dtype.itemsize
                          for a in (w0, b0, w1, b1, w2, b2, wf, bf))
                      + Bp * IN_DIM * 4 + Bp * OUT_PAD * 4)

    # NOTE: weight BlockSpecs use constant index maps, so Pallas DMAs them exactly once
    # per call; their double-buffer copies cost <1 MiB of VMEM here (pl.Buffered(1)
    # would reclaim it but is unnecessary at this size).
    out_pad = pl.pallas_call(
        _KERNEL,
        out_shape=jax.ShapeDtypeStruct((Bp, OUT_PAD), jnp.float32),
        grid=(Bp // TB,),
        in_specs=[
            pl.BlockSpec((TB, IN_DIM), lambda i: (i, 0)),                    # x = [inp|state]
            pl.BlockSpec((IN_DIM, HIDDEN), lambda i: (0, 0)),                # w0  (fp32, tiny)
            pl.BlockSpec((1, HIDDEN), lambda i: (0, 0)),                     # b0
            pl.BlockSpec((N_BLOCKS, HIDDEN, HIDDEN), lambda i: (0, 0, 0)),   # w1  (bf16 stack)
            pl.BlockSpec((N_BLOCKS, 1, HIDDEN), lambda i: (0, 0, 0)),        # b1
            pl.BlockSpec((N_BLOCKS, HIDDEN, HIDDEN), lambda i: (0, 0, 0)),   # w2  (bf16 stack)
            pl.BlockSpec((N_BLOCKS, 1, HIDDEN), lambda i: (0, 0, 0)),        # b2
            pl.BlockSpec((HIDDEN, OUT_PAD), lambda i: (0, 0)),               # wf  (bf16, padded)
            pl.BlockSpec((1, OUT_PAD), lambda i: (0, 0)),                    # bf  (padded)
        ],
        out_specs=pl.BlockSpec((TB, OUT_PAD), lambda i: (i, 0)),
        compiler_params=pltpu.CompilerParams(
            dimension_semantics=("parallel",)),
        cost_estimate=pl.CostEstimate(
            flops=flops, transcendentals=transcendentals,
            bytes_accessed=bytes_accessed),
    )(x, w0, b0, w1, b1, w2, b2, wf, bf)

    # Slice inside the same jit so XLA fuses it with the padded writeback.
    return out_pad[:B, :OUT_DIM]


def init_params(key):
    """Deterministic synthetic init mimicking nn.Linear (uniform +-1/sqrt(fan_in)).

    Residual / final weights are stored in bfloat16 (halves HBM DMA, native MXU rate);
    biases and the tiny first-layer weight stay fp32.  The final projection is
    zero-padded to OUT_PAD lanes for an unmasked, lane-dense store.
    """
    ks = jax.random.split(key, 8)

    def unif(k, shape, fan_in):
        bound = 1.0 / jnp.sqrt(jnp.float32(fan_in))
        return jax.random.uniform(k, shape, jnp.float32, -bound, bound)

    w0 = unif(ks[0], (IN_DIM, HIDDEN), IN_DIM)
    b0 = unif(ks[1], (1, HIDDEN), IN_DIM)
    w1 = unif(ks[2], (N_BLOCKS, HIDDEN, HIDDEN), HIDDEN).astype(jnp.bfloat16)
    b1 = unif(ks[3], (N_BLOCKS, 1, HIDDEN), HIDDEN)
    w2 = unif(ks[4], (N_BLOCKS, HIDDEN, HIDDEN), HIDDEN).astype(jnp.bfloat16)
    b2 = unif(ks[5], (N_BLOCKS, 1, HIDDEN), HIDDEN)
    wf = unif(ks[6], (HIDDEN, OUT_DIM), HIDDEN).astype(jnp.bfloat16)
    wf = jnp.pad(wf, ((0, 0), (0, OUT_PAD - OUT_DIM)))
    bf = unif(ks[7], (1, OUT_DIM), HIDDEN)
    bf = jnp.pad(bf, ((0, 0), (0, OUT_PAD - OUT_DIM)))
    return (w0, b0, w1, b1, w2, b2, wf, bf)


def reference_forward(inp, state, params):
    """Pure-JAX reference of the same forward pass using the canonical
    mish = x * tanh(softplus(x)), mirroring the kernel's chip-gated mixed-precision
    policy (bf16 matmul inputs, fp32 accumulation, mish element math in bf16 on
    v6e/v7x and fp32 elsewhere)."""
    w0, b0, w1, b1, w2, b2, wf, bf = params
    act_dt = jnp.bfloat16 if _BF16_ACT else jnp.float32

    def mish32(x):
        return x * jnp.tanh(jax.nn.softplus(x))

    def mish_mm(x):  # mish feeding a matmul, in the kernel's activation dtype
        x = x.astype(act_dt)
        return (x * jnp.tanh(jax.nn.softplus(x))).astype(jnp.bfloat16)

    def mm(a_bf16, w, b):
        return jnp.dot(a_bf16, w.astype(jnp.bfloat16),
                       preferred_element_type=jnp.float32) + b

    x = jnp.concatenate([inp, state], axis=-1).astype(jnp.float32)
    h = mish32(x @ w0 + b0)
    for i in range(N_BLOCKS):
        h_in = h
        a = mm(mish_mm(h), w1[i], b1[i])
        a = mm(mish_mm(a), w2[i], b2[i])
        h = a + h_in
    return mm(h.astype(jnp.bfloat16), wf, bf)[:, :OUT_DIM]


if __name__ == "__main__":
    key = jax.random.PRNGKey(0)
    k_inp, k_state, k_params = jax.random.split(key, 3)

    inp = jax.random.normal(k_inp, (BATCH, INP_D), jnp.float32)
    state = jax.random.normal(k_state, (BATCH, STATE_D), jnp.float32)
    params = init_params(k_params)

    out = jax.block_until_ready(residual_mlp_forward(inp, state, params))
    ref = reference_forward(inp, state, params)

    assert out.shape == (BATCH, OUT_DIM)
    # Kernel uses the algebraic mish reformulation + approx/bf16 EUP math; the
    # reference uses the canonical tanh(softplus) at the same precision policy, so
    # residual drift is a few bf16 ulps propagated through 7 layers.
    assert jnp.allclose(out, ref, atol=2.5e-2, rtol=2.5e-2), "mismatch vs JAX reference"

    print("KERNEL_OK")
</pallas_src>

<mosaic_0001>
module attributes {stable_mosaic.version = 11 : i64} {
  func.func @kernel(%arg0: i32, %arg1: memref<256x4xf32, #tpu.memory_space<vmem>>, %arg2: memref<4x256xf32, #tpu.memory_space<vmem>>, %arg3: memref<1x256xf32, #tpu.memory_space<vmem>>, %arg4: memref<3x256x256xbf16, #tpu.memory_space<vmem>>, %arg5: memref<3x1x256xf32, #tpu.memory_space<vmem>>, %arg6: memref<3x256x256xbf16, #tpu.memory_space<vmem>>, %arg7: memref<3x1x256xf32, #tpu.memory_space<vmem>>, %arg8: memref<256x128xbf16, #tpu.memory_space<vmem>>, %arg9: memref<1x128xf32, #tpu.memory_space<vmem>>, %arg10: memref<256x128xf32, #tpu.memory_space<vmem>>) attributes {dimension_semantics = [#tpu.dimension_semantics<parallel>], iteration_bounds = array<i64: 1>, scalar_prefetch = 0 : i64, scratch_operands = 0 : i64, tpu.core_type = #tpu.core_type<tc>, window_params = [{transform_indices = @transform_0, window_bounds = array<i64: 256, 4>}, {pipeline_mode = #tpu.pipeline_mode<synchronous>, transform_indices = @transform_1, window_bounds = array<i64: 4, 256>}, {pipeline_mode = #tpu.pipeline_mode<synchronous>, transform_indices = @transform_2, window_bounds = array<i64: 1, 256>}, {pipeline_mode = #tpu.pipeline_mode<synchronous>, transform_indices = @transform_3, window_bounds = array<i64: 3, 256, 256>}, {pipeline_mode = #tpu.pipeline_mode<synchronous>, transform_indices = @transform_4, window_bounds = array<i64: 3, 1, 256>}, {pipeline_mode = #tpu.pipeline_mode<synchronous>, transform_indices = @transform_5, window_bounds = array<i64: 3, 256, 256>}, {pipeline_mode = #tpu.pipeline_mode<synchronous>, transform_indices = @transform_6, window_bounds = array<i64: 3, 1, 256>}, {pipeline_mode = #tpu.pipeline_mode<synchronous>, transform_indices = @transform_7, window_bounds = array<i64: 256, 128>}, {pipeline_mode = #tpu.pipeline_mode<synchronous>, transform_indices = @transform_8, window_bounds = array<i64: 1, 128>}, {transform_indices = @transform_9, window_bounds = array<i64: 256, 128>}]} {
    %c0 = arith.constant 0 : index
    %c0_0 = arith.constant 0 : index
    %0 = vector.load %arg1[%c0, %c0_0] : memref<256x4xf32, #tpu.memory_space<vmem>>, vector<256x4xf32>
    %c0_1 = arith.constant 0 : index
    %c0_2 = arith.constant 0 : index
    %1 = vector.load %arg2[%c0_1, %c0_2] : memref<4x256xf32, #tpu.memory_space<vmem>>, vector<4x256xf32>
    %c0_3 = arith.constant 0 : index
    %c0_4 = arith.constant 0 : index
    %2 = vector.load %arg3[%c0_3, %c0_4] : memref<1x256xf32, #tpu.memory_space<vmem>>, vector<1x256xf32>
    %3 = vector.extract_strided_slice %0 {offsets = [0, 0], sizes = [256, 1], strides = [1, 1]} : vector<256x4xf32> to vector<256x1xf32>
    %4 = vector.extract_strided_slice %1 {offsets = [0, 0], sizes = [1, 256], strides = [1, 1]} : vector<4x256xf32> to vector<1x256xf32>
    %5 = vector.broadcast %3 : vector<256x1xf32> to vector<256x256xf32>
    %6 = vector.broadcast %4 : vector<1x256xf32> to vector<256x256xf32>
    %7 = arith.mulf %5, %6 : vector<256x256xf32>
    %8 = vector.broadcast %2 : vector<1x256xf32> to vector<256x256xf32>
    %9 = arith.addf %8, %7 : vector<256x256xf32>
    %10 = vector.extract_strided_slice %0 {offsets = [0, 1], sizes = [256, 1], strides = [1, 1]} : vector<256x4xf32> to vector<256x1xf32>
    %11 = vector.extract_strided_slice %1 {offsets = [1, 0], sizes = [1, 256], strides = [1, 1]} : vector<4x256xf32> to vector<1x256xf32>
    %12 = vector.broadcast %10 : vector<256x1xf32> to vector<256x256xf32>
    %13 = vector.broadcast %11 : vector<1x256xf32> to vector<256x256xf32>
    %14 = arith.mulf %12, %13 : vector<256x256xf32>
    %15 = arith.addf %9, %14 : vector<256x256xf32>
    %16 = vector.extract_strided_slice %0 {offsets = [0, 2], sizes = [256, 1], strides = [1, 1]} : vector<256x4xf32> to vector<256x1xf32>
    %17 = vector.extract_strided_slice %1 {offsets = [2, 0], sizes = [1, 256], strides = [1, 1]} : vector<4x256xf32> to vector<1x256xf32>
    %18 = vector.broadcast %16 : vector<256x1xf32> to vector<256x256xf32>
    %19 = vector.broadcast %17 : vector<1x256xf32> to vector<256x256xf32>
    %20 = arith.mulf %18, %19 : vector<256x256xf32>
    %21 = arith.addf %15, %20 : vector<256x256xf32>
    %22 = vector.extract_strided_slice %0 {offsets = [0, 3], sizes = [256, 1], strides = [1, 1]} : vector<256x4xf32> to vector<256x1xf32>
    %23 = vector.extract_strided_slice %1 {offsets = [3, 0], sizes = [1, 256], strides = [1, 1]} : vector<4x256xf32> to vector<1x256xf32>
    %24 = vector.broadcast %22 : vector<256x1xf32> to vector<256x256xf32>
    %25 = vector.broadcast %23 : vector<1x256xf32> to vector<256x256xf32>
    %26 = arith.mulf %24, %25 : vector<256x256xf32>
    %27 = arith.addf %21, %26 : vector<256x256xf32>
    %cst = arith.constant 8.000000e+00 : f32
    %28 = vector.broadcast %cst : f32 to vector<256x256xf32>
    %29 = arith.minimumf %27, %28 : vector<256x256xf32>
    %30 = math.exp %29 : vector<256x256xf32>
    %cst_5 = arith.constant 2.000000e+00 : f32
    %31 = vector.broadcast %cst_5 : f32 to vector<256x256xf32>
    %32 = arith.addf %30, %31 : vector<256x256xf32>
    %33 = arith.mulf %30, %32 : vector<256x256xf32>
    %cst_6 = arith.constant 2.000000e+00 : f32
    %34 = vector.broadcast %cst_6 : f32 to vector<256x256xf32>
    %35 = arith.addf %33, %34 : vector<256x256xf32>
    %36 = tpu.reciprocal %35 {approx = true} : vector<256x256xf32> -> vector<256x256xf32>
    %37 = arith.mulf %33, %36 : vector<256x256xf32>
    %cst_7 = arith.constant 8.000000e+00 : f32
    %38 = vector.broadcast %cst_7 : f32 to vector<256x256xf32>
    %39 = arith.cmpf ogt, %27, %38 : vector<256x256xf32>
    %40 = arith.mulf %27, %37 : vector<256x256xf32>
    %41 = arith.select %39, %27, %40 : vector<256x256xi1>, vector<256x256xf32>
    %cst_8 = arith.constant 8.000000e+00 : f32
    %42 = vector.broadcast %cst_8 : f32 to vector<256x256xf32>
    %43 = arith.minimumf %41, %42 : vector<256x256xf32>
    %44 = math.exp %43 : vector<256x256xf32>
    %cst_9 = arith.constant 2.000000e+00 : f32
    %45 = vector.broadcast %cst_9 : f32 to vector<256x256xf32>
    %46 = arith.addf %44, %45 : vector<256x256xf32>
    %47 = arith.mulf %44, %46 : vector<256x256xf32>
    %cst_10 = arith.constant 2.000000e+00 : f32
    %48 = vector.broadcast %cst_10 : f32 to vector<256x256xf32>
    %49 = arith.addf %47, %48 : vector<256x256xf32>
    %50 = tpu.reciprocal %49 {approx = true} : vector<256x256xf32> -> vector<256x256xf32>
    %51 = arith.mulf %47, %50 : vector<256x256xf32>
    %cst_11 = arith.constant 8.000000e+00 : f32
    %52 = vector.broadcast %cst_11 : f32 to vector<256x256xf32>
    %53 = arith.cmpf ogt, %41, %52 : vector<256x256xf32>
    %54 = arith.mulf %41, %51 : vector<256x256xf32>
    %55 = arith.select %53, %41, %54 : vector<256x256xi1>, vector<256x256xf32>
    %56 = arith.truncf %55 : vector<256x256xf32> to vector<256x256xbf16>
    %c0_12 = arith.constant 0 : index
    %c0_13 = arith.constant 0 : index
    %c0_14 = arith.constant 0 : index
    %57 = vector.load %arg4[%c0_12, %c0_13, %c0_14] : memref<3x256x256xbf16, #tpu.memory_space<vmem>>, vector<1x256x256xbf16>
    %58 = vector.shape_cast %57 : vector<1x256x256xbf16> to vector<256x256xbf16>
    %c0_15 = arith.constant 0 : index
    %c0_16 = arith.constant 0 : index
    %c0_17 = arith.constant 0 : index
    %59 = vector.load %arg5[%c0_15, %c0_16, %c0_17] : memref<3x1x256xf32, #tpu.memory_space<vmem>>, vector<1x1x256xf32>
    %60 = vector.shape_cast %59 : vector<1x1x256xf32> to vector<1x256xf32>
    %cst_18 = arith.constant dense<0.000000e+00> : vector<256x256xf32>
    %61 = tpu.matmul %56, %58, %cst_18 {dimension_numbers = #tpu.dot_dimension_numbers<[1], [0], [0], [1], [0, 0, 1, 1], [], []>} : vector<256x256xbf16>, vector<256x256xbf16>, vector<256x256xf32> -> vector<256x256xf32>
    %62 = vector.broadcast %60 : vector<1x256xf32> to vector<256x256xf32>
    %63 = arith.addf %61, %62 : vector<256x256xf32>
    %cst_19 = arith.constant 8.000000e+00 : f32
    %64 = vector.broadcast %cst_19 : f32 to vector<256x256xf32>
    %65 = arith.minimumf %63, %64 : vector<256x256xf32>
    %66 = math.exp %65 : vector<256x256xf32>
    %cst_20 = arith.constant 2.000000e+00 : f32
    %67 = vector.broadcast %cst_20 : f32 to vector<256x256xf32>
    %68 = arith.addf %66, %67 : vector<256x256xf32>
    %69 = arith.mulf %66, %68 : vector<256x256xf32>
    %cst_21 = arith.constant 2.000000e+00 : f32
    %70 = vector.broadcast %cst_21 : f32 to vector<256x256xf32>
    %71 = arith.addf %69, %70 : vector<256x256xf32>
    %72 = tpu.reciprocal %71 {approx = true} : vector<256x256xf32> -> vector<256x256xf32>
    %73 = arith.mulf %69, %72 : vector<256x256xf32>
    %cst_22 = arith.constant 8.000000e+00 : f32
    %74 = vector.broadcast %cst_22 : f32 to vector<256x256xf32>
    %75 = arith.cmpf ogt, %63, %74 : vector<256x256xf32>
    %76 = arith.mulf %63, %73 : vector<256x256xf32>
    %77 = arith.select %75, %63, %76 : vector<256x256xi1>, vector<256x256xf32>
    %78 = arith.truncf %77 : vector<256x256xf32> to vector<256x256xbf16>
    %c0_23 = arith.constant 0 : index
    %c0_24 = arith.constant 0 : index
    %c0_25 = arith.constant 0 : index
    %79 = vector.load %arg6[%c0_23, %c0_24, %c0_25] : memref<3x256x256xbf16, #tpu.memory_space<vmem>>, vector<1x256x256xbf16>
    %80 = vector.shape_cast %79 : vector<1x256x256xbf16> to vector<256x256xbf16>
    %c0_26 = arith.constant 0 : index
    %c0_27 = arith.constant 0 : index
    %c0_28 = arith.constant 0 : index
    %81 = vector.load %arg7[%c0_26, %c0_27, %c0_28] : memref<3x1x256xf32, #tpu.memory_space<vmem>>, vector<1x1x256xf32>
    %82 = vector.shape_cast %81 : vector<1x1x256xf32> to vector<1x256xf32>
    %cst_29 = arith.constant dense<0.000000e+00> : vector<256x256xf32>
    %83 = tpu.matmul %78, %80, %cst_29 {dimension_numbers = #tpu.dot_dimension_numbers<[1], [0], [0], [1], [0, 0, 1, 1], [], []>} : vector<256x256xbf16>, vector<256x256xbf16>, vector<256x256xf32> -> vector<256x256xf32>
    %84 = vector.broadcast %82 : vector<1x256xf32> to vector<256x256xf32>
    %85 = arith.addf %83, %84 : vector<256x256xf32>
    %86 = arith.addf %85, %41 : vector<256x256xf32>
    %cst_30 = arith.constant 8.000000e+00 : f32
    %87 = vector.broadcast %cst_30 : f32 to vector<256x256xf32>
    %88 = arith.minimumf %86, %87 : vector<256x256xf32>
    %89 = math.exp %88 : vector<256x256xf32>
    %cst_31 = arith.constant 2.000000e+00 : f32
    %90 = vector.broadcast %cst_31 : f32 to vector<256x256xf32>
    %91 = arith.addf %89, %90 : vector<256x256xf32>
    %92 = arith.mulf %89, %91 : vector<256x256xf32>
    %cst_32 = arith.constant 2.000000e+00 : f32
    %93 = vector.broadcast %cst_32 : f32 to vector<256x256xf32>
    %94 = arith.addf %92, %93 : vector<256x256xf32>
    %95 = tpu.reciprocal %94 {approx = true} : vector<256x256xf32> -> vector<256x256xf32>
    %96 = arith.mulf %92, %95 : vector<256x256xf32>
    %cst_33 = arith.constant 8.000000e+00 : f32
    %97 = vector.broadcast %cst_33 : f32 to vector<256x256xf32>
    %98 = arith.cmpf ogt, %86, %97 : vector<256x256xf32>
    %99 = arith.mulf %86, %96 : vector<256x256xf32>
    %100 = arith.select %98, %86, %99 : vector<256x256xi1>, vector<256x256xf32>
    %101 = arith.truncf %100 : vector<256x256xf32> to vector<256x256xbf16>
    %c1 = arith.constant 1 : index
    %c0_34 = arith.constant 0 : index
    %c0_35 = arith.constant 0 : index
    %102 = vector.load %arg4[%c1, %c0_34, %c0_35] : memref<3x256x256xbf16, #tpu.memory_space<vmem>>, vector<1x256x256xbf16>
    %103 = vector.shape_cast %102 : vector<1x256x256xbf16> to vector<256x256xbf16>
    %c1_36 = arith.constant 1 : index
    %c0_37 = arith.constant 0 : index
    %c0_38 = arith.constant 0 : index
    %104 = vector.load %arg5[%c1_36, %c0_37, %c0_38] : memref<3x1x256xf32, #tpu.memory_space<vmem>>, vector<1x1x256xf32>
    %105 = vector.shape_cast %104 : vector<1x1x256xf32> to vector<1x256xf32>
    %cst_39 = arith.constant dense<0.000000e+00> : vector<256x256xf32>
    %106 = tpu.matmul %101, %103, %cst_39 {dimension_numbers = #tpu.dot_dimension_numbers<[1], [0], [0], [1], [0, 0, 1, 1], [], []>} : vector<256x256xbf16>, vector<256x256xbf16>, vector<256x256xf32> -> vector<256x256xf32>
    %107 = vector.broadcast %105 : vector<1x256xf32> to vector<256x256xf32>
    %108 = arith.addf %106, %107 : vector<256x256xf32>
    %cst_40 = arith.constant 8.000000e+00 : f32
    %109 = vector.broadcast %cst_40 : f32 to vector<256x256xf32>
    %110 = arith.minimumf %108, %109 : vector<256x256xf32>
    %111 = math.exp %110 : vector<256x256xf32>
    %cst_41 = arith.constant 2.000000e+00 : f32
    %112 = vector.broadcast %cst_41 : f32 to vector<256x256xf32>
    %113 = arith.addf %111, %112 : vector<256x256xf32>
    %114 = arith.mulf %111, %113 : vector<256x256xf32>
    %cst_42 = arith.constant 2.000000e+00 : f32
    %115 = vector.broadcast %cst_42 : f32 to vector<256x256xf32>
    %116 = arith.addf %114, %115 : vector<256x256xf32>
    %117 = tpu.reciprocal %116 {approx = true} : vector<256x256xf32> -> vector<256x256xf32>
    %118 = arith.mulf %114, %117 : vector<256x256xf32>
    %cst_43 = arith.constant 8.000000e+00 : f32
    %119 = vector.broadcast %cst_43 : f32 to vector<256x256xf32>
    %120 = arith.cmpf ogt, %108, %119 : vector<256x256xf32>
    %121 = arith.mulf %108, %118 : vector<256x256xf32>
    %122 = arith.select %120, %108, %121 : vector<256x256xi1>, vector<256x256xf32>
    %123 = arith.truncf %122 : vector<256x256xf32> to vector<256x256xbf16>
    %c1_44 = arith.constant 1 : index
    %c0_45 = arith.constant 0 : index
    %c0_46 = arith.constant 0 : index
    %124 = vector.load %arg6[%c1_44, %c0_45, %c0_46] : memref<3x256x256xbf16, #tpu.memory_space<vmem>>, vector<1x256x256xbf16>
    %125 = vector.shape_cast %124 : vector<1x256x256xbf16> to vector<256x256xbf16>
    %c1_47 = arith.constant 1 : index
    %c0_48 = arith.constant 0 : index
    %c0_49 = arith.constant 0 : index
    %126 = vector.load %arg7[%c1_47, %c0_48, %c0_49] : memref<3x1x256xf32, #tpu.memory_space<vmem>>, vector<1x1x256xf32>
    %127 = vector.shape_cast %126 : vector<1x1x256xf32> to vector<1x256xf32>
    %cst_50 = arith.constant dense<0.000000e+00> : vector<256x256xf32>
    %128 = tpu.matmul %123, %125, %cst_50 {dimension_numbers = #tpu.dot_dimension_numbers<[1], [0], [0], [1], [0, 0, 1, 1], [], []>} : vector<256x256xbf16>, vector<256x256xbf16>, vector<256x256xf32> -> vector<256x256xf32>
    %129 = vector.broadcast %127 : vector<1x256xf32> to vector<256x256xf32>
    %130 = arith.addf %128, %129 : vector<256x256xf32>
    %131 = arith.addf %130, %86 : vector<256x256xf32>
    %cst_51 = arith.constant 8.000000e+00 : f32
    %132 = vector.broadcast %cst_51 : f32 to vector<256x256xf32>
    %133 = arith.minimumf %131, %132 : vector<256x256xf32>
    %134 = math.exp %133 : vector<256x256xf32>
    %cst_52 = arith.constant 2.000000e+00 : f32
    %135 = vector.broadcast %cst_52 : f32 to vector<256x256xf32>
    %136 = arith.addf %134, %135 : vector<256x256xf32>
    %137 = arith.mulf %134, %136 : vector<256x256xf32>
    %cst_53 = arith.constant 2.000000e+00 : f32
    %138 = vector.broadcast %cst_53 : f32 to vector<256x256xf32>
    %139 = arith.addf %137, %138 : vector<256x256xf32>
    %140 = tpu.reciprocal %139 {approx = true} : vector<256x256xf32> -> vector<256x256xf32>
    %141 = arith.mulf %137, %140 : vector<256x256xf32>
    %cst_54 = arith.constant 8.000000e+00 : f32
    %142 = vector.broadcast %cst_54 : f32 to vector<256x256xf32>
    %143 = arith.cmpf ogt, %131, %142 : vector<256x256xf32>
    %144 = arith.mulf %131, %141 : vector<256x256xf32>
    %145 = arith.select %143, %131, %144 : vector<256x256xi1>, vector<256x256xf32>
    %146 = arith.truncf %145 : vector<256x256xf32> to vector<256x256xbf16>
    %c2 = arith.constant 2 : index
    %c0_55 = arith.constant 0 : index
    %c0_56 = arith.constant 0 : index
    %147 = vector.load %arg4[%c2, %c0_55, %c0_56] : memref<3x256x256xbf16, #tpu.memory_space<vmem>>, vector<1x256x256xbf16>
    %148 = vector.shape_cast %147 : vector<1x256x256xbf16> to vector<256x256xbf16>
    %c2_57 = arith.constant 2 : index
    %c0_58 = arith.constant 0 : index
    %c0_59 = arith.constant 0 : index
    %149 = vector.load %arg5[%c2_57, %c0_58, %c0_59] : memref<3x1x256xf32, #tpu.memory_space<vmem>>, vector<1x1x256xf32>
    %150 = vector.shape_cast %149 : vector<1x1x256xf32> to vector<1x256xf32>
    %cst_60 = arith.constant dense<0.000000e+00> : vector<256x256xf32>
    %151 = tpu.matmul %146, %148, %cst_60 {dimension_numbers = #tpu.dot_dimension_numbers<[1], [0], [0], [1], [0, 0, 1, 1], [], []>} : vector<256x256xbf16>, vector<256x256xbf16>, vector<256x256xf32> -> vector<256x256xf32>
    %152 = vector.broadcast %150 : vector<1x256xf32> to vector<256x256xf32>
    %153 = arith.addf %151, %152 : vector<256x256xf32>
    %cst_61 = arith.constant 8.000000e+00 : f32
    %154 = vector.broadcast %cst_61 : f32 to vector<256x256xf32>
    %155 = arith.minimumf %153, %154 : vector<256x256xf32>
    %156 = math.exp %155 : vector<256x256xf32>
    %cst_62 = arith.constant 2.000000e+00 : f32
    %157 = vector.broadcast %cst_62 : f32 to vector<256x256xf32>
    %158 = arith.addf %156, %157 : vector<256x256xf32>
    %159 = arith.mulf %156, %158 : vector<256x256xf32>
    %cst_63 = arith.constant 2.000000e+00 : f32
    %160 = vector.broadcast %cst_63 : f32 to vector<256x256xf32>
    %161 = arith.addf %159, %160 : vector<256x256xf32>
    %162 = tpu.reciprocal %161 {approx = true} : vector<256x256xf32> -> vector<256x256xf32>
    %163 = arith.mulf %159, %162 : vector<256x256xf32>
    %cst_64 = arith.constant 8.000000e+00 : f32
    %164 = vector.broadcast %cst_64 : f32 to vector<256x256xf32>
    %165 = arith.cmpf ogt, %153, %164 : vector<256x256xf32>
    %166 = arith.mulf %153, %163 : vector<256x256xf32>
    %167 = arith.select %165, %153, %166 : vector<256x256xi1>, vector<256x256xf32>
    %168 = arith.truncf %167 : vector<256x256xf32> to vector<256x256xbf16>
    %c2_65 = arith.constant 2 : index
    %c0_66 = arith.constant 0 : index
    %c0_67 = arith.constant 0 : index
    %169 = vector.load %arg6[%c2_65, %c0_66, %c0_67] : memref<3x256x256xbf16, #tpu.memory_space<vmem>>, vector<1x256x256xbf16>
    %170 = vector.shape_cast %169 : vector<1x256x256xbf16> to vector<256x256xbf16>
    %c2_68 = arith.constant 2 : index
    %c0_69 = arith.constant 0 : index
    %c0_70 = arith.constant 0 : index
    %171 = vector.load %arg7[%c2_68, %c0_69, %c0_70] : memref<3x1x256xf32, #tpu.memory_space<vmem>>, vector<1x1x256xf32>
    %172 = vector.shape_cast %171 : vector<1x1x256xf32> to vector<1x256xf32>
    %cst_71 = arith.constant dense<0.000000e+00> : vector<256x256xf32>
    %173 = tpu.matmul %168, %170, %cst_71 {dimension_numbers = #tpu.dot_dimension_numbers<[1], [0], [0], [1], [0, 0, 1, 1], [], []>} : vector<256x256xbf16>, vector<256x256xbf16>, vector<256x256xf32> -> vector<256x256xf32>
    %174 = vector.broadcast %172 : vector<1x256xf32> to vector<256x256xf32>
    %175 = arith.addf %173, %174 : vector<256x256xf32>
    %176 = arith.addf %175, %131 : vector<256x256xf32>
    %177 = arith.truncf %176 : vector<256x256xf32> to vector<256x256xbf16>
    %c0_72 = arith.constant 0 : index
    %c0_73 = arith.constant 0 : index
    %178 = vector.load %arg8[%c0_72, %c0_73] : memref<256x128xbf16, #tpu.memory_space<vmem>>, vector<256x128xbf16>
    %c0_74 = arith.constant 0 : index
    %c0_75 = arith.constant 0 : index
    %179 = vector.load %arg9[%c0_74, %c0_75] : memref<1x128xf32, #tpu.memory_space<vmem>>, vector<1x128xf32>
    %cst_76 = arith.constant dense<0.000000e+00> : vector<256x128xf32>
    %180 = tpu.matmul %177, %178, %cst_76 {dimension_numbers = #tpu.dot_dimension_numbers<[1], [0], [0], [1], [0, 0, 1, 1], [], []>} : vector<256x256xbf16>, vector<256x128xbf16>, vector<256x128xf32> -> vector<256x128xf32>
    %181 = vector.broadcast %179 : vector<1x128xf32> to vector<256x128xf32>
    %182 = arith.addf %180, %181 : vector<256x128xf32>
    %c0_77 = arith.constant 0 : index
    %c0_78 = arith.constant 0 : index
    %183 = vector.load %arg10[%c0_77, %c0_78] : memref<256x128xf32, #tpu.memory_space<vmem>>, vector<256x128xf32>
    tpu.vector_store %arg10[%c0_77, %c0_78], %182 {strides = array<i32>} : memref<256x128xf32, #tpu.memory_space<vmem>>, vector<256x128xf32>,
    return
  }
  func.func @transform_0(%arg0: i32) -> (i32, i32) {
    %c0_i32 = arith.constant 0 : i32
    %c0_i32_0 = arith.constant 0 : i32
    return %arg0, %c0_i32 : i32, i32
  }
  func.func @transform_1(%arg0: i32) -> (i32, i32) {
    %c0_i32 = arith.constant 0 : i32
    %c0_i32_0 = arith.constant 0 : i32
    %c0_i32_1 = arith.constant 0 : i32
    return %c0_i32, %c0_i32_0 : i32, i32
  }
  func.func @transform_2(%arg0: i32) -> (i32, i32) {
    %c0_i32 = arith.constant 0 : i32
    %c0_i32_0 = arith.constant 0 : i32
    %c0_i32_1 = arith.constant 0 : i32
    return %c0_i32, %c0_i32_0 : i32, i32
  }
  func.func @transform_3(%arg0: i32) -> (i32, i32, i32) {
    %c0_i32 = arith.constant 0 : i32
    %c0_i32_0 = arith.constant 0 : i32
    %c0_i32_1 = arith.constant 0 : i32
    %c0_i32_2 = arith.constant 0 : i32
    return %c0_i32, %c0_i32_0, %c0_i32_1 : i32, i32, i32
  }
  func.func @transform_4(%arg0: i32) -> (i32, i32, i32) {
    %c0_i32 = arith.constant 0 : i32
    %c0_i32_0 = arith.constant 0 : i32
    %c0_i32_1 = arith.constant 0 : i32
    %c0_i32_2 = arith.constant 0 : i32
    return %c0_i32, %c0_i32_0, %c0_i32_1 : i32, i32, i32
  }
  func.func @transform_5(%arg0: i32) -> (i32, i32, i32) {
    %c0_i32 = arith.constant 0 : i32
    %c0_i32_0 = arith.constant 0 : i32
    %c0_i32_1 = arith.constant 0 : i32
    %c0_i32_2 = arith.constant 0 : i32
    return %c0_i32, %c0_i32_0, %c0_i32_1 : i32, i32, i32
  }
  func.func @transform_6(%arg0: i32) -> (i32, i32, i32) {
    %c0_i32 = arith.constant 0 : i32
    %c0_i32_0 = arith.constant 0 : i32
    %c0_i32_1 = arith.constant 0 : i32
    %c0_i32_2 = arith.constant 0 : i32
    return %c0_i32, %c0_i32_0, %c0_i32_1 : i32, i32, i32
  }
  func.func @transform_7(%arg0: i32) -> (i32, i32) {
    %c0_i32 = arith.constant 0 : i32
    %c0_i32_0 = arith.constant 0 : i32
    %c0_i32_1 = arith.constant 0 : i32
    return %c0_i32, %c0_i32_0 : i32, i32
  }
  func.func @transform_8(%arg0: i32) -> (i32, i32) {
    %c0_i32 = arith.constant 0 : i32
    %c0_i32_0 = arith.constant 0 : i32
    %c0_i32_1 = arith.constant 0 : i32
    return %c0_i32, %c0_i32_0 : i32, i32
  }
  func.func @transform_9(%arg0: i32) -> (i32, i32) {
    %c0_i32 = arith.constant 0 : i32
    %c0_i32_0 = arith.constant 0 : i32
    return %arg0, %c0_i32 : i32, i32
  }
}

</mosaic_0001>

<llo_original>
// kernel: residual_mlp_forward.1
$region0: #{residual_mlp_forward.1}
  #allocation0 [shape = 'u32[]', space=smem, size = 0x4, offset = 0x4, fixed_abs, tag = 'smem constant byte address 0x4 - core index']
  #allocation1 [shape = 'u32[144,128]{1,0:T(1,128)}', space=vmem, size = 0x12000, scoped, tag = 'internal scratch']
  %s0 = inlined_call_operand.vmem [shape: f32[256,4], index: 0, kind: input, shape index: {}]
  %s1 = inlined_call_operand.vmem [shape: f32[4,256], index: 1, kind: input, shape index: {}]
  %s2 = inlined_call_operand.vmem [shape: f32[1,256], index: 2, kind: input, shape index: {}]
  %s3 = inlined_call_operand.hbm [shape: bf16[3,256,256], index: 3, kind: input, shape index: {}]
  %s4 = inlined_call_operand.vmem [shape: f32[3,1,256], index: 4, kind: input, shape index: {}]
  %s5 = inlined_call_operand.hbm [shape: bf16[3,256,256], index: 5, kind: input, shape index: {}]
  %s6 = inlined_call_operand.vmem [shape: f32[3,1,256], index: 6, kind: input, shape index: {}]
  %s7 = inlined_call_operand.vmem [shape: bf16[256,128], index: 7, kind: input, shape index: {}]
  %s8 = inlined_call_operand.vmem [shape: f32[1,128], index: 8, kind: input, shape index: {}]
  %s9 = inlined_call_operand.vmem [shape: f32[256,128], index: 9, kind: output, shape index: {}]
  %s10 = sld [smem:[#allocation0]]
  $region54: #{residual_mlp_forward.1} parent=0
    _
  %s12 = ssub.s32 1, %s10
  %s13 = scalar_select 0, %s12, %s10
  $region1: #{residual_mlp_forward.1} parent=0
    #allocation2 [shape = 'u8[393216]{0}', space=vmem, size = 0x60000, scoped, tag = 'input window, operand 3, single buffered']
    #allocation3 [shape = 's32[1]{0}', space=sflag, size = 0x4, scoped, tag = 'scoped memory for residual_mlp_forward.1']
    #allocation4 [shape = 'u8[393216]{0}', space=vmem, size = 0x60000, scoped, tag = 'input window, operand 5, single buffered']
    #allocation5 [shape = 's32[1]{0}', space=sflag, size = 0x4, scoped, tag = 'scoped memory for residual_mlp_forward.1']
    %14 = vsyncpa [#allocation3], 0
    %15 = vsyncpa [#allocation5], 0
    // Predicated region
    $region2: #{residual_mlp_forward.1} parent=1 // pred_check
      _
    $region3: #{residual_mlp_forward.1} parent=1 // pred_check_branch
      %17 = sbr.rel (0) target = $region5
    $region4: #{residual_mlp_forward.1} parent=1 // pred_region
      _
    $region5: #{residual_mlp_forward.1} parent=1 // pred_fallthru
      _
    // Predicated region
    $region6: #{residual_mlp_forward.1} parent=1 // pred_check
      _
    $region7: #{residual_mlp_forward.1} parent=1 // pred_check_branch
      %19 = sbr.rel (0) target = $region9
    $region8: #{residual_mlp_forward.1} parent=1 // pred_region
      _
    $region9: #{residual_mlp_forward.1} parent=1 // pred_fallthru
      _
    // Predicated region
    $region10: #{residual_mlp_forward.1} parent=1 // pred_check
      _
    $region11: #{residual_mlp_forward.1} parent=1 // pred_check_branch
      %21 = sbr.rel (0) target = $region13
    $region12: #{residual_mlp_forward.1} parent=1 // pred_region
      _
    $region13: #{residual_mlp_forward.1} parent=1 // pred_fallthru
      _
    // Predicated region
    $region14: #{residual_mlp_forward.1} parent=1 // pred_check
      _
    $region15: #{residual_mlp_forward.1} parent=1 // pred_check_branch
      %23 = sbr.rel (0) target = $region17
    $region16: #{residual_mlp_forward.1} parent=1 // pred_region
      %s25 = ssub.s32 12288, 12288
      %26 = vsyncadd [#allocation3], %s25
      %s27 = sshll.u32 [#allocation2], 4
      %s28 = int_to_ptr.vmem [resolvable:$true] %s27
      %33 = dma.hbm_to_vmem [thread:$0]  %s3, 12288, %s28, [#allocation3], 128, 128, 8
    $region17: #{residual_mlp_forward.1} parent=1 // pred_fallthru
      _
    // Predicated region
    $region18: #{residual_mlp_forward.1} parent=1 // pred_check
      _
    $region19: #{residual_mlp_forward.1} parent=1 // pred_check_branch
      %35 = sbr.rel (0) target = $region21
    $region20: #{residual_mlp_forward.1} parent=1 // pred_region
      _
    $region21: #{residual_mlp_forward.1} parent=1 // pred_fallthru
      _
    // Predicated region
    $region22: #{residual_mlp_forward.1} parent=1 // pred_check
      _
    $region23: #{residual_mlp_forward.1} parent=1 // pred_check_branch
      %37 = sbr.rel (0) target = $region25
    $region24: #{residual_mlp_forward.1} parent=1 // pred_region
      %s39 = ssub.s32 12288, 12288
      %40 = vsyncadd [#allocation5], %s39
      %s41 = sshll.u32 [#allocation4], 4
      %s42 = int_to_ptr.vmem [resolvable:$true] %s41
      %47 = dma.hbm_to_vmem [thread:$0]  %s5, 12288, %s42, [#allocation5], 128, 128, 8
    $region25: #{residual_mlp_forward.1} parent=1 // pred_fallthru
      _
    // Predicated region
    $region26: #{residual_mlp_forward.1} parent=1 // pred_check
      _
    $region27: #{residual_mlp_forward.1} parent=1 // pred_check_branch
      %49 = sbr.rel (0) target = $region29
    $region28: #{residual_mlp_forward.1} parent=1 // pred_region
      _
    $region29: #{residual_mlp_forward.1} parent=1 // pred_fallthru
      _
    // Predicated region
    $region30: #{residual_mlp_forward.1} parent=1 // pred_check
      _
    $region31: #{residual_mlp_forward.1} parent=1 // pred_check_branch
      %51 = sbr.rel (0) target = $region33
    $region32: #{residual_mlp_forward.1} parent=1 // pred_region
      _
    $region33: #{residual_mlp_forward.1} parent=1 // pred_fallthru
      _
    // Predicated region
    $region34: #{residual_mlp_forward.1} parent=1 // pred_check
      _
    $region35: #{residual_mlp_forward.1} parent=1 // pred_check_branch
      %53 = sbr.rel (0) target = $region37
    $region36: #{residual_mlp_forward.1} parent=1 // pred_region
      _
    $region37: #{residual_mlp_forward.1} parent=1 // pred_fallthru
      _
    // Predicated region
    $region38: #{residual_mlp_forward.1} parent=1 // pred_check
      _
    $region39: #{residual_mlp_forward.1} parent=1 // pred_check_branch
      %55 = sbr.rel (0) target = $region41
    $region40: #{residual_mlp_forward.1} parent=1 // pred_region
      %56 = dma.done [#allocation3], 12288
    $region41: #{residual_mlp_forward.1} parent=1 // pred_fallthru
      _
    // Predicated region
    $region42: #{residual_mlp_forward.1} parent=1 // pred_check
      _
    $region43: #{residual_mlp_forward.1} parent=1 // pred_check_branch
      %58 = sbr.rel (0) target = $region45
    $region44: #{residual_mlp_forward.1} parent=1 // pred_region
      %59 = dma.done [#allocation5], 12288
    $region45: #{residual_mlp_forward.1} parent=1 // pred_fallthru
      _
    %v61 = vld [vmem:[%s0] sm:$0xff]
    %v62 = vld [vmem:[%s0 + $0x8] sm:$0xff]
    %v63 = vld [vmem:[%s0 + $0x10] sm:$0xff]
    %v64 = vld [vmem:[%s0 + $0x18] sm:$0xff]
    %v65 = vld [vmem:[%s0 + $0x20] sm:$0xff]
    %v66 = vld [vmem:[%s0 + $0x28] sm:$0xff]
    %v67 = vld [vmem:[%s0 + $0x30] sm:$0xff]
    %v68 = vld [vmem:[%s0 + $0x38] sm:$0xff]
    %v69 = vld [vmem:[%s0 + $0x40] sm:$0xff]
    %v70 = vld [vmem:[%s0 + $0x48] sm:$0xff]
    %v71 = vld [vmem:[%s0 + $0x50] sm:$0xff]
    %v72 = vld [vmem:[%s0 + $0x58] sm:$0xff]
    %v73 = vld [vmem:[%s0 + $0x60] sm:$0xff]
    %v74 = vld [vmem:[%s0 + $0x68] sm:$0xff]
    %v75 = vld [vmem:[%s0 + $0x70] sm:$0xff]
    %v76 = vld [vmem:[%s0 + $0x78] sm:$0xff]
    %v77 = vld [vmem:[%s0 + $0x80] sm:$0xff]
    %v78 = vld [vmem:[%s0 + $0x88] sm:$0xff]
    %v79 = vld [vmem:[%s0 + $0x90] sm:$0xff]
    %v80 = vld [vmem:[%s0 + $0x98] sm:$0xff]
    %v81 = vld [vmem:[%s0 + $0xa0] sm:$0xff]
    %v82 = vld [vmem:[%s0 + $0xa8] sm:$0xff]
    %v83 = vld [vmem:[%s0 + $0xb0] sm:$0xff]
    %v84 = vld [vmem:[%s0 + $0xb8] sm:$0xff]
    %v85 = vld [vmem:[%s0 + $0xc0] sm:$0xff]
    %v86 = vld [vmem:[%s0 + $0xc8] sm:$0xff]
    %v87 = vld [vmem:[%s0 + $0xd0] sm:$0xff]
    %v88 = vld [vmem:[%s0 + $0xd8] sm:$0xff]
    %v89 = vld [vmem:[%s0 + $0xe0] sm:$0xff]
    %v90 = vld [vmem:[%s0 + $0xe8] sm:$0xff]
    %v91 = vld [vmem:[%s0 + $0xf0] sm:$0xff]
    %v92 = vld [vmem:[%s0 + $0xf8] sm:$0xff]
    %v93 = vld [vmem:[%s1] sm:$0xff]
    %v94 = vld [vmem:[%s2] sm:$0x3]
    %96 = vset.pattern.permute.xlu0 0
    %97 = vperm.xlu0 %96, %v61
    %v98 = vpop.permute.xlu0 %97
    %101 = vset.pattern.permute.xlu0 0
    %102 = vperm.xlu0 %101, %v62
    %v103 = vpop.permute.xlu0 %102
    %106 = vset.pattern.permute.xlu0 0
    %107 = vperm.xlu0 %106, %v63
    %v108 = vpop.permute.xlu0 %107
    %111 = vset.pattern.permute.xlu0 0
    %112 = vperm.xlu0 %111, %v64
    %v113 = vpop.permute.xlu0 %112
    %116 = vset.pattern.permute.xlu0 0
    %117 = vperm.xlu0 %116, %v65
    %v118 = vpop.permute.xlu0 %117
    %121 = vset.pattern.permute.xlu0 0
    %122 = vperm.xlu0 %121, %v66
    %v123 = vpop.permute.xlu0 %122
    %126 = vset.pattern.permute.xlu0 0
    %127 = vperm.xlu0 %126, %v67
    %v128 = vpop.permute.xlu0 %127
    %131 = vset.pattern.permute.xlu0 0
    %132 = vperm.xlu0 %131, %v68
    %v133 = vpop.permute.xlu0 %132
    %136 = vset.pattern.permute.xlu0 0
    %137 = vperm.xlu0 %136, %v69
    %v138 = vpop.permute.xlu0 %137
    %141 = vset.pattern.permute.xlu0 0
    %142 = vperm.xlu0 %141, %v70
    %v143 = vpop.permute.xlu0 %142
    %146 = vset.pattern.permute.xlu0 0
    %147 = vperm.xlu0 %146, %v71
    %v148 = vpop.permute.xlu0 %147
    %151 = vset.pattern.permute.xlu0 0
    %152 = vperm.xlu0 %151, %v72
    %v153 = vpop.permute.xlu0 %152
    %156 = vset.pattern.permute.xlu0 0
    %157 = vperm.xlu0 %156, %v73
    %v158 = vpop.permute.xlu0 %157
    %161 = vset.pattern.permute.xlu0 0
    %162 = vperm.xlu0 %161, %v74
    %v163 = vpop.permute.xlu0 %162
    %166 = vset.pattern.permute.xlu0 0
    %167 = vperm.xlu0 %166, %v75
    %v168 = vpop.permute.xlu0 %167
    %171 = vset.pattern.permute.xlu0 0
    %172 = vperm.xlu0 %171, %v76
    %v173 = vpop.permute.xlu0 %172
    %176 = vset.pattern.permute.xlu0 0
    %177 = vperm.xlu0 %176, %v77
    %v178 = vpop.permute.xlu0 %177
    %181 = vset.pattern.permute.xlu0 0
    %182 = vperm.xlu0 %181, %v78
    %v183 = vpop.permute.xlu0 %182
    %186 = vset.pattern.permute.xlu0 0
    %187 = vperm.xlu0 %186, %v79
    %v188 = vpop.permute.xlu0 %187
    %191 = vset.pattern.permute.xlu0 0
    %192 = vperm.xlu0 %191, %v80
    %v193 = vpop.permute.xlu0 %192
    %196 = vset.pattern.permute.xlu0 0
    %197 = vperm.xlu0 %196, %v81
    %v198 = vpop.permute.xlu0 %197
    %201 = vset.pattern.permute.xlu0 0
    %202 = vperm.xlu0 %201, %v82
    %v203 = vpop.permute.xlu0 %202
    %206 = vset.pattern.permute.xlu0 0
    %207 = vperm.xlu0 %206, %v83
    %v208 = vpop.permute.xlu0 %207
    %211 = vset.pattern.permute.xlu0 0
    %212 = vperm.xlu0 %211, %v84
    %v213 = vpop.permute.xlu0 %212
    %216 = vset.pattern.permute.xlu0 0
    %217 = vperm.xlu0 %216, %v85
    %v218 = vpop.permute.xlu0 %217
    %221 = vset.pattern.permute.xlu0 0
    %222 = vperm.xlu0 %221, %v86
    %v223 = vpop.permute.xlu0 %222
    %226 = vset.pattern.permute.xlu0 0
    %227 = vperm.xlu0 %226, %v87
    %v228 = vpop.permute.xlu0 %227
    %231 = vset.pattern.permute.xlu0 0
    %232 = vperm.xlu0 %231, %v88
    %v233 = vpop.permute.xlu0 %232
    %236 = vset.pattern.permute.xlu0 0
    %237 = vperm.xlu0 %236, %v89
    %v238 = vpop.permute.xlu0 %237
    %241 = vset.pattern.permute.xlu0 0
    %242 = vperm.xlu0 %241, %v90
    %v243 = vpop.permute.xlu0 %242
    %246 = vset.pattern.permute.xlu0 0
    %247 = vperm.xlu0 %246, %v91
    %v248 = vpop.permute.xlu0 %247
    %251 = vset.pattern.permute.xlu0 0
    %252 = vperm.xlu0 %251, %v92
    %v253 = vpop.permute.xlu0 %252
    %v256 = vlaneseq
    %v257 = vshrl.u32 %v256, 7
    %v258 = vsub.s32 0, %v257
    %v259 = vrot.slane %v93, %v258
    %v260 = vlaneseq
    %v261 = vshrl.u32 %v260, 7
    %v262 = vsub.s32 4, %v261
    %v263 = vrot.slane %v93, %v262
    %v266 = vlaneseq
    %v267 = vshrl.u32 %v266, 7
    %v268 = vsub.s32 0, %v267
    %v269 = vrot.slane %v259, %v268
    %v270 = vlaneseq
    %v271 = vshrl.u32 %v270, 7
    %v272 = vsub.s32 0, %v271
    %v273 = vrot.slane %v263, %v272
    %v274 = vmul.f32 %v98, %v269
    %v275 = vmul.f32 %v98, %v273
    %v276 = vmul.f32 %v103, %v269
    %v277 = vmul.f32 %v103, %v273
    %v278 = vmul.f32 %v108, %v269
    %v279 = vmul.f32 %v108, %v273
    %v280 = vmul.f32 %v113, %v269
    %v281 = vmul.f32 %v113, %v273
    %v282 = vmul.f32 %v118, %v269
    %v283 = vmul.f32 %v118, %v273
    %v284 = vmul.f32 %v123, %v269
    %v285 = vmul.f32 %v123, %v273
    %v286 = vmul.f32 %v128, %v269
    %v287 = vmul.f32 %v128, %v273
    %v288 = vmul.f32 %v133, %v269
    %v289 = vmul.f32 %v133, %v273
    %v290 = vmul.f32 %v138, %v269
    %v291 = vmul.f32 %v138, %v273
    %v292 = vmul.f32 %v143, %v269
    %v293 = vmul.f32 %v143, %v273
    %v294 = vmul.f32 %v148, %v269
    %v295 = vmul.f32 %v148, %v273
    %v296 = vmul.f32 %v153, %v269
    %v297 = vmul.f32 %v153, %v273
    %v298 = vmul.f32 %v158, %v269
    %v299 = vmul.f32 %v158, %v273
    %v300 = vmul.f32 %v163, %v269
    %v301 = vmul.f32 %v163, %v273
    %v302 = vmul.f32 %v168, %v269
    %v303 = vmul.f32 %v168, %v273
    %v304 = vmul.f32 %v173, %v269
    %v305 = vmul.f32 %v173, %v273
    %v306 = vmul.f32 %v178, %v269
    %v307 = vmul.f32 %v178, %v273
    %v308 = vmul.f32 %v183, %v269
    %v309 = vmul.f32 %v183, %v273
    %v310 = vmul.f32 %v188, %v269
    %v311 = vmul.f32 %v188, %v273
    %v312 = vmul.f32 %v193, %v269
    %v313 = vmul.f32 %v193, %v273
    %v314 = vmul.f32 %v198, %v269
    %v315 = vmul.f32 %v198, %v273
    %v316 = vmul.f32 %v203, %v269
    %v317 = vmul.f32 %v203, %v273
    %v318 = vmul.f32 %v208, %v269
    %v319 = vmul.f32 %v208, %v273
    %v320 = vmul.f32 %v213, %v269
    %v321 = vmul.f32 %v213, %v273
    %v322 = vmul.f32 %v218, %v269
    %v323 = vmul.f32 %v218, %v273
    %v324 = vmul.f32 %v223, %v269
    %v325 = vmul.f32 %v223, %v273
    %v326 = vmul.f32 %v228, %v269
    %v327 = vmul.f32 %v228, %v273
    %v328 = vmul.f32 %v233, %v269
    %v329 = vmul.f32 %v233, %v273
    %v330 = vmul.f32 %v238, %v269
    %v331 = vmul.f32 %v238, %v273
    %v332 = vmul.f32 %v243, %v269
    %v333 = vmul.f32 %v243, %v273
    %v334 = vmul.f32 %v248, %v269
    %v335 = vmul.f32 %v248, %v273
    %v336 = vmul.f32 %v253, %v269
    %v337 = vmul.f32 %v253, %v273
    %v339 = vlaneseq
    %v340 = vshrl.u32 %v339, 7
    %v341 = vsub.s32 0, %v340
    %v342 = vrot.slane %v94, %v341
    %v343 = vlaneseq
    %v344 = vshrl.u32 %v343, 7
    %v345 = vsub.s32 1, %v344
    %v346 = vrot.slane %v94, %v345
    %v349 = vadd.f32 %v342, %v274
    %v350 = vadd.f32 %v346, %v275
    %v351 = vadd.f32 %v342, %v276
    %v352 = vadd.f32 %v346, %v277
    %v353 = vadd.f32 %v342, %v278
    %v354 = vadd.f32 %v346, %v279
    %v355 = vadd.f32 %v342, %v280
    %v356 = vadd.f32 %v346, %v281
    %v357 = vadd.f32 %v342, %v282
    %v358 = vadd.f32 %v346, %v283
    %v359 = vadd.f32 %v342, %v284
    %v360 = vadd.f32 %v346, %v285
    %v361 = vadd.f32 %v342, %v286
    %v362 = vadd.f32 %v346, %v287
    %v363 = vadd.f32 %v342, %v288
    %v364 = vadd.f32 %v346, %v289
    %v365 = vadd.f32 %v342, %v290
    %v366 = vadd.f32 %v346, %v291
    %v367 = vadd.f32 %v342, %v292
    %v368 = vadd.f32 %v346, %v293
    %v369 = vadd.f32 %v342, %v294
    %v370 = vadd.f32 %v346, %v295
    %v371 = vadd.f32 %v342, %v296
    %v372 = vadd.f32 %v346, %v297
    %v373 = vadd.f32 %v342, %v298
    %v374 = vadd.f32 %v346, %v299
    %v375 = vadd.f32 %v342, %v300
    %v376 = vadd.f32 %v346, %v301
    %v377 = vadd.f32 %v342, %v302
    %v378 = vadd.f32 %v346, %v303
    %v379 = vadd.f32 %v342, %v304
    %v380 = vadd.f32 %v346, %v305
    %v381 = vadd.f32 %v342, %v306
    %v382 = vadd.f32 %v346, %v307
    %v383 = vadd.f32 %v342, %v308
    %v384 = vadd.f32 %v346, %v309
    %v385 = vadd.f32 %v342, %v310
    %v386 = vadd.f32 %v346, %v311
    %v387 = vadd.f32 %v342, %v312
    %v388 = vadd.f32 %v346, %v313
    %v389 = vadd.f32 %v342, %v314
    %v390 = vadd.f32 %v346, %v315
    %v391 = vadd.f32 %v342, %v316
    %v392 = vadd.f32 %v346, %v317
    %v393 = vadd.f32 %v342, %v318
    %v394 = vadd.f32 %v346, %v319
    %v395 = vadd.f32 %v342, %v320
    %v396 = vadd.f32 %v346, %v321
    %v397 = vadd.f32 %v342, %v322
    %v398 = vadd.f32 %v346, %v323
    %v399 = vadd.f32 %v342, %v324
    %v400 = vadd.f32 %v346, %v325
    %v401 = vadd.f32 %v342, %v326
    %v402 = vadd.f32 %v346, %v327
    %v403 = vadd.f32 %v342, %v328
    %v404 = vadd.f32 %v346, %v329
    %v405 = vadd.f32 %v342, %v330
    %v406 = vadd.f32 %v346, %v331
    %v407 = vadd.f32 %v342, %v332
    %v408 = vadd.f32 %v346, %v333
    %v409 = vadd.f32 %v342, %v334
    %v410 = vadd.f32 %v346, %v335
    %v411 = vadd.f32 %v342, %v336
    %v412 = vadd.f32 %v346, %v337
    %413 = vset.pattern.permute.xlu0 1
    %414 = vperm.xlu0 %413, %v61
    %v415 = vpop.permute.xlu0 %414
    %417 = vset.pattern.permute.xlu0 1
    %418 = vperm.xlu0 %417, %v62
    %v419 = vpop.permute.xlu0 %418
    %421 = vset.pattern.permute.xlu0 1
    %422 = vperm.xlu0 %421, %v63
    %v423 = vpop.permute.xlu0 %422
    %425 = vset.pattern.permute.xlu0 1
    %426 = vperm.xlu0 %425, %v64
    %v427 = vpop.permute.xlu0 %426
    %429 = vset.pattern.permute.xlu0 1
    %430 = vperm.xlu0 %429, %v65
    %v431 = vpop.permute.xlu0 %430
    %433 = vset.pattern.permute.xlu0 1
    %434 = vperm.xlu0 %433, %v66
    %v435 = vpop.permute.xlu0 %434
    %437 = vset.pattern.permute.xlu0 1
    %438 = vperm.xlu0 %437, %v67
    %v439 = vpop.permute.xlu0 %438
    %441 = vset.pattern.permute.xlu0 1
    %442 = vperm.xlu0 %441, %v68
    %v443 = vpop.permute.xlu0 %442
    %445 = vset.pattern.permute.xlu0 1
    %446 = vperm.xlu0 %445, %v69
    %v447 = vpop.permute.xlu0 %446
    %449 = vset.pattern.permute.xlu0 1
    %450 = vperm.xlu0 %449, %v70
    %v451 = vpop.permute.xlu0 %450
    %453 = vset.pattern.permute.xlu0 1
    %454 = vperm.xlu0 %453, %v71
    %v455 = vpop.permute.xlu0 %454
    %457 = vset.pattern.permute.xlu0 1
    %458 = vperm.xlu0 %457, %v72
    %v459 = vpop.permute.xlu0 %458
    %461 = vset.pattern.permute.xlu0 1
    %462 = vperm.xlu0 %461, %v73
    %v463 = vpop.permute.xlu0 %462
    %465 = vset.pattern.permute.xlu0 1
    %466 = vperm.xlu0 %465, %v74
    %v467 = vpop.permute.xlu0 %466
    %469 = vset.pattern.permute.xlu0 1
    %470 = vperm.xlu0 %469, %v75
    %v471 = vpop.permute.xlu0 %470
    %473 = vset.pattern.permute.xlu0 1
    %474 = vperm.xlu0 %473, %v76
    %v475 = vpop.permute.xlu0 %474
    %477 = vset.pattern.permute.xlu0 1
    %478 = vperm.xlu0 %477, %v77
    %v479 = vpop.permute.xlu0 %478
    %481 = vset.pattern.permute.xlu0 1
    %482 = vperm.xlu0 %481, %v78
    %v483 = vpop.permute.xlu0 %482
    %485 = vset.pattern.permute.xlu0 1
    %486 = vperm.xlu0 %485, %v79
    %v487 = vpop.permute.xlu0 %486
    %489 = vset.pattern.permute.xlu0 1
    %490 = vperm.xlu0 %489, %v80
    %v491 = vpop.permute.xlu0 %490
    %493 = vset.pattern.permute.xlu0 1
    %494 = vperm.xlu0 %493, %v81
    %v495 = vpop.permute.xlu0 %494
    %497 = vset.pattern.permute.xlu0 1
    %498 = vperm.xlu0 %497, %v82
    %v499 = vpop.permute.xlu0 %498
    %501 = vset.pattern.permute.xlu0 1
    %502 = vperm.xlu0 %501, %v83
    %v503 = vpop.permute.xlu0 %502
    %505 = vset.pattern.permute.xlu0 1
    %506 = vperm.xlu0 %505, %v84
    %v507 = vpop.permute.xlu0 %506
    %509 = vset.pattern.permute.xlu0 1
    %510 = vperm.xlu0 %509, %v85
    %v511 = vpop.permute.xlu0 %510
    %513 = vset.pattern.permute.xlu0 1
    %514 = vperm.xlu0 %513, %v86
    %v515 = vpop.permute.xlu0 %514
    %517 = vset.pattern.permute.xlu0 1
    %518 = vperm.xlu0 %517, %v87
    %v519 = vpop.permute.xlu0 %518
    %521 = vset.pattern.permute.xlu0 1
    %522 = vperm.xlu0 %521, %v88
    %v523 = vpop.permute.xlu0 %522
    %525 = vset.pattern.permute.xlu0 1
    %526 = vperm.xlu0 %525, %v89
    %v527 = vpop.permute.xlu0 %526
    %529 = vset.pattern.permute.xlu0 1
    %530 = vperm.xlu0 %529, %v90
    %v531 = vpop.permute.xlu0 %530
    %533 = vset.pattern.permute.xlu0 1
    %534 = vperm.xlu0 %533, %v91
    %v535 = vpop.permute.xlu0 %534
    %537 = vset.pattern.permute.xlu0 1
    %538 = vperm.xlu0 %537, %v92
    %v539 = vpop.permute.xlu0 %538
    %v541 = vlaneseq
    %v542 = vshrl.u32 %v541, 7
    %v543 = vsub.s32 1, %v542
    %v544 = vrot.slane %v93, %v543
    %v545 = vlaneseq
    %v546 = vshrl.u32 %v545, 7
    %v547 = vsub.s32 5, %v546
    %v548 = vrot.slane %v93, %v547
    %v551 = vlaneseq
    %v552 = vshrl.u32 %v551, 7
    %v553 = vsub.s32 1, %v552
    %v554 = vrot.slane %v544, %v553
    %v555 = vlaneseq
    %v556 = vshrl.u32 %v555, 7
    %v557 = vsub.s32 1, %v556
    %v558 = vrot.slane %v548, %v557
    %v559 = vmul.f32 %v415, %v554
    %v560 = vmul.f32 %v415, %v558
    %v561 = vmul.f32 %v419, %v554
    %v562 = vmul.f32 %v419, %v558
    %v563 = vmul.f32 %v423, %v554
    %v564 = vmul.f32 %v423, %v558
    %v565 = vmul.f32 %v427, %v554
    %v566 = vmul.f32 %v427, %v558
    %v567 = vmul.f32 %v431, %v554
    %v568 = vmul.f32 %v431, %v558
    %v569 = vmul.f32 %v435, %v554
    %v570 = vmul.f32 %v435, %v558
    %v571 = vmul.f32 %v439, %v554
    %v572 = vmul.f32 %v439, %v558
    %v573 = vmul.f32 %v443, %v554
    %v574 = vmul.f32 %v443, %v558
    %v575 = vmul.f32 %v447, %v554
    %v576 = vmul.f32 %v447, %v558
    %v577 = vmul.f32 %v451, %v554
    %v578 = vmul.f32 %v451, %v558
    %v579 = vmul.f32 %v455, %v554
    %v580 = vmul.f32 %v455, %v558
    %v581 = vmul.f32 %v459, %v554
    %v582 = vmul.f32 %v459, %v558
    %v583 = vmul.f32 %v463, %v554
    %v584 = vmul.f32 %v463, %v558
    %v585 = vmul.f32 %v467, %v554
    %v586 = vmul.f32 %v467, %v558
    %v587 = vmul.f32 %v471, %v554
    %v588 = vmul.f32 %v471, %v558
    %v589 = vmul.f32 %v475, %v554
    %v590 = vmul.f32 %v475, %v558
    %v591 = vmul.f32 %v479, %v554
    %v592 = vmul.f32 %v479, %v558
    %v593 = vmul.f32 %v483, %v554
    %v594 = vmul.f32 %v483, %v558
    %v595 = vmul.f32 %v487, %v554
    %v596 = vmul.f32 %v487, %v558
    %v597 = vmul.f32 %v491, %v554
    %v598 = vmul.f32 %v491, %v558
    %v599 = vmul.f32 %v495, %v554
    %v600 = vmul.f32 %v495, %v558
    %v601 = vmul.f32 %v499, %v554
    %v602 = vmul.f32 %v499, %v558
    %v603 = vmul.f32 %v503, %v554
    %v604 = vmul.f32 %v503, %v558
    %v605 = vmul.f32 %v507, %v554
    %v606 = vmul.f32 %v507, %v558
    %v607 = vmul.f32 %v511, %v554
    %v608 = vmul.f32 %v511, %v558
    %v609 = vmul.f32 %v515, %v554
    %v610 = vmul.f32 %v515, %v558
    %v611 = vmul.f32 %v519, %v554
    %v612 = vmul.f32 %v519, %v558
    %v613 = vmul.f32 %v523, %v554
    %v614 = vmul.f32 %v523, %v558
    %v615 = vmul.f32 %v527, %v554
    %v616 = vmul.f32 %v527, %v558
    %v617 = vmul.f32 %v531, %v554
    %v618 = vmul.f32 %v531, %v558
    %v619 = vmul.f32 %v535, %v554
    %v620 = vmul.f32 %v535, %v558
    %v621 = vmul.f32 %v539, %v554
    %v622 = vmul.f32 %v539, %v558
    %v623 = vadd.f32 %v349, %v559
    %v624 = vadd.f32 %v350, %v560
    %v625 = vadd.f32 %v351, %v561
    %v626 = vadd.f32 %v352, %v562
    %v627 = vadd.f32 %v353, %v563
    %v628 = vadd.f32 %v354, %v564
    %v629 = vadd.f32 %v355, %v565
    %v630 = vadd.f32 %v356, %v566
    %v631 = vadd.f32 %v357, %v567
    %v632 = vadd.f32 %v358, %v568
    %v633 = vadd.f32 %v359, %v569
    %v634 = vadd.f32 %v360, %v570
    %v635 = vadd.f32 %v361, %v571
    %v636 = vadd.f32 %v362, %v572
    %v637 = vadd.f32 %v363, %v573
    %v638 = vadd.f32 %v364, %v574
    %v639 = vadd.f32 %v365, %v575
    %v640 = vadd.f32 %v366, %v576
    %v641 = vadd.f32 %v367, %v577
    %v642 = vadd.f32 %v368, %v578
    %v643 = vadd.f32 %v369, %v579
    %v644 = vadd.f32 %v370, %v580
    %v645 = vadd.f32 %v371, %v581
    %v646 = vadd.f32 %v372, %v582
    %v647 = vadd.f32 %v373, %v583
    %v648 = vadd.f32 %v374, %v584
    %v649 = vadd.f32 %v375, %v585
    %v650 = vadd.f32 %v376, %v586
    %v651 = vadd.f32 %v377, %v587
    %v652 = vadd.f32 %v378, %v588
    %v653 = vadd.f32 %v379, %v589
    %v654 = vadd.f32 %v380, %v590
    %v655 = vadd.f32 %v381, %v591
    %v656 = vadd.f32 %v382, %v592
    %v657 = vadd.f32 %v383, %v593
    %v658 = vadd.f32 %v384, %v594
    %v659 = vadd.f32 %v385, %v595
    %v660 = vadd.f32 %v386, %v596
    %v661 = vadd.f32 %v387, %v597
    %v662 = vadd.f32 %v388, %v598
    %v663 = vadd.f32 %v389, %v599
    %v664 = vadd.f32 %v390, %v600
    %v665 = vadd.f32 %v391, %v601
    %v666 = vadd.f32 %v392, %v602
    %v667 = vadd.f32 %v393, %v603
    %v668 = vadd.f32 %v394, %v604
    %v669 = vadd.f32 %v395, %v605
    %v670 = vadd.f32 %v396, %v606
    %v671 = vadd.f32 %v397, %v607
    %v672 = vadd.f32 %v398, %v608
    %v673 = vadd.f32 %v399, %v609
    %v674 = vadd.f32 %v400, %v610
    %v675 = vadd.f32 %v401, %v611
    %v676 = vadd.f32 %v402, %v612
    %v677 = vadd.f32 %v403, %v613
    %v678 = vadd.f32 %v404, %v614
    %v679 = vadd.f32 %v405, %v615
    %v680 = vadd.f32 %v406, %v616
    %v681 = vadd.f32 %v407, %v617
    %v682 = vadd.f32 %v408, %v618
    %v683 = vadd.f32 %v409, %v619
    %v684 = vadd.f32 %v410, %v620
    %v685 = vadd.f32 %v411, %v621
    %v686 = vadd.f32 %v412, %v622
    %687 = vset.pattern.permute.xlu0 2
    %688 = vperm.xlu0 %687, %v61
    %v689 = vpop.permute.xlu0 %688
    %691 = vset.pattern.permute.xlu0 2
    %692 = vperm.xlu0 %691, %v62
    %v693 = vpop.permute.xlu0 %692
    %695 = vset.pattern.permute.xlu0 2
    %696 = vperm.xlu0 %695, %v63
    %v697 = vpop.permute.xlu0 %696
    %699 = vset.pattern.permute.xlu0 2
    %700 = vperm.xlu0 %699, %v64
    %v701 = vpop.permute.xlu0 %700
    %703 = vset.pattern.permute.xlu0 2
    %704 = vperm.xlu0 %703, %v65
    %v705 = vpop.permute.xlu0 %704
    %707 = vset.pattern.permute.xlu0 2
    %708 = vperm.xlu0 %707, %v66
    %v709 = vpop.permute.xlu0 %708
    %711 = vset.pattern.permute.xlu0 2
    %712 = vperm.xlu0 %711, %v67
    %v713 = vpop.permute.xlu0 %712
    %715 = vset.pattern.permute.xlu0 2
    %716 = vperm.xlu0 %715, %v68
    %v717 = vpop.permute.xlu0 %716
    %719 = vset.pattern.permute.xlu0 2
    %720 = vperm.xlu0 %719, %v69
    %v721 = vpop.permute.xlu0 %720
    %723 = vset.pattern.permute.xlu0 2
    %724 = vperm.xlu0 %723, %v70
    %v725 = vpop.permute.xlu0 %724
    %727 = vset.pattern.permute.xlu0 2
    %728 = vperm.xlu0 %727, %v71
    %v729 = vpop.permute.xlu0 %728
    %731 = vset.pattern.permute.xlu0 2
    %732 = vperm.xlu0 %731, %v72
    %v733 = vpop.permute.xlu0 %732
    %735 = vset.pattern.permute.xlu0 2
    %736 = vperm.xlu0 %735, %v73
    %v737 = vpop.permute.xlu0 %736
    %739 = vset.pattern.permute.xlu0 2
    %740 = vperm.xlu0 %739, %v74
    %v741 = vpop.permute.xlu0 %740
    %743 = vset.pattern.permute.xlu0 2
    %744 = vperm.xlu0 %743, %v75
    %v745 = vpop.permute.xlu0 %744
    %747 = vset.pattern.permute.xlu0 2
    %748 = vperm.xlu0 %747, %v76
    %v749 = vpop.permute.xlu0 %748
    %751 = vset.pattern.permute.xlu0 2
    %752 = vperm.xlu0 %751, %v77
    %v753 = vpop.permute.xlu0 %752
    %755 = vset.pattern.permute.xlu0 2
    %756 = vperm.xlu0 %755, %v78
    %v757 = vpop.permute.xlu0 %756
    %759 = vset.pattern.permute.xlu0 2
    %760 = vperm.xlu0 %759, %v79
    %v761 = vpop.permute.xlu0 %760
    %763 = vset.pattern.permute.xlu0 2
    %764 = vperm.xlu0 %763, %v80
    %v765 = vpop.permute.xlu0 %764
    %767 = vset.pattern.permute.xlu0 2
    %768 = vperm.xlu0 %767, %v81
    %v769 = vpop.permute.xlu0 %768
    %771 = vset.pattern.permute.xlu0 2
    %772 = vperm.xlu0 %771, %v82
    %v773 = vpop.permute.xlu0 %772
    %775 = vset.pattern.permute.xlu0 2
    %776 = vperm.xlu0 %775, %v83
    %v777 = vpop.permute.xlu0 %776
    %779 = vset.pattern.permute.xlu0 2
    %780 = vperm.xlu0 %779, %v84
    %v781 = vpop.permute.xlu0 %780
    %783 = vset.pattern.permute.xlu0 2
    %784 = vperm.xlu0 %783, %v85
    %v785 = vpop.permute.xlu0 %784
    %787 = vset.pattern.permute.xlu0 2
    %788 = vperm.xlu0 %787, %v86
    %v789 = vpop.permute.xlu0 %788
    %791 = vset.pattern.permute.xlu0 2
    %792 = vperm.xlu0 %791, %v87
    %v793 = vpop.permute.xlu0 %792
    %795 = vset.pattern.permute.xlu0 2
    %796 = vperm.xlu0 %795, %v88
    %v797 = vpop.permute.xlu0 %796
    %799 = vset.pattern.permute.xlu0 2
    %800 = vperm.xlu0 %799, %v89
    %v801 = vpop.permute.xlu0 %800
    %803 = vset.pattern.permute.xlu0 2
    %804 = vperm.xlu0 %803, %v90
    %v805 = vpop.permute.xlu0 %804
    %807 = vset.pattern.permute.xlu0 2
    %808 = vperm.xlu0 %807, %v91
    %v809 = vpop.permute.xlu0 %808
    %811 = vset.pattern.permute.xlu0 2
    %812 = vperm.xlu0 %811, %v92
    %v813 = vpop.permute.xlu0 %812
    %v815 = vlaneseq
    %v816 = vshrl.u32 %v815, 7
    %v817 = vsub.s32 2, %v816
    %v818 = vrot.slane %v93, %v817
    %v819 = vlaneseq
    %v820 = vshrl.u32 %v819, 7
    %v821 = vsub.s32 6, %v820
    %v822 = vrot.slane %v93, %v821
    %v825 = vlaneseq
    %v826 = vshrl.u32 %v825, 7
    %v827 = vsub.s32 2, %v826
    %v828 = vrot.slane %v818, %v827
    %v829 = vlaneseq
    %v830 = vshrl.u32 %v829, 7
    %v831 = vsub.s32 2, %v830
    %v832 = vrot.slane %v822, %v831
    %v833 = vmul.f32 %v689, %v828
    %v834 = vmul.f32 %v689, %v832
    %v835 = vmul.f32 %v693, %v828
    %v836 = vmul.f32 %v693, %v832
    %v837 = vmul.f32 %v697, %v828
    %v838 = vmul.f32 %v697, %v832
    %v839 = vmul.f32 %v701, %v828
    %v840 = vmul.f32 %v701, %v832
    %v841 = vmul.f32 %v705, %v828
    %v842 = vmul.f32 %v705, %v832
    %v843 = vmul.f32 %v709, %v828
    %v844 = vmul.f32 %v709, %v832
    %v845 = vmul.f32 %v713, %v828
    %v846 = vmul.f32 %v713, %v832
    %v847 = vmul.f32 %v717, %v828
    %v848 = vmul.f32 %v717, %v832
    %v849 = vmul.f32 %v721, %v828
    %v850 = vmul.f32 %v721, %v832
    %v851 = vmul.f32 %v725, %v828
    %v852 = vmul.f32 %v725, %v832
    %v853 = vmul.f32 %v729, %v828
    %v854 = vmul.f32 %v729, %v832
    %v855 = vmul.f32 %v733, %v828
    %v856 = vmul.f32 %v733, %v832
    %v857 = vmul.f32 %v737, %v828
    %v858 = vmul.f32 %v737, %v832
    %v859 = vmul.f32 %v741, %v828
    %v860 = vmul.f32 %v741, %v832
    %v861 = vmul.f32 %v745, %v828
    %v862 = vmul.f32 %v745, %v832
    %v863 = vmul.f32 %v749, %v828
    %v864 = vmul.f32 %v749, %v832
    %v865 = vmul.f32 %v753, %v828
    %v866 = vmul.f32 %v753, %v832
    %v867 = vmul.f32 %v757, %v828
    %v868 = vmul.f32 %v757, %v832
    %v869 = vmul.f32 %v761, %v828
    %v870 = vmul.f32 %v761, %v832
    %v871 = vmul.f32 %v765, %v828
    %v872 = vmul.f32 %v765, %v832
    %v873 = vmul.f32 %v769, %v828
    %v874 = vmul.f32 %v769, %v832
    %v875 = vmul.f32 %v773, %v828
    %v876 = vmul.f32 %v773, %v832
    %v877 = vmul.f32 %v777, %v828
    %v878 = vmul.f32 %v777, %v832
    %v879 = vmul.f32 %v781, %v828
    %v880 = vmul.f32 %v781, %v832
    %v881 = vmul.f32 %v785, %v828
    %v882 = vmul.f32 %v785, %v832
    %v883 = vmul.f32 %v789, %v828
    %v884 = vmul.f32 %v789, %v832
    %v885 = vmul.f32 %v793, %v828
    %v886 = vmul.f32 %v793, %v832
    %v887 = vmul.f32 %v797, %v828
    %v888 = vmul.f32 %v797, %v832
    %v889 = vmul.f32 %v801, %v828
    %v890 = vmul.f32 %v801, %v832
    %v891 = vmul.f32 %v805, %v828
    %v892 = vmul.f32 %v805, %v832
    %v893 = vmul.f32 %v809, %v828
    %v894 = vmul.f32 %v809, %v832
    %v895 = vmul.f32 %v813, %v828
    %v896 = vmul.f32 %v813, %v832
    %v897 = vadd.f32 %v623, %v833
    %v898 = vadd.f32 %v624, %v834
    %v899 = vadd.f32 %v625, %v835
    %v900 = vadd.f32 %v626, %v836
    %v901 = vadd.f32 %v627, %v837
    %v902 = vadd.f32 %v628, %v838
    %v903 = vadd.f32 %v629, %v839
    %v904 = vadd.f32 %v630, %v840
    %v905 = vadd.f32 %v631, %v841
    %v906 = vadd.f32 %v632, %v842
    %v907 = vadd.f32 %v633, %v843
    %v908 = vadd.f32 %v634, %v844
    %v909 = vadd.f32 %v635, %v845
    %v910 = vadd.f32 %v636, %v846
    %v911 = vadd.f32 %v637, %v847
    %v912 = vadd.f32 %v638, %v848
    %v913 = vadd.f32 %v639, %v849
    %v914 = vadd.f32 %v640, %v850
    %v915 = vadd.f32 %v641, %v851
    %v916 = vadd.f32 %v642, %v852
    %v917 = vadd.f32 %v643, %v853
    %v918 = vadd.f32 %v644, %v854
    %v919 = vadd.f32 %v645, %v855
    %v920 = vadd.f32 %v646, %v856
    %v921 = vadd.f32 %v647, %v857
    %v922 = vadd.f32 %v648, %v858
    %v923 = vadd.f32 %v649, %v859
    %v924 = vadd.f32 %v650, %v860
    %v925 = vadd.f32 %v651, %v861
    %v926 = vadd.f32 %v652, %v862
    %v927 = vadd.f32 %v653, %v863
    %v928 = vadd.f32 %v654, %v864
    %v929 = vadd.f32 %v655, %v865
    %v930 = vadd.f32 %v656, %v866
    %v931 = vadd.f32 %v657, %v867
    %v932 = vadd.f32 %v658, %v868
    %v933 = vadd.f32 %v659, %v869
    %v934 = vadd.f32 %v660, %v870
    %v935 = vadd.f32 %v661, %v871
    %v936 = vadd.f32 %v662, %v872
    %v937 = vadd.f32 %v663, %v873
    %v938 = vadd.f32 %v664, %v874
    %v939 = vadd.f32 %v665, %v875
    %v940 = vadd.f32 %v666, %v876
    %v941 = vadd.f32 %v667, %v877
    %v942 = vadd.f32 %v668, %v878
    %v943 = vadd.f32 %v669, %v879
    %v944 = vadd.f32 %v670, %v880
    %v945 = vadd.f32 %v671, %v881
    %v946 = vadd.f32 %v672, %v882
    %v947 = vadd.f32 %v673, %v883
    %v948 = vadd.f32 %v674, %v884
    %v949 = vadd.f32 %v675, %v885
    %v950 = vadd.f32 %v676, %v886
    %v951 = vadd.f32 %v677, %v887
    %v952 = vadd.f32 %v678, %v888
    %v953 = vadd.f32 %v679, %v889
    %v954 = vadd.f32 %v680, %v890
    %v955 = vadd.f32 %v681, %v891
    %v956 = vadd.f32 %v682, %v892
    %v957 = vadd.f32 %v683, %v893
    %v958 = vadd.f32 %v684, %v894
    %v959 = vadd.f32 %v685, %v895
    %v960 = vadd.f32 %v686, %v896
    %961 = vset.pattern.permute.xlu0 3
    %962 = vperm.xlu0 %961, %v61
    %v963 = vpop.permute.xlu0 %962
    %965 = vset.pattern.permute.xlu0 3
    %966 = vperm.xlu0 %965, %v62
    %v967 = vpop.permute.xlu0 %966
    %969 = vset.pattern.permute.xlu0 3
    %970 = vperm.xlu0 %969, %v63
    %v971 = vpop.permute.xlu0 %970
    %973 = vset.pattern.permute.xlu0 3
    %974 = vperm.xlu0 %973, %v64
    %v975 = vpop.permute.xlu0 %974
    %977 = vset.pattern.permute.xlu0 3
    %978 = vperm.xlu0 %977, %v65
    %v979 = vpop.permute.xlu0 %978
    %981 = vset.pattern.permute.xlu0 3
    %982 = vperm.xlu0 %981, %v66
    %v983 = vpop.permute.xlu0 %982
    %985 = vset.pattern.permute.xlu0 3
    %986 = vperm.xlu0 %985, %v67
    %v987 = vpop.permute.xlu0 %986
    %989 = vset.pattern.permute.xlu0 3
    %990 = vperm.xlu0 %989, %v68
    %v991 = vpop.permute.xlu0 %990
    %993 = vset.pattern.permute.xlu0 3
    %994 = vperm.xlu0 %993, %v69
    %v995 = vpop.permute.xlu0 %994
    %997 = vset.pattern.permute.xlu0 3
    %998 = vperm.xlu0 %997, %v70
    %v999 = vpop.permute.xlu0 %998
    %1001 = vset.pattern.permute.xlu0 3
    %1002 = vperm.xlu0 %1001, %v71
    %v1003 = vpop.permute.xlu0 %1002
    %1005 = vset.pattern.permute.xlu0 3
    %1006 = vperm.xlu0 %1005, %v72
    %v1007 = vpop.permute.xlu0 %1006
    %1009 = vset.pattern.permute.xlu0 3
    %1010 = vperm.xlu0 %1009, %v73
    %v1011 = vpop.permute.xlu0 %1010
    %1013 = vset.pattern.permute.xlu0 3
    %1014 = vperm.xlu0 %1013, %v74
    %v1015 = vpop.permute.xlu0 %1014
    %1017 = vset.pattern.permute.xlu0 3
    %1018 = vperm.xlu0 %1017, %v75
    %v1019 = vpop.permute.xlu0 %1018
    %1021 = vset.pattern.permute.xlu0 3
    %1022 = vperm.xlu0 %1021, %v76
    %v1023 = vpop.permute.xlu0 %1022
    %1025 = vset.pattern.permute.xlu0 3
    %1026 = vperm.xlu0 %1025, %v77
    %v1027 = vpop.permute.xlu0 %1026
    %1029 = vset.pattern.permute.xlu0 3
    %1030 = vperm.xlu0 %1029, %v78
    %v1031 = vpop.permute.xlu0 %1030
    %1033 = vset.pattern.permute.xlu0 3
    %1034 = vperm.xlu0 %1033, %v79
    %v1035 = vpop.permute.xlu0 %1034
    %1037 = vset.pattern.permute.xlu0 3
    %1038 = vperm.xlu0 %1037, %v80
    %v1039 = vpop.permute.xlu0 %1038
    %1041 = vset.pattern.permute.xlu0 3
    %1042 = vperm.xlu0 %1041, %v81
    %v1043 = vpop.permute.xlu0 %1042
    %1045 = vset.pattern.permute.xlu0 3
    %1046 = vperm.xlu0 %1045, %v82
    %v1047 = vpop.permute.xlu0 %1046
    %1049 = vset.pattern.permute.xlu0 3
    %1050 = vperm.xlu0 %1049, %v83
    %v1051 = vpop.permute.xlu0 %1050
    %1053 = vset.pattern.permute.xlu0 3
    %1054 = vperm.xlu0 %1053, %v84
    %v1055 = vpop.permute.xlu0 %1054
    %1057 = vset.pattern.permute.xlu0 3
    %1058 = vperm.xlu0 %1057, %v85
    %v1059 = vpop.permute.xlu0 %1058
    %1061 = vset.pattern.permute.xlu0 3
    %1062 = vperm.xlu0 %1061, %v86
    %v1063 = vpop.permute.xlu0 %1062
    %1065 = vset.pattern.permute.xlu0 3
    %1066 = vperm.xlu0 %1065, %v87
    %v1067 = vpop.permute.xlu0 %1066
    %1069 = vset.pattern.permute.xlu0 3
    %1070 = vperm.xlu0 %1069, %v88
    %v1071 = vpop.permute.xlu0 %1070
    %1073 = vset.pattern.permute.xlu0 3
    %1074 = vperm.xlu0 %1073, %v89
    %v1075 = vpop.permute.xlu0 %1074
    %1077 = vset.pattern.permute.xlu0 3
    %1078 = vperm.xlu0 %1077, %v90
    %v1079 = vpop.permute.xlu0 %1078
    %1081 = vset.pattern.permute.xlu0 3
    %1082 = vperm.xlu0 %1081, %v91
    %v1083 = vpop.permute.xlu0 %1082
    %1085 = vset.pattern.permute.xlu0 3
    %1086 = vperm.xlu0 %1085, %v92
    %v1087 = vpop.permute.xlu0 %1086
    %v1089 = vlaneseq
    %v1090 = vshrl.u32 %v1089, 7
    %v1091 = vsub.s32 3, %v1090
    %v1092 = vrot.slane %v93, %v1091
    %v1093 = vlaneseq
    %v1094 = vshrl.u32 %v1093, 7
    %v1095 = vsub.s32 7, %v1094
    %v1096 = vrot.slane %v93, %v1095
    %v1099 = vlaneseq
    %v1100 = vshrl.u32 %v1099, 7
    %v1101 = vsub.s32 3, %v1100
    %v1102 = vrot.slane %v1092, %v1101
    %v1103 = vlaneseq
    %v1104 = vshrl.u32 %v1103, 7
    %v1105 = vsub.s32 3, %v1104
    %v1106 = vrot.slane %v1096, %v1105
    %v1107 = vmul.f32 %v963, %v1102
    %v1108 = vmul.f32 %v963, %v1106
    %v1109 = vmul.f32 %v967, %v1102
    %v1110 = vmul.f32 %v967, %v1106
    %v1111 = vmul.f32 %v971, %v1102
    %v1112 = vmul.f32 %v971, %v1106
    %v1113 = vmul.f32 %v975, %v1102
    %v1114 = vmul.f32 %v975, %v1106
    %v1115 = vmul.f32 %v979, %v1102
    %v1116 = vmul.f32 %v979, %v1106
    %v1117 = vmul.f32 %v983, %v1102
    %v1118 = vmul.f32 %v983, %v1106
    %v1119 = vmul.f32 %v987, %v1102
    %v1120 = vmul.f32 %v987, %v1106
    %v1121 = vmul.f32 %v991, %v1102
    %v1122 = vmul.f32 %v991, %v1106
    %v1123 = vmul.f32 %v995, %v1102
    %v1124 = vmul.f32 %v995, %v1106
    %v1125 = vmul.f32 %v999, %v1102
    %v1126 = vmul.f32 %v999, %v1106
    %v1127 = vmul.f32 %v1003, %v1102
    %v1128 = vmul.f32 %v1003, %v1106
    %v1129 = vmul.f32 %v1007, %v1102
    %v1130 = vmul.f32 %v1007, %v1106
    %v1131 = vmul.f32 %v1011, %v1102
    %v1132 = vmul.f32 %v1011, %v1106
    %v1133 = vmul.f32 %v1015, %v1102
    %v1134 = vmul.f32 %v1015, %v1106
    %v1135 = vmul.f32 %v1019, %v1102
    %v1136 = vmul.f32 %v1019, %v1106
    %v1137 = vmul.f32 %v1023, %v1102
    %v1138 = vmul.f32 %v1023, %v1106
    %v1139 = vmul.f32 %v1027, %v1102
    %v1140 = vmul.f32 %v1027, %v1106
    %v1141 = vmul.f32 %v1031, %v1102
    %v1142 = vmul.f32 %v1031, %v1106
    %v1143 = vmul.f32 %v1035, %v1102
    %v1144 = vmul.f32 %v1035, %v1106
    %v1145 = vmul.f32 %v1039, %v1102
    %v1146 = vmul.f32 %v1039, %v1106
    %v1147 = vmul.f32 %v1043, %v1102
    %v1148 = vmul.f32 %v1043, %v1106
    %v1149 = vmul.f32 %v1047, %v1102
    %v1150 = vmul.f32 %v1047, %v1106
    %v1151 = vmul.f32 %v1051, %v1102
    %v1152 = vmul.f32 %v1051, %v1106
    %v1153 = vmul.f32 %v1055, %v1102
    %v1154 = vmul.f32 %v1055, %v1106
    %v1155 = vmul.f32 %v1059, %v1102
    %v1156 = vmul.f32 %v1059, %v1106
    %v1157 = vmul.f32 %v1063, %v1102
    %v1158 = vmul.f32 %v1063, %v1106
    %v1159 = vmul.f32 %v1067, %v1102
    %v1160 = vmul.f32 %v1067, %v1106
    %v1161 = vmul.f32 %v1071, %v1102
    %v1162 = vmul.f32 %v1071, %v1106
    %v1163 = vmul.f32 %v1075, %v1102
    %v1164 = vmul.f32 %v1075, %v1106
    %v1165 = vmul.f32 %v1079, %v1102
    %v1166 = vmul.f32 %v1079, %v1106
    %v1167 = vmul.f32 %v1083, %v1102
    %v1168 = vmul.f32 %v1083, %v1106
    %v1169 = vmul.f32 %v1087, %v1102
    %v1170 = vmul.f32 %v1087, %v1106
    %v1171 = vadd.f32 %v897, %v1107
    %v1172 = vadd.f32 %v898, %v1108
    %v1173 = vadd.f32 %v899, %v1109
    %v1174 = vadd.f32 %v900, %v1110
    %v1175 = vadd.f32 %v901, %v1111
    %v1176 = vadd.f32 %v902, %v1112
    %v1177 = vadd.f32 %v903, %v1113
    %v1178 = vadd.f32 %v904, %v1114
    %v1179 = vadd.f32 %v905, %v1115
    %v1180 = vadd.f32 %v906, %v1116
    %v1181 = vadd.f32 %v907, %v1117
    %v1182 = vadd.f32 %v908, %v1118
    %v1183 = vadd.f32 %v909, %v1119
    %v1184 = vadd.f32 %v910, %v1120
    %v1185 = vadd.f32 %v911, %v1121
    %v1186 = vadd.f32 %v912, %v1122
    %v1187 = vadd.f32 %v913, %v1123
    %v1188 = vadd.f32 %v914, %v1124
    %v1189 = vadd.f32 %v915, %v1125
    %v1190 = vadd.f32 %v916, %v1126
    %v1191 = vadd.f32 %v917, %v1127
    %v1192 = vadd.f32 %v918, %v1128
    %v1193 = vadd.f32 %v919, %v1129
    %v1194 = vadd.f32 %v920, %v1130
    %v1195 = vadd.f32 %v921, %v1131
    %v1196 = vadd.f32 %v922, %v1132
    %v1197 = vadd.f32 %v923, %v1133
    %v1198 = vadd.f32 %v924, %v1134
    %v1199 = vadd.f32 %v925, %v1135
    %v1200 = vadd.f32 %v926, %v1136
    %v1201 = vadd.f32 %v927, %v1137
    %v1202 = vadd.f32 %v928, %v1138
    %v1203 = vadd.f32 %v929, %v1139
    %v1204 = vadd.f32 %v930, %v1140
    %v1205 = vadd.f32 %v931, %v1141
    %v1206 = vadd.f32 %v932, %v1142
    %v1207 = vadd.f32 %v933, %v1143
    %v1208 = vadd.f32 %v934, %v1144
    %v1209 = vadd.f32 %v935, %v1145
    %v1210 = vadd.f32 %v936, %v1146
    %v1211 = vadd.f32 %v937, %v1147
    %v1212 = vadd.f32 %v938, %v1148
    %v1213 = vadd.f32 %v939, %v1149
    %v1214 = vadd.f32 %v940, %v1150
    %v1215 = vadd.f32 %v941, %v1151
    %v1216 = vadd.f32 %v942, %v1152
    %v1217 = vadd.f32 %v943, %v1153
    %v1218 = vadd.f32 %v944, %v1154
    %v1219 = vadd.f32 %v945, %v1155
    %v1220 = vadd.f32 %v946, %v1156
    %v1221 = vadd.f32 %v947, %v1157
    %v1222 = vadd.f32 %v948, %v1158
    %v1223 = vadd.f32 %v949, %v1159
    %v1224 = vadd.f32 %v950, %v1160
    %v1225 = vadd.f32 %v951, %v1161
    %v1226 = vadd.f32 %v952, %v1162
    %v1227 = vadd.f32 %v953, %v1163
    %v1228 = vadd.f32 %v954, %v1164
    %v1229 = vadd.f32 %v955, %v1165
    %v1230 = vadd.f32 %v956, %v1166
    %v1231 = vadd.f32 %v957, %v1167
    %v1232 = vadd.f32 %v958, %v1168
    %v1233 = vadd.f32 %v959, %v1169
    %v1234 = vadd.f32 %v960, %v1170
    %v1235 = vmin.f32 %v1171, 8.0
    %v1236 = vmin.f32 %v1172, 8.0
    %v1237 = vmin.f32 %v1173, 8.0
    %v1238 = vmin.f32 %v1174, 8.0
    %v1239 = vmin.f32 %v1175, 8.0
    %v1240 = vmin.f32 %v1176, 8.0
    %v1241 = vmin.f32 %v1177, 8.0
    %v1242 = vmin.f32 %v1178, 8.0
    %v1243 = vmin.f32 %v1179, 8.0
    %v1244 = vmin.f32 %v1180, 8.0
    %v1245 = vmin.f32 %v1181, 8.0
    %v1246 = vmin.f32 %v1182, 8.0
    %v1247 = vmin.f32 %v1183, 8.0
    %v1248 = vmin.f32 %v1184, 8.0
    %v1249 = vmin.f32 %v1185, 8.0
    %v1250 = vmin.f32 %v1186, 8.0
    %v1251 = vmin.f32 %v1187, 8.0
    %v1252 = vmin.f32 %v1188, 8.0
    %v1253 = vmin.f32 %v1189, 8.0
    %v1254 = vmin.f32 %v1190, 8.0
    %v1255 = vmin.f32 %v1191, 8.0
    %v1256 = vmin.f32 %v1192, 8.0
    %v1257 = vmin.f32 %v1193, 8.0
    %v1258 = vmin.f32 %v1194, 8.0
    %v1259 = vmin.f32 %v1195, 8.0
    %v1260 = vmin.f32 %v1196, 8.0
    %v1261 = vmin.f32 %v1197, 8.0
    %v1262 = vmin.f32 %v1198, 8.0
    %v1263 = vmin.f32 %v1199, 8.0
    %v1264 = vmin.f32 %v1200, 8.0
    %v1265 = vmin.f32 %v1201, 8.0
    %v1266 = vmin.f32 %v1202, 8.0
    %v1267 = vmin.f32 %v1203, 8.0
    %v1268 = vmin.f32 %v1204, 8.0
    %v1269 = vmin.f32 %v1205, 8.0
    %v1270 = vmin.f32 %v1206, 8.0
    %v1271 = vmin.f32 %v1207, 8.0
    %v1272 = vmin.f32 %v1208, 8.0
    %v1273 = vmin.f32 %v1209, 8.0
    %v1274 = vmin.f32 %v1210, 8.0
    %v1275 = vmin.f32 %v1211, 8.0
    %v1276 = vmin.f32 %v1212, 8.0
    %v1277 = vmin.f32 %v1213, 8.0
    %v1278 = vmin.f32 %v1214, 8.0
    %v1279 = vmin.f32 %v1215, 8.0
    %v1280 = vmin.f32 %v1216, 8.0
    %v1281 = vmin.f32 %v1217, 8.0
    %v1282 = vmin.f32 %v1218, 8.0
    %v1283 = vmin.f32 %v1219, 8.0
    %v1284 = vmin.f32 %v1220, 8.0
    %v1285 = vmin.f32 %v1221, 8.0
    %v1286 = vmin.f32 %v1222, 8.0
    %v1287 = vmin.f32 %v1223, 8.0
    %v1288 = vmin.f32 %v1224, 8.0
    %v1289 = vmin.f32 %v1225, 8.0
    %v1290 = vmin.f32 %v1226, 8.0
    %v1291 = vmin.f32 %v1227, 8.0
    %v1292 = vmin.f32 %v1228, 8.0
    %v1293 = vmin.f32 %v1229, 8.0
    %v1294 = vmin.f32 %v1230, 8.0
    %v1295 = vmin.f32 %v1231, 8.0
    %v1296 = vmin.f32 %v1232, 8.0
    %v1297 = vmin.f32 %v1233, 8.0
    %v1298 = vmin.f32 %v1234, 8.0
    %v1299 = vmul.f32 %v1235, 1.442695
    %v1300 = vpow.pop %v1299
    %v1301 = vmul.f32 %v1236, 1.442695
    %v1302 = vpow.pop %v1301
    %v1303 = vmul.f32 %v1237, 1.442695
    %v1304 = vpow.pop %v1303
    %v1305 = vmul.f32 %v1238, 1.442695
    %v1306 = vpow.pop %v1305
    %v1307 = vmul.f32 %v1239, 1.442695
    %v1308 = vpow.pop %v1307
    %v1309 = vmul.f32 %v1240, 1.442695
    %v1310 = vpow.pop %v1309
    %v1311 = vmul.f32 %v1241, 1.442695
    %v1312 = vpow.pop %v1311
    %v1313 = vmul.f32 %v1242, 1.442695
    %v1314 = vpow.pop %v1313
    %v1315 = vmul.f32 %v1243, 1.442695
    %v1316 = vpow.pop %v1315
    %v1317 = vmul.f32 %v1244, 1.442695
    %v1318 = vpow.pop %v1317
    %v1319 = vmul.f32 %v1245, 1.442695
    %v1320 = vpow.pop %v1319
    %v1321 = vmul.f32 %v1246, 1.442695
    %v1322 = vpow.pop %v1321
    %v1323 = vmul.f32 %v1247, 1.442695
    %v1324 = vpow.pop %v1323
    %v1325 = vmul.f32 %v1248, 1.442695
    %v1326 = vpow.pop %v1325
    %v1327 = vmul.f32 %v1249, 1.442695
    %v1328 = vpow.pop %v1327
    %v1329 = vmul.f32 %v1250, 1.442695
    %v1330 = vpow.pop %v1329
    %v1331 = vmul.f32 %v1251, 1.442695
    %v1332 = vpow.pop %v1331
    %v1333 = vmul.f32 %v1252, 1.442695
    %v1334 = vpow.pop %v1333
    %v1335 = vmul.f32 %v1253, 1.442695
    %v1336 = vpow.pop %v1335
    %v1337 = vmul.f32 %v1254, 1.442695
    %v1338 = vpow.pop %v1337
    %v1339 = vmul.f32 %v1255, 1.442695
    %v1340 = vpow.pop %v1339
    %v1341 = vmul.f32 %v1256, 1.442695
    %v1342 = vpow.pop %v1341
    %v1343 = vmul.f32 %v1257, 1.442695
    %v1344 = vpow.pop %v1343
    %v1345 = vmul.f32 %v1258, 1.442695
    %v1346 = vpow.pop %v1345
    %v1347 = vmul.f32 %v1259, 1.442695
    %v1348 = vpow.pop %v1347
    %v1349 = vmul.f32 %v1260, 1.442695
    %v1350 = vpow.pop %v1349
    %v1351 = vmul.f32 %v1261, 1.442695
    %v1352 = vpow.pop %v1351
    %v1353 = vmul.f32 %v1262, 1.442695
    %v1354 = vpow.pop %v1353
    %v1355 = vmul.f32 %v1263, 1.442695
    %v1356 = vpow.pop %v1355
    %v1357 = vmul.f32 %v1264, 1.442695
    %v1358 = vpow.pop %v1357
    %v1359 = vmul.f32 %v1265, 1.442695
    %v1360 = vpow.pop %v1359
    %v1361 = vmul.f32 %v1266, 1.442695
    %v1362 = vpow.pop %v1361
    %v1363 = vmul.f32 %v1267, 1.442695
    %v1364 = vpow.pop %v1363
    %v1365 = vmul.f32 %v1268, 1.442695
    %v1366 = vpow.pop %v1365
    %v1367 = vmul.f32 %v1269, 1.442695
    %v1368 = vpow.pop %v1367
    %v1369 = vmul.f32 %v1270, 1.442695
    %v1370 = vpow.pop %v1369
    %v1371 = vmul.f32 %v1271, 1.442695
    %v1372 = vpow.pop %v1371
    %v1373 = vmul.f32 %v1272, 1.442695
    %v1374 = vpow.pop %v1373
    %v1375 = vmul.f32 %v1273, 1.442695
    %v1376 = vpow.pop %v1375
    %v1377 = vmul.f32 %v1274, 1.442695
    %v1378 = vpow.pop %v1377
    %v1379 = vmul.f32 %v1275, 1.442695
    %v1380 = vpow.pop %v1379
    %v1381 = vmul.f32 %v1276, 1.442695
    %v1382 = vpow.pop %v1381
    %v1383 = vmul.f32 %v1277, 1.442695
    %v1384 = vpow.pop %v1383
    %v1385 = vmul.f32 %v1278, 1.442695
    %v1386 = vpow.pop %v1385
    %v1387 = vmul.f32 %v1279, 1.442695
    %v1388 = vpow.pop %v1387
    %v1389 = vmul.f32 %v1280, 1.442695
    %v1390 = vpow.pop %v1389
    %v1391 = vmul.f32 %v1281, 1.442695
    %v1392 = vpow.pop %v1391
    %v1393 = vmul.f32 %v1282, 1.442695
    %v1394 = vpow.pop %v1393
    %v1395 = vmul.f32 %v1283, 1.442695
    %v1396 = vpow.pop %v1395
    %v1397 = vmul.f32 %v1284, 1.442695
    %v1398 = vpow.pop %v1397
    %v1399 = vmul.f32 %v1285, 1.442695
    %v1400 = vpow.pop %v1399
    %v1401 = vmul.f32 %v1286, 1.442695
    %v1402 = vpow.pop %v1401
    %v1403 = vmul.f32 %v1287, 1.442695
    %v1404 = vpow.pop %v1403
    %v1405 = vmul.f32 %v1288, 1.442695
    %v1406 = vpow.pop %v1405
    %v1407 = vmul.f32 %v1289, 1.442695
    %v1408 = vpow.pop %v1407
    %v1409 = vmul.f32 %v1290, 1.442695
    %v1410 = vpow.pop %v1409
    %v1411 = vmul.f32 %v1291, 1.442695
    %v1412 = vpow.pop %v1411
    %v1413 = vmul.f32 %v1292, 1.442695
    %v1414 = vpow.pop %v1413
    %v1415 = vmul.f32 %v1293, 1.442695
    %v1416 = vpow.pop %v1415
    %v1417 = vmul.f32 %v1294, 1.442695
    %v1418 = vpow.pop %v1417
    %v1419 = vmul.f32 %v1295, 1.442695
    %v1420 = vpow.pop %v1419
    %v1421 = vmul.f32 %v1296, 1.442695
    %v1422 = vpow.pop %v1421
    %v1423 = vmul.f32 %v1297, 1.442695
    %v1424 = vpow.pop %v1423
    %v1425 = vmul.f32 %v1298, 1.442695
    %v1426 = vpow.pop %v1425
    %v1427 = vadd.f32 %v1300, 2.0
    %v1428 = vadd.f32 %v1302, 2.0
    %v1429 = vadd.f32 %v1304, 2.0
    %v1430 = vadd.f32 %v1306, 2.0
    %v1431 = vadd.f32 %v1308, 2.0
    %v1432 = vadd.f32 %v1310, 2.0
    %v1433 = vadd.f32 %v1312, 2.0
    %v1434 = vadd.f32 %v1314, 2.0
    %v1435 = vadd.f32 %v1316, 2.0
    %v1436 = vadd.f32 %v1318, 2.0
    %v1437 = vadd.f32 %v1320, 2.0
    %v1438 = vadd.f32 %v1322, 2.0
    %v1439 = vadd.f32 %v1324, 2.0
    %v1440 = vadd.f32 %v1326, 2.0
    %v1441 = vadd.f32 %v1328, 2.0
    %v1442 = vadd.f32 %v1330, 2.0
    %v1443 = vadd.f32 %v1332, 2.0
    %v1444 = vadd.f32 %v1334, 2.0
    %v1445 = vadd.f32 %v1336, 2.0
    %v1446 = vadd.f32 %v1338, 2.0
    %v1447 = vadd.f32 %v1340, 2.0
    %v1448 = vadd.f32 %v1342, 2.0
    %v1449 = vadd.f32 %v1344, 2.0
    %v1450 = vadd.f32 %v1346, 2.0
    %v1451 = vadd.f32 %v1348, 2.0
    %v1452 = vadd.f32 %v1350, 2.0
    %v1453 = vadd.f32 %v1352, 2.0
    %v1454 = vadd.f32 %v1354, 2.0
    %v1455 = vadd.f32 %v1356, 2.0
    %v1456 = vadd.f32 %v1358, 2.0
    %v1457 = vadd.f32 %v1360, 2.0
    %v1458 = vadd.f32 %v1362, 2.0
    %v1459 = vadd.f32 %v1364, 2.0
    %v1460 = vadd.f32 %v1366, 2.0
    %v1461 = vadd.f32 %v1368, 2.0
    %v1462 = vadd.f32 %v1370, 2.0
    %v1463 = vadd.f32 %v1372, 2.0
    %v1464 = vadd.f32 %v1374, 2.0
    %v1465 = vadd.f32 %v1376, 2.0
    %v1466 = vadd.f32 %v1378, 2.0
    %v1467 = vadd.f32 %v1380, 2.0
    %v1468 = vadd.f32 %v1382, 2.0
    %v1469 = vadd.f32 %v1384, 2.0
    %v1470 = vadd.f32 %v1386, 2.0
    %v1471 = vadd.f32 %v1388, 2.0
    %v1472 = vadd.f32 %v1390, 2.0
    %v1473 = vadd.f32 %v1392, 2.0
    %v1474 = vadd.f32 %v1394, 2.0
    %v1475 = vadd.f32 %v1396, 2.0
    %v1476 = vadd.f32 %v1398, 2.0
    %v1477 = vadd.f32 %v1400, 2.0
    %v1478 = vadd.f32 %v1402, 2.0
    %v1479 = vadd.f32 %v1404, 2.0
    %v1480 = vadd.f32 %v1406, 2.0
    %v1481 = vadd.f32 %v1408, 2.0
    %v1482 = vadd.f32 %v1410, 2.0
    %v1483 = vadd.f32 %v1412, 2.0
    %v1484 = vadd.f32 %v1414, 2.0
    %v1485 = vadd.f32 %v1416, 2.0
    %v1486 = vadd.f32 %v1418, 2.0
    %v1487 = vadd.f32 %v1420, 2.0
    %v1488 = vadd.f32 %v1422, 2.0
    %v1489 = vadd.f32 %v1424, 2.0
    %v1490 = vadd.f32 %v1426, 2.0
    %v1491 = vmul.f32 %v1300, %v1427
    %v1492 = vmul.f32 %v1302, %v1428
    %v1493 = vmul.f32 %v1304, %v1429
    %v1494 = vmul.f32 %v1306, %v1430
    %v1495 = vmul.f32 %v1308, %v1431
    %v1496 = vmul.f32 %v1310, %v1432
    %v1497 = vmul.f32 %v1312, %v1433
    %v1498 = vmul.f32 %v1314, %v1434
    %v1499 = vmul.f32 %v1316, %v1435
    %v1500 = vmul.f32 %v1318, %v1436
    %v1501 = vmul.f32 %v1320, %v1437
    %v1502 = vmul.f32 %v1322, %v1438
    %v1503 = vmul.f32 %v1324, %v1439
    %v1504 = vmul.f32 %v1326, %v1440
    %v1505 = vmul.f32 %v1328, %v1441
    %v1506 = vmul.f32 %v1330, %v1442
    %v1507 = vmul.f32 %v1332, %v1443
    %v1508 = vmul.f32 %v1334, %v1444
    %v1509 = vmul.f32 %v1336, %v1445
    %v1510 = vmul.f32 %v1338, %v1446
    %v1511 = vmul.f32 %v1340, %v1447
    %v1512 = vmul.f32 %v1342, %v1448
    %v1513 = vmul.f32 %v1344, %v1449
    %v1514 = vmul.f32 %v1346, %v1450
    %v1515 = vmul.f32 %v1348, %v1451
    %v1516 = vmul.f32 %v1350, %v1452
    %v1517 = vmul.f32 %v1352, %v1453
    %v1518 = vmul.f32 %v1354, %v1454
    %v1519 = vmul.f32 %v1356, %v1455
    %v1520 = vmul.f32 %v1358, %v1456
    %v1521 = vmul.f32 %v1360, %v1457
    %v1522 = vmul.f32 %v1362, %v1458
    %v1523 = vmul.f32 %v1364, %v1459
    %v1524 = vmul.f32 %v1366, %v1460
    %v1525 = vmul.f32 %v1368, %v1461
    %v1526 = vmul.f32 %v1370, %v1462
    %v1527 = vmul.f32 %v1372, %v1463
    %v1528 = vmul.f32 %v1374, %v1464
    %v1529 = vmul.f32 %v1376, %v1465
    %v1530 = vmul.f32 %v1378, %v1466
    %v1531 = vmul.f32 %v1380, %v1467
    %v1532 = vmul.f32 %v1382, %v1468
    %v1533 = vmul.f32 %v1384, %v1469
    %v1534 = vmul.f32 %v1386, %v1470
    %v1535 = vmul.f32 %v1388, %v1471
    %v1536 = vmul.f32 %v1390, %v1472
    %v1537 = vmul.f32 %v1392, %v1473
    %v1538 = vmul.f32 %v1394, %v1474
    %v1539 = vmul.f32 %v1396, %v1475
    %v1540 = vmul.f32 %v1398, %v1476
    %v1541 = vmul.f32 %v1400, %v1477
    %v1542 = vmul.f32 %v1402, %v1478
    %v1543 = vmul.f32 %v1404, %v1479
    %v1544 = vmul.f32 %v1406, %v1480
    %v1545 = vmul.f32 %v1408, %v1481
    %v1546 = vmul.f32 %v1410, %v1482
    %v1547 = vmul.f32 %v1412, %v1483
    %v1548 = vmul.f32 %v1414, %v1484
    %v1549 = vmul.f32 %v1416, %v1485
    %v1550 = vmul.f32 %v1418, %v1486
    %v1551 = vmul.f32 %v1420, %v1487
    %v1552 = vmul.f32 %v1422, %v1488
    %v1553 = vmul.f32 %v1424, %v1489
    %v1554 = vmul.f32 %v1426, %v1490
    %v1555 = vadd.f32 %v1491, 2.0
    %v1556 = vadd.f32 %v1492, 2.0
    %v1557 = vadd.f32 %v1493, 2.0
    %v1558 = vadd.f32 %v1494, 2.0
    %v1559 = vadd.f32 %v1495, 2.0
    %v1560 = vadd.f32 %v1496, 2.0
    %v1561 = vadd.f32 %v1497, 2.0
    %v1562 = vadd.f32 %v1498, 2.0
    %v1563 = vadd.f32 %v1499, 2.0
    %v1564 = vadd.f32 %v1500, 2.0
    %v1565 = vadd.f32 %v1501, 2.0
    %v1566 = vadd.f32 %v1502, 2.0
    %v1567 = vadd.f32 %v1503, 2.0
    %v1568 = vadd.f32 %v1504, 2.0
    %v1569 = vadd.f32 %v1505, 2.0
    %v1570 = vadd.f32 %v1506, 2.0
    %v1571 = vadd.f32 %v1507, 2.0
    %v1572 = vadd.f32 %v1508, 2.0
    %v1573 = vadd.f32 %v1509, 2.0
    %v1574 = vadd.f32 %v1510, 2.0
    %v1575 = vadd.f32 %v1511, 2.0
    %v1576 = vadd.f32 %v1512, 2.0
    %v1577 = vadd.f32 %v1513, 2.0
    %v1578 = vadd.f32 %v1514, 2.0
    %v1579 = vadd.f32 %v1515, 2.0
    %v1580 = vadd.f32 %v1516, 2.0
    %v1581 = vadd.f32 %v1517, 2.0
    %v1582 = vadd.f32 %v1518, 2.0
    %v1583 = vadd.f32 %v1519, 2.0
    %v1584 = vadd.f32 %v1520, 2.0
    %v1585 = vadd.f32 %v1521, 2.0
    %v1586 = vadd.f32 %v1522, 2.0
    %v1587 = vadd.f32 %v1523, 2.0
    %v1588 = vadd.f32 %v1524, 2.0
    %v1589 = vadd.f32 %v1525, 2.0
    %v1590 = vadd.f32 %v1526, 2.0
    %v1591 = vadd.f32 %v1527, 2.0
    %v1592 = vadd.f32 %v1528, 2.0
    %v1593 = vadd.f32 %v1529, 2.0
    %v1594 = vadd.f32 %v1530, 2.0
    %v1595 = vadd.f32 %v1531, 2.0
    %v1596 = vadd.f32 %v1532, 2.0
    %v1597 = vadd.f32 %v1533, 2.0
    %v1598 = vadd.f32 %v1534, 2.0
    %v1599 = vadd.f32 %v1535, 2.0
    %v1600 = vadd.f32 %v1536, 2.0
    %v1601 = vadd.f32 %v1537, 2.0
    %v1602 = vadd.f32 %v1538, 2.0
    %v1603 = vadd.f32 %v1539, 2.0
    %v1604 = vadd.f32 %v1540, 2.0
    %v1605 = vadd.f32 %v1541, 2.0
    %v1606 = vadd.f32 %v1542, 2.0
    %v1607 = vadd.f32 %v1543, 2.0
    %v1608 = vadd.f32 %v1544, 2.0
    %v1609 = vadd.f32 %v1545, 2.0
    %v1610 = vadd.f32 %v1546, 2.0
    %v1611 = vadd.f32 %v1547, 2.0
    %v1612 = vadd.f32 %v1548, 2.0
    %v1613 = vadd.f32 %v1549, 2.0
    %v1614 = vadd.f32 %v1550, 2.0
    %v1615 = vadd.f32 %v1551, 2.0
    %v1616 = vadd.f32 %v1552, 2.0
    %v1617 = vadd.f32 %v1553, 2.0
    %v1618 = vadd.f32 %v1554, 2.0
    %v1619 = vrcp.pop %v1555
    %v1620 = vrcp.pop %v1556
    %v1621 = vrcp.pop %v1557
    %v1622 = vrcp.pop %v1558
    %v1623 = vrcp.pop %v1559
    %v1624 = vrcp.pop %v1560
    %v1625 = vrcp.pop %v1561
    %v1626 = vrcp.pop %v1562
    %v1627 = vrcp.pop %v1563
    %v1628 = vrcp.pop %v1564
    %v1629 = vrcp.pop %v1565
    %v1630 = vrcp.pop %v1566
    %v1631 = vrcp.pop %v1567
    %v1632 = vrcp.pop %v1568
    %v1633 = vrcp.pop %v1569
    %v1634 = vrcp.pop %v1570
    %v1635 = vrcp.pop %v1571
    %v1636 = vrcp.pop %v1572
    %v1637 = vrcp.pop %v1573
    %v1638 = vrcp.pop %v1574
    %v1639 = vrcp.pop %v1575
    %v1640 = vrcp.pop %v1576
    %v1641 = vrcp.pop %v1577
    %v1642 = vrcp.pop %v1578
    %v1643 = vrcp.pop %v1579
    %v1644 = vrcp.pop %v1580
    %v1645 = vrcp.pop %v1581
    %v1646 = vrcp.pop %v1582
    %v1647 = vrcp.pop %v1583
    %v1648 = vrcp.pop %v1584
    %v1649 = vrcp.pop %v1585
    %v1650 = vrcp.pop %v1586
    %v1651 = vrcp.pop %v1587
    %v1652 = vrcp.pop %v1588
    %v1653 = vrcp.pop %v1589
    %v1654 = vrcp.pop %v1590
    %v1655 = vrcp.pop %v1591
    %v1656 = vrcp.pop %v1592
    %v1657 = vrcp.pop %v1593
    %v1658 = vrcp.pop %v1594
    %v1659 = vrcp.pop %v1595
    %v1660 = vrcp.pop %v1596
    %v1661 = vrcp.pop %v1597
    %v1662 = vrcp.pop %v1598
    %v1663 = vrcp.pop %v1599
    %v1664 = vrcp.pop %v1600
    %v1665 = vrcp.pop %v1601
    %v1666 = vrcp.pop %v1602
    %v1667 = vrcp.pop %v1603
    %v1668 = vrcp.pop %v1604
    %v1669 = vrcp.pop %v1605
    %v1670 = vrcp.pop %v1606
    %v1671 = vrcp.pop %v1607
    %v1672 = vrcp.pop %v1608
    %v1673 = vrcp.pop %v1609
    %v1674 = vrcp.pop %v1610
    %v1675 = vrcp.pop %v1611
    %v1676 = vrcp.pop %v1612
    %v1677 = vrcp.pop %v1613
    %v1678 = vrcp.pop %v1614
    %v1679 = vrcp.pop %v1615
    %v1680 = vrcp.pop %v1616
    %v1681 = vrcp.pop %v1617
    %v1682 = vrcp.pop %v1618
    %v1683 = vmul.f32 %v1491, %v1619
    %v1684 = vmul.f32 %v1492, %v1620
    %v1685 = vmul.f32 %v1493, %v1621
    %v1686 = vmul.f32 %v1494, %v1622
    %v1687 = vmul.f32 %v1495, %v1623
    %v1688 = vmul.f32 %v1496, %v1624
    %v1689 = vmul.f32 %v1497, %v1625
    %v1690 = vmul.f32 %v1498, %v1626
    %v1691 = vmul.f32 %v1499, %v1627
    %v1692 = vmul.f32 %v1500, %v1628
    %v1693 = vmul.f32 %v1501, %v1629
    %v1694 = vmul.f32 %v1502, %v1630
    %v1695 = vmul.f32 %v1503, %v1631
    %v1696 = vmul.f32 %v1504, %v1632
    %v1697 = vmul.f32 %v1505, %v1633
    %v1698 = vmul.f32 %v1506, %v1634
    %v1699 = vmul.f32 %v1507, %v1635
    %v1700 = vmul.f32 %v1508, %v1636
    %v1701 = vmul.f32 %v1509, %v1637
    %v1702 = vmul.f32 %v1510, %v1638
    %v1703 = vmul.f32 %v1511, %v1639
    %v1704 = vmul.f32 %v1512, %v1640
    %v1705 = vmul.f32 %v1513, %v1641
    %v1706 = vmul.f32 %v1514, %v1642
    %v1707 = vmul.f32 %v1515, %v1643
    %v1708 = vmul.f32 %v1516, %v1644
    %v1709 = vmul.f32 %v1517, %v1645
    %v1710 = vmul.f32 %v1518, %v1646
    %v1711 = vmul.f32 %v1519, %v1647
    %v1712 = vmul.f32 %v1520, %v1648
    %v1713 = vmul.f32 %v1521, %v1649
    %v1714 = vmul.f32 %v1522, %v1650
    %v1715 = vmul.f32 %v1523, %v1651
    %v1716 = vmul.f32 %v1524, %v1652
    %v1717 = vmul.f32 %v1525, %v1653
    %v1718 = vmul.f32 %v1526, %v1654
    %v1719 = vmul.f32 %v1527, %v1655
    %v1720 = vmul.f32 %v1528, %v1656
    %v1721 = vmul.f32 %v1529, %v1657
    %v1722 = vmul.f32 %v1530, %v1658
    %v1723 = vmul.f32 %v1531, %v1659
    %v1724 = vmul.f32 %v1532, %v1660
    %v1725 = vmul.f32 %v1533, %v1661
    %v1726 = vmul.f32 %v1534, %v1662
    %v1727 = vmul.f32 %v1535, %v1663
    %v1728 = vmul.f32 %v1536, %v1664
    %v1729 = vmul.f32 %v1537, %v1665
    %v1730 = vmul.f32 %v1538, %v1666
    %v1731 = vmul.f32 %v1539, %v1667
    %v1732 = vmul.f32 %v1540, %v1668
    %v1733 = vmul.f32 %v1541, %v1669
    %v1734 = vmul.f32 %v1542, %v1670
    %v1735 = vmul.f32 %v1543, %v1671
    %v1736 = vmul.f32 %v1544, %v1672
    %v1737 = vmul.f32 %v1545, %v1673
    %v1738 = vmul.f32 %v1546, %v1674
    %v1739 = vmul.f32 %v1547, %v1675
    %v1740 = vmul.f32 %v1548, %v1676
    %v1741 = vmul.f32 %v1549, %v1677
    %v1742 = vmul.f32 %v1550, %v1678
    %v1743 = vmul.f32 %v1551, %v1679
    %v1744 = vmul.f32 %v1552, %v1680
    %v1745 = vmul.f32 %v1553, %v1681
    %v1746 = vmul.f32 %v1554, %v1682
    %vm1747 = vcmp.gt.f32.partialorder %v1171, 8.0
    %vm1748 = vcmp.gt.f32.partialorder %v1172, 8.0
    %vm1749 = vcmp.gt.f32.partialorder %v1173, 8.0
    %vm1750 = vcmp.gt.f32.partialorder %v1174, 8.0
    %vm1751 = vcmp.gt.f32.partialorder %v1175, 8.0
    %vm1752 = vcmp.gt.f32.partialorder %v1176, 8.0
    %vm1753 = vcmp.gt.f32.partialorder %v1177, 8.0
    %vm1754 = vcmp.gt.f32.partialorder %v1178, 8.0
    %vm1755 = vcmp.gt.f32.partialorder %v1179, 8.0
    %vm1756 = vcmp.gt.f32.partialorder %v1180, 8.0
    %vm1757 = vcmp.gt.f32.partialorder %v1181, 8.0
    %vm1758 = vcmp.gt.f32.partialorder %v1182, 8.0
    %vm1759 = vcmp.gt.f32.partialorder %v1183, 8.0
    %vm1760 = vcmp.gt.f32.partialorder %v1184, 8.0
    %vm1761 = vcmp.gt.f32.partialorder %v1185, 8.0
    %vm1762 = vcmp.gt.f32.partialorder %v1186, 8.0
    %vm1763 = vcmp.gt.f32.partialorder %v1187, 8.0
    %vm1764 = vcmp.gt.f32.partialorder %v1188, 8.0
    %vm1765 = vcmp.gt.f32.partialorder %v1189, 8.0
    %vm1766 = vcmp.gt.f32.partialorder %v1190, 8.0
    %vm1767 = vcmp.gt.f32.partialorder %v1191, 8.0
    %vm1768 = vcmp.gt.f32.partialorder %v1192, 8.0
    %vm1769 = vcmp.gt.f32.partialorder %v1193, 8.0
    %vm1770 = vcmp.gt.f32.partialorder %v1194, 8.0
    %vm1771 = vcmp.gt.f32.partialorder %v1195, 8.0
    %vm1772 = vcmp.gt.f32.partialorder %v1196, 8.0
    %vm1773 = vcmp.gt.f32.partialorder %v1197, 8.0
    %vm1774 = vcmp.gt.f32.partialorder %v1198, 8.0
    %vm1775 = vcmp.gt.f32.partialorder %v1199, 8.0
    %vm1776 = vcmp.gt.f32.partialorder %v1200, 8.0
    %vm1777 = vcmp.gt.f32.partialorder %v1201, 8.0
    %vm1778 = vcmp.gt.f32.partialorder %v1202, 8.0
    %vm1779 = vcmp.gt.f32.partialorder %v1203, 8.0
    %vm1780 = vcmp.gt.f32.partialorder %v1204, 8.0
    %vm1781 = vcmp.gt.f32.partialorder %v1205, 8.0
    %vm1782 = vcmp.gt.f32.partialorder %v1206, 8.0
    %vm1783 = vcmp.gt.f32.partialorder %v1207, 8.0
    %vm1784 = vcmp.gt.f32.partialorder %v1208, 8.0
    %vm1785 = vcmp.gt.f32.partialorder %v1209, 8.0
    %vm1786 = vcmp.gt.f32.partialorder %v1210, 8.0
    %vm1787 = vcmp.gt.f32.partialorder %v1211, 8.0
    %vm1788 = vcmp.gt.f32.partialorder %v1212, 8.0
    %vm1789 = vcmp.gt.f32.partialorder %v1213, 8.0
    %vm1790 = vcmp.gt.f32.partialorder %v1214, 8.0
    %vm1791 = vcmp.gt.f32.partialorder %v1215, 8.0
    %vm1792 = vcmp.gt.f32.partialorder %v1216, 8.0
    %vm1793 = vcmp.gt.f32.partialorder %v1217, 8.0
    %vm1794 = vcmp.gt.f32.partialorder %v1218, 8.0
    %vm1795 = vcmp.gt.f32.partialorder %v1219, 8.0
    %vm1796 = vcmp.gt.f32.partialorder %v1220, 8.0
    %vm1797 = vcmp.gt.f32.partialorder %v1221, 8.0
    %vm1798 = vcmp.gt.f32.partialorder %v1222, 8.0
    %vm1799 = vcmp.gt.f32.partialorder %v1223, 8.0
    %vm1800 = vcmp.gt.f32.partialorder %v1224, 8.0
    %vm1801 = vcmp.gt.f32.partialorder %v1225, 8.0
    %vm1802 = vcmp.gt.f32.partialorder %v1226, 8.0
    %vm1803 = vcmp.gt.f32.partialorder %v1227, 8.0
    %vm1804 = vcmp.gt.f32.partialorder %v1228, 8.0
    %vm1805 = vcmp.gt.f32.partialorder %v1229, 8.0
    %vm1806 = vcmp.gt.f32.partialorder %v1230, 8.0
    %vm1807 = vcmp.gt.f32.partialorder %v1231, 8.0
    %vm1808 = vcmp.gt.f32.partialorder %v1232, 8.0
    %vm1809 = vcmp.gt.f32.partialorder %v1233, 8.0
    %vm1810 = vcmp.gt.f32.partialorder %v1234, 8.0
    %v1811 = vmul.f32 %v1171, %v1683
    %v1812 = vmul.f32 %v1172, %v1684
    %v1813 = vmul.f32 %v1173, %v1685
    %v1814 = vmul.f32 %v1174, %v1686
    %v1815 = vmul.f32 %v1175, %v1687
    %v1816 = vmul.f32 %v1176, %v1688
    %v1817 = vmul.f32 %v1177, %v1689
    %v1818 = vmul.f32 %v1178, %v1690
    %v1819 = vmul.f32 %v1179, %v1691
    %v1820 = vmul.f32 %v1180, %v1692
    %v1821 = vmul.f32 %v1181, %v1693
    %v1822 = vmul.f32 %v1182, %v1694
    %v1823 = vmul.f32 %v1183, %v1695
    %v1824 = vmul.f32 %v1184, %v1696
    %v1825 = vmul.f32 %v1185, %v1697
    %v1826 = vmul.f32 %v1186, %v1698
    %v1827 = vmul.f32 %v1187, %v1699
    %v1828 = vmul.f32 %v1188, %v1700
    %v1829 = vmul.f32 %v1189, %v1701
    %v1830 = vmul.f32 %v1190, %v1702
    %v1831 = vmul.f32 %v1191, %v1703
    %v1832 = vmul.f32 %v1192, %v1704
    %v1833 = vmul.f32 %v1193, %v1705
    %v1834 = vmul.f32 %v1194, %v1706
    %v1835 = vmul.f32 %v1195, %v1707
    %v1836 = vmul.f32 %v1196, %v1708
    %v1837 = vmul.f32 %v1197, %v1709
    %v1838 = vmul.f32 %v1198, %v1710
    %v1839 = vmul.f32 %v1199, %v1711
    %v1840 = vmul.f32 %v1200, %v1712
    %v1841 = vmul.f32 %v1201, %v1713
    %v1842 = vmul.f32 %v1202, %v1714
    %v1843 = vmul.f32 %v1203, %v1715
    %v1844 = vmul.f32 %v1204, %v1716
    %v1845 = vmul.f32 %v1205, %v1717
    %v1846 = vmul.f32 %v1206, %v1718
    %v1847 = vmul.f32 %v1207, %v1719
    %v1848 = vmul.f32 %v1208, %v1720
    %v1849 = vmul.f32 %v1209, %v1721
    %v1850 = vmul.f32 %v1210, %v1722
    %v1851 = vmul.f32 %v1211, %v1723
    %v1852 = vmul.f32 %v1212, %v1724
    %v1853 = vmul.f32 %v1213, %v1725
    %v1854 = vmul.f32 %v1214, %v1726
    %v1855 = vmul.f32 %v1215, %v1727
    %v1856 = vmul.f32 %v1216, %v1728
    %v1857 = vmul.f32 %v1217, %v1729
    %v1858 = vmul.f32 %v1218, %v1730
    %v1859 = vmul.f32 %v1219, %v1731
    %v1860 = vmul.f32 %v1220, %v1732
    %v1861 = vmul.f32 %v1221, %v1733
    %v1862 = vmul.f32 %v1222, %v1734
    %v1863 = vmul.f32 %v1223, %v1735
    %v1864 = vmul.f32 %v1224, %v1736
    %v1865 = vmul.f32 %v1225, %v1737
    %v1866 = vmul.f32 %v1226, %v1738
    %v1867 = vmul.f32 %v1227, %v1739
    %v1868 = vmul.f32 %v1228, %v1740
    %v1869 = vmul.f32 %v1229, %v1741
    %v1870 = vmul.f32 %v1230, %v1742
    %v1871 = vmul.f32 %v1231, %v1743
    %v1872 = vmul.f32 %v1232, %v1744
    %v1873 = vmul.f32 %v1233, %v1745
    %v1874 = vmul.f32 %v1234, %v1746
    %v1875 = vsel %vm1747, %v1171, %v1811
    %v1876 = vsel %vm1748, %v1172, %v1812
    %v1877 = vsel %vm1749, %v1173, %v1813
    %v1878 = vsel %vm1750, %v1174, %v1814
    %v1879 = vsel %vm1751, %v1175, %v1815
    %v1880 = vsel %vm1752, %v1176, %v1816
    %v1881 = vsel %vm1753, %v1177, %v1817
    %v1882 = vsel %vm1754, %v1178, %v1818
    %v1883 = vsel %vm1755, %v1179, %v1819
    %v1884 = vsel %vm1756, %v1180, %v1820
    %v1885 = vsel %vm1757, %v1181, %v1821
    %v1886 = vsel %vm1758, %v1182, %v1822
    %v1887 = vsel %vm1759, %v1183, %v1823
    %v1888 = vsel %vm1760, %v1184, %v1824
    %v1889 = vsel %vm1761, %v1185, %v1825
    %v1890 = vsel %vm1762, %v1186, %v1826
    %v1891 = vsel %vm1763, %v1187, %v1827
    %v1892 = vsel %vm1764, %v1188, %v1828
    %v1893 = vsel %vm1765, %v1189, %v1829
    %v1894 = vsel %vm1766, %v1190, %v1830
    %v1895 = vsel %vm1767, %v1191, %v1831
    %v1896 = vsel %vm1768, %v1192, %v1832
    %v1897 = vsel %vm1769, %v1193, %v1833
    %v1898 = vsel %vm1770, %v1194, %v1834
    %v1899 = vsel %vm1771, %v1195, %v1835
    %v1900 = vsel %vm1772, %v1196, %v1836
    %v1901 = vsel %vm1773, %v1197, %v1837
    %v1902 = vsel %vm1774, %v1198, %v1838
    %v1903 = vsel %vm1775, %v1199, %v1839
    %v1904 = vsel %vm1776, %v1200, %v1840
    %v1905 = vsel %vm1777, %v1201, %v1841
    %v1906 = vsel %vm1778, %v1202, %v1842
    %v1907 = vsel %vm1779, %v1203, %v1843
    %v1908 = vsel %vm1780, %v1204, %v1844
    %v1909 = vsel %vm1781, %v1205, %v1845
    %v1910 = vsel %vm1782, %v1206, %v1846
    %v1911 = vsel %vm1783, %v1207, %v1847
    %v1912 = vsel %vm1784, %v1208, %v1848
    %v1913 = vsel %vm1785, %v1209, %v1849
    %v1914 = vsel %vm1786, %v1210, %v1850
    %v1915 = vsel %vm1787, %v1211, %v1851
    %v1916 = vsel %vm1788, %v1212, %v1852
    %v1917 = vsel %vm1789, %v1213, %v1853
    %v1918 = vsel %vm1790, %v1214, %v1854
    %v1919 = vsel %vm1791, %v1215, %v1855
    %v1920 = vsel %vm1792, %v1216, %v1856
    %v1921 = vsel %vm1793, %v1217, %v1857
    %v1922 = vsel %vm1794, %v1218, %v1858
    %v1923 = vsel %vm1795, %v1219, %v1859
    %v1924 = vsel %vm1796, %v1220, %v1860
    %v1925 = vsel %vm1797, %v1221, %v1861
    %v1926 = vsel %vm1798, %v1222, %v1862
    %v1927 = vsel %vm1799, %v1223, %v1863
    %v1928 = vsel %vm1800, %v1224, %v1864
    %v1929 = vsel %vm1801, %v1225, %v1865
    %v1930 = vsel %vm1802, %v1226, %v1866
    %v1931 = vsel %vm1803, %v1227, %v1867
    %v1932 = vsel %vm1804, %v1228, %v1868
    %v1933 = vsel %vm1805, %v1229, %v1869
    %v1934 = vsel %vm1806, %v1230, %v1870
    %v1935 = vsel %vm1807, %v1231, %v1871
    %v1936 = vsel %vm1808, %v1232, %v1872
    %v1937 = vsel %vm1809, %v1233, %v1873
    %v1938 = vsel %vm1810, %v1234, %v1874
    %v1939 = vmin.f32 %v1875, 8.0
    %v1940 = vmin.f32 %v1876, 8.0
    %v1941 = vmin.f32 %v1877, 8.0
    %v1942 = vmin.f32 %v1878, 8.0
    %v1943 = vmin.f32 %v1879, 8.0
    %v1944 = vmin.f32 %v1880, 8.0
    %v1945 = vmin.f32 %v1881, 8.0
    %v1946 = vmin.f32 %v1882, 8.0
    %v1947 = vmin.f32 %v1883, 8.0
    %v1948 = vmin.f32 %v1884, 8.0
    %v1949 = vmin.f32 %v1885, 8.0
    %v1950 = vmin.f32 %v1886, 8.0
    %v1951 = vmin.f32 %v1887, 8.0
    %v1952 = vmin.f32 %v1888, 8.0
    %v1953 = vmin.f32 %v1889, 8.0
    %v1954 = vmin.f32 %v1890, 8.0
    %v1955 = vmin.f32 %v1891, 8.0
    %v1956 = vmin.f32 %v1892, 8.0
    %v1957 = vmin.f32 %v1893, 8.0
    %v1958 = vmin.f32 %v1894, 8.0
    %v1959 = vmin.f32 %v1895, 8.0
    %v1960 = vmin.f32 %v1896, 8.0
    %v1961 = vmin.f32 %v1897, 8.0
    %v1962 = vmin.f32 %v1898, 8.0
    %v1963 = vmin.f32 %v1899, 8.0
    %v1964 = vmin.f32 %v1900, 8.0
    %v1965 = vmin.f32 %v1901, 8.0
    %v1966 = vmin.f32 %v1902, 8.0
    %v1967 = vmin.f32 %v1903, 8.0
    %v1968 = vmin.f32 %v1904, 8.0
    %v1969 = vmin.f32 %v1905, 8.0
    %v1970 = vmin.f32 %v1906, 8.0
    %v1971 = vmin.f32 %v1907, 8.0
    %v1972 = vmin.f32 %v1908, 8.0
    %v1973 = vmin.f32 %v1909, 8.0
    %v1974 = vmin.f32 %v1910, 8.0
    %v1975 = vmin.f32 %v1911, 8.0
    %v1976 = vmin.f32 %v1912, 8.0
    %v1977 = vmin.f32 %v1913, 8.0
    %v1978 = vmin.f32 %v1914, 8.0
    %v1979 = vmin.f32 %v1915, 8.0
    %v1980 = vmin.f32 %v1916, 8.0
    %v1981 = vmin.f32 %v1917, 8.0
    %v1982 = vmin.f32 %v1918, 8.0
    %v1983 = vmin.f32 %v1919, 8.0
    %v1984 = vmin.f32 %v1920, 8.0
    %v1985 = vmin.f32 %v1921, 8.0
    %v1986 = vmin.f32 %v1922, 8.0
    %v1987 = vmin.f32 %v1923, 8.0
    %v1988 = vmin.f32 %v1924, 8.0
    %v1989 = vmin.f32 %v1925, 8.0
    %v1990 = vmin.f32 %v1926, 8.0
    %v1991 = vmin.f32 %v1927, 8.0
    %v1992 = vmin.f32 %v1928, 8.0
    %v1993 = vmin.f32 %v1929, 8.0
    %v1994 = vmin.f32 %v1930, 8.0
    %v1995 = vmin.f32 %v1931, 8.0
    %v1996 = vmin.f32 %v1932, 8.0
    %v1997 = vmin.f32 %v1933, 8.0
    %v1998 = vmin.f32 %v1934, 8.0
    %v1999 = vmin.f32 %v1935, 8.0
    %v2000 = vmin.f32 %v1936, 8.0
    %v2001 = vmin.f32 %v1937, 8.0
    %v2002 = vmin.f32 %v1938, 8.0
    %v2003 = vmul.f32 %v1939, 1.442695
    %v2004 = vpow.pop %v2003
    %v2005 = vmul.f32 %v1940, 1.442695
    %v2006 = vpow.pop %v2005
    %v2007 = vmul.f32 %v1941, 1.442695
    %v2008 = vpow.pop %v2007
    %v2009 = vmul.f32 %v1942, 1.442695
    %v2010 = vpow.pop %v2009
    %v2011 = vmul.f32 %v1943, 1.442695
    %v2012 = vpow.pop %v2011
    %v2013 = vmul.f32 %v1944, 1.442695
    %v2014 = vpow.pop %v2013
    %v2015 = vmul.f32 %v1945, 1.442695
    %v2016 = vpow.pop %v2015
    %v2017 = vmul.f32 %v1946, 1.442695
    %v2018 = vpow.pop %v2017
    %v2019 = vmul.f32 %v1947, 1.442695
    %v2020 = vpow.pop %v2019
    %v2021 = vmul.f32 %v1948, 1.442695
    %v2022 = vpow.pop %v2021
    %v2023 = vmul.f32 %v1949, 1.442695
    %v2024 = vpow.pop %v2023
    %v2025 = vmul.f32 %v1950, 1.442695
    %v2026 = vpow.pop %v2025
    %v2027 = vmul.f32 %v1951, 1.442695
    %v2028 = vpow.pop %v2027
    %v2029 = vmul.f32 %v1952, 1.442695
    %v2030 = vpow.pop %v2029
    %v2031 = vmul.f32 %v1953, 1.442695
    %v2032 = vpow.pop %v2031
    %v2033 = vmul.f32 %v1954, 1.442695
    %v2034 = vpow.pop %v2033
    %v2035 = vmul.f32 %v1955, 1.442695
    %v2036 = vpow.pop %v2035
    %v2037 = vmul.f32 %v1956, 1.442695
    %v2038 = vpow.pop %v2037
    %v2039 = vmul.f32 %v1957, 1.442695
    %v2040 = vpow.pop %v2039
    %v2041 = vmul.f32 %v1958, 1.442695
    %v2042 = vpow.pop %v2041
    %v2043 = vmul.f32 %v1959, 1.442695
    %v2044 = vpow.pop %v2043
    %v2045 = vmul.f32 %v1960, 1.442695
    %v2046 = vpow.pop %v2045
    %v2047 = vmul.f32 %v1961, 1.442695
    %v2048 = vpow.pop %v2047
    %v2049 = vmul.f32 %v1962, 1.442695
    %v2050 = vpow.pop %v2049
    %v2051 = vmul.f32 %v1963, 1.442695
    %v2052 = vpow.pop %v2051
    %v2053 = vmul.f32 %v1964, 1.442695
    %v2054 = vpow.pop %v2053
    %v2055 = vmul.f32 %v1965, 1.442695
    %v2056 = vpow.pop %v2055
    %v2057 = vmul.f32 %v1966, 1.442695
    %v2058 = vpow.pop %v2057
    %v2059 = vmul.f32 %v1967, 1.442695
    %v2060 = vpow.pop %v2059
    %v2061 = vmul.f32 %v1968, 1.442695
    %v2062 = vpow.pop %v2061
    %v2063 = vmul.f32 %v1969, 1.442695
    %v2064 = vpow.pop %v2063
    %v2065 = vmul.f32 %v1970, 1.442695
    %v2066 = vpow.pop %v2065
    %v2067 = vmul.f32 %v1971, 1.442695
    %v2068 = vpow.pop %v2067
    %v2069 = vmul.f32 %v1972, 1.442695
    %v2070 = vpow.pop %v2069
    %v2071 = vmul.f32 %v1973, 1.442695
    %v2072 = vpow.pop %v2071
    %v2073 = vmul.f32 %v1974, 1.442695
    %v2074 = vpow.pop %v2073
    %v2075 = vmul.f32 %v1975, 1.442695
    %v2076 = vpow.pop %v2075
    %v2077 = vmul.f32 %v1976, 1.442695
    %v2078 = vpow.pop %v2077
    %v2079 = vmul.f32 %v1977, 1.442695
    %v2080 = vpow.pop %v2079
    %v2081 = vmul.f32 %v1978, 1.442695
    %v2082 = vpow.pop %v2081
    %v2083 = vmul.f32 %v1979, 1.442695
    %v2084 = vpow.pop %v2083
    %v2085 = vmul.f32 %v1980, 1.442695
    %v2086 = vpow.pop %v2085
    %v2087 = vmul.f32 %v1981, 1.442695
    %v2088 = vpow.pop %v2087
    %v2089 = vmul.f32 %v1982, 1.442695
    %v2090 = vpow.pop %v2089
    %v2091 = vmul.f32 %v1983, 1.442695
    %v2092 = vpow.pop %v2091
    %v2093 = vmul.f32 %v1984, 1.442695
    %v2094 = vpow.pop %v2093
    %v2095 = vmul.f32 %v1985, 1.442695
    %v2096 = vpow.pop %v2095
    %v2097 = vmul.f32 %v1986, 1.442695
    %v2098 = vpow.pop %v2097
    %v2099 = vmul.f32 %v1987, 1.442695
    %v2100 = vpow.pop %v2099
    %v2101 = vmul.f32 %v1988, 1.442695
    %v2102 = vpow.pop %v2101
    %v2103 = vmul.f32 %v1989, 1.442695
    %v2104 = vpow.pop %v2103
    %v2105 = vmul.f32 %v1990, 1.442695
    %v2106 = vpow.pop %v2105
    %v2107 = vmul.f32 %v1991, 1.442695
    %v2108 = vpow.pop %v2107
    %v2109 = vmul.f32 %v1992, 1.442695
    %v2110 = vpow.pop %v2109
    %v2111 = vmul.f32 %v1993, 1.442695
    %v2112 = vpow.pop %v2111
    %v2113 = vmul.f32 %v1994, 1.442695
    %v2114 = vpow.pop %v2113
    %v2115 = vmul.f32 %v1995, 1.442695
    %v2116 = vpow.pop %v2115
    %v2117 = vmul.f32 %v1996, 1.442695
    %v2118 = vpow.pop %v2117
    %v2119 = vmul.f32 %v1997, 1.442695
    %v2120 = vpow.pop %v2119
    %v2121 = vmul.f32 %v1998, 1.442695
    %v2122 = vpow.pop %v2121
    %v2123 = vmul.f32 %v1999, 1.442695
    %v2124 = vpow.pop %v2123
    %v2125 = vmul.f32 %v2000, 1.442695
    %v2126 = vpow.pop %v2125
    %v2127 = vmul.f32 %v2001, 1.442695
    %v2128 = vpow.pop %v2127
    %v2129 = vmul.f32 %v2002, 1.442695
    %v2130 = vpow.pop %v2129
    %v2131 = vadd.f32 %v2004, 2.0
    %v2132 = vadd.f32 %v2006, 2.0
    %v2133 = vadd.f32 %v2008, 2.0
    %v2134 = vadd.f32 %v2010, 2.0
    %v2135 = vadd.f32 %v2012, 2.0
    %v2136 = vadd.f32 %v2014, 2.0
    %v2137 = vadd.f32 %v2016, 2.0
    %v2138 = vadd.f32 %v2018, 2.0
    %v2139 = vadd.f32 %v2020, 2.0
    %v2140 = vadd.f32 %v2022, 2.0
    %v2141 = vadd.f32 %v2024, 2.0
    %v2142 = vadd.f32 %v2026, 2.0
    %v2143 = vadd.f32 %v2028, 2.0
    %v2144 = vadd.f32 %v2030, 2.0
    %v2145 = vadd.f32 %v2032, 2.0
    %v2146 = vadd.f32 %v2034, 2.0
    %v2147 = vadd.f32 %v2036, 2.0
    %v2148 = vadd.f32 %v2038, 2.0
    %v2149 = vadd.f32 %v2040, 2.0
    %v2150 = vadd.f32 %v2042, 2.0
    %v2151 = vadd.f32 %v2044, 2.0
    %v2152 = vadd.f32 %v2046, 2.0
    %v2153 = vadd.f32 %v2048, 2.0
    %v2154 = vadd.f32 %v2050, 2.0
    %v2155 = vadd.f32 %v2052, 2.0
    %v2156 = vadd.f32 %v2054, 2.0
    %v2157 = vadd.f32 %v2056, 2.0
    %v2158 = vadd.f32 %v2058, 2.0
    %v2159 = vadd.f32 %v2060, 2.0
    %v2160 = vadd.f32 %v2062, 2.0
    %v2161 = vadd.f32 %v2064, 2.0
    %v2162 = vadd.f32 %v2066, 2.0
    %v2163 = vadd.f32 %v2068, 2.0
    %v2164 = vadd.f32 %v2070, 2.0
    %v2165 = vadd.f32 %v2072, 2.0
    %v2166 = vadd.f32 %v2074, 2.0
    %v2167 = vadd.f32 %v2076, 2.0
    %v2168 = vadd.f32 %v2078, 2.0
    %v2169 = vadd.f32 %v2080, 2.0
    %v2170 = vadd.f32 %v2082, 2.0
    %v2171 = vadd.f32 %v2084, 2.0
    %v2172 = vadd.f32 %v2086, 2.0
    %v2173 = vadd.f32 %v2088, 2.0
    %v2174 = vadd.f32 %v2090, 2.0
    %v2175 = vadd.f32 %v2092, 2.0
    %v2176 = vadd.f32 %v2094, 2.0
    %v2177 = vadd.f32 %v2096, 2.0
    %v2178 = vadd.f32 %v2098, 2.0
    %v2179 = vadd.f32 %v2100, 2.0
    %v2180 = vadd.f32 %v2102, 2.0
    %v2181 = vadd.f32 %v2104, 2.0
    %v2182 = vadd.f32 %v2106, 2.0
    %v2183 = vadd.f32 %v2108, 2.0
    %v2184 = vadd.f32 %v2110, 2.0
    %v2185 = vadd.f32 %v2112, 2.0
    %v2186 = vadd.f32 %v2114, 2.0
    %v2187 = vadd.f32 %v2116, 2.0
    %v2188 = vadd.f32 %v2118, 2.0
    %v2189 = vadd.f32 %v2120, 2.0
    %v2190 = vadd.f32 %v2122, 2.0
    %v2191 = vadd.f32 %v2124, 2.0
    %v2192 = vadd.f32 %v2126, 2.0
    %v2193 = vadd.f32 %v2128, 2.0
    %v2194 = vadd.f32 %v2130, 2.0
    %v2195 = vmul.f32 %v2004, %v2131
    %v2196 = vmul.f32 %v2006, %v2132
    %v2197 = vmul.f32 %v2008, %v2133
    %v2198 = vmul.f32 %v2010, %v2134
    %v2199 = vmul.f32 %v2012, %v2135
    %v2200 = vmul.f32 %v2014, %v2136
    %v2201 = vmul.f32 %v2016, %v2137
    %v2202 = vmul.f32 %v2018, %v2138
    %v2203 = vmul.f32 %v2020, %v2139
    %v2204 = vmul.f32 %v2022, %v2140
    %v2205 = vmul.f32 %v2024, %v2141
    %v2206 = vmul.f32 %v2026, %v2142
    %v2207 = vmul.f32 %v2028, %v2143
    %v2208 = vmul.f32 %v2030, %v2144
    %v2209 = vmul.f32 %v2032, %v2145
    %v2210 = vmul.f32 %v2034, %v2146
    %v2211 = vmul.f32 %v2036, %v2147
    %v2212 = vmul.f32 %v2038, %v2148
    %v2213 = vmul.f32 %v2040, %v2149
    %v2214 = vmul.f32 %v2042, %v2150
    %v2215 = vmul.f32 %v2044, %v2151
    %v2216 = vmul.f32 %v2046, %v2152
    %v2217 = vmul.f32 %v2048, %v2153
    %v2218 = vmul.f32 %v2050, %v2154
    %v2219 = vmul.f32 %v2052, %v2155
    %v2220 = vmul.f32 %v2054, %v2156
    %v2221 = vmul.f32 %v2056, %v2157
    %v2222 = vmul.f32 %v2058, %v2158
    %v2223 = vmul.f32 %v2060, %v2159
    %v2224 = vmul.f32 %v2062, %v2160
    %v2225 = vmul.f32 %v2064, %v2161
    %v2226 = vmul.f32 %v2066, %v2162
    %v2227 = vmul.f32 %v2068, %v2163
    %v2228 = vmul.f32 %v2070, %v2164
    %v2229 = vmul.f32 %v2072, %v2165
    %v2230 = vmul.f32 %v2074, %v2166
    %v2231 = vmul.f32 %v2076, %v2167
    %v2232 = vmul.f32 %v2078, %v2168
    %v2233 = vmul.f32 %v2080, %v2169
    %v2234 = vmul.f32 %v2082, %v2170
    %v2235 = vmul.f32 %v2084, %v2171
    %v2236 = vmul.f32 %v2086, %v2172
    %v2237 = vmul.f32 %v2088, %v2173
    %v2238 = vmul.f32 %v2090, %v2174
    %v2239 = vmul.f32 %v2092, %v2175
    %v2240 = vmul.f32 %v2094, %v2176
    %v2241 = vmul.f32 %v2096, %v2177
    %v2242 = vmul.f32 %v2098, %v2178
    %v2243 = vmul.f32 %v2100, %v2179
    %v2244 = vmul.f32 %v2102, %v2180
    %v2245 = vmul.f32 %v2104, %v2181
    %v2246 = vmul.f32 %v2106, %v2182
    %v2247 = vmul.f32 %v2108, %v2183
    %v2248 = vmul.f32 %v2110, %v2184
    %v2249 = vmul.f32 %v2112, %v2185
    %v2250 = vmul.f32 %v2114, %v2186
    %v2251 = vmul.f32 %v2116, %v2187
    %v2252 = vmul.f32 %v2118, %v2188
    %v2253 = vmul.f32 %v2120, %v2189
    %v2254 = vmul.f32 %v2122, %v2190
    %v2255 = vmul.f32 %v2124, %v2191
    %v2256 = vmul.f32 %v2126, %v2192
    %v2257 = vmul.f32 %v2128, %v2193
    %v2258 = vmul.f32 %v2130, %v2194
    %v2259 = vadd.f32 %v2195, 2.0
    %v2260 = vadd.f32 %v2196, 2.0
    %v2261 = vadd.f32 %v2197, 2.0
    %v2262 = vadd.f32 %v2198, 2.0
    %v2263 = vadd.f32 %v2199, 2.0
    %v2264 = vadd.f32 %v2200, 2.0
    %v2265 = vadd.f32 %v2201, 2.0
    %v2266 = vadd.f32 %v2202, 2.0
    %v2267 = vadd.f32 %v2203, 2.0
    %v2268 = vadd.f32 %v2204, 2.0
    %v2269 = vadd.f32 %v2205, 2.0
    %v2270 = vadd.f32 %v2206, 2.0
    %v2271 = vadd.f32 %v2207, 2.0
    %v2272 = vadd.f32 %v2208, 2.0
    %v2273 = vadd.f32 %v2209, 2.0
    %v2274 = vadd.f32 %v2210, 2.0
    %v2275 = vadd.f32 %v2211, 2.0
    %v2276 = vadd.f32 %v2212, 2.0
    %v2277 = vadd.f32 %v2213, 2.0
    %v2278 = vadd.f32 %v2214, 2.0
    %v2279 = vadd.f32 %v2215, 2.0
    %v2280 = vadd.f32 %v2216, 2.0
    %v2281 = vadd.f32 %v2217, 2.0
    %v2282 = vadd.f32 %v2218, 2.0
    %v2283 = vadd.f32 %v2219, 2.0
    %v2284 = vadd.f32 %v2220, 2.0
    %v2285 = vadd.f32 %v2221, 2.0
    %v2286 = vadd.f32 %v2222, 2.0
    %v2287 = vadd.f32 %v2223, 2.0
    %v2288 = vadd.f32 %v2224, 2.0
    %v2289 = vadd.f32 %v2225, 2.0
    %v2290 = vadd.f32 %v2226, 2.0
    %v2291 = vadd.f32 %v2227, 2.0
    %v2292 = vadd.f32 %v2228, 2.0
    %v2293 = vadd.f32 %v2229, 2.0
    %v2294 = vadd.f32 %v2230, 2.0
    %v2295 = vadd.f32 %v2231, 2.0
    %v2296 = vadd.f32 %v2232, 2.0
    %v2297 = vadd.f32 %v2233, 2.0
    %v2298 = vadd.f32 %v2234, 2.0
    %v2299 = vadd.f32 %v2235, 2.0
    %v2300 = vadd.f32 %v2236, 2.0
    %v2301 = vadd.f32 %v2237, 2.0
    %v2302 = vadd.f32 %v2238, 2.0
    %v2303 = vadd.f32 %v2239, 2.0
    %v2304 = vadd.f32 %v2240, 2.0
    %v2305 = vadd.f32 %v2241, 2.0
    %v2306 = vadd.f32 %v2242, 2.0
    %v2307 = vadd.f32 %v2243, 2.0
    %v2308 = vadd.f32 %v2244, 2.0
    %v2309 = vadd.f32 %v2245, 2.0
    %v2310 = vadd.f32 %v2246, 2.0
    %v2311 = vadd.f32 %v2247, 2.0
    %v2312 = vadd.f32 %v2248, 2.0
    %v2313 = vadd.f32 %v2249, 2.0
    %v2314 = vadd.f32 %v2250, 2.0
    %v2315 = vadd.f32 %v2251, 2.0
    %v2316 = vadd.f32 %v2252, 2.0
    %v2317 = vadd.f32 %v2253, 2.0
    %v2318 = vadd.f32 %v2254, 2.0
    %v2319 = vadd.f32 %v2255, 2.0
    %v2320 = vadd.f32 %v2256, 2.0
    %v2321 = vadd.f32 %v2257, 2.0
    %v2322 = vadd.f32 %v2258, 2.0
    %v2323 = vrcp.pop %v2259
    %v2324 = vrcp.pop %v2260
    %v2325 = vrcp.pop %v2261
    %v2326 = vrcp.pop %v2262
    %v2327 = vrcp.pop %v2263
    %v2328 = vrcp.pop %v2264
    %v2329 = vrcp.pop %v2265
    %v2330 = vrcp.pop %v2266
    %v2331 = vrcp.pop %v2267
    %v2332 = vrcp.pop %v2268
    %v2333 = vrcp.pop %v2269
    %v2334 = vrcp.pop %v2270
    %v2335 = vrcp.pop %v2271
    %v2336 = vrcp.pop %v2272
    %v2337 = vrcp.pop %v2273
    %v2338 = vrcp.pop %v2274
    %v2339 = vrcp.pop %v2275
    %v2340 = vrcp.pop %v2276
    %v2341 = vrcp.pop %v2277
    %v2342 = vrcp.pop %v2278
    %v2343 = vrcp.pop %v2279
    %v2344 = vrcp.pop %v2280
    %v2345 = vrcp.pop %v2281
    %v2346 = vrcp.pop %v2282
    %v2347 = vrcp.pop %v2283
    %v2348 = vrcp.pop %v2284
    %v2349 = vrcp.pop %v2285
    %v2350 = vrcp.pop %v2286
    %v2351 = vrcp.pop %v2287
    %v2352 = vrcp.pop %v2288
    %v2353 = vrcp.pop %v2289
    %v2354 = vrcp.pop %v2290
    %v2355 = vrcp.pop %v2291
    %v2356 = vrcp.pop %v2292
    %v2357 = vrcp.pop %v2293
    %v2358 = vrcp.pop %v2294
    %v2359 = vrcp.pop %v2295
    %v2360 = vrcp.pop %v2296
    %v2361 = vrcp.pop %v2297
    %v2362 = vrcp.pop %v2298
    %v2363 = vrcp.pop %v2299
    %v2364 = vrcp.pop %v2300
    %v2365 = vrcp.pop %v2301
    %v2366 = vrcp.pop %v2302
    %v2367 = vrcp.pop %v2303
    %v2368 = vrcp.pop %v2304
    %v2369 = vrcp.pop %v2305
    %v2370 = vrcp.pop %v2306
    %v2371 = vrcp.pop %v2307
    %v2372 = vrcp.pop %v2308
    %v2373 = vrcp.pop %v2309
    %v2374 = vrcp.pop %v2310
    %v2375 = vrcp.pop %v2311
    %v2376 = vrcp.pop %v2312
    %v2377 = vrcp.pop %v2313
    %v2378 = vrcp.pop %v2314
    %v2379 = vrcp.pop %v2315
    %v2380 = vrcp.pop %v2316
    %v2381 = vrcp.pop %v2317
    %v2382 = vrcp.pop %v2318
    %v2383 = vrcp.pop %v2319
    %v2384 = vrcp.pop %v2320
    %v2385 = vrcp.pop %v2321
    %v2386 = vrcp.pop %v2322
    %v2387 = vmul.f32 %v2195, %v2323
    %v2388 = vmul.f32 %v2196, %v2324
    %v2389 = vmul.f32 %v2197, %v2325
    %v2390 = vmul.f32 %v2198, %v2326
    %v2391 = vmul.f32 %v2199, %v2327
    %v2392 = vmul.f32 %v2200, %v2328
    %v2393 = vmul.f32 %v2201, %v2329
    %v2394 = vmul.f32 %v2202, %v2330
    %v2395 = vmul.f32 %v2203, %v2331
    %v2396 = vmul.f32 %v2204, %v2332
    %v2397 = vmul.f32 %v2205, %v2333
    %v2398 = vmul.f32 %v2206, %v2334
    %v2399 = vmul.f32 %v2207, %v2335
    %v2400 = vmul.f32 %v2208, %v2336
    %v2401 = vmul.f32 %v2209, %v2337
    %v2402 = vmul.f32 %v2210, %v2338
    %v2403 = vmul.f32 %v2211, %v2339
    %v2404 = vmul.f32 %v2212, %v2340
    %v2405 = vmul.f32 %v2213, %v2341
    %v2406 = vmul.f32 %v2214, %v2342
    %v2407 = vmul.f32 %v2215, %v2343
    %v2408 = vmul.f32 %v2216, %v2344
    %v2409 = vmul.f32 %v2217, %v2345
    %v2410 = vmul.f32 %v2218, %v2346
    %v2411 = vmul.f32 %v2219, %v2347
    %v2412 = vmul.f32 %v2220, %v2348
    %v2413 = vmul.f32 %v2221, %v2349
    %v2414 = vmul.f32 %v2222, %v2350
    %v2415 = vmul.f32 %v2223, %v2351
    %v2416 = vmul.f32 %v2224, %v2352
    %v2417 = vmul.f32 %v2225, %v2353
    %v2418 = vmul.f32 %v2226, %v2354
    %v2419 = vmul.f32 %v2227, %v2355
    %v2420 = vmul.f32 %v2228, %v2356
    %v2421 = vmul.f32 %v2229, %v2357
    %v2422 = vmul.f32 %v2230, %v2358
    %v2423 = vmul.f32 %v2231, %v2359
    %v2424 = vmul.f32 %v2232, %v2360
    %v2425 = vmul.f32 %v2233, %v2361
    %v2426 = vmul.f32 %v2234, %v2362
    %v2427 = vmul.f32 %v2235, %v2363
    %v2428 = vmul.f32 %v2236, %v2364
    %v2429 = vmul.f32 %v2237, %v2365
    %v2430 = vmul.f32 %v2238, %v2366
    %v2431 = vmul.f32 %v2239, %v2367
    %v2432 = vmul.f32 %v2240, %v2368
    %v2433 = vmul.f32 %v2241, %v2369
    %v2434 = vmul.f32 %v2242, %v2370
    %v2435 = vmul.f32 %v2243, %v2371
    %v2436 = vmul.f32 %v2244, %v2372
    %v2437 = vmul.f32 %v2245, %v2373
    %v2438 = vmul.f32 %v2246, %v2374
    %v2439 = vmul.f32 %v2247, %v2375
    %v2440 = vmul.f32 %v2248, %v2376
    %v2441 = vmul.f32 %v2249, %v2377
    %v2442 = vmul.f32 %v2250, %v2378
    %v2443 = vmul.f32 %v2251, %v2379
    %v2444 = vmul.f32 %v2252, %v2380
    %v2445 = vmul.f32 %v2253, %v2381
    %v2446 = vmul.f32 %v2254, %v2382
    %v2447 = vmul.f32 %v2255, %v2383
    %v2448 = vmul.f32 %v2256, %v2384
    %v2449 = vmul.f32 %v2257, %v2385
    %v2450 = vmul.f32 %v2258, %v2386
    %vm2451 = vcmp.gt.f32.partialorder %v1875, 8.0
    %vm2452 = vcmp.gt.f32.partialorder %v1876, 8.0
    %vm2453 = vcmp.gt.f32.partialorder %v1877, 8.0
    %vm2454 = vcmp.gt.f32.partialorder %v1878, 8.0
    %vm2455 = vcmp.gt.f32.partialorder %v1879, 8.0
    %vm2456 = vcmp.gt.f32.partialorder %v1880, 8.0
    %vm2457 = vcmp.gt.f32.partialorder %v1881, 8.0
    %vm2458 = vcmp.gt.f32.partialorder %v1882, 8.0
    %vm2459 = vcmp.gt.f32.partialorder %v1883, 8.0
    %vm2460 = vcmp.gt.f32.partialorder %v1884, 8.0
    %vm2461 = vcmp.gt.f32.partialorder %v1885, 8.0
    %vm2462 = vcmp.gt.f32.partialorder %v1886, 8.0
    %vm2463 = vcmp.gt.f32.partialorder %v1887, 8.0
    %vm2464 = vcmp.gt.f32.partialorder %v1888, 8.0
    %vm2465 = vcmp.gt.f32.partialorder %v1889, 8.0
    %vm2466 = vcmp.gt.f32.partialorder %v1890, 8.0
    %vm2467 = vcmp.gt.f32.partialorder %v1891, 8.0
    %vm2468 = vcmp.gt.f32.partialorder %v1892, 8.0
    %vm2469 = vcmp.gt.f32.partialorder %v1893, 8.0
    %vm2470 = vcmp.gt.f32.partialorder %v1894, 8.0
    %vm2471 = vcmp.gt.f32.partialorder %v1895, 8.0
    %vm2472 = vcmp.gt.f32.partialorder %v1896, 8.0
    %vm2473 = vcmp.gt.f32.partialorder %v1897, 8.0
    %vm2474 = vcmp.gt.f32.partialorder %v1898, 8.0
    %vm2475 = vcmp.gt.f32.partialorder %v1899, 8.0
    %vm2476 = vcmp.gt.f32.partialorder %v1900, 8.0
    %vm2477 = vcmp.gt.f32.partialorder %v1901, 8.0
    %vm2478 = vcmp.gt.f32.partialorder %v1902, 8.0
    %vm2479 = vcmp.gt.f32.partialorder %v1903, 8.0
    %vm2480 = vcmp.gt.f32.partialorder %v1904, 8.0
    %vm2481 = vcmp.gt.f32.partialorder %v1905, 8.0
    %vm2482 = vcmp.gt.f32.partialorder %v1906, 8.0
    %vm2483 = vcmp.gt.f32.partialorder %v1907, 8.0
    %vm2484 = vcmp.gt.f32.partialorder %v1908, 8.0
    %vm2485 = vcmp.gt.f32.partialorder %v1909, 8.0
    %vm2486 = vcmp.gt.f32.partialorder %v1910, 8.0
    %vm2487 = vcmp.gt.f32.partialorder %v1911, 8.0
    %vm2488 = vcmp.gt.f32.partialorder %v1912, 8.0
    %vm2489 = vcmp.gt.f32.partialorder %v1913, 8.0
    %vm2490 = vcmp.gt.f32.partialorder %v1914, 8.0
    %vm2491 = vcmp.gt.f32.partialorder %v1915, 8.0
    %vm2492 = vcmp.gt.f32.partialorder %v1916, 8.0
    %vm2493 = vcmp.gt.f32.partialorder %v1917, 8.0
    %vm2494 = vcmp.gt.f32.partialorder %v1918, 8.0
    %vm2495 = vcmp.gt.f32.partialorder %v1919, 8.0
    %vm2496 = vcmp.gt.f32.partialorder %v1920, 8.0
    %vm2497 = vcmp.gt.f32.partialorder %v1921, 8.0
    %vm2498 = vcmp.gt.f32.partialorder %v1922, 8.0
    %vm2499 = vcmp.gt.f32.partialorder %v1923, 8.0
    %vm2500 = vcmp.gt.f32.partialorder %v1924, 8.0
    %vm2501 = vcmp.gt.f32.partialorder %v1925, 8.0
    %vm2502 = vcmp.gt.f32.partialorder %v1926, 8.0
    %vm2503 = vcmp.gt.f32.partialorder %v1927, 8.0
    %vm2504 = vcmp.gt.f32.partialorder %v1928, 8.0
    %vm2505 = vcmp.gt.f32.partialorder %v1929, 8.0
    %vm2506 = vcmp.gt.f32.partialorder %v1930, 8.0
    %vm2507 = vcmp.gt.f32.partialorder %v1931, 8.0
    %vm2508 = vcmp.gt.f32.partialorder %v1932, 8.0
    %vm2509 = vcmp.gt.f32.partialorder %v1933, 8.0
    %vm2510 = vcmp.gt.f32.partialorder %v1934, 8.0
    %vm2511 = vcmp.gt.f32.partialorder %v1935, 8.0
    %vm2512 = vcmp.gt.f32.partialorder %v1936, 8.0
    %vm2513 = vcmp.gt.f32.partialorder %v1937, 8.0
    %vm2514 = vcmp.gt.f32.partialorder %v1938, 8.0
    %v2515 = vmul.f32 %v1875, %v2387
    %v2516 = vmul.f32 %v1876, %v2388
    %v2517 = vmul.f32 %v1877, %v2389
    %v2518 = vmul.f32 %v1878, %v2390
    %v2519 = vmul.f32 %v1879, %v2391
    %v2520 = vmul.f32 %v1880, %v2392
    %v2521 = vmul.f32 %v1881, %v2393
    %v2522 = vmul.f32 %v1882, %v2394
    %v2523 = vmul.f32 %v1883, %v2395
    %v2524 = vmul.f32 %v1884, %v2396
    %v2525 = vmul.f32 %v1885, %v2397
    %v2526 = vmul.f32 %v1886, %v2398
    %v2527 = vmul.f32 %v1887, %v2399
    %v2528 = vmul.f32 %v1888, %v2400
    %v2529 = vmul.f32 %v1889, %v2401
    %v2530 = vmul.f32 %v1890, %v2402
    %v2531 = vmul.f32 %v1891, %v2403
    %v2532 = vmul.f32 %v1892, %v2404
    %v2533 = vmul.f32 %v1893, %v2405
    %v2534 = vmul.f32 %v1894, %v2406
    %v2535 = vmul.f32 %v1895, %v2407
    %v2536 = vmul.f32 %v1896, %v2408
    %v2537 = vmul.f32 %v1897, %v2409
    %v2538 = vmul.f32 %v1898, %v2410
    %v2539 = vmul.f32 %v1899, %v2411
    %v2540 = vmul.f32 %v1900, %v2412
    %v2541 = vmul.f32 %v1901, %v2413
    %v2542 = vmul.f32 %v1902, %v2414
    %v2543 = vmul.f32 %v1903, %v2415
    %v2544 = vmul.f32 %v1904, %v2416
    %v2545 = vmul.f32 %v1905, %v2417
    %v2546 = vmul.f32 %v1906, %v2418
    %v2547 = vmul.f32 %v1907, %v2419
    %v2548 = vmul.f32 %v1908, %v2420
    %v2549 = vmul.f32 %v1909, %v2421
    %v2550 = vmul.f32 %v1910, %v2422
    %v2551 = vmul.f32 %v1911, %v2423
    %v2552 = vmul.f32 %v1912, %v2424
    %v2553 = vmul.f32 %v1913, %v2425
    %v2554 = vmul.f32 %v1914, %v2426
    %v2555 = vmul.f32 %v1915, %v2427
    %v2556 = vmul.f32 %v1916, %v2428
    %v2557 = vmul.f32 %v1917, %v2429
    %v2558 = vmul.f32 %v1918, %v2430
    %v2559 = vmul.f32 %v1919, %v2431
    %v2560 = vmul.f32 %v1920, %v2432
    %v2561 = vmul.f32 %v1921, %v2433
    %v2562 = vmul.f32 %v1922, %v2434
    %v2563 = vmul.f32 %v1923, %v2435
    %v2564 = vmul.f32 %v1924, %v2436
    %v2565 = vmul.f32 %v1925, %v2437
    %v2566 = vmul.f32 %v1926, %v2438
    %v2567 = vmul.f32 %v1927, %v2439
    %v2568 = vmul.f32 %v1928, %v2440
    %v2569 = vmul.f32 %v1929, %v2441
    %v2570 = vmul.f32 %v1930, %v2442
    %v2571 = vmul.f32 %v1931, %v2443
    %v2572 = vmul.f32 %v1932, %v2444
    %v2573 = vmul.f32 %v1933, %v2445
    %v2574 = vmul.f32 %v1934, %v2446
    %v2575 = vmul.f32 %v1935, %v2447
    %v2576 = vmul.f32 %v1936, %v2448
    %v2577 = vmul.f32 %v1937, %v2449
    %v2578 = vmul.f32 %v1938, %v2450
    %v2579 = vsel %vm2451, %v1875, %v2515
    %v2580 = vsel %vm2452, %v1876, %v2516
    %v2581 = vsel %vm2453, %v1877, %v2517
    %v2582 = vsel %vm2454, %v1878, %v2518
    %v2583 = vsel %vm2455, %v1879, %v2519
    %v2584 = vsel %vm2456, %v1880, %v2520
    %v2585 = vsel %vm2457, %v1881, %v2521
    %v2586 = vsel %vm2458, %v1882, %v2522
    %v2587 = vsel %vm2459, %v1883, %v2523
    %v2588 = vsel %vm2460, %v1884, %v2524
    %v2589 = vsel %vm2461, %v1885, %v2525
    %v2590 = vsel %vm2462, %v1886, %v2526
    %v2591 = vsel %vm2463, %v1887, %v2527
    %v2592 = vsel %vm2464, %v1888, %v2528
    %v2593 = vsel %vm2465, %v1889, %v2529
    %v2594 = vsel %vm2466, %v1890, %v2530
    %v2595 = vsel %vm2467, %v1891, %v2531
    %v2596 = vsel %vm2468, %v1892, %v2532
    %v2597 = vsel %vm2469, %v1893, %v2533
    %v2598 = vsel %vm2470, %v1894, %v2534
    %v2599 = vsel %vm2471, %v1895, %v2535
    %v2600 = vsel %vm2472, %v1896, %v2536
    %v2601 = vsel %vm2473, %v1897, %v2537
    %v2602 = vsel %vm2474, %v1898, %v2538
    %v2603 = vsel %vm2475, %v1899, %v2539
    %v2604 = vsel %vm2476, %v1900, %v2540
    %v2605 = vsel %vm2477, %v1901, %v2541
    %v2606 = vsel %vm2478, %v1902, %v2542
    %v2607 = vsel %vm2479, %v1903, %v2543
    %v2608 = vsel %vm2480, %v1904, %v2544
    %v2609 = vsel %vm2481, %v1905, %v2545
    %v2610 = vsel %vm2482, %v1906, %v2546
    %v2611 = vsel %vm2483, %v1907, %v2547
    %v2612 = vsel %vm2484, %v1908, %v2548
    %v2613 = vsel %vm2485, %v1909, %v2549
    %v2614 = vsel %vm2486, %v1910, %v2550
    %v2615 = vsel %vm2487, %v1911, %v2551
    %v2616 = vsel %vm2488, %v1912, %v2552
    %v2617 = vsel %vm2489, %v1913, %v2553
    %v2618 = vsel %vm2490, %v1914, %v2554
    %v2619 = vsel %vm2491, %v1915, %v2555
    %v2620 = vsel %vm2492, %v1916, %v2556
    %v2621 = vsel %vm2493, %v1917, %v2557
    %v2622 = vsel %vm2494, %v1918, %v2558
    %v2623 = vsel %vm2495, %v1919, %v2559
    %v2624 = vsel %vm2496, %v1920, %v2560
    %v2625 = vsel %vm2497, %v1921, %v2561
    %v2626 = vsel %vm2498, %v1922, %v2562
    %v2627 = vsel %vm2499, %v1923, %v2563
    %v2628 = vsel %vm2500, %v1924, %v2564
    %v2629 = vsel %vm2501, %v1925, %v2565
    %v2630 = vsel %vm2502, %v1926, %v2566
    %v2631 = vsel %vm2503, %v1927, %v2567
    %v2632 = vsel %vm2504, %v1928, %v2568
    %v2633 = vsel %vm2505, %v1929, %v2569
    %v2634 = vsel %vm2506, %v1930, %v2570
    %v2635 = vsel %vm2507, %v1931, %v2571
    %v2636 = vsel %vm2508, %v1932, %v2572
    %v2637 = vsel %vm2509, %v1933, %v2573
    %v2638 = vsel %vm2510, %v1934, %v2574
    %v2639 = vsel %vm2511, %v1935, %v2575
    %v2640 = vsel %vm2512, %v1936, %v2576
    %v2641 = vsel %vm2513, %v1937, %v2577
    %v2642 = vsel %vm2514, %v1938, %v2578
    %v2643 = vpack.c.bf16 %v2581, %v2579
    %v2644 = vpack.c.bf16 %v2582, %v2580
    %v2645 = vpack.c.bf16 %v2585, %v2583
    %v2646 = vpack.c.bf16 %v2586, %v2584
    %v2647 = vpack.c.bf16 %v2589, %v2587
    %v2648 = vpack.c.bf16 %v2590, %v2588
    %v2649 = vpack.c.bf16 %v2593, %v2591
    %v2650 = vpack.c.bf16 %v2594, %v2592
    %v2651 = vpack.c.bf16 %v2597, %v2595
    %v2652 = vpack.c.bf16 %v2598, %v2596
    %v2653 = vpack.c.bf16 %v2601, %v2599
    %v2654 = vpack.c.bf16 %v2602, %v2600
    %v2655 = vpack.c.bf16 %v2605, %v2603
    %v2656 = vpack.c.bf16 %v2606, %v2604
    %v2657 = vpack.c.bf16 %v2609, %v2607
    %v2658 = vpack.c.bf16 %v2610, %v2608
    %v2659 = vpack.c.bf16 %v2613, %v2611
    %v2660 = vpack.c.bf16 %v2614, %v2612
    %v2661 = vpack.c.bf16 %v2617, %v2615
    %v2662 = vpack.c.bf16 %v2618, %v2616
    %v2663 = vpack.c.bf16 %v2621, %v2619
    %v2664 = vpack.c.bf16 %v2622, %v2620
    %v2665 = vpack.c.bf16 %v2625, %v2623
    %v2666 = vpack.c.bf16 %v2626, %v2624
    %v2667 = vpack.c.bf16 %v2629, %v2627
    %v2668 = vpack.c.bf16 %v2630, %v2628
    %v2669 = vpack.c.bf16 %v2633, %v2631
    %v2670 = vpack.c.bf16 %v2634, %v2632
    %v2671 = vpack.c.bf16 %v2637, %v2635
    %v2672 = vpack.c.bf16 %v2638, %v2636
    %v2673 = vpack.c.bf16 %v2641, %v2639
    %v2674 = vpack.c.bf16 %v2642, %v2640
    %v2675 = vld [vmem:[#allocation2] sm:$0xff]
    %v2676 = vld [vmem:[#allocation2 + $0x8] sm:$0xff]
    %v2677 = vld [vmem:[#allocation2 + $0x10] sm:$0xff]
    %v2678 = vld [vmem:[#allocation2 + $0x18] sm:$0xff]
    %v2679 = vld [vmem:[#allocation2 + $0x20] sm:$0xff]
    %v2680 = vld [vmem:[#allocation2 + $0x28] sm:$0xff]
    %v2681 = vld [vmem:[#allocation2 + $0x30] sm:$0xff]
    %v2682 = vld [vmem:[#allocation2 + $0x38] sm:$0xff]
    %v2683 = vld [vmem:[#allocation2 + $0x40] sm:$0xff]
    %v2684 = vld [vmem:[#allocation2 + $0x48] sm:$0xff]
    %v2685 = vld [vmem:[#allocation2 + $0x50] sm:$0xff]
    %v2686 = vld [vmem:[#allocation2 + $0x58] sm:$0xff]
    %v2687 = vld [vmem:[#allocation2 + $0x60] sm:$0xff]
    %v2688 = vld [vmem:[#allocation2 + $0x68] sm:$0xff]
    %v2689 = vld [vmem:[#allocation2 + $0x70] sm:$0xff]
    %v2690 = vld [vmem:[#allocation2 + $0x78] sm:$0xff]
    %v2691 = vld [vmem:[#allocation2 + $0x80] sm:$0xff]
    %v2692 = vld [vmem:[#allocation2 + $0x88] sm:$0xff]
    %v2693 = vld [vmem:[#allocation2 + $0x90] sm:$0xff]
    %v2694 = vld [vmem:[#allocation2 + $0x98] sm:$0xff]
    %v2695 = vld [vmem:[#allocation2 + $0xa0] sm:$0xff]
    %v2696 = vld [vmem:[#allocation2 + $0xa8] sm:$0xff]
    %v2697 = vld [vmem:[#allocation2 + $0xb0] sm:$0xff]
    %v2698 = vld [vmem:[#allocation2 + $0xb8] sm:$0xff]
    %v2699 = vld [vmem:[#allocation2 + $0xc0] sm:$0xff]
    %v2700 = vld [vmem:[#allocation2 + $0xc8] sm:$0xff]
    %v2701 = vld [vmem:[#allocation2 + $0xd0] sm:$0xff]
    %v2702 = vld [vmem:[#allocation2 + $0xd8] sm:$0xff]
    %v2703 = vld [vmem:[#allocation2 + $0xe0] sm:$0xff]
    %v2704 = vld [vmem:[#allocation2 + $0xe8] sm:$0xff]
    %v2705 = vld [vmem:[#allocation2 + $0xf0] sm:$0xff]
    %v2706 = vld [vmem:[#allocation2 + $0xf8] sm:$0xff]
    %v2707 = vld [vmem:[%s4] sm:$0x3]
    %v2709 = vlaneseq
    %v2710 = vshrl.u32 %v2709, 7
    %v2711 = vsub.s32 0, %v2710
    %v2712 = vrot.slane %v2707, %v2711
    %v2713 = vlaneseq
    %v2714 = vshrl.u32 %v2713, 7
    %v2715 = vsub.s32 1, %v2714
    %v2716 = vrot.slane %v2707, %v2715
    %v2751 = vunpack.c.l.b16 %v2675
    %v2752 = vunpack.c.h.b16 %v2675
    %v2753 = vunpack.c.l.b16 %v2676
    %v2754 = vunpack.c.h.b16 %v2676
    %v2755 = vunpack.c.l.b16 %v2677
    %v2756 = vunpack.c.h.b16 %v2677
    %v2757 = vunpack.c.l.b16 %v2678
    %v2758 = vunpack.c.h.b16 %v2678
    %v2759 = vunpack.c.l.b16 %v2679
    %v2760 = vunpack.c.h.b16 %v2679
    %v2761 = vunpack.c.l.b16 %v2680
    %v2762 = vunpack.c.h.b16 %v2680
    %v2763 = vunpack.c.l.b16 %v2681
    %v2764 = vunpack.c.h.b16 %v2681
    %v2765 = vunpack.c.l.b16 %v2682
    %v2766 = vunpack.c.h.b16 %v2682
    %v2767 = vunpack.c.l.b16 %v2683
    %v2768 = vunpack.c.h.b16 %v2683
    %v2769 = vunpack.c.l.b16 %v2684
    %v2770 = vunpack.c.h.b16 %v2684
    %v2771 = vunpack.c.l.b16 %v2685
    %v2772 = vunpack.c.h.b16 %v2685
    %v2773 = vunpack.c.l.b16 %v2686
    %v2774 = vunpack.c.h.b16 %v2686
    %v2775 = vunpack.c.l.b16 %v2687
    %v2776 = vunpack.c.h.b16 %v2687
    %v2777 = vunpack.c.l.b16 %v2688
    %v2778 = vunpack.c.h.b16 %v2688
    %v2779 = vunpack.c.l.b16 %v2689
    %v2780 = vunpack.c.h.b16 %v2689
    %v2781 = vunpack.c.l.b16 %v2690
    %v2782 = vunpack.c.h.b16 %v2690
    %v2783 = vunpack.c.l.b16 %v2691
    %v2784 = vunpack.c.h.b16 %v2691
    %v2785 = vunpack.c.l.b16 %v2692
    %v2786 = vunpack.c.h.b16 %v2692
    %v2787 = vunpack.c.l.b16 %v2693
    %v2788 = vunpack.c.h.b16 %v2693
    %v2789 = vunpack.c.l.b16 %v2694
    %v2790 = vunpack.c.h.b16 %v2694
    %v2791 = vunpack.c.l.b16 %v2695
    %v2792 = vunpack.c.h.b16 %v2695
    %v2793 = vunpack.c.l.b16 %v2696
    %v2794 = vunpack.c.h.b16 %v2696
    %v2795 = vunpack.c.l.b16 %v2697
    %v2796 = vunpack.c.h.b16 %v2697
    %v2797 = vunpack.c.l.b16 %v2698
    %v2798 = vunpack.c.h.b16 %v2698
    %v2799 = vunpack.c.l.b16 %v2699
    %v2800 = vunpack.c.h.b16 %v2699
    %v2801 = vunpack.c.l.b16 %v2700
    %v2802 = vunpack.c.h.b16 %v2700
    %v2803 = vunpack.c.l.b16 %v2701
    %v2804 = vunpack.c.h.b16 %v2701
    %v2805 = vunpack.c.l.b16 %v2702
    %v2806 = vunpack.c.h.b16 %v2702
    %v2807 = vunpack.c.l.b16 %v2703
    %v2808 = vunpack.c.h.b16 %v2703
    %v2809 = vunpack.c.l.b16 %v2704
    %v2810 = vunpack.c.h.b16 %v2704
    %v2811 = vunpack.c.l.b16 %v2705
    %v2812 = vunpack.c.h.b16 %v2705
    %v2813 = vunpack.c.l.b16 %v2706
    %v2814 = vunpack.c.h.b16 %v2706
    %v2815 = vpack.c.b16 %v2753, %v2751
    %v2816 = vpack.c.b16 %v2754, %v2752
    %v2817 = vpack.c.b16 %v2757, %v2755
    %v2818 = vpack.c.b16 %v2758, %v2756
    %v2819 = vpack.c.b16 %v2761, %v2759
    %v2820 = vpack.c.b16 %v2762, %v2760
    %v2821 = vpack.c.b16 %v2765, %v2763
    %v2822 = vpack.c.b16 %v2766, %v2764
    %v2823 = vpack.c.b16 %v2769, %v2767
    %v2824 = vpack.c.b16 %v2770, %v2768
    %v2825 = vpack.c.b16 %v2773, %v2771
    %v2826 = vpack.c.b16 %v2774, %v2772
    %v2827 = vpack.c.b16 %v2777, %v2775
    %v2828 = vpack.c.b16 %v2778, %v2776
    %v2829 = vpack.c.b16 %v2781, %v2779
    %v2830 = vpack.c.b16 %v2782, %v2780
    %v2831 = vpack.c.b16 %v2785, %v2783
    %v2832 = vpack.c.b16 %v2786, %v2784
    %v2833 = vpack.c.b16 %v2789, %v2787
    %v2834 = vpack.c.b16 %v2790, %v2788
    %v2835 = vpack.c.b16 %v2793, %v2791
    %v2836 = vpack.c.b16 %v2794, %v2792
    %v2837 = vpack.c.b16 %v2797, %v2795
    %v2838 = vpack.c.b16 %v2798, %v2796
    %v2839 = vpack.c.b16 %v2801, %v2799
    %v2840 = vpack.c.b16 %v2802, %v2800
    %v2841 = vpack.c.b16 %v2805, %v2803
    %v2842 = vpack.c.b16 %v2806, %v2804
    %v2843 = vpack.c.b16 %v2809, %v2807
    %v2844 = vpack.c.b16 %v2810, %v2808
    %v2845 = vpack.c.b16 %v2813, %v2811
    %v2846 = vpack.c.b16 %v2814, %v2812
    %2879 = vmatprep.subr.bf16.mxu0 %v2816
    %2880 = vmatpush1.bf16.msra.mxu0 %v2815
    %2881 = vmatprep.subr.bf16.mxu0 %v2818
    %2882 = vmatpush1.bf16.msra.mxu0 %v2817
    %2883 = vmatprep.subr.bf16.mxu0 %v2820
    %2884 = vmatpush1.bf16.msra.mxu0 %v2819
    %2885 = vmatprep.subr.bf16.mxu0 %v2822
    %2886 = vmatpush1.bf16.msra.mxu0 %v2821
    %2887 = vmatprep.subr.bf16.mxu0 %v2824
    %2888 = vmatpush1.bf16.msra.mxu0 %v2823
    %2889 = vmatprep.subr.bf16.mxu0 %v2826
    %2890 = vmatpush1.bf16.msra.mxu0 %v2825
    %2891 = vmatprep.subr.bf16.mxu0 %v2828
    %2892 = vmatpush1.bf16.msra.mxu0 %v2827
    %2893 = vmatprep.subr.bf16.mxu0 %v2830
    %2894 = vmatpush1.bf16.msra.mxu0 %v2829
    %2895 = vmatprep.subr.bf16.mxu0 %v2832
    %2896 = vmatpush1.bf16.msra.mxu0 %v2831
    %2897 = vmatprep.subr.bf16.mxu0 %v2834
    %2898 = vmatpush1.bf16.msra.mxu0 %v2833
    %2899 = vmatprep.subr.bf16.mxu0 %v2836
    %2900 = vmatpush1.bf16.msra.mxu0 %v2835
    %2901 = vmatprep.subr.bf16.mxu0 %v2838
    %2902 = vmatpush1.bf16.msra.mxu0 %v2837
    %2903 = vmatprep.subr.bf16.mxu0 %v2840
    %2904 = vmatpush1.bf16.msra.mxu0 %v2839
    %2905 = vmatprep.subr.bf16.mxu0 %v2842
    %2906 = vmatpush1.bf16.msra.mxu0 %v2841
    %2907 = vmatprep.subr.bf16.mxu0 %v2844
    %2908 = vmatpush1.bf16.msra.mxu0 %v2843
    %2909 = vmatprep.subr.bf16.mxu0 %v2846
    %2910 = vmatpush1.bf16.msra.mxu0 %v2845
    %2911 = vmatprep.mubr.bf16.mxu0 %v2644
    %2912 = vmatmul.mubr.bf16.gmra.mrb[0].mxu0 %v2643
    %v2913 = vpop.f32.mrb[0].mxu0
    %v2914 = vadd.f32 %v2712, %v2913
    %v2915 = vpop.f32.mrb[0].mxu0
    %v2916 = vadd.f32 %v2716, %v2915
    %v2917 = vpop.f32.mrb[0].mxu0
    %v2918 = vadd.f32 %v2712, %v2917
    %v2919 = vpop.f32.mrb[0].mxu0
    %v2920 = vadd.f32 %v2716, %v2919
    %2921 = vmatprep.mubr.bf16.mxu0 %v2646
    %2922 = vmatmul.mubr.bf16.gmra.mrb[0].mxu0 %v2645
    %v2923 = vpop.f32.mrb[0].mxu0
    %v2924 = vadd.f32 %v2712, %v2923
    %v2925 = vpop.f32.mrb[0].mxu0
    %v2926 = vadd.f32 %v2716, %v2925
    %v2927 = vpop.f32.mrb[0].mxu0
    %v2928 = vadd.f32 %v2712, %v2927
    %v2929 = vpop.f32.mrb[0].mxu0
    %v2930 = vadd.f32 %v2716, %v2929
    %2931 = vmatprep.mubr.bf16.mxu0 %v2648
    %2932 = vmatmul.mubr.bf16.gmra.mrb[0].mxu0 %v2647
    %v2933 = vpop.f32.mrb[0].mxu0
    %v2934 = vadd.f32 %v2712, %v2933
    %v2935 = vpop.f32.mrb[0].mxu0
    %v2936 = vadd.f32 %v2716, %v2935
    %v2937 = vpop.f32.mrb[0].mxu0
    %v2938 = vadd.f32 %v2712, %v2937
    %v2939 = vpop.f32.mrb[0].mxu0
    %v2940 = vadd.f32 %v2716, %v2939
    %2941 = vmatprep.mubr.bf16.mxu0 %v2650
    %2942 = vmatmul.mubr.bf16.gmra.mrb[0].mxu0 %v2649
    %v2943 = vpop.f32.mrb[0].mxu0
    %v2944 = vadd.f32 %v2712, %v2943
    %v2945 = vpop.f32.mrb[0].mxu0
    %v2946 = vadd.f32 %v2716, %v2945
    %v2947 = vpop.f32.mrb[0].mxu0
    %v2948 = vadd.f32 %v2712, %v2947
    %v2949 = vpop.f32.mrb[0].mxu0
    %v2950 = vadd.f32 %v2716, %v2949
    %2951 = vmatprep.mubr.bf16.mxu0 %v2652
    %2952 = vmatmul.mubr.bf16.gmra.mrb[0].mxu0 %v2651
    %v2953 = vpop.f32.mrb[0].mxu0
    %v2954 = vadd.f32 %v2712, %v2953
    %v2955 = vpop.f32.mrb[0].mxu0
    %v2956 = vadd.f32 %v2716, %v2955
    %v2957 = vpop.f32.mrb[0].mxu0
    %v2958 = vadd.f32 %v2712, %v2957
    %v2959 = vpop.f32.mrb[0].mxu0
    %v2960 = vadd.f32 %v2716, %v2959
    %2961 = vmatprep.mubr.bf16.mxu0 %v2654
    %2962 = vmatmul.mubr.bf16.gmra.mrb[0].mxu0 %v2653
    %v2963 = vpop.f32.mrb[0].mxu0
    %v2964 = vadd.f32 %v2712, %v2963
    %v2965 = vpop.f32.mrb[0].mxu0
    %v2966 = vadd.f32 %v2716, %v2965
    %v2967 = vpop.f32.mrb[0].mxu0
    %v2968 = vadd.f32 %v2712, %v2967
    %v2969 = vpop.f32.mrb[0].mxu0
    %v2970 = vadd.f32 %v2716, %v2969
    %2971 = vmatprep.mubr.bf16.mxu0 %v2656
    %2972 = vmatmul.mubr.bf16.gmra.mrb[0].mxu0 %v2655
    %v2973 = vpop.f32.mrb[0].mxu0
    %v2974 = vadd.f32 %v2712, %v2973
    %v2975 = vpop.f32.mrb[0].mxu0
    %v2976 = vadd.f32 %v2716, %v2975
    %v2977 = vpop.f32.mrb[0].mxu0
    %v2978 = vadd.f32 %v2712, %v2977
    %v2979 = vpop.f32.mrb[0].mxu0
    %v2980 = vadd.f32 %v2716, %v2979
    %2981 = vmatprep.mubr.bf16.mxu0 %v2658
    %2982 = vmatmul.mubr.bf16.gmra.mrb[0].mxu0 %v2657
    %v2983 = vpop.f32.mrb[0].mxu0
    %v2984 = vadd.f32 %v2712, %v2983
    %v2985 = vpop.f32.mrb[0].mxu0
    %v2986 = vadd.f32 %v2716, %v2985
    %v2987 = vpop.f32.mrb[0].mxu0
    %v2988 = vadd.f32 %v2712, %v2987
    %v2989 = vpop.f32.mrb[0].mxu0
    %v2990 = vadd.f32 %v2716, %v2989
    %2991 = vmatprep.mubr.bf16.mxu0 %v2660
    %2992 = vmatmul.mubr.bf16.gmra.mrb[0].mxu0 %v2659
    %v2993 = vpop.f32.mrb[0].mxu0
    %v2994 = vadd.f32 %v2712, %v2993
    %v2995 = vpop.f32.mrb[0].mxu0
    %v2996 = vadd.f32 %v2716, %v2995
    %v2997 = vpop.f32.mrb[0].mxu0
    %v2998 = vadd.f32 %v2712, %v2997
    %v2999 = vpop.f32.mrb[0].mxu0
    %v3000 = vadd.f32 %v2716, %v2999
    %3001 = vmatprep.mubr.bf16.mxu0 %v2662
    %3002 = vmatmul.mubr.bf16.gmra.mrb[0].mxu0 %v2661
    %v3003 = vpop.f32.mrb[0].mxu0
    %v3004 = vadd.f32 %v2712, %v3003
    %v3005 = vpop.f32.mrb[0].mxu0
    %v3006 = vadd.f32 %v2716, %v3005
    %v3007 = vpop.f32.mrb[0].mxu0
    %v3008 = vadd.f32 %v2712, %v3007
    %v3009 = vpop.f32.mrb[0].mxu0
    %v3010 = vadd.f32 %v2716, %v3009
    %3011 = vmatprep.mubr.bf16.mxu0 %v2664
    %3012 = vmatmul.mubr.bf16.gmra.mrb[0].mxu0 %v2663
    %v3013 = vpop.f32.mrb[0].mxu0
    %v3014 = vadd.f32 %v2712, %v3013
    %v3015 = vpop.f32.mrb[0].mxu0
    %v3016 = vadd.f32 %v2716, %v3015
    %v3017 = vpop.f32.mrb[0].mxu0
    %v3018 = vadd.f32 %v2712, %v3017
    %v3019 = vpop.f32.mrb[0].mxu0
    %v3020 = vadd.f32 %v2716, %v3019
    %3021 = vmatprep.mubr.bf16.mxu0 %v2666
    %3022 = vmatmul.mubr.bf16.gmra.mrb[0].mxu0 %v2665
    %v3023 = vpop.f32.mrb[0].mxu0
    %v3024 = vadd.f32 %v2712, %v3023
    %v3025 = vpop.f32.mrb[0].mxu0
    %v3026 = vadd.f32 %v2716, %v3025
    %v3027 = vpop.f32.mrb[0].mxu0
    %v3028 = vadd.f32 %v2712, %v3027
    %v3029 = vpop.f32.mrb[0].mxu0
    %v3030 = vadd.f32 %v2716, %v3029
    %3031 = vmatprep.mubr.bf16.mxu0 %v2668
    %3032 = vmatmul.mubr.bf16.gmra.mrb[0].mxu0 %v2667
    %v3033 = vpop.f32.mrb[0].mxu0
    %v3034 = vadd.f32 %v2712, %v3033
    %v3035 = vpop.f32.mrb[0].mxu0
    %v3036 = vadd.f32 %v2716, %v3035
    %v3037 = vpop.f32.mrb[0].mxu0
    %v3038 = vadd.f32 %v2712, %v3037
    %v3039 = vpop.f32.mrb[0].mxu0
    %v3040 = vadd.f32 %v2716, %v3039
    %3041 = vmatprep.mubr.bf16.mxu0 %v2670
    %3042 = vmatmul.mubr.bf16.gmra.mrb[0].mxu0 %v2669
    %v3043 = vpop.f32.mrb[0].mxu0
    %v3044 = vadd.f32 %v2712, %v3043
    %v3045 = vpop.f32.mrb[0].mxu0
    %v3046 = vadd.f32 %v2716, %v3045
    %v3047 = vpop.f32.mrb[0].mxu0
    %v3048 = vadd.f32 %v2712, %v3047
    %v3049 = vpop.f32.mrb[0].mxu0
    %v3050 = vadd.f32 %v2716, %v3049
    %3051 = vmatprep.mubr.bf16.mxu0 %v2672
    %3052 = vmatmul.mubr.bf16.gmra.mrb[0].mxu0 %v2671
    %v3053 = vpop.f32.mrb[0].mxu0
    %v3054 = vadd.f32 %v2712, %v3053
    %v3055 = vpop.f32.mrb[0].mxu0
    %v3056 = vadd.f32 %v2716, %v3055
    %v3057 = vpop.f32.mrb[0].mxu0
    %v3058 = vadd.f32 %v2712, %v3057
    %v3059 = vpop.f32.mrb[0].mxu0
    %v3060 = vadd.f32 %v2716, %v3059
    %3061 = vmatprep.mubr.bf16.mxu0 %v2674
    %3062 = vmatmul.mubr.bf16.gmra.mrb[0].mxu0 %v2673
    %v3063 = vpop.f32.mrb[0].mxu0
    %v3064 = vadd.f32 %v2712, %v3063
    %v3065 = vpop.f32.mrb[0].mxu0
    %v3066 = vadd.f32 %v2716, %v3065
    %v3067 = vpop.f32.mrb[0].mxu0
    %v3068 = vadd.f32 %v2712, %v3067
    %v3069 = vpop.f32.mrb[0].mxu0
    %v3070 = vadd.f32 %v2716, %v3069
    %3071 = vdwg.mxu0
    %v3072 = vmin.f32 %v2914, 8.0
    %v3073 = vmin.f32 %v2916, 8.0
    %v3074 = vmin.f32 %v2918, 8.0
    %v3075 = vmin.f32 %v2920, 8.0
    %v3076 = vmin.f32 %v2924, 8.0
    %v3077 = vmin.f32 %v2926, 8.0
    %v3078 = vmin.f32 %v2928, 8.0
    %v3079 = vmin.f32 %v2930, 8.0
    %v3080 = vmin.f32 %v2934, 8.0
    %v3081 = vmin.f32 %v2936, 8.0
    %v3082 = vmin.f32 %v2938, 8.0
    %v3083 = vmin.f32 %v2940, 8.0
    %v3084 = vmin.f32 %v2944, 8.0
    %v3085 = vmin.f32 %v2946, 8.0
    %v3086 = vmin.f32 %v2948, 8.0
    %v3087 = vmin.f32 %v2950, 8.0
    %v3088 = vmin.f32 %v2954, 8.0
    %v3089 = vmin.f32 %v2956, 8.0
    %v3090 = vmin.f32 %v2958, 8.0
    %v3091 = vmin.f32 %v2960, 8.0
    %v3092 = vmin.f32 %v2964, 8.0
    %v3093 = vmin.f32 %v2966, 8.0
    %v3094 = vmin.f32 %v2968, 8.0
    %v3095 = vmin.f32 %v2970, 8.0
    %v3096 = vmin.f32 %v2974, 8.0
    %v3097 = vmin.f32 %v2976, 8.0
    %v3098 = vmin.f32 %v2978, 8.0
    %v3099 = vmin.f32 %v2980, 8.0
    %v3100 = vmin.f32 %v2984, 8.0
    %v3101 = vmin.f32 %v2986, 8.0
    %v3102 = vmin.f32 %v2988, 8.0
    %v3103 = vmin.f32 %v2990, 8.0
    %v3104 = vmin.f32 %v2994, 8.0
    %v3105 = vmin.f32 %v2996, 8.0
    %v3106 = vmin.f32 %v2998, 8.0
    %v3107 = vmin.f32 %v3000, 8.0
    %v3108 = vmin.f32 %v3004, 8.0
    %v3109 = vmin.f32 %v3006, 8.0
    %v3110 = vmin.f32 %v3008, 8.0
    %v3111 = vmin.f32 %v3010, 8.0
    %v3112 = vmin.f32 %v3014, 8.0
    %v3113 = vmin.f32 %v3016, 8.0
    %v3114 = vmin.f32 %v3018, 8.0
    %v3115 = vmin.f32 %v3020, 8.0
    %v3116 = vmin.f32 %v3024, 8.0
    %v3117 = vmin.f32 %v3026, 8.0
    %v3118 = vmin.f32 %v3028, 8.0
    %v3119 = vmin.f32 %v3030, 8.0
    %v3120 = vmin.f32 %v3034, 8.0
    %v3121 = vmin.f32 %v3036, 8.0
    %v3122 = vmin.f32 %v3038, 8.0
    %v3123 = vmin.f32 %v3040, 8.0
    %v3124 = vmin.f32 %v3044, 8.0
    %v3125 = vmin.f32 %v3046, 8.0
    %v3126 = vmin.f32 %v3048, 8.0
    %v3127 = vmin.f32 %v3050, 8.0
    %v3128 = vmin.f32 %v3054, 8.0
    %v3129 = vmin.f32 %v3056, 8.0
    %v3130 = vmin.f32 %v3058, 8.0
    %v3131 = vmin.f32 %v3060, 8.0
    %v3132 = vmin.f32 %v3064, 8.0
    %v3133 = vmin.f32 %v3066, 8.0
    %v3134 = vmin.f32 %v3068, 8.0
    %v3135 = vmin.f32 %v3070, 8.0
    %v3136 = vmul.f32 %v3072, 1.442695
    %v3137 = vpow.pop %v3136
    %v3138 = vmul.f32 %v3073, 1.442695
    %v3139 = vpow.pop %v3138
    %v3140 = vmul.f32 %v3074, 1.442695
    %v3141 = vpow.pop %v3140
    %v3142 = vmul.f32 %v3075, 1.442695
    %v3143 = vpow.pop %v3142
    %v3144 = vmul.f32 %v3076, 1.442695
    %v3145 = vpow.pop %v3144
    %v3146 = vmul.f32 %v3077, 1.442695
    %v3147 = vpow.pop %v3146
    %v3148 = vmul.f32 %v3078, 1.442695
    %v3149 = vpow.pop %v3148
    %v3150 = vmul.f32 %v3079, 1.442695
    %v3151 = vpow.pop %v3150
    %v3152 = vmul.f32 %v3080, 1.442695
    %v3153 = vpow.pop %v3152
    %v3154 = vmul.f32 %v3081, 1.442695
    %v3155 = vpow.pop %v3154
    %v3156 = vmul.f32 %v3082, 1.442695
    %v3157 = vpow.pop %v3156
    %v3158 = vmul.f32 %v3083, 1.442695
    %v3159 = vpow.pop %v3158
    %v3160 = vmul.f32 %v3084, 1.442695
    %v3161 = vpow.pop %v3160
    %v3162 = vmul.f32 %v3085, 1.442695
    %v3163 = vpow.pop %v3162
    %v3164 = vmul.f32 %v3086, 1.442695
    %v3165 = vpow.pop %v3164
    %v3166 = vmul.f32 %v3087, 1.442695
    %v3167 = vpow.pop %v3166
    %v3168 = vmul.f32 %v3088, 1.442695
    %v3169 = vpow.pop %v3168
    %v3170 = vmul.f32 %v3089, 1.442695
    %v3171 = vpow.pop %v3170
    %v3172 = vmul.f32 %v3090, 1.442695
    %v3173 = vpow.pop %v3172
    %v3174 = vmul.f32 %v3091, 1.442695
    %v3175 = vpow.pop %v3174
    %v3176 = vmul.f32 %v3092, 1.442695
    %v3177 = vpow.pop %v3176
    %v3178 = vmul.f32 %v3093, 1.442695
    %v3179 = vpow.pop %v3178
    %v3180 = vmul.f32 %v3094, 1.442695
    %v3181 = vpow.pop %v3180
    %v3182 = vmul.f32 %v3095, 1.442695
    %v3183 = vpow.pop %v3182
    %v3184 = vmul.f32 %v3096, 1.442695
    %v3185 = vpow.pop %v3184
    %v3186 = vmul.f32 %v3097, 1.442695
    %v3187 = vpow.pop %v3186
    %v3188 = vmul.f32 %v3098, 1.442695
    %v3189 = vpow.pop %v3188
    %v3190 = vmul.f32 %v3099, 1.442695
    %v3191 = vpow.pop %v3190
    %v3192 = vmul.f32 %v3100, 1.442695
    %v3193 = vpow.pop %v3192
    %v3194 = vmul.f32 %v3101, 1.442695
    %v3195 = vpow.pop %v3194
    %v3196 = vmul.f32 %v3102, 1.442695
    %v3197 = vpow.pop %v3196
    %v3198 = vmul.f32 %v3103, 1.442695
    %v3199 = vpow.pop %v3198
    %v3200 = vmul.f32 %v3104, 1.442695
    %v3201 = vpow.pop %v3200
    %v3202 = vmul.f32 %v3105, 1.442695
    %v3203 = vpow.pop %v3202
    %v3204 = vmul.f32 %v3106, 1.442695
    %v3205 = vpow.pop %v3204
    %v3206 = vmul.f32 %v3107, 1.442695
    %v3207 = vpow.pop %v3206
    %v3208 = vmul.f32 %v3108, 1.442695
    %v3209 = vpow.pop %v3208
    %v3210 = vmul.f32 %v3109, 1.442695
    %v3211 = vpow.pop %v3210
    %v3212 = vmul.f32 %v3110, 1.442695
    %v3213 = vpow.pop %v3212
    %v3214 = vmul.f32 %v3111, 1.442695
    %v3215 = vpow.pop %v3214
    %v3216 = vmul.f32 %v3112, 1.442695
    %v3217 = vpow.pop %v3216
    %v3218 = vmul.f32 %v3113, 1.442695
    %v3219 = vpow.pop %v3218
    %v3220 = vmul.f32 %v3114, 1.442695
    %v3221 = vpow.pop %v3220
    %v3222 = vmul.f32 %v3115, 1.442695
    %v3223 = vpow.pop %v3222
    %v3224 = vmul.f32 %v3116, 1.442695
    %v3225 = vpow.pop %v3224
    %v3226 = vmul.f32 %v3117, 1.442695
    %v3227 = vpow.pop %v3226
    %v3228 = vmul.f32 %v3118, 1.442695
    %v3229 = vpow.pop %v3228
    %v3230 = vmul.f32 %v3119, 1.442695
    %v3231 = vpow.pop %v3230
    %v3232 = vmul.f32 %v3120, 1.442695
    %v3233 = vpow.pop %v3232
    %v3234 = vmul.f32 %v3121, 1.442695
    %v3235 = vpow.pop %v3234
    %v3236 = vmul.f32 %v3122, 1.442695
    %v3237 = vpow.pop %v3236
    %v3238 = vmul.f32 %v3123, 1.442695
    %v3239 = vpow.pop %v3238
    %v3240 = vmul.f32 %v3124, 1.442695
    %v3241 = vpow.pop %v3240
    %v3242 = vmul.f32 %v3125, 1.442695
    %v3243 = vpow.pop %v3242
    %v3244 = vmul.f32 %v3126, 1.442695
    %v3245 = vpow.pop %v3244
    %v3246 = vmul.f32 %v3127, 1.442695
    %v3247 = vpow.pop %v3246
    %v3248 = vmul.f32 %v3128, 1.442695
    %v3249 = vpow.pop %v3248
    %v3250 = vmul.f32 %v3129, 1.442695
    %v3251 = vpow.pop %v3250
    %v3252 = vmul.f32 %v3130, 1.442695
    %v3253 = vpow.pop %v3252
    %v3254 = vmul.f32 %v3131, 1.442695
    %v3255 = vpow.pop %v3254
    %v3256 = vmul.f32 %v3132, 1.442695
    %v3257 = vpow.pop %v3256
    %v3258 = vmul.f32 %v3133, 1.442695
    %v3259 = vpow.pop %v3258
    %v3260 = vmul.f32 %v3134, 1.442695
    %v3261 = vpow.pop %v3260
    %v3262 = vmul.f32 %v3135, 1.442695
    %v3263 = vpow.pop %v3262
    %v3264 = vadd.f32 %v3137, 2.0
    %v3265 = vadd.f32 %v3139, 2.0
    %v3266 = vadd.f32 %v3141, 2.0
    %v3267 = vadd.f32 %v3143, 2.0
    %v3268 = vadd.f32 %v3145, 2.0
    %v3269 = vadd.f32 %v3147, 2.0
    %v3270 = vadd.f32 %v3149, 2.0
    %v3271 = vadd.f32 %v3151, 2.0
    %v3272 = vadd.f32 %v3153, 2.0
    %v3273 = vadd.f32 %v3155, 2.0
    %v3274 = vadd.f32 %v3157, 2.0
    %v3275 = vadd.f32 %v3159, 2.0
    %v3276 = vadd.f32 %v3161, 2.0
    %v3277 = vadd.f32 %v3163, 2.0
    %v3278 = vadd.f32 %v3165, 2.0
    %v3279 = vadd.f32 %v3167, 2.0
    %v3280 = vadd.f32 %v3169, 2.0
    %v3281 = vadd.f32 %v3171, 2.0
    %v3282 = vadd.f32 %v3173, 2.0
    %v3283 = vadd.f32 %v3175, 2.0
    %v3284 = vadd.f32 %v3177, 2.0
    %v3285 = vadd.f32 %v3179, 2.0
    %v3286 = vadd.f32 %v3181, 2.0
    %v3287 = vadd.f32 %v3183, 2.0
    %v3288 = vadd.f32 %v3185, 2.0
    %v3289 = vadd.f32 %v3187, 2.0
    %v3290 = vadd.f32 %v3189, 2.0
    %v3291 = vadd.f32 %v3191, 2.0
    %v3292 = vadd.f32 %v3193, 2.0
    %v3293 = vadd.f32 %v3195, 2.0
    %v3294 = vadd.f32 %v3197, 2.0
    %v3295 = vadd.f32 %v3199, 2.0
    %v3296 = vadd.f32 %v3201, 2.0
    %v3297 = vadd.f32 %v3203, 2.0
    %v3298 = vadd.f32 %v3205, 2.0
    %v3299 = vadd.f32 %v3207, 2.0
    %v3300 = vadd.f32 %v3209, 2.0
    %v3301 = vadd.f32 %v3211, 2.0
    %v3302 = vadd.f32 %v3213, 2.0
    %v3303 = vadd.f32 %v3215, 2.0
    %v3304 = vadd.f32 %v3217, 2.0
    %v3305 = vadd.f32 %v3219, 2.0
    %v3306 = vadd.f32 %v3221, 2.0
    %v3307 = vadd.f32 %v3223, 2.0
    %v3308 = vadd.f32 %v3225, 2.0
    %v3309 = vadd.f32 %v3227, 2.0
    %v3310 = vadd.f32 %v3229, 2.0
    %v3311 = vadd.f32 %v3231, 2.0
    %v3312 = vadd.f32 %v3233, 2.0
    %v3313 = vadd.f32 %v3235, 2.0
    %v3314 = vadd.f32 %v3237, 2.0
    %v3315 = vadd.f32 %v3239, 2.0
    %v3316 = vadd.f32 %v3241, 2.0
    %v3317 = vadd.f32 %v3243, 2.0
    %v3318 = vadd.f32 %v3245, 2.0
    %v3319 = vadd.f32 %v3247, 2.0
    %v3320 = vadd.f32 %v3249, 2.0
    %v3321 = vadd.f32 %v3251, 2.0
    %v3322 = vadd.f32 %v3253, 2.0
    %v3323 = vadd.f32 %v3255, 2.0
    %v3324 = vadd.f32 %v3257, 2.0
    %v3325 = vadd.f32 %v3259, 2.0
    %v3326 = vadd.f32 %v3261, 2.0
    %v3327 = vadd.f32 %v3263, 2.0
    %v3328 = vmul.f32 %v3137, %v3264
    %v3329 = vmul.f32 %v3139, %v3265
    %v3330 = vmul.f32 %v3141, %v3266
    %v3331 = vmul.f32 %v3143, %v3267
    %v3332 = vmul.f32 %v3145, %v3268
    %v3333 = vmul.f32 %v3147, %v3269
    %v3334 = vmul.f32 %v3149, %v3270
    %v3335 = vmul.f32 %v3151, %v3271
    %v3336 = vmul.f32 %v3153, %v3272
    %v3337 = vmul.f32 %v3155, %v3273
    %v3338 = vmul.f32 %v3157, %v3274
    %v3339 = vmul.f32 %v3159, %v3275
    %v3340 = vmul.f32 %v3161, %v3276
    %v3341 = vmul.f32 %v3163, %v3277
    %v3342 = vmul.f32 %v3165, %v3278
    %v3343 = vmul.f32 %v3167, %v3279
    %v3344 = vmul.f32 %v3169, %v3280
    %v3345 = vmul.f32 %v3171, %v3281
    %v3346 = vmul.f32 %v3173, %v3282
    %v3347 = vmul.f32 %v3175, %v3283
    %v3348 = vmul.f32 %v3177, %v3284
    %v3349 = vmul.f32 %v3179, %v3285
    %v3350 = vmul.f32 %v3181, %v3286
    %v3351 = vmul.f32 %v3183, %v3287
    %v3352 = vmul.f32 %v3185, %v3288
    %v3353 = vmul.f32 %v3187, %v3289
    %v3354 = vmul.f32 %v3189, %v3290
    %v3355 = vmul.f32 %v3191, %v3291
    %v3356 = vmul.f32 %v3193, %v3292
    %v3357 = vmul.f32 %v3195, %v3293
    %v3358 = vmul.f32 %v3197, %v3294
    %v3359 = vmul.f32 %v3199, %v3295
    %v3360 = vmul.f32 %v3201, %v3296
    %v3361 = vmul.f32 %v3203, %v3297
    %v3362 = vmul.f32 %v3205, %v3298
    %v3363 = vmul.f32 %v3207, %v3299
    %v3364 = vmul.f32 %v3209, %v3300
    %v3365 = vmul.f32 %v3211, %v3301
    %v3366 = vmul.f32 %v3213, %v3302
    %v3367 = vmul.f32 %v3215, %v3303
    %v3368 = vmul.f32 %v3217, %v3304
    %v3369 = vmul.f32 %v3219, %v3305
    %v3370 = vmul.f32 %v3221, %v3306
    %v3371 = vmul.f32 %v3223, %v3307
    %v3372 = vmul.f32 %v3225, %v3308
    %v3373 = vmul.f32 %v3227, %v3309
    %v3374 = vmul.f32 %v3229, %v3310
    %v3375 = vmul.f32 %v3231, %v3311
    %v3376 = vmul.f32 %v3233, %v3312
    %v3377 = vmul.f32 %v3235, %v3313
    %v3378 = vmul.f32 %v3237, %v3314
    %v3379 = vmul.f32 %v3239, %v3315
    %v3380 = vmul.f32 %v3241, %v3316
    %v3381 = vmul.f32 %v3243, %v3317
    %v3382 = vmul.f32 %v3245, %v3318
    %v3383 = vmul.f32 %v3247, %v3319
    %v3384 = vmul.f32 %v3249, %v3320
    %v3385 = vmul.f32 %v3251, %v3321
    %v3386 = vmul.f32 %v3253, %v3322
    %v3387 = vmul.f32 %v3255, %v3323
    %v3388 = vmul.f32 %v3257, %v3324
    %v3389 = vmul.f32 %v3259, %v3325
    %v3390 = vmul.f32 %v3261, %v3326
    %v3391 = vmul.f32 %v3263, %v3327
    %v3392 = vadd.f32 %v3328, 2.0
    %v3393 = vadd.f32 %v3329, 2.0
    %v3394 = vadd.f32 %v3330, 2.0
    %v3395 = vadd.f32 %v3331, 2.0
    %v3396 = vadd.f32 %v3332, 2.0
    %v3397 = vadd.f32 %v3333, 2.0
    %v3398 = vadd.f32 %v3334, 2.0
    %v3399 = vadd.f32 %v3335, 2.0
    %v3400 = vadd.f32 %v3336, 2.0
    %v3401 = vadd.f32 %v3337, 2.0
    %v3402 = vadd.f32 %v3338, 2.0
    %v3403 = vadd.f32 %v3339, 2.0
    %v3404 = vadd.f32 %v3340, 2.0
    %v3405 = vadd.f32 %v3341, 2.0
    %v3406 = vadd.f32 %v3342, 2.0
    %v3407 = vadd.f32 %v3343, 2.0
    %v3408 = vadd.f32 %v3344, 2.0
    %v3409 = vadd.f32 %v3345, 2.0
    %v3410 = vadd.f32 %v3346, 2.0
    %v3411 = vadd.f32 %v3347, 2.0
    %v3412 = vadd.f32 %v3348, 2.0
    %v3413 = vadd.f32 %v3349, 2.0
    %v3414 = vadd.f32 %v3350, 2.0
    %v3415 = vadd.f32 %v3351, 2.0
    %v3416 = vadd.f32 %v3352, 2.0
    %v3417 = vadd.f32 %v3353, 2.0
    %v3418 = vadd.f32 %v3354, 2.0
    %v3419 = vadd.f32 %v3355, 2.0
    %v3420 = vadd.f32 %v3356, 2.0
    %v3421 = vadd.f32 %v3357, 2.0
    %v3422 = vadd.f32 %v3358, 2.0
    %v3423 = vadd.f32 %v3359, 2.0
    %v3424 = vadd.f32 %v3360, 2.0
    %v3425 = vadd.f32 %v3361, 2.0
    %v3426 = vadd.f32 %v3362, 2.0
    %v3427 = vadd.f32 %v3363, 2.0
    %v3428 = vadd.f32 %v3364, 2.0
    %v3429 = vadd.f32 %v3365, 2.0
    %v3430 = vadd.f32 %v3366, 2.0
    %v3431 = vadd.f32 %v3367, 2.0
    %v3432 = vadd.f32 %v3368, 2.0
    %v3433 = vadd.f32 %v3369, 2.0
    %v3434 = vadd.f32 %v3370, 2.0
    %v3435 = vadd.f32 %v3371, 2.0
    %v3436 = vadd.f32 %v3372, 2.0
    %v3437 = vadd.f32 %v3373, 2.0
    %v3438 = vadd.f32 %v3374, 2.0
    %v3439 = vadd.f32 %v3375, 2.0
    %v3440 = vadd.f32 %v3376, 2.0
    %v3441 = vadd.f32 %v3377, 2.0
    %v3442 = vadd.f32 %v3378, 2.0
    %v3443 = vadd.f32 %v3379, 2.0
    %v3444 = vadd.f32 %v3380, 2.0
    %v3445 = vadd.f32 %v3381, 2.0
    %v3446 = vadd.f32 %v3382, 2.0
    %v3447 = vadd.f32 %v3383, 2.0
    %v3448 = vadd.f32 %v3384, 2.0
    %v3449 = vadd.f32 %v3385, 2.0
    %v3450 = vadd.f32 %v3386, 2.0
    %v3451 = vadd.f32 %v3387, 2.0
    %v3452 = vadd.f32 %v3388, 2.0
    %v3453 = vadd.f32 %v3389, 2.0
    %v3454 = vadd.f32 %v3390, 2.0
    %v3455 = vadd.f32 %v3391, 2.0
    %v3456 = vrcp.pop %v3392
    %v3457 = vrcp.pop %v3393
    %v3458 = vrcp.pop %v3394
    %v3459 = vrcp.pop %v3395
    %v3460 = vrcp.pop %v3396
    %v3461 = vrcp.pop %v3397
    %v3462 = vrcp.pop %v3398
    %v3463 = vrcp.pop %v3399
    %v3464 = vrcp.pop %v3400
    %v3465 = vrcp.pop %v3401
    %v3466 = vrcp.pop %v3402
    %v3467 = vrcp.pop %v3403
    %v3468 = vrcp.pop %v3404
    %v3469 = vrcp.pop %v3405
    %v3470 = vrcp.pop %v3406
    %v3471 = vrcp.pop %v3407
    %v3472 = vrcp.pop %v3408
    %v3473 = vrcp.pop %v3409
    %v3474 = vrcp.pop %v3410
    %v3475 = vrcp.pop %v3411
    %v3476 = vrcp.pop %v3412
    %v3477 = vrcp.pop %v3413
    %v3478 = vrcp.pop %v3414
    %v3479 = vrcp.pop %v3415
    %v3480 = vrcp.pop %v3416
    %v3481 = vrcp.pop %v3417
    %v3482 = vrcp.pop %v3418
    %v3483 = vrcp.pop %v3419
    %v3484 = vrcp.pop %v3420
    %v3485 = vrcp.pop %v3421
    %v3486 = vrcp.pop %v3422
    %v3487 = vrcp.pop %v3423
    %v3488 = vrcp.pop %v3424
    %v3489 = vrcp.pop %v3425
    %v3490 = vrcp.pop %v3426
    %v3491 = vrcp.pop %v3427
    %v3492 = vrcp.pop %v3428
    %v3493 = vrcp.pop %v3429
    %v3494 = vrcp.pop %v3430
    %v3495 = vrcp.pop %v3431
    %v3496 = vrcp.pop %v3432
    %v3497 = vrcp.pop %v3433
    %v3498 = vrcp.pop %v3434
    %v3499 = vrcp.pop %v3435
    %v3500 = vrcp.pop %v3436
    %v3501 = vrcp.pop %v3437
    %v3502 = vrcp.pop %v3438
    %v3503 = vrcp.pop %v3439
    %v3504 = vrcp.pop %v3440
    %v3505 = vrcp.pop %v3441
    %v3506 = vrcp.pop %v3442
    %v3507 = vrcp.pop %v3443
    %v3508 = vrcp.pop %v3444
    %v3509 = vrcp.pop %v3445
    %v3510 = vrcp.pop %v3446
    %v3511 = vrcp.pop %v3447
    %v3512 = vrcp.pop %v3448
    %v3513 = vrcp.pop %v3449
    %v3514 = vrcp.pop %v3450
    %v3515 = vrcp.pop %v3451
    %v3516 = vrcp.pop %v3452
    %v3517 = vrcp.pop %v3453
    %v3518 = vrcp.pop %v3454
    %v3519 = vrcp.pop %v3455
    %v3520 = vmul.f32 %v3328, %v3456
    %v3521 = vmul.f32 %v3329, %v3457
    %v3522 = vmul.f32 %v3330, %v3458
    %v3523 = vmul.f32 %v3331, %v3459
    %v3524 = vmul.f32 %v3332, %v3460
    %v3525 = vmul.f32 %v3333, %v3461
    %v3526 = vmul.f32 %v3334, %v3462
    %v3527 = vmul.f32 %v3335, %v3463
    %v3528 = vmul.f32 %v3336, %v3464
    %v3529 = vmul.f32 %v3337, %v3465
    %v3530 = vmul.f32 %v3338, %v3466
    %v3531 = vmul.f32 %v3339, %v3467
    %v3532 = vmul.f32 %v3340, %v3468
    %v3533 = vmul.f32 %v3341, %v3469
    %v3534 = vmul.f32 %v3342, %v3470
    %v3535 = vmul.f32 %v3343, %v3471
    %v3536 = vmul.f32 %v3344, %v3472
    %v3537 = vmul.f32 %v3345, %v3473
    %v3538 = vmul.f32 %v3346, %v3474
    %v3539 = vmul.f32 %v3347, %v3475
    %v3540 = vmul.f32 %v3348, %v3476
    %v3541 = vmul.f32 %v3349, %v3477
    %v3542 = vmul.f32 %v3350, %v3478
    %v3543 = vmul.f32 %v3351, %v3479
    %v3544 = vmul.f32 %v3352, %v3480
    %v3545 = vmul.f32 %v3353, %v3481
    %v3546 = vmul.f32 %v3354, %v3482
    %v3547 = vmul.f32 %v3355, %v3483
    %v3548 = vmul.f32 %v3356, %v3484
    %v3549 = vmul.f32 %v3357, %v3485
    %v3550 = vmul.f32 %v3358, %v3486
    %v3551 = vmul.f32 %v3359, %v3487
    %v3552 = vmul.f32 %v3360, %v3488
    %v3553 = vmul.f32 %v3361, %v3489
    %v3554 = vmul.f32 %v3362, %v3490
    %v3555 = vmul.f32 %v3363, %v3491
    %v3556 = vmul.f32 %v3364, %v3492
    %v3557 = vmul.f32 %v3365, %v3493
    %v3558 = vmul.f32 %v3366, %v3494
    %v3559 = vmul.f32 %v3367, %v3495
    %v3560 = vmul.f32 %v3368, %v3496
    %v3561 = vmul.f32 %v3369, %v3497
    %v3562 = vmul.f32 %v3370, %v3498
    %v3563 = vmul.f32 %v3371, %v3499
    %v3564 = vmul.f32 %v3372, %v3500
    %v3565 = vmul.f32 %v3373, %v3501
    %v3566 = vmul.f32 %v3374, %v3502
    %v3567 = vmul.f32 %v3375, %v3503
    %v3568 = vmul.f32 %v3376, %v3504
    %v3569 = vmul.f32 %v3377, %v3505
    %v3570 = vmul.f32 %v3378, %v3506
    %v3571 = vmul.f32 %v3379, %v3507
    %v3572 = vmul.f32 %v3380, %v3508
    %v3573 = vmul.f32 %v3381, %v3509
    %v3574 = vmul.f32 %v3382, %v3510
    %v3575 = vmul.f32 %v3383, %v3511
    %v3576 = vmul.f32 %v3384, %v3512
    %v3577 = vmul.f32 %v3385, %v3513
    %v3578 = vmul.f32 %v3386, %v3514
    %v3579 = vmul.f32 %v3387, %v3515
    %v3580 = vmul.f32 %v3388, %v3516
    %v3581 = vmul.f32 %v3389, %v3517
    %v3582 = vmul.f32 %v3390, %v3518
    %v3583 = vmul.f32 %v3391, %v3519
    %vm3584 = vcmp.gt.f32.partialorder %v2914, 8.0
    %vm3585 = vcmp.gt.f32.partialorder %v2916, 8.0
    %vm3586 = vcmp.gt.f32.partialorder %v2918, 8.0
    %vm3587 = vcmp.gt.f32.partialorder %v2920, 8.0
    %vm3588 = vcmp.gt.f32.partialorder %v2924, 8.0
    %vm3589 = vcmp.gt.f32.partialorder %v2926, 8.0
    %vm3590 = vcmp.gt.f32.partialorder %v2928, 8.0
    %vm3591 = vcmp.gt.f32.partialorder %v2930, 8.0
    %vm3592 = vcmp.gt.f32.partialorder %v2934, 8.0
    %vm3593 = vcmp.gt.f32.partialorder %v2936, 8.0
    %vm3594 = vcmp.gt.f32.partialorder %v2938, 8.0
    %vm3595 = vcmp.gt.f32.partialorder %v2940, 8.0
    %vm3596 = vcmp.gt.f32.partialorder %v2944, 8.0
    %vm3597 = vcmp.gt.f32.partialorder %v2946, 8.0
    %vm3598 = vcmp.gt.f32.partialorder %v2948, 8.0
    %vm3599 = vcmp.gt.f32.partialorder %v2950, 8.0
    %vm3600 = vcmp.gt.f32.partialorder %v2954, 8.0
    %vm3601 = vcmp.gt.f32.partialorder %v2956, 8.0
    %vm3602 = vcmp.gt.f32.partialorder %v2958, 8.0
    %vm3603 = vcmp.gt.f32.partialorder %v2960, 8.0
    %vm3604 = vcmp.gt.f32.partialorder %v2964, 8.0
    %vm3605 = vcmp.gt.f32.partialorder %v2966, 8.0
    %vm3606 = vcmp.gt.f32.partialorder %v2968, 8.0
    %vm3607 = vcmp.gt.f32.partialorder %v2970, 8.0
    %vm3608 = vcmp.gt.f32.partialorder %v2974, 8.0
    %vm3609 = vcmp.gt.f32.partialorder %v2976, 8.0
    %vm3610 = vcmp.gt.f32.partialorder %v2978, 8.0
    %vm3611 = vcmp.gt.f32.partialorder %v2980, 8.0
    %vm3612 = vcmp.gt.f32.partialorder %v2984, 8.0
    %vm3613 = vcmp.gt.f32.partialorder %v2986, 8.0
    %vm3614 = vcmp.gt.f32.partialorder %v2988, 8.0
    %vm3615 = vcmp.gt.f32.partialorder %v2990, 8.0
    %vm3616 = vcmp.gt.f32.partialorder %v2994, 8.0
    %vm3617 = vcmp.gt.f32.partialorder %v2996, 8.0
    %vm3618 = vcmp.gt.f32.partialorder %v2998, 8.0
    %vm3619 = vcmp.gt.f32.partialorder %v3000, 8.0
    %vm3620 = vcmp.gt.f32.partialorder %v3004, 8.0
    %vm3621 = vcmp.gt.f32.partialorder %v3006, 8.0
    %vm3622 = vcmp.gt.f32.partialorder %v3008, 8.0
    %vm3623 = vcmp.gt.f32.partialorder %v3010, 8.0
    %vm3624 = vcmp.gt.f32.partialorder %v3014, 8.0
    %vm3625 = vcmp.gt.f32.partialorder %v3016, 8.0
    %vm3626 = vcmp.gt.f32.partialorder %v3018, 8.0
    %vm3627 = vcmp.gt.f32.partialorder %v3020, 8.0
    %vm3628 = vcmp.gt.f32.partialorder %v3024, 8.0
    %vm3629 = vcmp.gt.f32.partialorder %v3026, 8.0
    %vm3630 = vcmp.gt.f32.partialorder %v3028, 8.0
    %vm3631 = vcmp.gt.f32.partialorder %v3030, 8.0
    %vm3632 = vcmp.gt.f32.partialorder %v3034, 8.0
    %vm3633 = vcmp.gt.f32.partialorder %v3036, 8.0
    %vm3634 = vcmp.gt.f32.partialorder %v3038, 8.0
    %vm3635 = vcmp.gt.f32.partialorder %v3040, 8.0
    %vm3636 = vcmp.gt.f32.partialorder %v3044, 8.0
    %vm3637 = vcmp.gt.f32.partialorder %v3046, 8.0
    %vm3638 = vcmp.gt.f32.partialorder %v3048, 8.0
    %vm3639 = vcmp.gt.f32.partialorder %v3050, 8.0
    %vm3640 = vcmp.gt.f32.partialorder %v3054, 8.0
    %vm3641 = vcmp.gt.f32.partialorder %v3056, 8.0
    %vm3642 = vcmp.gt.f32.partialorder %v3058, 8.0
    %vm3643 = vcmp.gt.f32.partialorder %v3060, 8.0
    %vm3644 = vcmp.gt.f32.partialorder %v3064, 8.0
    %vm3645 = vcmp.gt.f32.partialorder %v3066, 8.0
    %vm3646 = vcmp.gt.f32.partialorder %v3068, 8.0
    %vm3647 = vcmp.gt.f32.partialorder %v3070, 8.0
    %v3648 = vmul.f32 %v2914, %v3520
    %v3649 = vmul.f32 %v2916, %v3521
    %v3650 = vmul.f32 %v2918, %v3522
    %v3651 = vmul.f32 %v2920, %v3523
    %v3652 = vmul.f32 %v2924, %v3524
    %v3653 = vmul.f32 %v2926, %v3525
    %v3654 = vmul.f32 %v2928, %v3526
    %v3655 = vmul.f32 %v2930, %v3527
    %v3656 = vmul.f32 %v2934, %v3528
    %v3657 = vmul.f32 %v2936, %v3529
    %v3658 = vmul.f32 %v2938, %v3530
    %v3659 = vmul.f32 %v2940, %v3531
    %v3660 = vmul.f32 %v2944, %v3532
    %v3661 = vmul.f32 %v2946, %v3533
    %v3662 = vmul.f32 %v2948, %v3534
    %v3663 = vmul.f32 %v2950, %v3535
    %v3664 = vmul.f32 %v2954, %v3536
    %v3665 = vmul.f32 %v2956, %v3537
    %v3666 = vmul.f32 %v2958, %v3538
    %v3667 = vmul.f32 %v2960, %v3539
    %v3668 = vmul.f32 %v2964, %v3540
    %v3669 = vmul.f32 %v2966, %v3541
    %v3670 = vmul.f32 %v2968, %v3542
    %v3671 = vmul.f32 %v2970, %v3543
    %v3672 = vmul.f32 %v2974, %v3544
    %v3673 = vmul.f32 %v2976, %v3545
    %v3674 = vmul.f32 %v2978, %v3546
    %v3675 = vmul.f32 %v2980, %v3547
    %v3676 = vmul.f32 %v2984, %v3548
    %v3677 = vmul.f32 %v2986, %v3549
    %v3678 = vmul.f32 %v2988, %v3550
    %v3679 = vmul.f32 %v2990, %v3551
    %v3680 = vmul.f32 %v2994, %v3552
    %v3681 = vmul.f32 %v2996, %v3553
    %v3682 = vmul.f32 %v2998, %v3554
    %v3683 = vmul.f32 %v3000, %v3555
    %v3684 = vmul.f32 %v3004, %v3556
    %v3685 = vmul.f32 %v3006, %v3557
    %v3686 = vmul.f32 %v3008, %v3558
    %v3687 = vmul.f32 %v3010, %v3559
    %v3688 = vmul.f32 %v3014, %v3560
    %v3689 = vmul.f32 %v3016, %v3561
    %v3690 = vmul.f32 %v3018, %v3562
    %v3691 = vmul.f32 %v3020, %v3563
    %v3692 = vmul.f32 %v3024, %v3564
    %v3693 = vmul.f32 %v3026, %v3565
    %v3694 = vmul.f32 %v3028, %v3566
    %v3695 = vmul.f32 %v3030, %v3567
    %v3696 = vmul.f32 %v3034, %v3568
    %v3697 = vmul.f32 %v3036, %v3569
    %v3698 = vmul.f32 %v3038, %v3570
    %v3699 = vmul.f32 %v3040, %v3571
    %v3700 = vmul.f32 %v3044, %v3572
    %v3701 = vmul.f32 %v3046, %v3573
    %v3702 = vmul.f32 %v3048, %v3574
    %v3703 = vmul.f32 %v3050, %v3575
    %v3704 = vmul.f32 %v3054, %v3576
    %v3705 = vmul.f32 %v3056, %v3577
    %v3706 = vmul.f32 %v3058, %v3578
    %v3707 = vmul.f32 %v3060, %v3579
    %v3708 = vmul.f32 %v3064, %v3580
    %v3709 = vmul.f32 %v3066, %v3581
    %v3710 = vmul.f32 %v3068, %v3582
    %v3711 = vmul.f32 %v3070, %v3583
    %v3712 = vsel %vm3584, %v2914, %v3648
    %v3713 = vsel %vm3585, %v2916, %v3649
    %v3714 = vsel %vm3586, %v2918, %v3650
    %v3715 = vsel %vm3587, %v2920, %v3651
    %v3716 = vsel %vm3588, %v2924, %v3652
    %v3717 = vsel %vm3589, %v2926, %v3653
    %v3718 = vsel %vm3590, %v2928, %v3654
    %v3719 = vsel %vm3591, %v2930, %v3655
    %v3720 = vsel %vm3592, %v2934, %v3656
    %v3721 = vsel %vm3593, %v2936, %v3657
    %v3722 = vsel %vm3594, %v2938, %v3658
    %v3723 = vsel %vm3595, %v2940, %v3659
    %v3724 = vsel %vm3596, %v2944, %v3660
    %v3725 = vsel %vm3597, %v2946, %v3661
    %v3726 = vsel %vm3598, %v2948, %v3662
    %v3727 = vsel %vm3599, %v2950, %v3663
    %v3728 = vsel %vm3600, %v2954, %v3664
    %v3729 = vsel %vm3601, %v2956, %v3665
    %v3730 = vsel %vm3602, %v2958, %v3666
    %v3731 = vsel %vm3603, %v2960, %v3667
    %v3732 = vsel %vm3604, %v2964, %v3668
    %v3733 = vsel %vm3605, %v2966, %v3669
    %v3734 = vsel %vm3606, %v2968, %v3670
    %v3735 = vsel %vm3607, %v2970, %v3671
    %v3736 = vsel %vm3608, %v2974, %v3672
    %v3737 = vsel %vm3609, %v2976, %v3673
    %v3738 = vsel %vm3610, %v2978, %v3674
    %v3739 = vsel %vm3611, %v2980, %v3675
    %v3740 = vsel %vm3612, %v2984, %v3676
    %v3741 = vsel %vm3613, %v2986, %v3677
    %v3742 = vsel %vm3614, %v2988, %v3678
    %v3743 = vsel %vm3615, %v2990, %v3679
    %v3744 = vsel %vm3616, %v2994, %v3680
    %v3745 = vsel %vm3617, %v2996, %v3681
    %v3746 = vsel %vm3618, %v2998, %v3682
    %v3747 = vsel %vm3619, %v3000, %v3683
    %v3748 = vsel %vm3620, %v3004, %v3684
    %v3749 = vsel %vm3621, %v3006, %v3685
    %v3750 = vsel %vm3622, %v3008, %v3686
    %v3751 = vsel %vm3623, %v3010, %v3687
    %v3752 = vsel %vm3624, %v3014, %v3688
    %v3753 = vsel %vm3625, %v3016, %v3689
    %v3754 = vsel %vm3626, %v3018, %v3690
    %v3755 = vsel %vm3627, %v3020, %v3691
    %v3756 = vsel %vm3628, %v3024, %v3692
    %v3757 = vsel %vm3629, %v3026, %v3693
    %v3758 = vsel %vm3630, %v3028, %v3694
    %v3759 = vsel %vm3631, %v3030, %v3695
    %v3760 = vsel %vm3632, %v3034, %v3696
    %v3761 = vsel %vm3633, %v3036, %v3697
    %v3762 = vsel %vm3634, %v3038, %v3698
    %v3763 = vsel %vm3635, %v3040, %v3699
    %v3764 = vsel %vm3636, %v3044, %v3700
    %v3765 = vsel %vm3637, %v3046, %v3701
    %v3766 = vsel %vm3638, %v3048, %v3702
    %v3767 = vsel %vm3639, %v3050, %v3703
    %v3768 = vsel %vm3640, %v3054, %v3704
    %v3769 = vsel %vm3641, %v3056, %v3705
    %v3770 = vsel %vm3642, %v3058, %v3706
    %v3771 = vsel %vm3643, %v3060, %v3707
    %v3772 = vsel %vm3644, %v3064, %v3708
    %v3773 = vsel %vm3645, %v3066, %v3709
    %v3774 = vsel %vm3646, %v3068, %v3710
    %v3775 = vsel %vm3647, %v3070, %v3711
    %v3776 = vpack.c.bf16 %v3714, %v3712
    %v3777 = vpack.c.bf16 %v3715, %v3713
    %v3778 = vpack.c.bf16 %v3718, %v3716
    %v3779 = vpack.c.bf16 %v3719, %v3717
    %v3780 = vpack.c.bf16 %v3722, %v3720
    %v3781 = vpack.c.bf16 %v3723, %v3721
    %v3782 = vpack.c.bf16 %v3726, %v3724
    %v3783 = vpack.c.bf16 %v3727, %v3725
    %v3784 = vpack.c.bf16 %v3730, %v3728
    %v3785 = vpack.c.bf16 %v3731, %v3729
    %v3786 = vpack.c.bf16 %v3734, %v3732
    %v3787 = vpack.c.bf16 %v3735, %v3733
    %v3788 = vpack.c.bf16 %v3738, %v3736
    %v3789 = vpack.c.bf16 %v3739, %v3737
    %v3790 = vpack.c.bf16 %v3742, %v3740
    %v3791 = vpack.c.bf16 %v3743, %v3741
    %v3792 = vpack.c.bf16 %v3746, %v3744
    %v3793 = vpack.c.bf16 %v3747, %v3745
    %v3794 = vpack.c.bf16 %v3750, %v3748
    %v3795 = vpack.c.bf16 %v3751, %v3749
    %v3796 = vpack.c.bf16 %v3754, %v3752
    %v3797 = vpack.c.bf16 %v3755, %v3753
    %v3798 = vpack.c.bf16 %v3758, %v3756
    %v3799 = vpack.c.bf16 %v3759, %v3757
    %v3800 = vpack.c.bf16 %v3762, %v3760
    %v3801 = vpack.c.bf16 %v3763, %v3761
    %v3802 = vpack.c.bf16 %v3766, %v3764
    %v3803 = vpack.c.bf16 %v3767, %v3765
    %v3804 = vpack.c.bf16 %v3770, %v3768
    %v3805 = vpack.c.bf16 %v3771, %v3769
    %v3806 = vpack.c.bf16 %v3774, %v3772
    %v3807 = vpack.c.bf16 %v3775, %v3773
    %v3808 = vld [vmem:[#allocation4] sm:$0xff]
    %v3809 = vld [vmem:[#allocation4 + $0x8] sm:$0xff]
    %v3810 = vld [vmem:[#allocation4 + $0x10] sm:$0xff]
    %v3811 = vld [vmem:[#allocation4 + $0x18] sm:$0xff]
    %v3812 = vld [vmem:[#allocation4 + $0x20] sm:$0xff]
    %v3813 = vld [vmem:[#allocation4 + $0x28] sm:$0xff]
    %v3814 = vld [vmem:[#allocation4 + $0x30] sm:$0xff]
    %v3815 = vld [vmem:[#allocation4 + $0x38] sm:$0xff]
    %v3816 = vld [vmem:[#allocation4 + $0x40] sm:$0xff]
    %v3817 = vld [vmem:[#allocation4 + $0x48] sm:$0xff]
    %v3818 = vld [vmem:[#allocation4 + $0x50] sm:$0xff]
    %v3819 = vld [vmem:[#allocation4 + $0x58] sm:$0xff]
    %v3820 = vld [vmem:[#allocation4 + $0x60] sm:$0xff]
    %v3821 = vld [vmem:[#allocation4 + $0x68] sm:$0xff]
    %v3822 = vld [vmem:[#allocation4 + $0x70] sm:$0xff]
    %v3823 = vld [vmem:[#allocation4 + $0x78] sm:$0xff]
    %v3824 = vld [vmem:[#allocation4 + $0x80] sm:$0xff]
    %v3825 = vld [vmem:[#allocation4 + $0x88] sm:$0xff]
    %v3826 = vld [vmem:[#allocation4 + $0x90] sm:$0xff]
    %v3827 = vld [vmem:[#allocation4 + $0x98] sm:$0xff]
    %v3828 = vld [vmem:[#allocation4 + $0xa0] sm:$0xff]
    %v3829 = vld [vmem:[#allocation4 + $0xa8] sm:$0xff]
    %v3830 = vld [vmem:[#allocation4 + $0xb0] sm:$0xff]
    %v3831 = vld [vmem:[#allocation4 + $0xb8] sm:$0xff]
    %v3832 = vld [vmem:[#allocation4 + $0xc0] sm:$0xff]
    %v3833 = vld [vmem:[#allocation4 + $0xc8] sm:$0xff]
    %v3834 = vld [vmem:[#allocation4 + $0xd0] sm:$0xff]
    %v3835 = vld [vmem:[#allocation4 + $0xd8] sm:$0xff]
    %v3836 = vld [vmem:[#allocation4 + $0xe0] sm:$0xff]
    %v3837 = vld [vmem:[#allocation4 + $0xe8] sm:$0xff]
    %v3838 = vld [vmem:[#allocation4 + $0xf0] sm:$0xff]
    %v3839 = vld [vmem:[#allocation4 + $0xf8] sm:$0xff]
    %v3840 = vld [vmem:[%s6] sm:$0x3]
    %v3842 = vlaneseq
    %v3843 = vshrl.u32 %v3842, 7
    %v3844 = vsub.s32 0, %v3843
    %v3845 = vrot.slane %v3840, %v3844
    %v3846 = vlaneseq
    %v3847 = vshrl.u32 %v3846, 7
    %v3848 = vsub.s32 1, %v3847
    %v3849 = vrot.slane %v3840, %v3848
    %v3884 = vunpack.c.l.b16 %v3808
    %v3885 = vunpack.c.h.b16 %v3808
    %v3886 = vunpack.c.l.b16 %v3809
    %v3887 = vunpack.c.h.b16 %v3809
    %v3888 = vunpack.c.l.b16 %v3810
    %v3889 = vunpack.c.h.b16 %v3810
    %v3890 = vunpack.c.l.b16 %v3811
    %v3891 = vunpack.c.h.b16 %v3811
    %v3892 = vunpack.c.l.b16 %v3812
    %v3893 = vunpack.c.h.b16 %v3812
    %v3894 = vunpack.c.l.b16 %v3813
    %v3895 = vunpack.c.h.b16 %v3813
    %v3896 = vunpack.c.l.b16 %v3814
    %v3897 = vunpack.c.h.b16 %v3814
    %v3898 = vunpack.c.l.b16 %v3815
    %v3899 = vunpack.c.h.b16 %v3815
    %v3900 = vunpack.c.l.b16 %v3816
    %v3901 = vunpack.c.h.b16 %v3816
    %v3902 = vunpack.c.l.b16 %v3817
    %v3903 = vunpack.c.h.b16 %v3817
    %v3904 = vunpack.c.l.b16 %v3818
    %v3905 = vunpack.c.h.b16 %v3818
    %v3906 = vunpack.c.l.b16 %v3819
    %v3907 = vunpack.c.h.b16 %v3819
    %v3908 = vunpack.c.l.b16 %v3820
    %v3909 = vunpack.c.h.b16 %v3820
    %v3910 = vunpack.c.l.b16 %v3821
    %v3911 = vunpack.c.h.b16 %v3821
    %v3912 = vunpack.c.l.b16 %v3822
    %v3913 = vunpack.c.h.b16 %v3822
    %v3914 = vunpack.c.l.b16 %v3823
    %v3915 = vunpack.c.h.b16 %v3823
    %v3916 = vunpack.c.l.b16 %v3824
    %v3917 = vunpack.c.h.b16 %v3824
    %v3918 = vunpack.c.l.b16 %v3825
    %v3919 = vunpack.c.h.b16 %v3825
    %v3920 = vunpack.c.l.b16 %v3826
    %v3921 = vunpack.c.h.b16 %v3826
    %v3922 = vunpack.c.l.b16 %v3827
    %v3923 = vunpack.c.h.b16 %v3827
    %v3924 = vunpack.c.l.b16 %v3828
    %v3925 = vunpack.c.h.b16 %v3828
    %v3926 = vunpack.c.l.b16 %v3829
    %v3927 = vunpack.c.h.b16 %v3829
    %v3928 = vunpack.c.l.b16 %v3830
    %v3929 = vunpack.c.h.b16 %v3830
    %v3930 = vunpack.c.l.b16 %v3831
    %v3931 = vunpack.c.h.b16 %v3831
    %v3932 = vunpack.c.l.b16 %v3832
    %v3933 = vunpack.c.h.b16 %v3832
    %v3934 = vunpack.c.l.b16 %v3833
    %v3935 = vunpack.c.h.b16 %v3833
    %v3936 = vunpack.c.l.b16 %v3834
    %v3937 = vunpack.c.h.b16 %v3834
    %v3938 = vunpack.c.l.b16 %v3835
    %v3939 = vunpack.c.h.b16 %v3835
    %v3940 = vunpack.c.l.b16 %v3836
    %v3941 = vunpack.c.h.b16 %v3836
    %v3942 = vunpack.c.l.b16 %v3837
    %v3943 = vunpack.c.h.b16 %v3837
    %v3944 = vunpack.c.l.b16 %v3838
    %v3945 = vunpack.c.h.b16 %v3838
    %v3946 = vunpack.c.l.b16 %v3839
    %v3947 = vunpack.c.h.b16 %v3839
    %v3948 = vpack.c.b16 %v3886, %v3884
    %v3949 = vpack.c.b16 %v3887, %v3885
    %v3950 = vpack.c.b16 %v3890, %v3888
    %v3951 = vpack.c.b16 %v3891, %v3889
    %v3952 = vpack.c.b16 %v3894, %v3892
    %v3953 = vpack.c.b16 %v3895, %v3893
    %v3954 = vpack.c.b16 %v3898, %v3896
    %v3955 = vpack.c.b16 %v3899, %v3897
    %v3956 = vpack.c.b16 %v3902, %v3900
    %v3957 = vpack.c.b16 %v3903, %v3901
    %v3958 = vpack.c.b16 %v3906, %v3904
    %v3959 = vpack.c.b16 %v3907, %v3905
    %v3960 = vpack.c.b16 %v3910, %v3908
    %v3961 = vpack.c.b16 %v3911, %v3909
    %v3962 = vpack.c.b16 %v3914, %v3912
    %v3963 = vpack.c.b16 %v3915, %v3913
    %v3964 = vpack.c.b16 %v3918, %v3916
    %v3965 = vpack.c.b16 %v3919, %v3917
    %v3966 = vpack.c.b16 %v3922, %v3920
    %v3967 = vpack.c.b16 %v3923, %v3921
    %v3968 = vpack.c.b16 %v3926, %v3924
    %v3969 = vpack.c.b16 %v3927, %v3925
    %v3970 = vpack.c.b16 %v3930, %v3928
    %v3971 = vpack.c.b16 %v3931, %v3929
    %v3972 = vpack.c.b16 %v3934, %v3932
    %v3973 = vpack.c.b16 %v3935, %v3933
    %v3974 = vpack.c.b16 %v3938, %v3936
    %v3975 = vpack.c.b16 %v3939, %v3937
    %v3976 = vpack.c.b16 %v3942, %v3940
    %v3977 = vpack.c.b16 %v3943, %v3941
    %v3978 = vpack.c.b16 %v3946, %v3944
    %v3979 = vpack.c.b16 %v3947, %v3945
    %4012 = vmatprep.subr.bf16.mxu0 %v3949
    %4013 = vmatpush1.bf16.msra.mxu0 %v3948
    %4014 = vmatprep.subr.bf16.mxu0 %v3951
    %4015 = vmatpush1.bf16.msra.mxu0 %v3950
    %4016 = vmatprep.subr.bf16.mxu0 %v3953
    %4017 = vmatpush1.bf16.msra.mxu0 %v3952
    %4018 = vmatprep.subr.bf16.mxu0 %v3955
    %4019 = vmatpush1.bf16.msra.mxu0 %v3954
    %4020 = vmatprep.subr.bf16.mxu0 %v3957
    %4021 = vmatpush1.bf16.msra.mxu0 %v3956
    %4022 = vmatprep.subr.bf16.mxu0 %v3959
    %4023 = vmatpush1.bf16.msra.mxu0 %v3958
    %4024 = vmatprep.subr.bf16.mxu0 %v3961
    %4025 = vmatpush1.bf16.msra.mxu0 %v3960
    %4026 = vmatprep.subr.bf16.mxu0 %v3963
    %4027 = vmatpush1.bf16.msra.mxu0 %v3962
    %4028 = vmatprep.subr.bf16.mxu0 %v3965
    %4029 = vmatpush1.bf16.msra.mxu0 %v3964
    %4030 = vmatprep.subr.bf16.mxu0 %v3967
    %4031 = vmatpush1.bf16.msra.mxu0 %v3966
    %4032 = vmatprep.subr.bf16.mxu0 %v3969
    %4033 = vmatpush1.bf16.msra.mxu0 %v3968
    %4034 = vmatprep.subr.bf16.mxu0 %v3971
    %4035 = vmatpush1.bf16.msra.mxu0 %v3970
    %4036 = vmatprep.subr.bf16.mxu0 %v3973
    %4037 = vmatpush1.bf16.msra.mxu0 %v3972
    %4038 = vmatprep.subr.bf16.mxu0 %v3975
    %4039 = vmatpush1.bf16.msra.mxu0 %v3974
    %4040 = vmatprep.subr.bf16.mxu0 %v3977
    %4041 = vmatpush1.bf16.msra.mxu0 %v3976
    %4042 = vmatprep.subr.bf16.mxu0 %v3979
    %4043 = vmatpush1.bf16.msra.mxu0 %v3978
    %4044 = vmatprep.mubr.bf16.mxu0 %v3777
    %4045 = vmatmul.mubr.bf16.gmra.mrb[0].mxu0 %v3776
    %v4046 = vpop.f32.mrb[0].mxu0
    %v4047 = vadd.f32 %v3845, %v4046
    %v4048 = vpop.f32.mrb[0].mxu0
    %v4049 = vadd.f32 %v3849, %v4048
    %v4050 = vpop.f32.mrb[0].mxu0
    %v4051 = vadd.f32 %v3845, %v4050
    %v4052 = vpop.f32.mrb[0].mxu0
    %v4053 = vadd.f32 %v3849, %v4052
    %4054 = vmatprep.mubr.bf16.mxu0 %v3779
    %4055 = vmatmul.mubr.bf16.gmra.mrb[0].mxu0 %v3778
    %v4056 = vpop.f32.mrb[0].mxu0
    %v4057 = vadd.f32 %v3845, %v4056
    %v4058 = vpop.f32.mrb[0].mxu0
    %v4059 = vadd.f32 %v3849, %v4058
    %v4060 = vpop.f32.mrb[0].mxu0
    %v4061 = vadd.f32 %v3845, %v4060
    %v4062 = vpop.f32.mrb[0].mxu0
    %v4063 = vadd.f32 %v3849, %v4062
    %4064 = vmatprep.mubr.bf16.mxu0 %v3781
    %4065 = vmatmul.mubr.bf16.gmra.mrb[0].mxu0 %v3780
    %v4066 = vpop.f32.mrb[0].mxu0
    %v4067 = vadd.f32 %v3845, %v4066
    %v4068 = vpop.f32.mrb[0].mxu0
    %v4069 = vadd.f32 %v3849, %v4068
    %v4070 = vpop.f32.mrb[0].mxu0
    %v4071 = vadd.f32 %v3845, %v4070
    %v4072 = vpop.f32.mrb[0].mxu0
    %v4073 = vadd.f32 %v3849, %v4072
    %4074 = vmatprep.mubr.bf16.mxu0 %v3783
    %4075 = vmatmul.mubr.bf16.gmra.mrb[0].mxu0 %v3782
    %v4076 = vpop.f32.mrb[0].mxu0
    %v4077 = vadd.f32 %v3845, %v4076
    %v4078 = vpop.f32.mrb[0].mxu0
    %v4079 = vadd.f32 %v3849, %v4078
    %v4080 = vpop.f32.mrb[0].mxu0
    %v4081 = vadd.f32 %v3845, %v4080
    %v4082 = vpop.f32.mrb[0].mxu0
    %v4083 = vadd.f32 %v3849, %v4082
    %4084 = vmatprep.mubr.bf16.mxu0 %v3785
    %4085 = vmatmul.mubr.bf16.gmra.mrb[0].mxu0 %v3784
    %v4086 = vpop.f32.mrb[0].mxu0
    %v4087 = vadd.f32 %v3845, %v4086
    %v4088 = vpop.f32.mrb[0].mxu0
    %v4089 = vadd.f32 %v3849, %v4088
    %v4090 = vpop.f32.mrb[0].mxu0
    %v4091 = vadd.f32 %v3845, %v4090
    %v4092 = vpop.f32.mrb[0].mxu0
    %v4093 = vadd.f32 %v3849, %v4092
    %4094 = vmatprep.mubr.bf16.mxu0 %v3787
    %4095 = vmatmul.mubr.bf16.gmra.mrb[0].mxu0 %v3786
    %v4096 = vpop.f32.mrb[0].mxu0
    %v4097 = vadd.f32 %v3845, %v4096
    %v4098 = vpop.f32.mrb[0].mxu0
    %v4099 = vadd.f32 %v3849, %v4098
    %v4100 = vpop.f32.mrb[0].mxu0
    %v4101 = vadd.f32 %v3845, %v4100
    %v4102 = vpop.f32.mrb[0].mxu0
    %v4103 = vadd.f32 %v3849, %v4102
    %4104 = vmatprep.mubr.bf16.mxu0 %v3789
    %4105 = vmatmul.mubr.bf16.gmra.mrb[0].mxu0 %v3788
    %v4106 = vpop.f32.mrb[0].mxu0
    %v4107 = vadd.f32 %v3845, %v4106
    %v4108 = vpop.f32.mrb[0].mxu0
    %v4109 = vadd.f32 %v3849, %v4108
    %v4110 = vpop.f32.mrb[0].mxu0
    %v4111 = vadd.f32 %v3845, %v4110
    %v4112 = vpop.f32.mrb[0].mxu0
    %v4113 = vadd.f32 %v3849, %v4112
    %4114 = vmatprep.mubr.bf16.mxu0 %v3791
    %4115 = vmatmul.mubr.bf16.gmra.mrb[0].mxu0 %v3790
    %v4116 = vpop.f32.mrb[0].mxu0
    %v4117 = vadd.f32 %v3845, %v4116
    %v4118 = vpop.f32.mrb[0].mxu0
    %v4119 = vadd.f32 %v3849, %v4118
    %v4120 = vpop.f32.mrb[0].mxu0
    %v4121 = vadd.f32 %v3845, %v4120
    %v4122 = vpop.f32.mrb[0].mxu0
    %v4123 = vadd.f32 %v3849, %v4122
    %4124 = vmatprep.mubr.bf16.mxu0 %v3793
    %4125 = vmatmul.mubr.bf16.gmra.mrb[0].mxu0 %v3792
    %v4126 = vpop.f32.mrb[0].mxu0
    %v4127 = vadd.f32 %v3845, %v4126
    %v4128 = vpop.f32.mrb[0].mxu0
    %v4129 = vadd.f32 %v3849, %v4128
    %v4130 = vpop.f32.mrb[0].mxu0
    %v4131 = vadd.f32 %v3845, %v4130
    %v4132 = vpop.f32.mrb[0].mxu0
    %v4133 = vadd.f32 %v3849, %v4132
    %4134 = vmatprep.mubr.bf16.mxu0 %v3795
    %4135 = vmatmul.mubr.bf16.gmra.mrb[0].mxu0 %v3794
    %v4136 = vpop.f32.mrb[0].mxu0
    %v4137 = vadd.f32 %v3845, %v4136
    %v4138 = vpop.f32.mrb[0].mxu0
    %v4139 = vadd.f32 %v3849, %v4138
    %v4140 = vpop.f32.mrb[0].mxu0
    %v4141 = vadd.f32 %v3845, %v4140
    %v4142 = vpop.f32.mrb[0].mxu0
    %v4143 = vadd.f32 %v3849, %v4142
    %4144 = vmatprep.mubr.bf16.mxu0 %v3797
    %4145 = vmatmul.mubr.bf16.gmra.mrb[0].mxu0 %v3796
    %v4146 = vpop.f32.mrb[0].mxu0
    %v4147 = vadd.f32 %v3845, %v4146
    %v4148 = vpop.f32.mrb[0].mxu0
    %v4149 = vadd.f32 %v3849, %v4148
    %v4150 = vpop.f32.mrb[0].mxu0
    %v4151 = vadd.f32 %v3845, %v4150
    %v4152 = vpop.f32.mrb[0].mxu0
    %v4153 = vadd.f32 %v3849, %v4152
    %4154 = vmatprep.mubr.bf16.mxu0 %v3799
    %4155 = vmatmul.mubr.bf16.gmra.mrb[0].mxu0 %v3798
    %v4156 = vpop.f32.mrb[0].mxu0
    %v4157 = vadd.f32 %v3845, %v4156
    %v4158 = vpop.f32.mrb[0].mxu0
    %v4159 = vadd.f32 %v3849, %v4158
    %v4160 = vpop.f32.mrb[0].mxu0
    %v4161 = vadd.f32 %v3845, %v4160
    %v4162 = vpop.f32.mrb[0].mxu0
    %v4163 = vadd.f32 %v3849, %v4162
    %4164 = vmatprep.mubr.bf16.mxu0 %v3801
    %4165 = vmatmul.mubr.bf16.gmra.mrb[0].mxu0 %v3800
    %v4166 = vpop.f32.mrb[0].mxu0
    %v4167 = vadd.f32 %v3845, %v4166
    %v4168 = vpop.f32.mrb[0].mxu0
    %v4169 = vadd.f32 %v3849, %v4168
    %v4170 = vpop.f32.mrb[0].mxu0
    %v4171 = vadd.f32 %v3845, %v4170
    %v4172 = vpop.f32.mrb[0].mxu0
    %v4173 = vadd.f32 %v3849, %v4172
    %4174 = vmatprep.mubr.bf16.mxu0 %v3803
    %4175 = vmatmul.mubr.bf16.gmra.mrb[0].mxu0 %v3802
    %v4176 = vpop.f32.mrb[0].mxu0
    %v4177 = vadd.f32 %v3845, %v4176
    %v4178 = vpop.f32.mrb[0].mxu0
    %v4179 = vadd.f32 %v3849, %v4178
    %v4180 = vpop.f32.mrb[0].mxu0
    %v4181 = vadd.f32 %v3845, %v4180
    %v4182 = vpop.f32.mrb[0].mxu0
    %v4183 = vadd.f32 %v3849, %v4182
    %4184 = vmatprep.mubr.bf16.mxu0 %v3805
    %4185 = vmatmul.mubr.bf16.gmra.mrb[0].mxu0 %v3804
    %v4186 = vpop.f32.mrb[0].mxu0
    %v4187 = vadd.f32 %v3845, %v4186
    %v4188 = vpop.f32.mrb[0].mxu0
    %v4189 = vadd.f32 %v3849, %v4188
    %v4190 = vpop.f32.mrb[0].mxu0
    %v4191 = vadd.f32 %v3845, %v4190
    %v4192 = vpop.f32.mrb[0].mxu0
    %v4193 = vadd.f32 %v3849, %v4192
    %4194 = vmatprep.mubr.bf16.mxu0 %v3807
    %4195 = vmatmul.mubr.bf16.gmra.mrb[0].mxu0 %v3806
    %v4196 = vpop.f32.mrb[0].mxu0
    %v4197 = vadd.f32 %v3845, %v4196
    %v4198 = vpop.f32.mrb[0].mxu0
    %v4199 = vadd.f32 %v3849, %v4198
    %v4200 = vpop.f32.mrb[0].mxu0
    %v4201 = vadd.f32 %v3845, %v4200
    %v4202 = vpop.f32.mrb[0].mxu0
    %v4203 = vadd.f32 %v3849, %v4202
    %4204 = vdwg.mxu0
    %v4205 = vadd.f32 %v4047, %v1875
    %v4206 = vadd.f32 %v4049, %v1876
    %v4207 = vadd.f32 %v4051, %v1877
    %v4208 = vadd.f32 %v4053, %v1878
    %v4209 = vadd.f32 %v4057, %v1879
    %v4210 = vadd.f32 %v4059, %v1880
    %v4211 = vadd.f32 %v4061, %v1881
    %v4212 = vadd.f32 %v4063, %v1882
    %v4213 = vadd.f32 %v4067, %v1883
    %v4214 = vadd.f32 %v4069, %v1884
    %v4215 = vadd.f32 %v4071, %v1885
    %v4216 = vadd.f32 %v4073, %v1886
    %v4217 = vadd.f32 %v4077, %v1887
    %v4218 = vadd.f32 %v4079, %v1888
    %v4219 = vadd.f32 %v4081, %v1889
    %v4220 = vadd.f32 %v4083, %v1890
    %v4221 = vadd.f32 %v4087, %v1891
    %v4222 = vadd.f32 %v4089, %v1892
    %v4223 = vadd.f32 %v4091, %v1893
    %v4224 = vadd.f32 %v4093, %v1894
    %v4225 = vadd.f32 %v4097, %v1895
    %v4226 = vadd.f32 %v4099, %v1896
    %v4227 = vadd.f32 %v4101, %v1897
    %v4228 = vadd.f32 %v4103, %v1898
    %v4229 = vadd.f32 %v4107, %v1899
    %v4230 = vadd.f32 %v4109, %v1900
    %v4231 = vadd.f32 %v4111, %v1901
    %v4232 = vadd.f32 %v4113, %v1902
    %v4233 = vadd.f32 %v4117, %v1903
    %v4234 = vadd.f32 %v4119, %v1904
    %v4235 = vadd.f32 %v4121, %v1905
    %v4236 = vadd.f32 %v4123, %v1906
    %v4237 = vadd.f32 %v4127, %v1907
    %v4238 = vadd.f32 %v4129, %v1908
    %v4239 = vadd.f32 %v4131, %v1909
    %v4240 = vadd.f32 %v4133, %v1910
    %v4241 = vadd.f32 %v4137, %v1911
    %v4242 = vadd.f32 %v4139, %v1912
    %v4243 = vadd.f32 %v4141, %v1913
    %v4244 = vadd.f32 %v4143, %v1914
    %v4245 = vadd.f32 %v4147, %v1915
    %v4246 = vadd.f32 %v4149, %v1916
    %v4247 = vadd.f32 %v4151, %v1917
    %v4248 = vadd.f32 %v4153, %v1918
    %v4249 = vadd.f32 %v4157, %v1919
    %v4250 = vadd.f32 %v4159, %v1920
    %v4251 = vadd.f32 %v4161, %v1921
    %v4252 = vadd.f32 %v4163, %v1922
    %v4253 = vadd.f32 %v4167, %v1923
    %v4254 = vadd.f32 %v4169, %v1924
    %v4255 = vadd.f32 %v4171, %v1925
    %v4256 = vadd.f32 %v4173, %v1926
    %v4257 = vadd.f32 %v4177, %v1927
    %v4258 = vadd.f32 %v4179, %v1928
    %v4259 = vadd.f32 %v4181, %v1929
    %v4260 = vadd.f32 %v4183, %v1930
    %v4261 = vadd.f32 %v4187, %v1931
    %v4262 = vadd.f32 %v4189, %v1932
    %v4263 = vadd.f32 %v4191, %v1933
    %v4264 = vadd.f32 %v4193, %v1934
    %v4265 = vadd.f32 %v4197, %v1935
    %v4266 = vadd.f32 %v4199, %v1936
    %v4267 = vadd.f32 %v4201, %v1937
    %v4268 = vadd.f32 %v4203, %v1938
    %v4269 = vmin.f32 %v4205, 8.0
    %v4270 = vmin.f32 %v4206, 8.0
    %v4271 = vmin.f32 %v4207, 8.0
    %v4272 = vmin.f32 %v4208, 8.0
    %v4273 = vmin.f32 %v4209, 8.0
    %v4274 = vmin.f32 %v4210, 8.0
    %v4275 = vmin.f32 %v4211, 8.0
    %v4276 = vmin.f32 %v4212, 8.0
    %v4277 = vmin.f32 %v4213, 8.0
    %v4278 = vmin.f32 %v4214, 8.0
    %v4279 = vmin.f32 %v4215, 8.0
    %v4280 = vmin.f32 %v4216, 8.0
    %v4281 = vmin.f32 %v4217, 8.0
    %v4282 = vmin.f32 %v4218, 8.0
    %v4283 = vmin.f32 %v4219, 8.0
    %v4284 = vmin.f32 %v4220, 8.0
    %v4285 = vmin.f32 %v4221, 8.0
    %v4286 = vmin.f32 %v4222, 8.0
    %v4287 = vmin.f32 %v4223, 8.0
    %v4288 = vmin.f32 %v4224, 8.0
    %v4289 = vmin.f32 %v4225, 8.0
    %v4290 = vmin.f32 %v4226, 8.0
    %v4291 = vmin.f32 %v4227, 8.0
    %v4292 = vmin.f32 %v4228, 8.0
    %v4293 = vmin.f32 %v4229, 8.0
    %v4294 = vmin.f32 %v4230, 8.0
    %v4295 = vmin.f32 %v4231, 8.0
    %v4296 = vmin.f32 %v4232, 8.0
    %v4297 = vmin.f32 %v4233, 8.0
    %v4298 = vmin.f32 %v4234, 8.0
    %v4299 = vmin.f32 %v4235, 8.0
    %v4300 = vmin.f32 %v4236, 8.0
    %v4301 = vmin.f32 %v4237, 8.0
    %v4302 = vmin.f32 %v4238, 8.0
    %v4303 = vmin.f32 %v4239, 8.0
    %v4304 = vmin.f32 %v4240, 8.0
    %v4305 = vmin.f32 %v4241, 8.0
    %v4306 = vmin.f32 %v4242, 8.0
    %v4307 = vmin.f32 %v4243, 8.0
    %v4308 = vmin.f32 %v4244, 8.0
    %v4309 = vmin.f32 %v4245, 8.0
    %v4310 = vmin.f32 %v4246, 8.0
    %v4311 = vmin.f32 %v4247, 8.0
    %v4312 = vmin.f32 %v4248, 8.0
    %v4313 = vmin.f32 %v4249, 8.0
    %v4314 = vmin.f32 %v4250, 8.0
    %v4315 = vmin.f32 %v4251, 8.0
    %v4316 = vmin.f32 %v4252, 8.0
    %v4317 = vmin.f32 %v4253, 8.0
    %v4318 = vmin.f32 %v4254, 8.0
    %v4319 = vmin.f32 %v4255, 8.0
    %v4320 = vmin.f32 %v4256, 8.0
    %v4321 = vmin.f32 %v4257, 8.0
    %v4322 = vmin.f32 %v4258, 8.0
    %v4323 = vmin.f32 %v4259, 8.0
    %v4324 = vmin.f32 %v4260, 8.0
    %v4325 = vmin.f32 %v4261, 8.0
    %v4326 = vmin.f32 %v4262, 8.0
    %v4327 = vmin.f32 %v4263, 8.0
    %v4328 = vmin.f32 %v4264, 8.0
    %v4329 = vmin.f32 %v4265, 8.0
    %v4330 = vmin.f32 %v4266, 8.0
    %v4331 = vmin.f32 %v4267, 8.0
    %v4332 = vmin.f32 %v4268, 8.0
    %v4333 = vmul.f32 %v4269, 1.442695
    %v4334 = vpow.pop %v4333
    %v4335 = vmul.f32 %v4270, 1.442695
    %v4336 = vpow.pop %v4335
    %v4337 = vmul.f32 %v4271, 1.442695
    %v4338 = vpow.pop %v4337
    %v4339 = vmul.f32 %v4272, 1.442695
    %v4340 = vpow.pop %v4339
    %v4341 = vmul.f32 %v4273, 1.442695
    %v4342 = vpow.pop %v4341
    %v4343 = vmul.f32 %v4274, 1.442695
    %v4344 = vpow.pop %v4343
    %v4345 = vmul.f32 %v4275, 1.442695
    %v4346 = vpow.pop %v4345
    %v4347 = vmul.f32 %v4276, 1.442695
    %v4348 = vpow.pop %v4347
    %v4349 = vmul.f32 %v4277, 1.442695
    %v4350 = vpow.pop %v4349
    %v4351 = vmul.f32 %v4278, 1.442695
    %v4352 = vpow.pop %v4351
    %v4353 = vmul.f32 %v4279, 1.442695
    %v4354 = vpow.pop %v4353
    %v4355 = vmul.f32 %v4280, 1.442695
    %v4356 = vpow.pop %v4355
    %v4357 = vmul.f32 %v4281, 1.442695
    %v4358 = vpow.pop %v4357
    %v4359 = vmul.f32 %v4282, 1.442695
    %v4360 = vpow.pop %v4359
    %v4361 = vmul.f32 %v4283, 1.442695
    %v4362 = vpow.pop %v4361
    %v4363 = vmul.f32 %v4284, 1.442695
    %v4364 = vpow.pop %v4363
    %v4365 = vmul.f32 %v4285, 1.442695
    %v4366 = vpow.pop %v4365
    %v4367 = vmul.f32 %v4286, 1.442695
    %v4368 = vpow.pop %v4367
    %v4369 = vmul.f32 %v4287, 1.442695
    %v4370 = vpow.pop %v4369
    %v4371 = vmul.f32 %v4288, 1.442695
    %v4372 = vpow.pop %v4371
    %v4373 = vmul.f32 %v4289, 1.442695
    %v4374 = vpow.pop %v4373
    %v4375 = vmul.f32 %v4290, 1.442695
    %v4376 = vpow.pop %v4375
    %v4377 = vmul.f32 %v4291, 1.442695
    %v4378 = vpow.pop %v4377
    %v4379 = vmul.f32 %v4292, 1.442695
    %v4380 = vpow.pop %v4379
    %v4381 = vmul.f32 %v4293, 1.442695
    %v4382 = vpow.pop %v4381
    %v4383 = vmul.f32 %v4294, 1.442695
    %v4384 = vpow.pop %v4383
    %v4385 = vmul.f32 %v4295, 1.442695
    %v4386 = vpow.pop %v4385
    %v4387 = vmul.f32 %v4296, 1.442695
    %v4388 = vpow.pop %v4387
    %v4389 = vmul.f32 %v4297, 1.442695
    %v4390 = vpow.pop %v4389
    %v4391 = vmul.f32 %v4298, 1.442695
    %v4392 = vpow.pop %v4391
    %v4393 = vmul.f32 %v4299, 1.442695
    %v4394 = vpow.pop %v4393
    %v4395 = vmul.f32 %v4300, 1.442695
    %v4396 = vpow.pop %v4395
    %v4397 = vmul.f32 %v4301, 1.442695
    %v4398 = vpow.pop %v4397
    %v4399 = vmul.f32 %v4302, 1.442695
    %v4400 = vpow.pop %v4399
    %v4401 = vmul.f32 %v4303, 1.442695
    %v4402 = vpow.pop %v4401
    %v4403 = vmul.f32 %v4304, 1.442695
    %v4404 = vpow.pop %v4403
    %v4405 = vmul.f32 %v4305, 1.442695
    %v4406 = vpow.pop %v4405
    %v4407 = vmul.f32 %v4306, 1.442695
    %v4408 = vpow.pop %v4407
    %v4409 = vmul.f32 %v4307, 1.442695
    %v4410 = vpow.pop %v4409
    %v4411 = vmul.f32 %v4308, 1.442695
    %v4412 = vpow.pop %v4411
    %v4413 = vmul.f32 %v4309, 1.442695
    %v4414 = vpow.pop %v4413
    %v4415 = vmul.f32 %v4310, 1.442695
    %v4416 = vpow.pop %v4415
    %v4417 = vmul.f32 %v4311, 1.442695
    %v4418 = vpow.pop %v4417
    %v4419 = vmul.f32 %v4312, 1.442695
    %v4420 = vpow.pop %v4419
    %v4421 = vmul.f32 %v4313, 1.442695
    %v4422 = vpow.pop %v4421
    %v4423 = vmul.f32 %v4314, 1.442695
    %v4424 = vpow.pop %v4423
    %v4425 = vmul.f32 %v4315, 1.442695
    %v4426 = vpow.pop %v4425
    %v4427 = vmul.f32 %v4316, 1.442695
    %v4428 = vpow.pop %v4427
    %v4429 = vmul.f32 %v4317, 1.442695
    %v4430 = vpow.pop %v4429
    %v4431 = vmul.f32 %v4318, 1.442695
    %v4432 = vpow.pop %v4431
    %v4433 = vmul.f32 %v4319, 1.442695
    %v4434 = vpow.pop %v4433
    %v4435 = vmul.f32 %v4320, 1.442695
    %v4436 = vpow.pop %v4435
    %v4437 = vmul.f32 %v4321, 1.442695
    %v4438 = vpow.pop %v4437
    %v4439 = vmul.f32 %v4322, 1.442695
    %v4440 = vpow.pop %v4439
    %v4441 = vmul.f32 %v4323, 1.442695
    %v4442 = vpow.pop %v4441
    %v4443 = vmul.f32 %v4324, 1.442695
    %v4444 = vpow.pop %v4443
    %v4445 = vmul.f32 %v4325, 1.442695
    %v4446 = vpow.pop %v4445
    %v4447 = vmul.f32 %v4326, 1.442695
    %v4448 = vpow.pop %v4447
    %v4449 = vmul.f32 %v4327, 1.442695
    %v4450 = vpow.pop %v4449
    %v4451 = vmul.f32 %v4328, 1.442695
    %v4452 = vpow.pop %v4451
    %v4453 = vmul.f32 %v4329, 1.442695
    %v4454 = vpow.pop %v4453
    %v4455 = vmul.f32 %v4330, 1.442695
    %v4456 = vpow.pop %v4455
    %v4457 = vmul.f32 %v4331, 1.442695
    %v4458 = vpow.pop %v4457
    %v4459 = vmul.f32 %v4332, 1.442695
    %v4460 = vpow.pop %v4459
    %v4461 = vadd.f32 %v4334, 2.0
    %v4462 = vadd.f32 %v4336, 2.0
    %v4463 = vadd.f32 %v4338, 2.0
    %v4464 = vadd.f32 %v4340, 2.0
    %v4465 = vadd.f32 %v4342, 2.0
    %v4466 = vadd.f32 %v4344, 2.0
    %v4467 = vadd.f32 %v4346, 2.0
    %v4468 = vadd.f32 %v4348, 2.0
    %v4469 = vadd.f32 %v4350, 2.0
    %v4470 = vadd.f32 %v4352, 2.0
    %v4471 = vadd.f32 %v4354, 2.0
    %v4472 = vadd.f32 %v4356, 2.0
    %v4473 = vadd.f32 %v4358, 2.0
    %v4474 = vadd.f32 %v4360, 2.0
    %v4475 = vadd.f32 %v4362, 2.0
    %v4476 = vadd.f32 %v4364, 2.0
    %v4477 = vadd.f32 %v4366, 2.0
    %v4478 = vadd.f32 %v4368, 2.0
    %v4479 = vadd.f32 %v4370, 2.0
    %v4480 = vadd.f32 %v4372, 2.0
    %v4481 = vadd.f32 %v4374, 2.0
    %v4482 = vadd.f32 %v4376, 2.0
    %v4483 = vadd.f32 %v4378, 2.0
    %v4484 = vadd.f32 %v4380, 2.0
    %v4485 = vadd.f32 %v4382, 2.0
    %v4486 = vadd.f32 %v4384, 2.0
    %v4487 = vadd.f32 %v4386, 2.0
    %v4488 = vadd.f32 %v4388, 2.0
    %v4489 = vadd.f32 %v4390, 2.0
    %v4490 = vadd.f32 %v4392, 2.0
    %v4491 = vadd.f32 %v4394, 2.0
    %v4492 = vadd.f32 %v4396, 2.0
    %v4493 = vadd.f32 %v4398, 2.0
    %v4494 = vadd.f32 %v4400, 2.0
    %v4495 = vadd.f32 %v4402, 2.0
    %v4496 = vadd.f32 %v4404, 2.0
    %v4497 = vadd.f32 %v4406, 2.0
    %v4498 = vadd.f32 %v4408, 2.0
    %v4499 = vadd.f32 %v4410, 2.0
    %v4500 = vadd.f32 %v4412, 2.0
    %v4501 = vadd.f32 %v4414, 2.0
    %v4502 = vadd.f32 %v4416, 2.0
    %v4503 = vadd.f32 %v4418, 2.0
    %v4504 = vadd.f32 %v4420, 2.0
    %v4505 = vadd.f32 %v4422, 2.0
    %v4506 = vadd.f32 %v4424, 2.0
    %v4507 = vadd.f32 %v4426, 2.0
    %v4508 = vadd.f32 %v4428, 2.0
    %v4509 = vadd.f32 %v4430, 2.0
    %v4510 = vadd.f32 %v4432, 2.0
    %v4511 = vadd.f32 %v4434, 2.0
    %v4512 = vadd.f32 %v4436, 2.0
    %v4513 = vadd.f32 %v4438, 2.0
    %v4514 = vadd.f32 %v4440, 2.0
    %v4515 = vadd.f32 %v4442, 2.0
    %v4516 = vadd.f32 %v4444, 2.0
    %v4517 = vadd.f32 %v4446, 2.0
    %v4518 = vadd.f32 %v4448, 2.0
    %v4519 = vadd.f32 %v4450, 2.0
    %v4520 = vadd.f32 %v4452, 2.0
    %v4521 = vadd.f32 %v4454, 2.0
    %v4522 = vadd.f32 %v4456, 2.0
    %v4523 = vadd.f32 %v4458, 2.0
    %v4524 = vadd.f32 %v4460, 2.0
    %v4525 = vmul.f32 %v4334, %v4461
    %v4526 = vmul.f32 %v4336, %v4462
    %v4527 = vmul.f32 %v4338, %v4463
    %v4528 = vmul.f32 %v4340, %v4464
    %v4529 = vmul.f32 %v4342, %v4465
    %v4530 = vmul.f32 %v4344, %v4466
    %v4531 = vmul.f32 %v4346, %v4467
    %v4532 = vmul.f32 %v4348, %v4468
    %v4533 = vmul.f32 %v4350, %v4469
    %v4534 = vmul.f32 %v4352, %v4470
    %v4535 = vmul.f32 %v4354, %v4471
    %v4536 = vmul.f32 %v4356, %v4472
    %v4537 = vmul.f32 %v4358, %v4473
    %v4538 = vmul.f32 %v4360, %v4474
    %v4539 = vmul.f32 %v4362, %v4475
    %v4540 = vmul.f32 %v4364, %v4476
    %v4541 = vmul.f32 %v4366, %v4477
    %v4542 = vmul.f32 %v4368, %v4478
    %v4543 = vmul.f32 %v4370, %v4479
    %v4544 = vmul.f32 %v4372, %v4480
    %v4545 = vmul.f32 %v4374, %v4481
    %v4546 = vmul.f32 %v4376, %v4482
    %v4547 = vmul.f32 %v4378, %v4483
    %v4548 = vmul.f32 %v4380, %v4484
    %v4549 = vmul.f32 %v4382, %v4485
    %v4550 = vmul.f32 %v4384, %v4486
    %v4551 = vmul.f32 %v4386, %v4487
    %v4552 = vmul.f32 %v4388, %v4488
    %v4553 = vmul.f32 %v4390, %v4489
    %v4554 = vmul.f32 %v4392, %v4490
    %v4555 = vmul.f32 %v4394, %v4491
    %v4556 = vmul.f32 %v4396, %v4492
    %v4557 = vmul.f32 %v4398, %v4493
    %v4558 = vmul.f32 %v4400, %v4494
    %v4559 = vmul.f32 %v4402, %v4495
    %v4560 = vmul.f32 %v4404, %v4496
    %v4561 = vmul.f32 %v4406, %v4497
    %v4562 = vmul.f32 %v4408, %v4498
    %v4563 = vmul.f32 %v4410, %v4499
    %v4564 = vmul.f32 %v4412, %v4500
    %v4565 = vmul.f32 %v4414, %v4501
    %v4566 = vmul.f32 %v4416, %v4502
    %v4567 = vmul.f32 %v4418, %v4503
    %v4568 = vmul.f32 %v4420, %v4504
    %v4569 = vmul.f32 %v4422, %v4505
    %v4570 = vmul.f32 %v4424, %v4506
    %v4571 = vmul.f32 %v4426, %v4507
    %v4572 = vmul.f32 %v4428, %v4508
    %v4573 = vmul.f32 %v4430, %v4509
    %v4574 = vmul.f32 %v4432, %v4510
    %v4575 = vmul.f32 %v4434, %v4511
    %v4576 = vmul.f32 %v4436, %v4512
    %v4577 = vmul.f32 %v4438, %v4513
    %v4578 = vmul.f32 %v4440, %v4514
    %v4579 = vmul.f32 %v4442, %v4515
    %v4580 = vmul.f32 %v4444, %v4516
    %v4581 = vmul.f32 %v4446, %v4517
    %v4582 = vmul.f32 %v4448, %v4518
    %v4583 = vmul.f32 %v4450, %v4519
    %v4584 = vmul.f32 %v4452, %v4520
    %v4585 = vmul.f32 %v4454, %v4521
    %v4586 = vmul.f32 %v4456, %v4522
    %v4587 = vmul.f32 %v4458, %v4523
    %v4588 = vmul.f32 %v4460, %v4524
    %v4589 = vadd.f32 %v4525, 2.0
    %v4590 = vadd.f32 %v4526, 2.0
    %v4591 = vadd.f32 %v4527, 2.0
    %v4592 = vadd.f32 %v4528, 2.0
    %v4593 = vadd.f32 %v4529, 2.0
    %v4594 = vadd.f32 %v4530, 2.0
    %v4595 = vadd.f32 %v4531, 2.0
    %v4596 = vadd.f32 %v4532, 2.0
    %v4597 = vadd.f32 %v4533, 2.0
    %v4598 = vadd.f32 %v4534, 2.0
    %v4599 = vadd.f32 %v4535, 2.0
    %v4600 = vadd.f32 %v4536, 2.0
    %v4601 = vadd.f32 %v4537, 2.0
    %v4602 = vadd.f32 %v4538, 2.0
    %v4603 = vadd.f32 %v4539, 2.0
    %v4604 = vadd.f32 %v4540, 2.0
    %v4605 = vadd.f32 %v4541, 2.0
    %v4606 = vadd.f32 %v4542, 2.0
    %v4607 = vadd.f32 %v4543, 2.0
    %v4608 = vadd.f32 %v4544, 2.0
    %v4609 = vadd.f32 %v4545, 2.0
    %v4610 = vadd.f32 %v4546, 2.0
    %v4611 = vadd.f32 %v4547, 2.0
    %v4612 = vadd.f32 %v4548, 2.0
    %v4613 = vadd.f32 %v4549, 2.0
    %v4614 = vadd.f32 %v4550, 2.0
    %v4615 = vadd.f32 %v4551, 2.0
    %v4616 = vadd.f32 %v4552, 2.0
    %v4617 = vadd.f32 %v4553, 2.0
    %v4618 = vadd.f32 %v4554, 2.0
    %v4619 = vadd.f32 %v4555, 2.0
    %v4620 = vadd.f32 %v4556, 2.0
    %v4621 = vadd.f32 %v4557, 2.0
    %v4622 = vadd.f32 %v4558, 2.0
    %v4623 = vadd.f32 %v4559, 2.0
    %v4624 = vadd.f32 %v4560, 2.0
    %v4625 = vadd.f32 %v4561, 2.0
    %v4626 = vadd.f32 %v4562, 2.0
    %v4627 = vadd.f32 %v4563, 2.0
    %v4628 = vadd.f32 %v4564, 2.0
    %v4629 = vadd.f32 %v4565, 2.0
    %v4630 = vadd.f32 %v4566, 2.0
    %v4631 = vadd.f32 %v4567, 2.0
    %v4632 = vadd.f32 %v4568, 2.0
    %v4633 = vadd.f32 %v4569, 2.0
    %v4634 = vadd.f32 %v4570, 2.0
    %v4635 = vadd.f32 %v4571, 2.0
    %v4636 = vadd.f32 %v4572, 2.0
    %v4637 = vadd.f32 %v4573, 2.0
    %v4638 = vadd.f32 %v4574, 2.0
    %v4639 = vadd.f32 %v4575, 2.0
    %v4640 = vadd.f32 %v4576, 2.0
    %v4641 = vadd.f32 %v4577, 2.0
    %v4642 = vadd.f32 %v4578, 2.0
    %v4643 = vadd.f32 %v4579, 2.0
    %v4644 = vadd.f32 %v4580, 2.0
    %v4645 = vadd.f32 %v4581, 2.0
    %v4646 = vadd.f32 %v4582, 2.0
    %v4647 = vadd.f32 %v4583, 2.0
    %v4648 = vadd.f32 %v4584, 2.0
    %v4649 = vadd.f32 %v4585, 2.0
    %v4650 = vadd.f32 %v4586, 2.0
    %v4651 = vadd.f32 %v4587, 2.0
    %v4652 = vadd.f32 %v4588, 2.0
    %v4653 = vrcp.pop %v4589
    %v4654 = vrcp.pop %v4590
    %v4655 = vrcp.pop %v4591
    %v4656 = vrcp.pop %v4592
    %v4657 = vrcp.pop %v4593
    %v4658 = vrcp.pop %v4594
    %v4659 = vrcp.pop %v4595
    %v4660 = vrcp.pop %v4596
    %v4661 = vrcp.pop %v4597
    %v4662 = vrcp.pop %v4598
    %v4663 = vrcp.pop %v4599
    %v4664 = vrcp.pop %v4600
    %v4665 = vrcp.pop %v4601
    %v4666 = vrcp.pop %v4602
    %v4667 = vrcp.pop %v4603
    %v4668 = vrcp.pop %v4604
    %v4669 = vrcp.pop %v4605
    %v4670 = vrcp.pop %v4606
    %v4671 = vrcp.pop %v4607
    %v4672 = vrcp.pop %v4608
    %v4673 = vrcp.pop %v4609
    %v4674 = vrcp.pop %v4610
    %v4675 = vrcp.pop %v4611
    %v4676 = vrcp.pop %v4612
    %v4677 = vrcp.pop %v4613
    %v4678 = vrcp.pop %v4614
    %v4679 = vrcp.pop %v4615
    %v4680 = vrcp.pop %v4616
    %v4681 = vrcp.pop %v4617
    %v4682 = vrcp.pop %v4618
    %v4683 = vrcp.pop %v4619
    %v4684 = vrcp.pop %v4620
    %v4685 = vrcp.pop %v4621
    %v4686 = vrcp.pop %v4622
    %v4687 = vrcp.pop %v4623
    %v4688 = vrcp.pop %v4624
    %v4689 = vrcp.pop %v4625
    %v4690 = vrcp.pop %v4626
    %v4691 = vrcp.pop %v4627
    %v4692 = vrcp.pop %v4628
    %v4693 = vrcp.pop %v4629
    %v4694 = vrcp.pop %v4630
    %v4695 = vrcp.pop %v4631
    %v4696 = vrcp.pop %v4632
    %v4697 = vrcp.pop %v4633
    %v4698 = vrcp.pop %v4634
    %v4699 = vrcp.pop %v4635
    %v4700 = vrcp.pop %v4636
    %v4701 = vrcp.pop %v4637
    %v4702 = vrcp.pop %v4638
    %v4703 = vrcp.pop %v4639
    %v4704 = vrcp.pop %v4640
    %v4705 = vrcp.pop %v4641
    %v4706 = vrcp.pop %v4642
    %v4707 = vrcp.pop %v4643
    %v4708 = vrcp.pop %v4644
    %v4709 = vrcp.pop %v4645
    %v4710 = vrcp.pop %v4646
    %v4711 = vrcp.pop %v4647
    %v4712 = vrcp.pop %v4648
    %v4713 = vrcp.pop %v4649
    %v4714 = vrcp.pop %v4650
    %v4715 = vrcp.pop %v4651
    %v4716 = vrcp.pop %v4652
    %v4717 = vmul.f32 %v4525, %v4653
    %v4718 = vmul.f32 %v4526, %v4654
    %v4719 = vmul.f32 %v4527, %v4655
    %v4720 = vmul.f32 %v4528, %v4656
    %v4721 = vmul.f32 %v4529, %v4657
    %v4722 = vmul.f32 %v4530, %v4658
    %v4723 = vmul.f32 %v4531, %v4659
    %v4724 = vmul.f32 %v4532, %v4660
    %v4725 = vmul.f32 %v4533, %v4661
    %v4726 = vmul.f32 %v4534, %v4662
    %v4727 = vmul.f32 %v4535, %v4663
    %v4728 = vmul.f32 %v4536, %v4664
    %v4729 = vmul.f32 %v4537, %v4665
    %v4730 = vmul.f32 %v4538, %v4666
    %v4731 = vmul.f32 %v4539, %v4667
    %v4732 = vmul.f32 %v4540, %v4668
    %v4733 = vmul.f32 %v4541, %v4669
    %v4734 = vmul.f32 %v4542, %v4670
    %v4735 = vmul.f32 %v4543, %v4671
    %v4736 = vmul.f32 %v4544, %v4672
    %v4737 = vmul.f32 %v4545, %v4673
    %v4738 = vmul.f32 %v4546, %v4674
    %v4739 = vmul.f32 %v4547, %v4675
    %v4740 = vmul.f32 %v4548, %v4676
    %v4741 = vmul.f32 %v4549, %v4677
    %v4742 = vmul.f32 %v4550, %v4678
    %v4743 = vmul.f32 %v4551, %v4679
    %v4744 = vmul.f32 %v4552, %v4680
    %v4745 = vmul.f32 %v4553, %v4681
    %v4746 = vmul.f32 %v4554, %v4682
    %v4747 = vmul.f32 %v4555, %v4683
    %v4748 = vmul.f32 %v4556, %v4684
    %v4749 = vmul.f32 %v4557, %v4685
    %v4750 = vmul.f32 %v4558, %v4686
    %v4751 = vmul.f32 %v4559, %v4687
    %v4752 = vmul.f32 %v4560, %v4688
    %v4753 = vmul.f32 %v4561, %v4689
    %v4754 = vmul.f32 %v4562, %v4690
    %v4755 = vmul.f32 %v4563, %v4691
    %v4756 = vmul.f32 %v4564, %v4692
    %v4757 = vmul.f32 %v4565, %v4693
    %v4758 = vmul.f32 %v4566, %v4694
    %v4759 = vmul.f32 %v4567, %v4695
    %v4760 = vmul.f32 %v4568, %v4696
    %v4761 = vmul.f32 %v4569, %v4697
    %v4762 = vmul.f32 %v4570, %v4698
    %v4763 = vmul.f32 %v4571, %v4699
    %v4764 = vmul.f32 %v4572, %v4700
    %v4765 = vmul.f32 %v4573, %v4701
    %v4766 = vmul.f32 %v4574, %v4702
    %v4767 = vmul.f32 %v4575, %v4703
    %v4768 = vmul.f32 %v4576, %v4704
    %v4769 = vmul.f32 %v4577, %v4705
    %v4770 = vmul.f32 %v4578, %v4706
    %v4771 = vmul.f32 %v4579, %v4707
    %v4772 = vmul.f32 %v4580, %v4708
    %v4773 = vmul.f32 %v4581, %v4709
    %v4774 = vmul.f32 %v4582, %v4710
    %v4775 = vmul.f32 %v4583, %v4711
    %v4776 = vmul.f32 %v4584, %v4712
    %v4777 = vmul.f32 %v4585, %v4713
    %v4778 = vmul.f32 %v4586, %v4714
    %v4779 = vmul.f32 %v4587, %v4715
    %v4780 = vmul.f32 %v4588, %v4716
    %vm4781 = vcmp.gt.f32.partialorder %v4205, 8.0
    %vm4782 = vcmp.gt.f32.partialorder %v4206, 8.0
    %vm4783 = vcmp.gt.f32.partialorder %v4207, 8.0
    %vm4784 = vcmp.gt.f32.partialorder %v4208, 8.0
    %vm4785 = vcmp.gt.f32.partialorder %v4209, 8.0
    %vm4786 = vcmp.gt.f32.partialorder %v4210, 8.0
    %vm4787 = vcmp.gt.f32.partialorder %v4211, 8.0
    %vm4788 = vcmp.gt.f32.partialorder %v4212, 8.0
    %vm4789 = vcmp.gt.f32.partialorder %v4213, 8.0
    %vm4790 = vcmp.gt.f32.partialorder %v4214, 8.0
    %vm4791 = vcmp.gt.f32.partialorder %v4215, 8.0
    %vm4792 = vcmp.gt.f32.partialorder %v4216, 8.0
    %vm4793 = vcmp.gt.f32.partialorder %v4217, 8.0
    %vm4794 = vcmp.gt.f32.partialorder %v4218, 8.0
    %vm4795 = vcmp.gt.f32.partialorder %v4219, 8.0
    %vm4796 = vcmp.gt.f32.partialorder %v4220, 8.0
    %vm4797 = vcmp.gt.f32.partialorder %v4221, 8.0
    %vm4798 = vcmp.gt.f32.partialorder %v4222, 8.0
    %vm4799 = vcmp.gt.f32.partialorder %v4223, 8.0
    %vm4800 = vcmp.gt.f32.partialorder %v4224, 8.0
    %vm4801 = vcmp.gt.f32.partialorder %v4225, 8.0
    %vm4802 = vcmp.gt.f32.partialorder %v4226, 8.0
    %vm4803 = vcmp.gt.f32.partialorder %v4227, 8.0
    %vm4804 = vcmp.gt.f32.partialorder %v4228, 8.0
    %vm4805 = vcmp.gt.f32.partialorder %v4229, 8.0
    %vm4806 = vcmp.gt.f32.partialorder %v4230, 8.0
    %vm4807 = vcmp.gt.f32.partialorder %v4231, 8.0
    %vm4808 = vcmp.gt.f32.partialorder %v4232, 8.0
    %vm4809 = vcmp.gt.f32.partialorder %v4233, 8.0
    %vm4810 = vcmp.gt.f32.partialorder %v4234, 8.0
    %vm4811 = vcmp.gt.f32.partialorder %v4235, 8.0
    %vm4812 = vcmp.gt.f32.partialorder %v4236, 8.0
    %vm4813 = vcmp.gt.f32.partialorder %v4237, 8.0
    %vm4814 = vcmp.gt.f32.partialorder %v4238, 8.0
    %vm4815 = vcmp.gt.f32.partialorder %v4239, 8.0
    %vm4816 = vcmp.gt.f32.partialorder %v4240, 8.0
    %vm4817 = vcmp.gt.f32.partialorder %v4241, 8.0
    %vm4818 = vcmp.gt.f32.partialorder %v4242, 8.0
    %vm4819 = vcmp.gt.f32.partialorder %v4243, 8.0
    %vm4820 = vcmp.gt.f32.partialorder %v4244, 8.0
    %vm4821 = vcmp.gt.f32.partialorder %v4245, 8.0
    %vm4822 = vcmp.gt.f32.partialorder %v4246, 8.0
    %vm4823 = vcmp.gt.f32.partialorder %v4247, 8.0
    %vm4824 = vcmp.gt.f32.partialorder %v4248, 8.0
    %vm4825 = vcmp.gt.f32.partialorder %v4249, 8.0
    %vm4826 = vcmp.gt.f32.partialorder %v4250, 8.0
    %vm4827 = vcmp.gt.f32.partialorder %v4251, 8.0
    %vm4828 = vcmp.gt.f32.partialorder %v4252, 8.0
    %vm4829 = vcmp.gt.f32.partialorder %v4253, 8.0
    %vm4830 = vcmp.gt.f32.partialorder %v4254, 8.0
    %vm4831 = vcmp.gt.f32.partialorder %v4255, 8.0
    %vm4832 = vcmp.gt.f32.partialorder %v4256, 8.0
    %vm4833 = vcmp.gt.f32.partialorder %v4257, 8.0
    %vm4834 = vcmp.gt.f32.partialorder %v4258, 8.0
    %vm4835 = vcmp.gt.f32.partialorder %v4259, 8.0
    %vm4836 = vcmp.gt.f32.partialorder %v4260, 8.0
    %vm4837 = vcmp.gt.f32.partialorder %v4261, 8.0
    %vm4838 = vcmp.gt.f32.partialorder %v4262, 8.0
    %vm4839 = vcmp.gt.f32.partialorder %v4263, 8.0
    %vm4840 = vcmp.gt.f32.partialorder %v4264, 8.0
    %vm4841 = vcmp.gt.f32.partialorder %v4265, 8.0
    %vm4842 = vcmp.gt.f32.partialorder %v4266, 8.0
    %vm4843 = vcmp.gt.f32.partialorder %v4267, 8.0
    %vm4844 = vcmp.gt.f32.partialorder %v4268, 8.0
    %v4845 = vmul.f32 %v4205, %v4717
    %v4846 = vmul.f32 %v4206, %v4718
    %v4847 = vmul.f32 %v4207, %v4719
    %v4848 = vmul.f32 %v4208, %v4720
    %v4849 = vmul.f32 %v4209, %v4721
    %v4850 = vmul.f32 %v4210, %v4722
    %v4851 = vmul.f32 %v4211, %v4723
    %v4852 = vmul.f32 %v4212, %v4724
    %v4853 = vmul.f32 %v4213, %v4725
    %v4854 = vmul.f32 %v4214, %v4726
    %v4855 = vmul.f32 %v4215, %v4727
    %v4856 = vmul.f32 %v4216, %v4728
    %v4857 = vmul.f32 %v4217, %v4729
    %v4858 = vmul.f32 %v4218, %v4730
    %v4859 = vmul.f32 %v4219, %v4731
    %v4860 = vmul.f32 %v4220, %v4732
    %v4861 = vmul.f32 %v4221, %v4733
    %v4862 = vmul.f32 %v4222, %v4734
    %v4863 = vmul.f32 %v4223, %v4735
    %v4864 = vmul.f32 %v4224, %v4736
    %v4865 = vmul.f32 %v4225, %v4737
    %v4866 = vmul.f32 %v4226, %v4738
    %v4867 = vmul.f32 %v4227, %v4739
    %v4868 = vmul.f32 %v4228, %v4740
    %v4869 = vmul.f32 %v4229, %v4741
    %v4870 = vmul.f32 %v4230, %v4742
    %v4871 = vmul.f32 %v4231, %v4743
    %v4872 = vmul.f32 %v4232, %v4744
    %v4873 = vmul.f32 %v4233, %v4745
    %v4874 = vmul.f32 %v4234, %v4746
    %v4875 = vmul.f32 %v4235, %v4747
    %v4876 = vmul.f32 %v4236, %v4748
    %v4877 = vmul.f32 %v4237, %v4749
    %v4878 = vmul.f32 %v4238, %v4750
    %v4879 = vmul.f32 %v4239, %v4751
    %v4880 = vmul.f32 %v4240, %v4752
    %v4881 = vmul.f32 %v4241, %v4753
    %v4882 = vmul.f32 %v4242, %v4754
    %v4883 = vmul.f32 %v4243, %v4755
    %v4884 = vmul.f32 %v4244, %v4756
    %v4885 = vmul.f32 %v4245, %v4757
    %v4886 = vmul.f32 %v4246, %v4758
    %v4887 = vmul.f32 %v4247, %v4759
    %v4888 = vmul.f32 %v4248, %v4760
    %v4889 = vmul.f32 %v4249, %v4761
    %v4890 = vmul.f32 %v4250, %v4762
    %v4891 = vmul.f32 %v4251, %v4763
    %v4892 = vmul.f32 %v4252, %v4764
    %v4893 = vmul.f32 %v4253, %v4765
    %v4894 = vmul.f32 %v4254, %v4766
    %v4895 = vmul.f32 %v4255, %v4767
    %v4896 = vmul.f32 %v4256, %v4768
    %v4897 = vmul.f32 %v4257, %v4769
    %v4898 = vmul.f32 %v4258, %v4770
    %v4899 = vmul.f32 %v4259, %v4771
    %v4900 = vmul.f32 %v4260, %v4772
    %v4901 = vmul.f32 %v4261, %v4773
    %v4902 = vmul.f32 %v4262, %v4774
    %v4903 = vmul.f32 %v4263, %v4775
    %v4904 = vmul.f32 %v4264, %v4776
    %v4905 = vmul.f32 %v4265, %v4777
    %v4906 = vmul.f32 %v4266, %v4778
    %v4907 = vmul.f32 %v4267, %v4779
    %v4908 = vmul.f32 %v4268, %v4780
    %v4909 = vsel %vm4781, %v4205, %v4845
    %v4910 = vsel %vm4782, %v4206, %v4846
    %v4911 = vsel %vm4783, %v4207, %v4847
    %v4912 = vsel %vm4784, %v4208, %v4848
    %v4913 = vsel %vm4785, %v4209, %v4849
    %v4914 = vsel %vm4786, %v4210, %v4850
    %v4915 = vsel %vm4787, %v4211, %v4851
    %v4916 = vsel %vm4788, %v4212, %v4852
    %v4917 = vsel %vm4789, %v4213, %v4853
    %v4918 = vsel %vm4790, %v4214, %v4854
    %v4919 = vsel %vm4791, %v4215, %v4855
    %v4920 = vsel %vm4792, %v4216, %v4856
    %v4921 = vsel %vm4793, %v4217, %v4857
    %v4922 = vsel %vm4794, %v4218, %v4858
    %v4923 = vsel %vm4795, %v4219, %v4859
    %v4924 = vsel %vm4796, %v4220, %v4860
    %v4925 = vsel %vm4797, %v4221, %v4861
    %v4926 = vsel %vm4798, %v4222, %v4862
    %v4927 = vsel %vm4799, %v4223, %v4863
    %v4928 = vsel %vm4800, %v4224, %v4864
    %v4929 = vsel %vm4801, %v4225, %v4865
    %v4930 = vsel %vm4802, %v4226, %v4866
    %v4931 = vsel %vm4803, %v4227, %v4867
    %v4932 = vsel %vm4804, %v4228, %v4868
    %v4933 = vsel %vm4805, %v4229, %v4869
    %v4934 = vsel %vm4806, %v4230, %v4870
    %v4935 = vsel %vm4807, %v4231, %v4871
    %v4936 = vsel %vm4808, %v4232, %v4872
    %v4937 = vsel %vm4809, %v4233, %v4873
    %v4938 = vsel %vm4810, %v4234, %v4874
    %v4939 = vsel %vm4811, %v4235, %v4875
    %v4940 = vsel %vm4812, %v4236, %v4876
    %v4941 = vsel %vm4813, %v4237, %v4877
    %v4942 = vsel %vm4814, %v4238, %v4878
    %v4943 = vsel %vm4815, %v4239, %v4879
    %v4944 = vsel %vm4816, %v4240, %v4880
    %v4945 = vsel %vm4817, %v4241, %v4881
    %v4946 = vsel %vm4818, %v4242, %v4882
    %v4947 = vsel %vm4819, %v4243, %v4883
    %v4948 = vsel %vm4820, %v4244, %v4884
    %v4949 = vsel %vm4821, %v4245, %v4885
    %v4950 = vsel %vm4822, %v4246, %v4886
    %v4951 = vsel %vm4823, %v4247, %v4887
    %v4952 = vsel %vm4824, %v4248, %v4888
    %v4953 = vsel %vm4825, %v4249, %v4889
    %v4954 = vsel %vm4826, %v4250, %v4890
    %v4955 = vsel %vm4827, %v4251, %v4891
    %v4956 = vsel %vm4828, %v4252, %v4892
    %v4957 = vsel %vm4829, %v4253, %v4893
    %v4958 = vsel %vm4830, %v4254, %v4894
    %v4959 = vsel %vm4831, %v4255, %v4895
    %v4960 = vsel %vm4832, %v4256, %v4896
    %v4961 = vsel %vm4833, %v4257, %v4897
    %v4962 = vsel %vm4834, %v4258, %v4898
    %v4963 = vsel %vm4835, %v4259, %v4899
    %v4964 = vsel %vm4836, %v4260, %v4900
    %v4965 = vsel %vm4837, %v4261, %v4901
    %v4966 = vsel %vm4838, %v4262, %v4902
    %v4967 = vsel %vm4839, %v4263, %v4903
    %v4968 = vsel %vm4840, %v4264, %v4904
    %v4969 = vsel %vm4841, %v4265, %v4905
    %v4970 = vsel %vm4842, %v4266, %v4906
    %v4971 = vsel %vm4843, %v4267, %v4907
    %v4972 = vsel %vm4844, %v4268, %v4908
    %v4973 = vpack.c.bf16 %v4911, %v4909
    %v4974 = vpack.c.bf16 %v4912, %v4910
    %v4975 = vpack.c.bf16 %v4915, %v4913
    %v4976 = vpack.c.bf16 %v4916, %v4914
    %v4977 = vpack.c.bf16 %v4919, %v4917
    %v4978 = vpack.c.bf16 %v4920, %v4918
    %v4979 = vpack.c.bf16 %v4923, %v4921
    %v4980 = vpack.c.bf16 %v4924, %v4922
    %v4981 = vpack.c.bf16 %v4927, %v4925
    %v4982 = vpack.c.bf16 %v4928, %v4926
    %v4983 = vpack.c.bf16 %v4931, %v4929
    %v4984 = vpack.c.bf16 %v4932, %v4930
    %v4985 = vpack.c.bf16 %v4935, %v4933
    %v4986 = vpack.c.bf16 %v4936, %v4934
    %v4987 = vpack.c.bf16 %v4939, %v4937
    %v4988 = vpack.c.bf16 %v4940, %v4938
    %v4989 = vpack.c.bf16 %v4943, %v4941
    %v4990 = vpack.c.bf16 %v4944, %v4942
    %v4991 = vpack.c.bf16 %v4947, %v4945
    %v4992 = vpack.c.bf16 %v4948, %v4946
    %v4993 = vpack.c.bf16 %v4951, %v4949
    %v4994 = vpack.c.bf16 %v4952, %v4950
    %v4995 = vpack.c.bf16 %v4955, %v4953
    %v4996 = vpack.c.bf16 %v4956, %v4954
    %v4997 = vpack.c.bf16 %v4959, %v4957
    %v4998 = vpack.c.bf16 %v4960, %v4958
    %v4999 = vpack.c.bf16 %v4963, %v4961
    %v5000 = vpack.c.bf16 %v4964, %v4962
    %v5001 = vpack.c.bf16 %v4967, %v4965
    %v5002 = vpack.c.bf16 %v4968, %v4966
    %v5003 = vpack.c.bf16 %v4971, %v4969
    %v5004 = vpack.c.bf16 %v4972, %v4970
    %s5005 = scalar_lea.vmem [#allocation2], 256
    %v5006 = vld [vmem:[%s5005] sm:$0xff]
    %v5007 = vld [vmem:[%s5005 + $0x8] sm:$0xff]
    %v5008 = vld [vmem:[%s5005 + $0x10] sm:$0xff]
    %v5009 = vld [vmem:[%s5005 + $0x18] sm:$0xff]
    %v5010 = vld [vmem:[%s5005 + $0x20] sm:$0xff]
    %v5011 = vld [vmem:[%s5005 + $0x28] sm:$0xff]
    %v5012 = vld [vmem:[%s5005 + $0x30] sm:$0xff]
    %v5013 = vld [vmem:[%s5005 + $0x38] sm:$0xff]
    %v5014 = vld [vmem:[%s5005 + $0x40] sm:$0xff]
    %v5015 = vld [vmem:[%s5005 + $0x48] sm:$0xff]
    %v5016 = vld [vmem:[%s5005 + $0x50] sm:$0xff]
    %v5017 = vld [vmem:[%s5005 + $0x58] sm:$0xff]
    %v5018 = vld [vmem:[%s5005 + $0x60] sm:$0xff]
    %v5019 = vld [vmem:[%s5005 + $0x68] sm:$0xff]
    %v5020 = vld [vmem:[%s5005 + $0x70] sm:$0xff]
    %v5021 = vld [vmem:[%s5005 + $0x78] sm:$0xff]
    %v5022 = vld [vmem:[%s5005 + $0x80] sm:$0xff]
    %v5023 = vld [vmem:[%s5005 + $0x88] sm:$0xff]
    %v5024 = vld [vmem:[%s5005 + $0x90] sm:$0xff]
    %v5025 = vld [vmem:[%s5005 + $0x98] sm:$0xff]
    %v5026 = vld [vmem:[%s5005 + $0xa0] sm:$0xff]
    %v5027 = vld [vmem:[%s5005 + $0xa8] sm:$0xff]
    %v5028 = vld [vmem:[%s5005 + $0xb0] sm:$0xff]
    %v5029 = vld [vmem:[%s5005 + $0xb8] sm:$0xff]
    %v5030 = vld [vmem:[%s5005 + $0xc0] sm:$0xff]
    %v5031 = vld [vmem:[%s5005 + $0xc8] sm:$0xff]
    %v5032 = vld [vmem:[%s5005 + $0xd0] sm:$0xff]
    %v5033 = vld [vmem:[%s5005 + $0xd8] sm:$0xff]
    %v5034 = vld [vmem:[%s5005 + $0xe0] sm:$0xff]
    %v5035 = vld [vmem:[%s5005 + $0xe8] sm:$0xff]
    %v5036 = vld [vmem:[%s5005 + $0xf0] sm:$0xff]
    %v5037 = vld [vmem:[%s5005 + $0xf8] sm:$0xff]
    %s5038 = scalar_lea.vmem %s4, 2
    %v5039 = vld [vmem:[%s5038] sm:$0x3]
    %v5041 = vlaneseq
    %v5042 = vshrl.u32 %v5041, 7
    %v5043 = vsub.s32 0, %v5042
    %v5044 = vrot.slane %v5039, %v5043
    %v5045 = vlaneseq
    %v5046 = vshrl.u32 %v5045, 7
    %v5047 = vsub.s32 1, %v5046
    %v5048 = vrot.slane %v5039, %v5047
    %v5083 = vunpack.c.l.b16 %v5006
    %v5084 = vunpack.c.h.b16 %v5006
    %v5085 = vunpack.c.l.b16 %v5007
    %v5086 = vunpack.c.h.b16 %v5007
    %v5087 = vunpack.c.l.b16 %v5008
    %v5088 = vunpack.c.h.b16 %v5008
    %v5089 = vunpack.c.l.b16 %v5009
    %v5090 = vunpack.c.h.b16 %v5009
    %v5091 = vunpack.c.l.b16 %v5010
    %v5092 = vunpack.c.h.b16 %v5010
    %v5093 = vunpack.c.l.b16 %v5011
    %v5094 = vunpack.c.h.b16 %v5011
    %v5095 = vunpack.c.l.b16 %v5012
    %v5096 = vunpack.c.h.b16 %v5012
    %v5097 = vunpack.c.l.b16 %v5013
    %v5098 = vunpack.c.h.b16 %v5013
    %v5099 = vunpack.c.l.b16 %v5014
    %v5100 = vunpack.c.h.b16 %v5014
    %v5101 = vunpack.c.l.b16 %v5015
    %v5102 = vunpack.c.h.b16 %v5015
    %v5103 = vunpack.c.l.b16 %v5016
    %v5104 = vunpack.c.h.b16 %v5016
    %v5105 = vunpack.c.l.b16 %v5017
    %v5106 = vunpack.c.h.b16 %v5017
    %v5107 = vunpack.c.l.b16 %v5018
    %v5108 = vunpack.c.h.b16 %v5018
    %v5109 = vunpack.c.l.b16 %v5019
    %v5110 = vunpack.c.h.b16 %v5019
    %v5111 = vunpack.c.l.b16 %v5020
    %v5112 = vunpack.c.h.b16 %v5020
    %v5113 = vunpack.c.l.b16 %v5021
    %v5114 = vunpack.c.h.b16 %v5021
    %v5115 = vunpack.c.l.b16 %v5022
    %v5116 = vunpack.c.h.b16 %v5022
    %v5117 = vunpack.c.l.b16 %v5023
    %v5118 = vunpack.c.h.b16 %v5023
    %v5119 = vunpack.c.l.b16 %v5024
    %v5120 = vunpack.c.h.b16 %v5024
    %v5121 = vunpack.c.l.b16 %v5025
    %v5122 = vunpack.c.h.b16 %v5025
    %v5123 = vunpack.c.l.b16 %v5026
    %v5124 = vunpack.c.h.b16 %v5026
    %v5125 = vunpack.c.l.b16 %v5027
    %v5126 = vunpack.c.h.b16 %v5027
    %v5127 = vunpack.c.l.b16 %v5028
    %v5128 = vunpack.c.h.b16 %v5028
    %v5129 = vunpack.c.l.b16 %v5029
    %v5130 = vunpack.c.h.b16 %v5029
    %v5131 = vunpack.c.l.b16 %v5030
    %v5132 = vunpack.c.h.b16 %v5030
    %v5133 = vunpack.c.l.b16 %v5031
    %v5134 = vunpack.c.h.b16 %v5031
    %v5135 = vunpack.c.l.b16 %v5032
    %v5136 = vunpack.c.h.b16 %v5032
    %v5137 = vunpack.c.l.b16 %v5033
    %v5138 = vunpack.c.h.b16 %v5033
    %v5139 = vunpack.c.l.b16 %v5034
    %v5140 = vunpack.c.h.b16 %v5034
    %v5141 = vunpack.c.l.b16 %v5035
    %v5142 = vunpack.c.h.b16 %v5035
    %v5143 = vunpack.c.l.b16 %v5036
    %v5144 = vunpack.c.h.b16 %v5036
    %v5145 = vunpack.c.l.b16 %v5037
    %v5146 = vunpack.c.h.b16 %v5037
    %v5147 = vpack.c.b16 %v5085, %v5083
    %v5148 = vpack.c.b16 %v5086, %v5084
    %v5149 = vpack.c.b16 %v5089, %v5087
    %v5150 = vpack.c.b16 %v5090, %v5088
    %v5151 = vpack.c.b16 %v5093, %v5091
    %v5152 = vpack.c.b16 %v5094, %v5092
    %v5153 = vpack.c.b16 %v5097, %v5095
    %v5154 = vpack.c.b16 %v5098, %v5096
    %v5155 = vpack.c.b16 %v5101, %v5099
    %v5156 = vpack.c.b16 %v5102, %v5100
    %v5157 = vpack.c.b16 %v5105, %v5103
    %v5158 = vpack.c.b16 %v5106, %v5104
    %v5159 = vpack.c.b16 %v5109, %v5107
    %v5160 = vpack.c.b16 %v5110, %v5108
    %v5161 = vpack.c.b16 %v5113, %v5111
    %v5162 = vpack.c.b16 %v5114, %v5112
    %v5163 = vpack.c.b16 %v5117, %v5115
    %v5164 = vpack.c.b16 %v5118, %v5116
    %v5165 = vpack.c.b16 %v5121, %v5119
    %v5166 = vpack.c.b16 %v5122, %v5120
    %v5167 = vpack.c.b16 %v5125, %v5123
    %v5168 = vpack.c.b16 %v5126, %v5124
    %v5169 = vpack.c.b16 %v5129, %v5127
    %v5170 = vpack.c.b16 %v5130, %v5128
    %v5171 = vpack.c.b16 %v5133, %v5131
    %v5172 = vpack.c.b16 %v5134, %v5132
    %v5173 = vpack.c.b16 %v5137, %v5135
    %v5174 = vpack.c.b16 %v5138, %v5136
    %v5175 = vpack.c.b16 %v5141, %v5139
    %v5176 = vpack.c.b16 %v5142, %v5140
    %v5177 = vpack.c.b16 %v5145, %v5143
    %v5178 = vpack.c.b16 %v5146, %v5144
    %5211 = vmatprep.subr.bf16.mxu0 %v5148
    %5212 = vmatpush1.bf16.msra.mxu0 %v5147
    %5213 = vmatprep.subr.bf16.mxu0 %v5150
    %5214 = vmatpush1.bf16.msra.mxu0 %v5149
    %5215 = vmatprep.subr.bf16.mxu0 %v5152
    %5216 = vmatpush1.bf16.msra.mxu0 %v5151
    %5217 = vmatprep.subr.bf16.mxu0 %v5154
    %5218 = vmatpush1.bf16.msra.mxu0 %v5153
    %5219 = vmatprep.subr.bf16.mxu0 %v5156
    %5220 = vmatpush1.bf16.msra.mxu0 %v5155
    %5221 = vmatprep.subr.bf16.mxu0 %v5158
    %5222 = vmatpush1.bf16.msra.mxu0 %v5157
    %5223 = vmatprep.subr.bf16.mxu0 %v5160
    %5224 = vmatpush1.bf16.msra.mxu0 %v5159
    %5225 = vmatprep.subr.bf16.mxu0 %v5162
    %5226 = vmatpush1.bf16.msra.mxu0 %v5161
    %5227 = vmatprep.subr.bf16.mxu0 %v5164
    %5228 = vmatpush1.bf16.msra.mxu0 %v5163
    %5229 = vmatprep.subr.bf16.mxu0 %v5166
    %5230 = vmatpush1.bf16.msra.mxu0 %v5165
    %5231 = vmatprep.subr.bf16.mxu0 %v5168
    %5232 = vmatpush1.bf16.msra.mxu0 %v5167
    %5233 = vmatprep.subr.bf16.mxu0 %v5170
    %5234 = vmatpush1.bf16.msra.mxu0 %v5169
    %5235 = vmatprep.subr.bf16.mxu0 %v5172
    %5236 = vmatpush1.bf16.msra.mxu0 %v5171
    %5237 = vmatprep.subr.bf16.mxu0 %v5174
    %5238 = vmatpush1.bf16.msra.mxu0 %v5173
    %5239 = vmatprep.subr.bf16.mxu0 %v5176
    %5240 = vmatpush1.bf16.msra.mxu0 %v5175
    %5241 = vmatprep.subr.bf16.mxu0 %v5178
    %5242 = vmatpush1.bf16.msra.mxu0 %v5177
    %5243 = vmatprep.mubr.bf16.mxu0 %v4974
    %5244 = vmatmul.mubr.bf16.gmra.mrb[0].mxu0 %v4973
    %v5245 = vpop.f32.mrb[0].mxu0
    %v5246 = vadd.f32 %v5044, %v5245
    %v5247 = vpop.f32.mrb[0].mxu0
    %v5248 = vadd.f32 %v5048, %v5247
    %v5249 = vpop.f32.mrb[0].mxu0
    %v5250 = vadd.f32 %v5044, %v5249
    %v5251 = vpop.f32.mrb[0].mxu0
    %v5252 = vadd.f32 %v5048, %v5251
    %5253 = vmatprep.mubr.bf16.mxu0 %v4976
    %5254 = vmatmul.mubr.bf16.gmra.mrb[0].mxu0 %v4975
    %v5255 = vpop.f32.mrb[0].mxu0
    %v5256 = vadd.f32 %v5044, %v5255
    %v5257 = vpop.f32.mrb[0].mxu0
    %v5258 = vadd.f32 %v5048, %v5257
    %v5259 = vpop.f32.mrb[0].mxu0
    %v5260 = vadd.f32 %v5044, %v5259
    %v5261 = vpop.f32.mrb[0].mxu0
    %v5262 = vadd.f32 %v5048, %v5261
    %5263 = vmatprep.mubr.bf16.mxu0 %v4978
    %5264 = vmatmul.mubr.bf16.gmra.mrb[0].mxu0 %v4977
    %v5265 = vpop.f32.mrb[0].mxu0
    %v5266 = vadd.f32 %v5044, %v5265
    %v5267 = vpop.f32.mrb[0].mxu0
    %v5268 = vadd.f32 %v5048, %v5267
    %v5269 = vpop.f32.mrb[0].mxu0
    %v5270 = vadd.f32 %v5044, %v5269
    %v5271 = vpop.f32.mrb[0].mxu0
    %v5272 = vadd.f32 %v5048, %v5271
    %5273 = vmatprep.mubr.bf16.mxu0 %v4980
    %5274 = vmatmul.mubr.bf16.gmra.mrb[0].mxu0 %v4979
    %v5275 = vpop.f32.mrb[0].mxu0
    %v5276 = vadd.f32 %v5044, %v5275
    %v5277 = vpop.f32.mrb[0].mxu0
    %v5278 = vadd.f32 %v5048, %v5277
    %v5279 = vpop.f32.mrb[0].mxu0
    %v5280 = vadd.f32 %v5044, %v5279
    %v5281 = vpop.f32.mrb[0].mxu0
    %v5282 = vadd.f32 %v5048, %v5281
    %5283 = vmatprep.mubr.bf16.mxu0 %v4982
    %5284 = vmatmul.mubr.bf16.gmra.mrb[0].mxu0 %v4981
    %v5285 = vpop.f32.mrb[0].mxu0
    %v5286 = vadd.f32 %v5044, %v5285
    %v5287 = vpop.f32.mrb[0].mxu0
    %v5288 = vadd.f32 %v5048, %v5287
    %v5289 = vpop.f32.mrb[0].mxu0
    %v5290 = vadd.f32 %v5044, %v5289
    %v5291 = vpop.f32.mrb[0].mxu0
    %v5292 = vadd.f32 %v5048, %v5291
    %5293 = vmatprep.mubr.bf16.mxu0 %v4984
    %5294 = vmatmul.mubr.bf16.gmra.mrb[0].mxu0 %v4983
    %v5295 = vpop.f32.mrb[0].mxu0
    %v5296 = vadd.f32 %v5044, %v5295
    %v5297 = vpop.f32.mrb[0].mxu0
    %v5298 = vadd.f32 %v5048, %v5297
    %v5299 = vpop.f32.mrb[0].mxu0
    %v5300 = vadd.f32 %v5044, %v5299
    %v5301 = vpop.f32.mrb[0].mxu0
    %v5302 = vadd.f32 %v5048, %v5301
    %5303 = vmatprep.mubr.bf16.mxu0 %v4986
    %5304 = vmatmul.mubr.bf16.gmra.mrb[0].mxu0 %v4985
    %v5305 = vpop.f32.mrb[0].mxu0
    %v5306 = vadd.f32 %v5044, %v5305
    %v5307 = vpop.f32.mrb[0].mxu0
    %v5308 = vadd.f32 %v5048, %v5307
    %v5309 = vpop.f32.mrb[0].mxu0
    %v5310 = vadd.f32 %v5044, %v5309
    %v5311 = vpop.f32.mrb[0].mxu0
    %v5312 = vadd.f32 %v5048, %v5311
    %5313 = vmatprep.mubr.bf16.mxu0 %v4988
    %5314 = vmatmul.mubr.bf16.gmra.mrb[0].mxu0 %v4987
    %v5315 = vpop.f32.mrb[0].mxu0
    %v5316 = vadd.f32 %v5044, %v5315
    %v5317 = vpop.f32.mrb[0].mxu0
    %v5318 = vadd.f32 %v5048, %v5317
    %v5319 = vpop.f32.mrb[0].mxu0
    %v5320 = vadd.f32 %v5044, %v5319
    %v5321 = vpop.f32.mrb[0].mxu0
    %v5322 = vadd.f32 %v5048, %v5321
    %5323 = vmatprep.mubr.bf16.mxu0 %v4990
    %5324 = vmatmul.mubr.bf16.gmra.mrb[0].mxu0 %v4989
    %v5325 = vpop.f32.mrb[0].mxu0
    %v5326 = vadd.f32 %v5044, %v5325
    %v5327 = vpop.f32.mrb[0].mxu0
    %v5328 = vadd.f32 %v5048, %v5327
    %v5329 = vpop.f32.mrb[0].mxu0
    %v5330 = vadd.f32 %v5044, %v5329
    %v5331 = vpop.f32.mrb[0].mxu0
    %v5332 = vadd.f32 %v5048, %v5331
    %5333 = vmatprep.mubr.bf16.mxu0 %v4992
    %5334 = vmatmul.mubr.bf16.gmra.mrb[0].mxu0 %v4991
    %v5335 = vpop.f32.mrb[0].mxu0
    %v5336 = vadd.f32 %v5044, %v5335
    %v5337 = vpop.f32.mrb[0].mxu0
    %v5338 = vadd.f32 %v5048, %v5337
    %v5339 = vpop.f32.mrb[0].mxu0
    %v5340 = vadd.f32 %v5044, %v5339
    %v5341 = vpop.f32.mrb[0].mxu0
    %v5342 = vadd.f32 %v5048, %v5341
    %5343 = vmatprep.mubr.bf16.mxu0 %v4994
    %5344 = vmatmul.mubr.bf16.gmra.mrb[0].mxu0 %v4993
    %v5345 = vpop.f32.mrb[0].mxu0
    %v5346 = vadd.f32 %v5044, %v5345
    %v5347 = vpop.f32.mrb[0].mxu0
    %v5348 = vadd.f32 %v5048, %v5347
    %v5349 = vpop.f32.mrb[0].mxu0
    %v5350 = vadd.f32 %v5044, %v5349
    %v5351 = vpop.f32.mrb[0].mxu0
    %v5352 = vadd.f32 %v5048, %v5351
    %5353 = vmatprep.mubr.bf16.mxu0 %v4996
    %5354 = vmatmul.mubr.bf16.gmra.mrb[0].mxu0 %v4995
    %v5355 = vpop.f32.mrb[0].mxu0
    %v5356 = vadd.f32 %v5044, %v5355
    %v5357 = vpop.f32.mrb[0].mxu0
    %v5358 = vadd.f32 %v5048, %v5357
    %v5359 = vpop.f32.mrb[0].mxu0
    %v5360 = vadd.f32 %v5044, %v5359
    %v5361 = vpop.f32.mrb[0].mxu0
    %v5362 = vadd.f32 %v5048, %v5361
    %5363 = vmatprep.mubr.bf16.mxu0 %v4998
    %5364 = vmatmul.mubr.bf16.gmra.mrb[0].mxu0 %v4997
    %v5365 = vpop.f32.mrb[0].mxu0
    %v5366 = vadd.f32 %v5044, %v5365
    %v5367 = vpop.f32.mrb[0].mxu0
    %v5368 = vadd.f32 %v5048, %v5367
    %v5369 = vpop.f32.mrb[0].mxu0
    %v5370 = vadd.f32 %v5044, %v5369
    %v5371 = vpop.f32.mrb[0].mxu0
    %v5372 = vadd.f32 %v5048, %v5371
    %5373 = vmatprep.mubr.bf16.mxu0 %v5000
    %5374 = vmatmul.mubr.bf16.gmra.mrb[0].mxu0 %v4999
    %v5375 = vpop.f32.mrb[0].mxu0
    %v5376 = vadd.f32 %v5044, %v5375
    %v5377 = vpop.f32.mrb[0].mxu0
    %v5378 = vadd.f32 %v5048, %v5377
    %v5379 = vpop.f32.mrb[0].mxu0
    %v5380 = vadd.f32 %v5044, %v5379
    %v5381 = vpop.f32.mrb[0].mxu0
    %v5382 = vadd.f32 %v5048, %v5381
    %5383 = vmatprep.mubr.bf16.mxu0 %v5002
    %5384 = vmatmul.mubr.bf16.gmra.mrb[0].mxu0 %v5001
    %v5385 = vpop.f32.mrb[0].mxu0
    %v5386 = vadd.f32 %v5044, %v5385
    %v5387 = vpop.f32.mrb[0].mxu0
    %v5388 = vadd.f32 %v5048, %v5387
    %v5389 = vpop.f32.mrb[0].mxu0
    %v5390 = vadd.f32 %v5044, %v5389
    %v5391 = vpop.f32.mrb[0].mxu0
    %v5392 = vadd.f32 %v5048, %v5391
    %5393 = vmatprep.mubr.bf16.mxu0 %v5004
    %5394 = vmatmul.mubr.bf16.gmra.mrb[0].mxu0 %v5003
    %v5395 = vpop.f32.mrb[0].mxu0
    %v5396 = vadd.f32 %v5044, %v5395
    %v5397 = vpop.f32.mrb[0].mxu0
    %v5398 = vadd.f32 %v5048, %v5397
    %v5399 = vpop.f32.mrb[0].mxu0
    %v5400 = vadd.f32 %v5044, %v5399
    %v5401 = vpop.f32.mrb[0].mxu0
    %v5402 = vadd.f32 %v5048, %v5401
    %5403 = vdwg.mxu0
    %v5404 = vmin.f32 %v5246, 8.0
    %v5405 = vmin.f32 %v5248, 8.0
    %v5406 = vmin.f32 %v5250, 8.0
    %v5407 = vmin.f32 %v5252, 8.0
    %v5408 = vmin.f32 %v5256, 8.0
    %v5409 = vmin.f32 %v5258, 8.0
    %v5410 = vmin.f32 %v5260, 8.0
    %v5411 = vmin.f32 %v5262, 8.0
    %v5412 = vmin.f32 %v5266, 8.0
    %v5413 = vmin.f32 %v5268, 8.0
    %v5414 = vmin.f32 %v5270, 8.0
    %v5415 = vmin.f32 %v5272, 8.0
    %v5416 = vmin.f32 %v5276, 8.0
    %v5417 = vmin.f32 %v5278, 8.0
    %v5418 = vmin.f32 %v5280, 8.0
    %v5419 = vmin.f32 %v5282, 8.0
    %v5420 = vmin.f32 %v5286, 8.0
    %v5421 = vmin.f32 %v5288, 8.0
    %v5422 = vmin.f32 %v5290, 8.0
    %v5423 = vmin.f32 %v5292, 8.0
    %v5424 = vmin.f32 %v5296, 8.0
    %v5425 = vmin.f32 %v5298, 8.0
    %v5426 = vmin.f32 %v5300, 8.0
    %v5427 = vmin.f32 %v5302, 8.0
    %v5428 = vmin.f32 %v5306, 8.0
    %v5429 = vmin.f32 %v5308, 8.0
    %v5430 = vmin.f32 %v5310, 8.0
    %v5431 = vmin.f32 %v5312, 8.0
    %v5432 = vmin.f32 %v5316, 8.0
    %v5433 = vmin.f32 %v5318, 8.0
    %v5434 = vmin.f32 %v5320, 8.0
    %v5435 = vmin.f32 %v5322, 8.0
    %v5436 = vmin.f32 %v5326, 8.0
    %v5437 = vmin.f32 %v5328, 8.0
    %v5438 = vmin.f32 %v5330, 8.0
    %v5439 = vmin.f32 %v5332, 8.0
    %v5440 = vmin.f32 %v5336, 8.0
    %v5441 = vmin.f32 %v5338, 8.0
    %v5442 = vmin.f32 %v5340, 8.0
    %v5443 = vmin.f32 %v5342, 8.0
    %v5444 = vmin.f32 %v5346, 8.0
    %v5445 = vmin.f32 %v5348, 8.0
    %v5446 = vmin.f32 %v5350, 8.0
    %v5447 = vmin.f32 %v5352, 8.0
    %v5448 = vmin.f32 %v5356, 8.0
    %v5449 = vmin.f32 %v5358, 8.0
    %v5450 = vmin.f32 %v5360, 8.0
    %v5451 = vmin.f32 %v5362, 8.0
    %v5452 = vmin.f32 %v5366, 8.0
    %v5453 = vmin.f32 %v5368, 8.0
    %v5454 = vmin.f32 %v5370, 8.0
    %v5455 = vmin.f32 %v5372, 8.0
    %v5456 = vmin.f32 %v5376, 8.0
    %v5457 = vmin.f32 %v5378, 8.0
    %v5458 = vmin.f32 %v5380, 8.0
    %v5459 = vmin.f32 %v5382, 8.0
    %v5460 = vmin.f32 %v5386, 8.0
    %v5461 = vmin.f32 %v5388, 8.0
    %v5462 = vmin.f32 %v5390, 8.0
    %v5463 = vmin.f32 %v5392, 8.0
    %v5464 = vmin.f32 %v5396, 8.0
    %v5465 = vmin.f32 %v5398, 8.0
    %v5466 = vmin.f32 %v5400, 8.0
    %v5467 = vmin.f32 %v5402, 8.0
    %v5468 = vmul.f32 %v5404, 1.442695
    %v5469 = vpow.pop %v5468
    %v5470 = vmul.f32 %v5405, 1.442695
    %v5471 = vpow.pop %v5470
    %v5472 = vmul.f32 %v5406, 1.442695
    %v5473 = vpow.pop %v5472
    %v5474 = vmul.f32 %v5407, 1.442695
    %v5475 = vpow.pop %v5474
    %v5476 = vmul.f32 %v5408, 1.442695
    %v5477 = vpow.pop %v5476
    %v5478 = vmul.f32 %v5409, 1.442695
    %v5479 = vpow.pop %v5478
    %v5480 = vmul.f32 %v5410, 1.442695
    %v5481 = vpow.pop %v5480
    %v5482 = vmul.f32 %v5411, 1.442695
    %v5483 = vpow.pop %v5482
    %v5484 = vmul.f32 %v5412, 1.442695
    %v5485 = vpow.pop %v5484
    %v5486 = vmul.f32 %v5413, 1.442695
    %v5487 = vpow.pop %v5486
    %v5488 = vmul.f32 %v5414, 1.442695
    %v5489 = vpow.pop %v5488
    %v5490 = vmul.f32 %v5415, 1.442695
    %v5491 = vpow.pop %v5490
    %v5492 = vmul.f32 %v5416, 1.442695
    %v5493 = vpow.pop %v5492
    %v5494 = vmul.f32 %v5417, 1.442695
    %v5495 = vpow.pop %v5494
    %v5496 = vmul.f32 %v5418, 1.442695
    %v5497 = vpow.pop %v5496
    %v5498 = vmul.f32 %v5419, 1.442695
    %v5499 = vpow.pop %v5498
    %v5500 = vmul.f32 %v5420, 1.442695
    %v5501 = vpow.pop %v5500
    %v5502 = vmul.f32 %v5421, 1.442695
    %v5503 = vpow.pop %v5502
    %v5504 = vmul.f32 %v5422, 1.442695
    %v5505 = vpow.pop %v5504
    %v5506 = vmul.f32 %v5423, 1.442695
    %v5507 = vpow.pop %v5506
    %v5508 = vmul.f32 %v5424, 1.442695
    %v5509 = vpow.pop %v5508
    %v5510 = vmul.f32 %v5425, 1.442695
    %v5511 = vpow.pop %v5510
    %v5512 = vmul.f32 %v5426, 1.442695
    %v5513 = vpow.pop %v5512
    %v5514 = vmul.f32 %v5427, 1.442695
    %v5515 = vpow.pop %v5514
    %v5516 = vmul.f32 %v5428, 1.442695
    %v5517 = vpow.pop %v5516
    %v5518 = vmul.f32 %v5429, 1.442695
    %v5519 = vpow.pop %v5518
    %v5520 = vmul.f32 %v5430, 1.442695
    %v5521 = vpow.pop %v5520
    %v5522 = vmul.f32 %v5431, 1.442695
    %v5523 = vpow.pop %v5522
    %v5524 = vmul.f32 %v5432, 1.442695
    %v5525 = vpow.pop %v5524
    %v5526 = vmul.f32 %v5433, 1.442695
    %v5527 = vpow.pop %v5526
    %v5528 = vmul.f32 %v5434, 1.442695
    %v5529 = vpow.pop %v5528
    %v5530 = vmul.f32 %v5435, 1.442695
    %v5531 = vpow.pop %v5530
    %v5532 = vmul.f32 %v5436, 1.442695
    %v5533 = vpow.pop %v5532
    %v5534 = vmul.f32 %v5437, 1.442695
    %v5535 = vpow.pop %v5534
    %v5536 = vmul.f32 %v5438, 1.442695
    %v5537 = vpow.pop %v5536
    %v5538 = vmul.f32 %v5439, 1.442695
    %v5539 = vpow.pop %v5538
    %v5540 = vmul.f32 %v5440, 1.442695
    %v5541 = vpow.pop %v5540
    %v5542 = vmul.f32 %v5441, 1.442695
    %v5543 = vpow.pop %v5542
    %v5544 = vmul.f32 %v5442, 1.442695
    %v5545 = vpow.pop %v5544
    %v5546 = vmul.f32 %v5443, 1.442695
    %v5547 = vpow.pop %v5546
    %v5548 = vmul.f32 %v5444, 1.442695
    %v5549 = vpow.pop %v5548
    %v5550 = vmul.f32 %v5445, 1.442695
    %v5551 = vpow.pop %v5550
    %v5552 = vmul.f32 %v5446, 1.442695
    %v5553 = vpow.pop %v5552
    %v5554 = vmul.f32 %v5447, 1.442695
    %v5555 = vpow.pop %v5554
    %v5556 = vmul.f32 %v5448, 1.442695
    %v5557 = vpow.pop %v5556
    %v5558 = vmul.f32 %v5449, 1.442695
    %v5559 = vpow.pop %v5558
    %v5560 = vmul.f32 %v5450, 1.442695
    %v5561 = vpow.pop %v5560
    %v5562 = vmul.f32 %v5451, 1.442695
    %v5563 = vpow.pop %v5562
    %v5564 = vmul.f32 %v5452, 1.442695
    %v5565 = vpow.pop %v5564
    %v5566 = vmul.f32 %v5453, 1.442695
    %v5567 = vpow.pop %v5566
    %v5568 = vmul.f32 %v5454, 1.442695
    %v5569 = vpow.pop %v5568
    %v5570 = vmul.f32 %v5455, 1.442695
    %v5571 = vpow.pop %v5570
    %v5572 = vmul.f32 %v5456, 1.442695
    %v5573 = vpow.pop %v5572
    %v5574 = vmul.f32 %v5457, 1.442695
    %v5575 = vpow.pop %v5574
    %v5576 = vmul.f32 %v5458, 1.442695
    %v5577 = vpow.pop %v5576
    %v5578 = vmul.f32 %v5459, 1.442695
    %v5579 = vpow.pop %v5578
    %v5580 = vmul.f32 %v5460, 1.442695
    %v5581 = vpow.pop %v5580
    %v5582 = vmul.f32 %v5461, 1.442695
    %v5583 = vpow.pop %v5582
    %v5584 = vmul.f32 %v5462, 1.442695
    %v5585 = vpow.pop %v5584
    %v5586 = vmul.f32 %v5463, 1.442695
    %v5587 = vpow.pop %v5586
    %v5588 = vmul.f32 %v5464, 1.442695
    %v5589 = vpow.pop %v5588
    %v5590 = vmul.f32 %v5465, 1.442695
    %v5591 = vpow.pop %v5590
    %v5592 = vmul.f32 %v5466, 1.442695
    %v5593 = vpow.pop %v5592
    %v5594 = vmul.f32 %v5467, 1.442695
    %v5595 = vpow.pop %v5594
    %v5596 = vadd.f32 %v5469, 2.0
    %v5597 = vadd.f32 %v5471, 2.0
    %v5598 = vadd.f32 %v5473, 2.0
    %v5599 = vadd.f32 %v5475, 2.0
    %v5600 = vadd.f32 %v5477, 2.0
    %v5601 = vadd.f32 %v5479, 2.0
    %v5602 = vadd.f32 %v5481, 2.0
    %v5603 = vadd.f32 %v5483, 2.0
    %v5604 = vadd.f32 %v5485, 2.0
    %v5605 = vadd.f32 %v5487, 2.0
    %v5606 = vadd.f32 %v5489, 2.0
    %v5607 = vadd.f32 %v5491, 2.0
    %v5608 = vadd.f32 %v5493, 2.0
    %v5609 = vadd.f32 %v5495, 2.0
    %v5610 = vadd.f32 %v5497, 2.0
    %v5611 = vadd.f32 %v5499, 2.0
    %v5612 = vadd.f32 %v5501, 2.0
    %v5613 = vadd.f32 %v5503, 2.0
    %v5614 = vadd.f32 %v5505, 2.0
    %v5615 = vadd.f32 %v5507, 2.0
    %v5616 = vadd.f32 %v5509, 2.0
    %v5617 = vadd.f32 %v5511, 2.0
    %v5618 = vadd.f32 %v5513, 2.0
    %v5619 = vadd.f32 %v5515, 2.0
    %v5620 = vadd.f32 %v5517, 2.0
    %v5621 = vadd.f32 %v5519, 2.0
    %v5622 = vadd.f32 %v5521, 2.0
    %v5623 = vadd.f32 %v5523, 2.0
    %v5624 = vadd.f32 %v5525, 2.0
    %v5625 = vadd.f32 %v5527, 2.0
    %v5626 = vadd.f32 %v5529, 2.0
    %v5627 = vadd.f32 %v5531, 2.0
    %v5628 = vadd.f32 %v5533, 2.0
    %v5629 = vadd.f32 %v5535, 2.0
    %v5630 = vadd.f32 %v5537, 2.0
    %v5631 = vadd.f32 %v5539, 2.0
    %v5632 = vadd.f32 %v5541, 2.0
    %v5633 = vadd.f32 %v5543, 2.0
    %v5634 = vadd.f32 %v5545, 2.0
    %v5635 = vadd.f32 %v5547, 2.0
    %v5636 = vadd.f32 %v5549, 2.0
    %v5637 = vadd.f32 %v5551, 2.0
    %v5638 = vadd.f32 %v5553, 2.0
    %v5639 = vadd.f32 %v5555, 2.0
    %v5640 = vadd.f32 %v5557, 2.0
    %v5641 = vadd.f32 %v5559, 2.0
    %v5642 = vadd.f32 %v5561, 2.0
    %v5643 = vadd.f32 %v5563, 2.0
    %v5644 = vadd.f32 %v5565, 2.0
    %v5645 = vadd.f32 %v5567, 2.0
    %v5646 = vadd.f32 %v5569, 2.0
    %v5647 = vadd.f32 %v5571, 2.0
    %v5648 = vadd.f32 %v5573, 2.0
    %v5649 = vadd.f32 %v5575, 2.0
    %v5650 = vadd.f32 %v5577, 2.0
    %v5651 = vadd.f32 %v5579, 2.0
    %v5652 = vadd.f32 %v5581, 2.0
    %v5653 = vadd.f32 %v5583, 2.0
    %v5654 = vadd.f32 %v5585, 2.0
    %v5655 = vadd.f32 %v5587, 2.0
    %v5656 = vadd.f32 %v5589, 2.0
    %v5657 = vadd.f32 %v5591, 2.0
    %v5658 = vadd.f32 %v5593, 2.0
    %v5659 = vadd.f32 %v5595, 2.0
    %v5660 = vmul.f32 %v5469, %v5596
    %v5661 = vmul.f32 %v5471, %v5597
    %v5662 = vmul.f32 %v5473, %v5598
    %v5663 = vmul.f32 %v5475, %v5599
    %v5664 = vmul.f32 %v5477, %v5600
    %v5665 = vmul.f32 %v5479, %v5601
    %v5666 = vmul.f32 %v5481, %v5602
    %v5667 = vmul.f32 %v5483, %v5603
    %v5668 = vmul.f32 %v5485, %v5604
    %v5669 = vmul.f32 %v5487, %v5605
    %v5670 = vmul.f32 %v5489, %v5606
    %v5671 = vmul.f32 %v5491, %v5607
    %v5672 = vmul.f32 %v5493, %v5608
    %v5673 = vmul.f32 %v5495, %v5609
    %v5674 = vmul.f32 %v5497, %v5610
    %v5675 = vmul.f32 %v5499, %v5611
    %v5676 = vmul.f32 %v5501, %v5612
    %v5677 = vmul.f32 %v5503, %v5613
    %v5678 = vmul.f32 %v5505, %v5614
    %v5679 = vmul.f32 %v5507, %v5615
    %v5680 = vmul.f32 %v5509, %v5616
    %v5681 = vmul.f32 %v5511, %v5617
    %v5682 = vmul.f32 %v5513, %v5618
    %v5683 = vmul.f32 %v5515, %v5619
    %v5684 = vmul.f32 %v5517, %v5620
    %v5685 = vmul.f32 %v5519, %v5621
    %v5686 = vmul.f32 %v5521, %v5622
    %v5687 = vmul.f32 %v5523, %v5623
    %v5688 = vmul.f32 %v5525, %v5624
    %v5689 = vmul.f32 %v5527, %v5625
    %v5690 = vmul.f32 %v5529, %v5626
    %v5691 = vmul.f32 %v5531, %v5627
    %v5692 = vmul.f32 %v5533, %v5628
    %v5693 = vmul.f32 %v5535, %v5629
    %v5694 = vmul.f32 %v5537, %v5630
    %v5695 = vmul.f32 %v5539, %v5631
    %v5696 = vmul.f32 %v5541, %v5632
    %v5697 = vmul.f32 %v5543, %v5633
    %v5698 = vmul.f32 %v5545, %v5634
    %v5699 = vmul.f32 %v5547, %v5635
    %v5700 = vmul.f32 %v5549, %v5636
    %v5701 = vmul.f32 %v5551, %v5637
    %v5702 = vmul.f32 %v5553, %v5638
    %v5703 = vmul.f32 %v5555, %v5639
    %v5704 = vmul.f32 %v5557, %v5640
    %v5705 = vmul.f32 %v5559, %v5641
    %v5706 = vmul.f32 %v5561, %v5642
    %v5707 = vmul.f32 %v5563, %v5643
    %v5708 = vmul.f32 %v5565, %v5644
    %v5709 = vmul.f32 %v5567, %v5645
    %v5710 = vmul.f32 %v5569, %v5646
    %v5711 = vmul.f32 %v5571, %v5647
    %v5712 = vmul.f32 %v5573, %v5648
    %v5713 = vmul.f32 %v5575, %v5649
    %v5714 = vmul.f32 %v5577, %v5650
    %v5715 = vmul.f32 %v5579, %v5651
    %v5716 = vmul.f32 %v5581, %v5652
    %v5717 = vmul.f32 %v5583, %v5653
    %v5718 = vmul.f32 %v5585, %v5654
    %v5719 = vmul.f32 %v5587, %v5655
    %v5720 = vmul.f32 %v5589, %v5656
    %v5721 = vmul.f32 %v5591, %v5657
    %v5722 = vmul.f32 %v5593, %v5658
    %v5723 = vmul.f32 %v5595, %v5659
    %v5724 = vadd.f32 %v5660, 2.0
    %v5725 = vadd.f32 %v5661, 2.0
    %v5726 = vadd.f32 %v5662, 2.0
    %v5727 = vadd.f32 %v5663, 2.0
    %v5728 = vadd.f32 %v5664, 2.0
    %v5729 = vadd.f32 %v5665, 2.0
    %v5730 = vadd.f32 %v5666, 2.0
    %v5731 = vadd.f32 %v5667, 2.0
    %v5732 = vadd.f32 %v5668, 2.0
    %v5733 = vadd.f32 %v5669, 2.0
    %v5734 = vadd.f32 %v5670, 2.0
    %v5735 = vadd.f32 %v5671, 2.0
    %v5736 = vadd.f32 %v5672, 2.0
    %v5737 = vadd.f32 %v5673, 2.0
    %v5738 = vadd.f32 %v5674, 2.0
    %v5739 = vadd.f32 %v5675, 2.0
    %v5740 = vadd.f32 %v5676, 2.0
    %v5741 = vadd.f32 %v5677, 2.0
    %v5742 = vadd.f32 %v5678, 2.0
    %v5743 = vadd.f32 %v5679, 2.0
    %v5744 = vadd.f32 %v5680, 2.0
    %v5745 = vadd.f32 %v5681, 2.0
    %v5746 = vadd.f32 %v5682, 2.0
    %v5747 = vadd.f32 %v5683, 2.0
    %v5748 = vadd.f32 %v5684, 2.0
    %v5749 = vadd.f32 %v5685, 2.0
    %v5750 = vadd.f32 %v5686, 2.0
    %v5751 = vadd.f32 %v5687, 2.0
    %v5752 = vadd.f32 %v5688, 2.0
    %v5753 = vadd.f32 %v5689, 2.0
    %v5754 = vadd.f32 %v5690, 2.0
    %v5755 = vadd.f32 %v5691, 2.0
    %v5756 = vadd.f32 %v5692, 2.0
    %v5757 = vadd.f32 %v5693, 2.0
    %v5758 = vadd.f32 %v5694, 2.0
    %v5759 = vadd.f32 %v5695, 2.0
    %v5760 = vadd.f32 %v5696, 2.0
    %v5761 = vadd.f32 %v5697, 2.0
    %v5762 = vadd.f32 %v5698, 2.0
    %v5763 = vadd.f32 %v5699, 2.0
    %v5764 = vadd.f32 %v5700, 2.0
    %v5765 = vadd.f32 %v5701, 2.0
    %v5766 = vadd.f32 %v5702, 2.0
    %v5767 = vadd.f32 %v5703, 2.0
    %v5768 = vadd.f32 %v5704, 2.0
    %v5769 = vadd.f32 %v5705, 2.0
    %v5770 = vadd.f32 %v5706, 2.0
    %v5771 = vadd.f32 %v5707, 2.0
    %v5772 = vadd.f32 %v5708, 2.0
    %v5773 = vadd.f32 %v5709, 2.0
    %v5774 = vadd.f32 %v5710, 2.0
    %v5775 = vadd.f32 %v5711, 2.0
    %v5776 = vadd.f32 %v5712, 2.0
    %v5777 = vadd.f32 %v5713, 2.0
    %v5778 = vadd.f32 %v5714, 2.0
    %v5779 = vadd.f32 %v5715, 2.0
    %v5780 = vadd.f32 %v5716, 2.0
    %v5781 = vadd.f32 %v5717, 2.0
    %v5782 = vadd.f32 %v5718, 2.0
    %v5783 = vadd.f32 %v5719, 2.0
    %v5784 = vadd.f32 %v5720, 2.0
    %v5785 = vadd.f32 %v5721, 2.0
    %v5786 = vadd.f32 %v5722, 2.0
    %v5787 = vadd.f32 %v5723, 2.0
    %v5788 = vrcp.pop %v5724
    %v5789 = vrcp.pop %v5725
    %v5790 = vrcp.pop %v5726
    %v5791 = vrcp.pop %v5727
    %v5792 = vrcp.pop %v5728
    %v5793 = vrcp.pop %v5729
    %v5794 = vrcp.pop %v5730
    %v5795 = vrcp.pop %v5731
    %v5796 = vrcp.pop %v5732
    %v5797 = vrcp.pop %v5733
    %v5798 = vrcp.pop %v5734
    %v5799 = vrcp.pop %v5735
    %v5800 = vrcp.pop %v5736
    %v5801 = vrcp.pop %v5737
    %v5802 = vrcp.pop %v5738
    %v5803 = vrcp.pop %v5739
    %v5804 = vrcp.pop %v5740
    %v5805 = vrcp.pop %v5741
    %v5806 = vrcp.pop %v5742
    %v5807 = vrcp.pop %v5743
    %v5808 = vrcp.pop %v5744
    %v5809 = vrcp.pop %v5745
    %v5810 = vrcp.pop %v5746
    %v5811 = vrcp.pop %v5747
    %v5812 = vrcp.pop %v5748
    %v5813 = vrcp.pop %v5749
    %v5814 = vrcp.pop %v5750
    %v5815 = vrcp.pop %v5751
    %v5816 = vrcp.pop %v5752
    %v5817 = vrcp.pop %v5753
    %v5818 = vrcp.pop %v5754
    %v5819 = vrcp.pop %v5755
    %v5820 = vrcp.pop %v5756
    %v5821 = vrcp.pop %v5757
    %v5822 = vrcp.pop %v5758
    %v5823 = vrcp.pop %v5759
    %v5824 = vrcp.pop %v5760
    %v5825 = vrcp.pop %v5761
    %v5826 = vrcp.pop %v5762
    %v5827 = vrcp.pop %v5763
    %v5828 = vrcp.pop %v5764
    %v5829 = vrcp.pop %v5765
    %v5830 = vrcp.pop %v5766
    %v5831 = vrcp.pop %v5767
    %v5832 = vrcp.pop %v5768
    %v5833 = vrcp.pop %v5769
    %v5834 = vrcp.pop %v5770
    %v5835 = vrcp.pop %v5771
    %v5836 = vrcp.pop %v5772
    %v5837 = vrcp.pop %v5773
    %v5838 = vrcp.pop %v5774
    %v5839 = vrcp.pop %v5775
    %v5840 = vrcp.pop %v5776
    %v5841 = vrcp.pop %v5777
    %v5842 = vrcp.pop %v5778
    %v5843 = vrcp.pop %v5779
    %v5844 = vrcp.pop %v5780
    %v5845 = vrcp.pop %v5781
    %v5846 = vrcp.pop %v5782
    %v5847 = vrcp.pop %v5783
    %v5848 = vrcp.pop %v5784
    %v5849 = vrcp.pop %v5785
    %v5850 = vrcp.pop %v5786
    %v5851 = vrcp.pop %v5787
    %v5852 = vmul.f32 %v5660, %v5788
    %v5853 = vmul.f32 %v5661, %v5789
    %v5854 = vmul.f32 %v5662, %v5790
    %v5855 = vmul.f32 %v5663, %v5791
    %v5856 = vmul.f32 %v5664, %v5792
    %v5857 = vmul.f32 %v5665, %v5793
    %v5858 = vmul.f32 %v5666, %v5794
    %v5859 = vmul.f32 %v5667, %v5795
    %v5860 = vmul.f32 %v5668, %v5796
    %v5861 = vmul.f32 %v5669, %v5797
    %v5862 = vmul.f32 %v5670, %v5798
    %v5863 = vmul.f32 %v5671, %v5799
    %v5864 = vmul.f32 %v5672, %v5800
    %v5865 = vmul.f32 %v5673, %v5801
    %v5866 = vmul.f32 %v5674, %v5802
    %v5867 = vmul.f32 %v5675, %v5803
    %v5868 = vmul.f32 %v5676, %v5804
    %v5869 = vmul.f32 %v5677, %v5805
    %v5870 = vmul.f32 %v5678, %v5806
    %v5871 = vmul.f32 %v5679, %v5807
    %v5872 = vmul.f32 %v5680, %v5808
    %v5873 = vmul.f32 %v5681, %v5809
    %v5874 = vmul.f32 %v5682, %v5810
    %v5875 = vmul.f32 %v5683, %v5811
    %v5876 = vmul.f32 %v5684, %v5812
    %v5877 = vmul.f32 %v5685, %v5813
    %v5878 = vmul.f32 %v5686, %v5814
    %v5879 = vmul.f32 %v5687, %v5815
    %v5880 = vmul.f32 %v5688, %v5816
    %v5881 = vmul.f32 %v5689, %v5817
    %v5882 = vmul.f32 %v5690, %v5818
    %v5883 = vmul.f32 %v5691, %v5819
    %v5884 = vmul.f32 %v5692, %v5820
    %v5885 = vmul.f32 %v5693, %v5821
    %v5886 = vmul.f32 %v5694, %v5822
    %v5887 = vmul.f32 %v5695, %v5823
    %v5888 = vmul.f32 %v5696, %v5824
    %v5889 = vmul.f32 %v5697, %v5825
    %v5890 = vmul.f32 %v5698, %v5826
    %v5891 = vmul.f32 %v5699, %v5827
    %v5892 = vmul.f32 %v5700, %v5828
    %v5893 = vmul.f32 %v5701, %v5829
    %v5894 = vmul.f32 %v5702, %v5830
    %v5895 = vmul.f32 %v5703, %v5831
    %v5896 = vmul.f32 %v5704, %v5832
    %v5897 = vmul.f32 %v5705, %v5833
    %v5898 = vmul.f32 %v5706, %v5834
    %v5899 = vmul.f32 %v5707, %v5835
    %v5900 = vmul.f32 %v5708, %v5836
    %v5901 = vmul.f32 %v5709, %v5837
    %v5902 = vmul.f32 %v5710, %v5838
    %v5903 = vmul.f32 %v5711, %v5839
    %v5904 = vmul.f32 %v5712, %v5840
    %v5905 = vmul.f32 %v5713, %v5841
    %v5906 = vmul.f32 %v5714, %v5842
    %v5907 = vmul.f32 %v5715, %v5843
    %v5908 = vmul.f32 %v5716, %v5844
    %v5909 = vmul.f32 %v5717, %v5845
    %v5910 = vmul.f32 %v5718, %v5846
    %v5911 = vmul.f32 %v5719, %v5847
    %v5912 = vmul.f32 %v5720, %v5848
    %v5913 = vmul.f32 %v5721, %v5849
    %v5914 = vmul.f32 %v5722, %v5850
    %v5915 = vmul.f32 %v5723, %v5851
    %vm5916 = vcmp.gt.f32.partialorder %v5246, 8.0
    %vm5917 = vcmp.gt.f32.partialorder %v5248, 8.0
    %vm5918 = vcmp.gt.f32.partialorder %v5250, 8.0
    %vm5919 = vcmp.gt.f32.partialorder %v5252, 8.0
    %vm5920 = vcmp.gt.f32.partialorder %v5256, 8.0
    %vm5921 = vcmp.gt.f32.partialorder %v5258, 8.0
    %vm5922 = vcmp.gt.f32.partialorder %v5260, 8.0
    %vm5923 = vcmp.gt.f32.partialorder %v5262, 8.0
    %vm5924 = vcmp.gt.f32.partialorder %v5266, 8.0
    %vm5925 = vcmp.gt.f32.partialorder %v5268, 8.0
    %vm5926 = vcmp.gt.f32.partialorder %v5270, 8.0
    %vm5927 = vcmp.gt.f32.partialorder %v5272, 8.0
    %vm5928 = vcmp.gt.f32.partialorder %v5276, 8.0
    %vm5929 = vcmp.gt.f32.partialorder %v5278, 8.0
    %vm5930 = vcmp.gt.f32.partialorder %v5280, 8.0
    %vm5931 = vcmp.gt.f32.partialorder %v5282, 8.0
    %vm5932 = vcmp.gt.f32.partialorder %v5286, 8.0
    %vm5933 = vcmp.gt.f32.partialorder %v5288, 8.0
    %vm5934 = vcmp.gt.f32.partialorder %v5290, 8.0
    %vm5935 = vcmp.gt.f32.partialorder %v5292, 8.0
    %vm5936 = vcmp.gt.f32.partialorder %v5296, 8.0
    %vm5937 = vcmp.gt.f32.partialorder %v5298, 8.0
    %vm5938 = vcmp.gt.f32.partialorder %v5300, 8.0
    %vm5939 = vcmp.gt.f32.partialorder %v5302, 8.0
    %vm5940 = vcmp.gt.f32.partialorder %v5306, 8.0
    %vm5941 = vcmp.gt.f32.partialorder %v5308, 8.0
    %vm5942 = vcmp.gt.f32.partialorder %v5310, 8.0
    %vm5943 = vcmp.gt.f32.partialorder %v5312, 8.0
    %vm5944 = vcmp.gt.f32.partialorder %v5316, 8.0
    %vm5945 = vcmp.gt.f32.partialorder %v5318, 8.0
    %vm5946 = vcmp.gt.f32.partialorder %v5320, 8.0
    %vm5947 = vcmp.gt.f32.partialorder %v5322, 8.0
    %vm5948 = vcmp.gt.f32.partialorder %v5326, 8.0
    %vm5949 = vcmp.gt.f32.partialorder %v5328, 8.0
    %vm5950 = vcmp.gt.f32.partialorder %v5330, 8.0
    %vm5951 = vcmp.gt.f32.partialorder %v5332, 8.0
    %vm5952 = vcmp.gt.f32.partialorder %v5336, 8.0
    %vm5953 = vcmp.gt.f32.partialorder %v5338, 8.0
    %vm5954 = vcmp.gt.f32.partialorder %v5340, 8.0
    %vm5955 = vcmp.gt.f32.partialorder %v5342, 8.0
    %vm5956 = vcmp.gt.f32.partialorder %v5346, 8.0
    %vm5957 = vcmp.gt.f32.partialorder %v5348, 8.0
    %vm5958 = vcmp.gt.f32.partialorder %v5350, 8.0
    %vm5959 = vcmp.gt.f32.partialorder %v5352, 8.0
    %vm5960 = vcmp.gt.f32.partialorder %v5356, 8.0
    %vm5961 = vcmp.gt.f32.partialorder %v5358, 8.0
    %vm5962 = vcmp.gt.f32.partialorder %v5360, 8.0
    %vm5963 = vcmp.gt.f32.partialorder %v5362, 8.0
    %vm5964 = vcmp.gt.f32.partialorder %v5366, 8.0
    %vm5965 = vcmp.gt.f32.partialorder %v5368, 8.0
    %vm5966 = vcmp.gt.f32.partialorder %v5370, 8.0
    %vm5967 = vcmp.gt.f32.partialorder %v5372, 8.0
    %vm5968 = vcmp.gt.f32.partialorder %v5376, 8.0
    %vm5969 = vcmp.gt.f32.partialorder %v5378, 8.0
    %vm5970 = vcmp.gt.f32.partialorder %v5380, 8.0
    %vm5971 = vcmp.gt.f32.partialorder %v5382, 8.0
    %vm5972 = vcmp.gt.f32.partialorder %v5386, 8.0
    %vm5973 = vcmp.gt.f32.partialorder %v5388, 8.0
    %vm5974 = vcmp.gt.f32.partialorder %v5390, 8.0
    %vm5975 = vcmp.gt.f32.partialorder %v5392, 8.0
    %vm5976 = vcmp.gt.f32.partialorder %v5396, 8.0
    %vm5977 = vcmp.gt.f32.partialorder %v5398, 8.0
    %vm5978 = vcmp.gt.f32.partialorder %v5400, 8.0
    %vm5979 = vcmp.gt.f32.partialorder %v5402, 8.0
    %v5980 = vmul.f32 %v5246, %v5852
    %v5981 = vmul.f32 %v5248, %v5853
    %v5982 = vmul.f32 %v5250, %v5854
    %v5983 = vmul.f32 %v5252, %v5855
    %v5984 = vmul.f32 %v5256, %v5856
    %v5985 = vmul.f32 %v5258, %v5857
    %v5986 = vmul.f32 %v5260, %v5858
    %v5987 = vmul.f32 %v5262, %v5859
    %v5988 = vmul.f32 %v5266, %v5860
    %v5989 = vmul.f32 %v5268, %v5861
    %v5990 = vmul.f32 %v5270, %v5862
    %v5991 = vmul.f32 %v5272, %v5863
    %v5992 = vmul.f32 %v5276, %v5864
    %v5993 = vmul.f32 %v5278, %v5865
    %v5994 = vmul.f32 %v5280, %v5866
    %v5995 = vmul.f32 %v5282, %v5867
    %v5996 = vmul.f32 %v5286, %v5868
    %v5997 = vmul.f32 %v5288, %v5869
    %v5998 = vmul.f32 %v5290, %v5870
    %v5999 = vmul.f32 %v5292, %v5871
    %v6000 = vmul.f32 %v5296, %v5872
    %v6001 = vmul.f32 %v5298, %v5873
    %v6002 = vmul.f32 %v5300, %v5874
    %v6003 = vmul.f32 %v5302, %v5875
    %v6004 = vmul.f32 %v5306, %v5876
    %v6005 = vmul.f32 %v5308, %v5877
    %v6006 = vmul.f32 %v5310, %v5878
    %v6007 = vmul.f32 %v5312, %v5879
    %v6008 = vmul.f32 %v5316, %v5880
    %v6009 = vmul.f32 %v5318, %v5881
    %v6010 = vmul.f32 %v5320, %v5882
    %v6011 = vmul.f32 %v5322, %v5883
    %v6012 = vmul.f32 %v5326, %v5884
    %v6013 = vmul.f32 %v5328, %v5885
    %v6014 = vmul.f32 %v5330, %v5886
    %v6015 = vmul.f32 %v5332, %v5887
    %v6016 = vmul.f32 %v5336, %v5888
    %v6017 = vmul.f32 %v5338, %v5889
    %v6018 = vmul.f32 %v5340, %v5890
    %v6019 = vmul.f32 %v5342, %v5891
    %v6020 = vmul.f32 %v5346, %v5892
    %v6021 = vmul.f32 %v5348, %v5893
    %v6022 = vmul.f32 %v5350, %v5894
    %v6023 = vmul.f32 %v5352, %v5895
    %v6024 = vmul.f32 %v5356, %v5896
    %v6025 = vmul.f32 %v5358, %v5897
    %v6026 = vmul.f32 %v5360, %v5898
    %v6027 = vmul.f32 %v5362, %v5899
    %v6028 = vmul.f32 %v5366, %v5900
    %v6029 = vmul.f32 %v5368, %v5901
    %v6030 = vmul.f32 %v5370, %v5902
    %v6031 = vmul.f32 %v5372, %v5903
    %v6032 = vmul.f32 %v5376, %v5904
    %v6033 = vmul.f32 %v5378, %v5905
    %v6034 = vmul.f32 %v5380, %v5906
    %v6035 = vmul.f32 %v5382, %v5907
    %v6036 = vmul.f32 %v5386, %v5908
    %v6037 = vmul.f32 %v5388, %v5909
    %v6038 = vmul.f32 %v5390, %v5910
    %v6039 = vmul.f32 %v5392, %v5911
    %v6040 = vmul.f32 %v5396, %v5912
    %v6041 = vmul.f32 %v5398, %v5913
    %v6042 = vmul.f32 %v5400, %v5914
    %v6043 = vmul.f32 %v5402, %v5915
    %v6044 = vsel %vm5916, %v5246, %v5980
    %v6045 = vsel %vm5917, %v5248, %v5981
    %v6046 = vsel %vm5918, %v5250, %v5982
    %v6047 = vsel %vm5919, %v5252, %v5983
    %v6048 = vsel %vm5920, %v5256, %v5984
    %v6049 = vsel %vm5921, %v5258, %v5985
    %v6050 = vsel %vm5922, %v5260, %v5986
    %v6051 = vsel %vm5923, %v5262, %v5987
    %v6052 = vsel %vm5924, %v5266, %v5988
    %v6053 = vsel %vm5925, %v5268, %v5989
    %v6054 = vsel %vm5926, %v5270, %v5990
    %v6055 = vsel %vm5927, %v5272, %v5991
    %v6056 = vsel %vm5928, %v5276, %v5992
    %v6057 = vsel %vm5929, %v5278, %v5993
    %v6058 = vsel %vm5930, %v5280, %v5994
    %v6059 = vsel %vm5931, %v5282, %v5995
    %v6060 = vsel %vm5932, %v5286, %v5996
    %v6061 = vsel %vm5933, %v5288, %v5997
    %v6062 = vsel %vm5934, %v5290, %v5998
    %v6063 = vsel %vm5935, %v5292, %v5999
    %v6064 = vsel %vm5936, %v5296, %v6000
    %v6065 = vsel %vm5937, %v5298, %v6001
    %v6066 = vsel %vm5938, %v5300, %v6002
    %v6067 = vsel %vm5939, %v5302, %v6003
    %v6068 = vsel %vm5940, %v5306, %v6004
    %v6069 = vsel %vm5941, %v5308, %v6005
    %v6070 = vsel %vm5942, %v5310, %v6006
    %v6071 = vsel %vm5943, %v5312, %v6007
    %v6072 = vsel %vm5944, %v5316, %v6008
    %v6073 = vsel %vm5945, %v5318, %v6009
    %v6074 = vsel %vm5946, %v5320, %v6010
    %v6075 = vsel %vm5947, %v5322, %v6011
    %v6076 = vsel %vm5948, %v5326, %v6012
    %v6077 = vsel %vm5949, %v5328, %v6013
    %v6078 = vsel %vm5950, %v5330, %v6014
    %v6079 = vsel %vm5951, %v5332, %v6015
    %v6080 = vsel %vm5952, %v5336, %v6016
    %v6081 = vsel %vm5953, %v5338, %v6017
    %v6082 = vsel %vm5954, %v5340, %v6018
    %v6083 = vsel %vm5955, %v5342, %v6019
    %v6084 = vsel %vm5956, %v5346, %v6020
    %v6085 = vsel %vm5957, %v5348, %v6021
    %v6086 = vsel %vm5958, %v5350, %v6022
    %v6087 = vsel %vm5959, %v5352, %v6023
    %v6088 = vsel %vm5960, %v5356, %v6024
    %v6089 = vsel %vm5961, %v5358, %v6025
    %v6090 = vsel %vm5962, %v5360, %v6026
    %v6091 = vsel %vm5963, %v5362, %v6027
    %v6092 = vsel %vm5964, %v5366, %v6028
    %v6093 = vsel %vm5965, %v5368, %v6029
    %v6094 = vsel %vm5966, %v5370, %v6030
    %v6095 = vsel %vm5967, %v5372, %v6031
    %v6096 = vsel %vm5968, %v5376, %v6032
    %v6097 = vsel %vm5969, %v5378, %v6033
    %v6098 = vsel %vm5970, %v5380, %v6034
    %v6099 = vsel %vm5971, %v5382, %v6035
    %v6100 = vsel %vm5972, %v5386, %v6036
    %v6101 = vsel %vm5973, %v5388, %v6037
    %v6102 = vsel %vm5974, %v5390, %v6038
    %v6103 = vsel %vm5975, %v5392, %v6039
    %v6104 = vsel %vm5976, %v5396, %v6040
    %v6105 = vsel %vm5977, %v5398, %v6041
    %v6106 = vsel %vm5978, %v5400, %v6042
    %v6107 = vsel %vm5979, %v5402, %v6043
    %v6108 = vpack.c.bf16 %v6046, %v6044
    %v6109 = vpack.c.bf16 %v6047, %v6045
    %v6110 = vpack.c.bf16 %v6050, %v6048
    %v6111 = vpack.c.bf16 %v6051, %v6049
    %v6112 = vpack.c.bf16 %v6054, %v6052
    %v6113 = vpack.c.bf16 %v6055, %v6053
    %v6114 = vpack.c.bf16 %v6058, %v6056
    %v6115 = vpack.c.bf16 %v6059, %v6057
    %v6116 = vpack.c.bf16 %v6062, %v6060
    %v6117 = vpack.c.bf16 %v6063, %v6061
    %v6118 = vpack.c.bf16 %v6066, %v6064
    %v6119 = vpack.c.bf16 %v6067, %v6065
    %v6120 = vpack.c.bf16 %v6070, %v6068
    %v6121 = vpack.c.bf16 %v6071, %v6069
    %v6122 = vpack.c.bf16 %v6074, %v6072
    %v6123 = vpack.c.bf16 %v6075, %v6073
    %v6124 = vpack.c.bf16 %v6078, %v6076
    %v6125 = vpack.c.bf16 %v6079, %v6077
    %v6126 = vpack.c.bf16 %v6082, %v6080
    %v6127 = vpack.c.bf16 %v6083, %v6081
    %v6128 = vpack.c.bf16 %v6086, %v6084
    %v6129 = vpack.c.bf16 %v6087, %v6085
    %v6130 = vpack.c.bf16 %v6090, %v6088
    %v6131 = vpack.c.bf16 %v6091, %v6089
    %v6132 = vpack.c.bf16 %v6094, %v6092
    %v6133 = vpack.c.bf16 %v6095, %v6093
    %v6134 = vpack.c.bf16 %v6098, %v6096
    %v6135 = vpack.c.bf16 %v6099, %v6097
    %v6136 = vpack.c.bf16 %v6102, %v6100
    %v6137 = vpack.c.bf16 %v6103, %v6101
    %v6138 = vpack.c.bf16 %v6106, %v6104
    %v6139 = vpack.c.bf16 %v6107, %v6105
    %s6140 = scalar_lea.vmem [#allocation4], 256
    %v6141 = vld [vmem:[%s6140] sm:$0xff]
    %v6142 = vld [vmem:[%s6140 + $0x8] sm:$0xff]
    %v6143 = vld [vmem:[%s6140 + $0x10] sm:$0xff]
    %v6144 = vld [vmem:[%s6140 + $0x18] sm:$0xff]
    %v6145 = vld [vmem:[%s6140 + $0x20] sm:$0xff]
    %v6146 = vld [vmem:[%s6140 + $0x28] sm:$0xff]
    %v6147 = vld [vmem:[%s6140 + $0x30] sm:$0xff]
    %v6148 = vld [vmem:[%s6140 + $0x38] sm:$0xff]
    %v6149 = vld [vmem:[%s6140 + $0x40] sm:$0xff]
    %v6150 = vld [vmem:[%s6140 + $0x48] sm:$0xff]
    %v6151 = vld [vmem:[%s6140 + $0x50] sm:$0xff]
    %v6152 = vld [vmem:[%s6140 + $0x58] sm:$0xff]
    %v6153 = vld [vmem:[%s6140 + $0x60] sm:$0xff]
    %v6154 = vld [vmem:[%s6140 + $0x68] sm:$0xff]
    %v6155 = vld [vmem:[%s6140 + $0x70] sm:$0xff]
    %v6156 = vld [vmem:[%s6140 + $0x78] sm:$0xff]
    %v6157 = vld [vmem:[%s6140 + $0x80] sm:$0xff]
    %v6158 = vld [vmem:[%s6140 + $0x88] sm:$0xff]
    %v6159 = vld [vmem:[%s6140 + $0x90] sm:$0xff]
    %v6160 = vld [vmem:[%s6140 + $0x98] sm:$0xff]
    %v6161 = vld [vmem:[%s6140 + $0xa0] sm:$0xff]
    %v6162 = vld [vmem:[%s6140 + $0xa8] sm:$0xff]
    %v6163 = vld [vmem:[%s6140 + $0xb0] sm:$0xff]
    %v6164 = vld [vmem:[%s6140 + $0xb8] sm:$0xff]
    %v6165 = vld [vmem:[%s6140 + $0xc0] sm:$0xff]
    %v6166 = vld [vmem:[%s6140 + $0xc8] sm:$0xff]
    %v6167 = vld [vmem:[%s6140 + $0xd0] sm:$0xff]
    %v6168 = vld [vmem:[%s6140 + $0xd8] sm:$0xff]
    %v6169 = vld [vmem:[%s6140 + $0xe0] sm:$0xff]
    %v6170 = vld [vmem:[%s6140 + $0xe8] sm:$0xff]
    %v6171 = vld [vmem:[%s6140 + $0xf0] sm:$0xff]
    %v6172 = vld [vmem:[%s6140 + $0xf8] sm:$0xff]
    %s6173 = scalar_lea.vmem %s6, 2
    %v6174 = vld [vmem:[%s6173] sm:$0x3]
    %v6176 = vlaneseq
    %v6177 = vshrl.u32 %v6176, 7
    %v6178 = vsub.s32 0, %v6177
    %v6179 = vrot.slane %v6174, %v6178
    %v6180 = vlaneseq
    %v6181 = vshrl.u32 %v6180, 7
    %v6182 = vsub.s32 1, %v6181
    %v6183 = vrot.slane %v6174, %v6182
    %v6218 = vunpack.c.l.b16 %v6141
    %v6219 = vunpack.c.h.b16 %v6141
    %v6220 = vunpack.c.l.b16 %v6142
    %v6221 = vunpack.c.h.b16 %v6142
    %v6222 = vunpack.c.l.b16 %v6143
    %v6223 = vunpack.c.h.b16 %v6143
    %v6224 = vunpack.c.l.b16 %v6144
    %v6225 = vunpack.c.h.b16 %v6144
    %v6226 = vunpack.c.l.b16 %v6145
    %v6227 = vunpack.c.h.b16 %v6145
    %v6228 = vunpack.c.l.b16 %v6146
    %v6229 = vunpack.c.h.b16 %v6146
    %v6230 = vunpack.c.l.b16 %v6147
    %v6231 = vunpack.c.h.b16 %v6147
    %v6232 = vunpack.c.l.b16 %v6148
    %v6233 = vunpack.c.h.b16 %v6148
    %v6234 = vunpack.c.l.b16 %v6149
    %v6235 = vunpack.c.h.b16 %v6149
    %v6236 = vunpack.c.l.b16 %v6150
    %v6237 = vunpack.c.h.b16 %v6150
    %v6238 = vunpack.c.l.b16 %v6151
    %v6239 = vunpack.c.h.b16 %v6151
    %v6240 = vunpack.c.l.b16 %v6152
    %v6241 = vunpack.c.h.b16 %v6152
    %v6242 = vunpack.c.l.b16 %v6153
    %v6243 = vunpack.c.h.b16 %v6153
    %v6244 = vunpack.c.l.b16 %v6154
    %v6245 = vunpack.c.h.b16 %v6154
    %v6246 = vunpack.c.l.b16 %v6155
    %v6247 = vunpack.c.h.b16 %v6155
    %v6248 = vunpack.c.l.b16 %v6156
    %v6249 = vunpack.c.h.b16 %v6156
    %v6250 = vunpack.c.l.b16 %v6157
    %v6251 = vunpack.c.h.b16 %v6157
    %v6252 = vunpack.c.l.b16 %v6158
    %v6253 = vunpack.c.h.b16 %v6158
    %v6254 = vunpack.c.l.b16 %v6159
    %v6255 = vunpack.c.h.b16 %v6159
    %v6256 = vunpack.c.l.b16 %v6160
    %v6257 = vunpack.c.h.b16 %v6160
    %v6258 = vunpack.c.l.b16 %v6161
    %v6259 = vunpack.c.h.b16 %v6161
    %v6260 = vunpack.c.l.b16 %v6162
    %v6261 = vunpack.c.h.b16 %v6162
    %v6262 = vunpack.c.l.b16 %v6163
    %v6263 = vunpack.c.h.b16 %v6163
    %v6264 = vunpack.c.l.b16 %v6164
    %v6265 = vunpack.c.h.b16 %v6164
    %v6266 = vunpack.c.l.b16 %v6165
    %v6267 = vunpack.c.h.b16 %v6165
    %v6268 = vunpack.c.l.b16 %v6166
    %v6269 = vunpack.c.h.b16 %v6166
    %v6270 = vunpack.c.l.b16 %v6167
    %v6271 = vunpack.c.h.b16 %v6167
    %v6272 = vunpack.c.l.b16 %v6168
    %v6273 = vunpack.c.h.b16 %v6168
    %v6274 = vunpack.c.l.b16 %v6169
    %v6275 = vunpack.c.h.b16 %v6169
    %v6276 = vunpack.c.l.b16 %v6170
    %v6277 = vunpack.c.h.b16 %v6170
    %v6278 = vunpack.c.l.b16 %v6171
    %v6279 = vunpack.c.h.b16 %v6171
    %v6280 = vunpack.c.l.b16 %v6172
    %v6281 = vunpack.c.h.b16 %v6172
    %v6282 = vpack.c.b16 %v6220, %v6218
    %v6283 = vpack.c.b16 %v6221, %v6219
    %v6284 = vpack.c.b16 %v6224, %v6222
    %v6285 = vpack.c.b16 %v6225, %v6223
    %v6286 = vpack.c.b16 %v6228, %v6226
    %v6287 = vpack.c.b16 %v6229, %v6227
    %v6288 = vpack.c.b16 %v6232, %v6230
    %v6289 = vpack.c.b16 %v6233, %v6231
    %v6290 = vpack.c.b16 %v6236, %v6234
    %v6291 = vpack.c.b16 %v6237, %v6235
    %v6292 = vpack.c.b16 %v6240, %v6238
    %v6293 = vpack.c.b16 %v6241, %v6239
    %v6294 = vpack.c.b16 %v6244, %v6242
    %v6295 = vpack.c.b16 %v6245, %v6243
    %v6296 = vpack.c.b16 %v6248, %v6246
    %v6297 = vpack.c.b16 %v6249, %v6247
    %v6298 = vpack.c.b16 %v6252, %v6250
    %v6299 = vpack.c.b16 %v6253, %v6251
    %v6300 = vpack.c.b16 %v6256, %v6254
    %v6301 = vpack.c.b16 %v6257, %v6255
    %v6302 = vpack.c.b16 %v6260, %v6258
    %v6303 = vpack.c.b16 %v6261, %v6259
    %v6304 = vpack.c.b16 %v6264, %v6262
    %v6305 = vpack.c.b16 %v6265, %v6263
    %v6306 = vpack.c.b16 %v6268, %v6266
    %v6307 = vpack.c.b16 %v6269, %v6267
    %v6308 = vpack.c.b16 %v6272, %v6270
    %v6309 = vpack.c.b16 %v6273, %v6271
    %v6310 = vpack.c.b16 %v6276, %v6274
    %v6311 = vpack.c.b16 %v6277, %v6275
    %v6312 = vpack.c.b16 %v6280, %v6278
    %v6313 = vpack.c.b16 %v6281, %v6279
    %6346 = vmatprep.subr.bf16.mxu0 %v6283
    %6347 = vmatpush1.bf16.msra.mxu0 %v6282
    %6348 = vmatprep.subr.bf16.mxu0 %v6285
    %6349 = vmatpush1.bf16.msra.mxu0 %v6284
    %6350 = vmatprep.subr.bf16.mxu0 %v6287
    %6351 = vmatpush1.bf16.msra.mxu0 %v6286
    %6352 = vmatprep.subr.bf16.mxu0 %v6289
    %6353 = vmatpush1.bf16.msra.mxu0 %v6288
    %6354 = vmatprep.subr.bf16.mxu0 %v6291
    %6355 = vmatpush1.bf16.msra.mxu0 %v6290
    %6356 = vmatprep.subr.bf16.mxu0 %v6293
    %6357 = vmatpush1.bf16.msra.mxu0 %v6292
    %6358 = vmatprep.subr.bf16.mxu0 %v6295
    %6359 = vmatpush1.bf16.msra.mxu0 %v6294
    %6360 = vmatprep.subr.bf16.mxu0 %v6297
    %6361 = vmatpush1.bf16.msra.mxu0 %v6296
    %6362 = vmatprep.subr.bf16.mxu0 %v6299
    %6363 = vmatpush1.bf16.msra.mxu0 %v6298
    %6364 = vmatprep.subr.bf16.mxu0 %v6301
    %6365 = vmatpush1.bf16.msra.mxu0 %v6300
    %6366 = vmatprep.subr.bf16.mxu0 %v6303
    %6367 = vmatpush1.bf16.msra.mxu0 %v6302
    %6368 = vmatprep.subr.bf16.mxu0 %v6305
    %6369 = vmatpush1.bf16.msra.mxu0 %v6304
    %6370 = vmatprep.subr.bf16.mxu0 %v6307
    %6371 = vmatpush1.bf16.msra.mxu0 %v6306
    %6372 = vmatprep.subr.bf16.mxu0 %v6309
    %6373 = vmatpush1.bf16.msra.mxu0 %v6308
    %6374 = vmatprep.subr.bf16.mxu0 %v6311
    %6375 = vmatpush1.bf16.msra.mxu0 %v6310
    %6376 = vmatprep.subr.bf16.mxu0 %v6313
    %6377 = vmatpush1.bf16.msra.mxu0 %v6312
    %6378 = vmatprep.mubr.bf16.mxu0 %v6109
    %6379 = vmatmul.mubr.bf16.gmra.mrb[0].mxu0 %v6108
    %v6380 = vpop.f32.mrb[0].mxu0
    %v6381 = vadd.f32 %v6179, %v6380
    %v6382 = vpop.f32.mrb[0].mxu0
    %v6383 = vadd.f32 %v6183, %v6382
    %v6384 = vpop.f32.mrb[0].mxu0
    %v6385 = vadd.f32 %v6179, %v6384
    %v6386 = vpop.f32.mrb[0].mxu0
    %v6387 = vadd.f32 %v6183, %v6386
    %6388 = vmatprep.mubr.bf16.mxu0 %v6111
    %6389 = vmatmul.mubr.bf16.gmra.mrb[0].mxu0 %v6110
    %v6390 = vpop.f32.mrb[0].mxu0
    %v6391 = vadd.f32 %v6179, %v6390
    %v6392 = vpop.f32.mrb[0].mxu0
    %v6393 = vadd.f32 %v6183, %v6392
    %v6394 = vpop.f32.mrb[0].mxu0
    %v6395 = vadd.f32 %v6179, %v6394
    %v6396 = vpop.f32.mrb[0].mxu0
    %v6397 = vadd.f32 %v6183, %v6396
    %6398 = vmatprep.mubr.bf16.mxu0 %v6113
    %6399 = vmatmul.mubr.bf16.gmra.mrb[0].mxu0 %v6112
    %v6400 = vpop.f32.mrb[0].mxu0
    %v6401 = vadd.f32 %v6179, %v6400
    %v6402 = vpop.f32.mrb[0].mxu0
    %v6403 = vadd.f32 %v6183, %v6402
    %v6404 = vpop.f32.mrb[0].mxu0
    %v6405 = vadd.f32 %v6179, %v6404
    %v6406 = vpop.f32.mrb[0].mxu0
    %v6407 = vadd.f32 %v6183, %v6406
    %6408 = vmatprep.mubr.bf16.mxu0 %v6115
    %6409 = vmatmul.mubr.bf16.gmra.mrb[0].mxu0 %v6114
    %v6410 = vpop.f32.mrb[0].mxu0
    %v6411 = vadd.f32 %v6179, %v6410
    %v6412 = vpop.f32.mrb[0].mxu0
    %v6413 = vadd.f32 %v6183, %v6412
    %v6414 = vpop.f32.mrb[0].mxu0
    %v6415 = vadd.f32 %v6179, %v6414
    %v6416 = vpop.f32.mrb[0].mxu0
    %v6417 = vadd.f32 %v6183, %v6416
    %6418 = vmatprep.mubr.bf16.mxu0 %v6117
    %6419 = vmatmul.mubr.bf16.gmra.mrb[0].mxu0 %v6116
    %v6420 = vpop.f32.mrb[0].mxu0
    %v6421 = vadd.f32 %v6179, %v6420
    %v6422 = vpop.f32.mrb[0].mxu0
    %v6423 = vadd.f32 %v6183, %v6422
    %v6424 = vpop.f32.mrb[0].mxu0
    %v6425 = vadd.f32 %v6179, %v6424
    %v6426 = vpop.f32.mrb[0].mxu0
    %v6427 = vadd.f32 %v6183, %v6426
    %6428 = vmatprep.mubr.bf16.mxu0 %v6119
    %6429 = vmatmul.mubr.bf16.gmra.mrb[0].mxu0 %v6118
    %v6430 = vpop.f32.mrb[0].mxu0
    %v6431 = vadd.f32 %v6179, %v6430
    %v6432 = vpop.f32.mrb[0].mxu0
    %v6433 = vadd.f32 %v6183, %v6432
    %v6434 = vpop.f32.mrb[0].mxu0
    %v6435 = vadd.f32 %v6179, %v6434
    %v6436 = vpop.f32.mrb[0].mxu0
    %v6437 = vadd.f32 %v6183, %v6436
    %6438 = vmatprep.mubr.bf16.mxu0 %v6121
    %6439 = vmatmul.mubr.bf16.gmra.mrb[0].mxu0 %v6120
    %v6440 = vpop.f32.mrb[0].mxu0
    %v6441 = vadd.f32 %v6179, %v6440
    %v6442 = vpop.f32.mrb[0].mxu0
    %v6443 = vadd.f32 %v6183, %v6442
    %v6444 = vpop.f32.mrb[0].mxu0
    %v6445 = vadd.f32 %v6179, %v6444
    %v6446 = vpop.f32.mrb[0].mxu0
    %v6447 = vadd.f32 %v6183, %v6446
    %6448 = vmatprep.mubr.bf16.mxu0 %v6123
    %6449 = vmatmul.mubr.bf16.gmra.mrb[0].mxu0 %v6122
    %v6450 = vpop.f32.mrb[0].mxu0
    %v6451 = vadd.f32 %v6179, %v6450
    %v6452 = vpop.f32.mrb[0].mxu0
    %v6453 = vadd.f32 %v6183, %v6452
    %v6454 = vpop.f32.mrb[0].mxu0
    %v6455 = vadd.f32 %v6179, %v6454
    %v6456 = vpop.f32.mrb[0].mxu0
    %v6457 = vadd.f32 %v6183, %v6456
    %6458 = vmatprep.mubr.bf16.mxu0 %v6125
    %6459 = vmatmul.mubr.bf16.gmra.mrb[0].mxu0 %v6124
    %v6460 = vpop.f32.mrb[0].mxu0
    %v6461 = vadd.f32 %v6179, %v6460
    %v6462 = vpop.f32.mrb[0].mxu0
    %v6463 = vadd.f32 %v6183, %v6462
    %v6464 = vpop.f32.mrb[0].mxu0
    %v6465 = vadd.f32 %v6179, %v6464
    %v6466 = vpop.f32.mrb[0].mxu0
    %v6467 = vadd.f32 %v6183, %v6466
    %6468 = vmatprep.mubr.bf16.mxu0 %v6127
    %6469 = vmatmul.mubr.bf16.gmra.mrb[0].mxu0 %v6126
    %v6470 = vpop.f32.mrb[0].mxu0
    %v6471 = vadd.f32 %v6179, %v6470
    %v6472 = vpop.f32.mrb[0].mxu0
    %v6473 = vadd.f32 %v6183, %v6472
    %v6474 = vpop.f32.mrb[0].mxu0
    %v6475 = vadd.f32 %v6179, %v6474
    %v6476 = vpop.f32.mrb[0].mxu0
    %v6477 = vadd.f32 %v6183, %v6476
    %6478 = vmatprep.mubr.bf16.mxu0 %v6129
    %6479 = vmatmul.mubr.bf16.gmra.mrb[0].mxu0 %v6128
    %v6480 = vpop.f32.mrb[0].mxu0
    %v6481 = vadd.f32 %v6179, %v6480
    %v6482 = vpop.f32.mrb[0].mxu0
    %v6483 = vadd.f32 %v6183, %v6482
    %v6484 = vpop.f32.mrb[0].mxu0
    %v6485 = vadd.f32 %v6179, %v6484
    %v6486 = vpop.f32.mrb[0].mxu0
    %v6487 = vadd.f32 %v6183, %v6486
    %6488 = vmatprep.mubr.bf16.mxu0 %v6131
    %6489 = vmatmul.mubr.bf16.gmra.mrb[0].mxu0 %v6130
    %v6490 = vpop.f32.mrb[0].mxu0
    %v6491 = vadd.f32 %v6179, %v6490
    %v6492 = vpop.f32.mrb[0].mxu0
    %v6493 = vadd.f32 %v6183, %v6492
    %v6494 = vpop.f32.mrb[0].mxu0
    %v6495 = vadd.f32 %v6179, %v6494
    %v6496 = vpop.f32.mrb[0].mxu0
    %v6497 = vadd.f32 %v6183, %v6496
    %6498 = vmatprep.mubr.bf16.mxu0 %v6133
    %6499 = vmatmul.mubr.bf16.gmra.mrb[0].mxu0 %v6132
    %v6500 = vpop.f32.mrb[0].mxu0
    %v6501 = vadd.f32 %v6179, %v6500
    %v6502 = vpop.f32.mrb[0].mxu0
    %v6503 = vadd.f32 %v6183, %v6502
    %v6504 = vpop.f32.mrb[0].mxu0
    %v6505 = vadd.f32 %v6179, %v6504
    %v6506 = vpop.f32.mrb[0].mxu0
    %v6507 = vadd.f32 %v6183, %v6506
    %6508 = vmatprep.mubr.bf16.mxu0 %v6135
    %6509 = vmatmul.mubr.bf16.gmra.mrb[0].mxu0 %v6134
    %v6510 = vpop.f32.mrb[0].mxu0
    %v6511 = vadd.f32 %v6179, %v6510
    %v6512 = vpop.f32.mrb[0].mxu0
    %v6513 = vadd.f32 %v6183, %v6512
    %v6514 = vpop.f32.mrb[0].mxu0
    %v6515 = vadd.f32 %v6179, %v6514
    %v6516 = vpop.f32.mrb[0].mxu0
    %v6517 = vadd.f32 %v6183, %v6516
    %6518 = vmatprep.mubr.bf16.mxu0 %v6137
    %6519 = vmatmul.mubr.bf16.gmra.mrb[0].mxu0 %v6136
    %v6520 = vpop.f32.mrb[0].mxu0
    %v6521 = vadd.f32 %v6179, %v6520
    %v6522 = vpop.f32.mrb[0].mxu0
    %v6523 = vadd.f32 %v6183, %v6522
    %v6524 = vpop.f32.mrb[0].mxu0
    %v6525 = vadd.f32 %v6179, %v6524
    %v6526 = vpop.f32.mrb[0].mxu0
    %v6527 = vadd.f32 %v6183, %v6526
    %6528 = vmatprep.mubr.bf16.mxu0 %v6139
    %6529 = vmatmul.mubr.bf16.gmra.mrb[0].mxu0 %v6138
    %v6530 = vpop.f32.mrb[0].mxu0
    %v6531 = vadd.f32 %v6179, %v6530
    %v6532 = vpop.f32.mrb[0].mxu0
    %v6533 = vadd.f32 %v6183, %v6532
    %v6534 = vpop.f32.mrb[0].mxu0
    %v6535 = vadd.f32 %v6179, %v6534
    %v6536 = vpop.f32.mrb[0].mxu0
    %v6537 = vadd.f32 %v6183, %v6536
    %6538 = vdwg.mxu0
    %v6539 = vadd.f32 %v6381, %v4205
    %v6540 = vadd.f32 %v6383, %v4206
    %v6541 = vadd.f32 %v6385, %v4207
    %v6542 = vadd.f32 %v6387, %v4208
    %v6543 = vadd.f32 %v6391, %v4209
    %v6544 = vadd.f32 %v6393, %v4210
    %v6545 = vadd.f32 %v6395, %v4211
    %v6546 = vadd.f32 %v6397, %v4212
    %v6547 = vadd.f32 %v6401, %v4213
    %v6548 = vadd.f32 %v6403, %v4214
    %v6549 = vadd.f32 %v6405, %v4215
    %v6550 = vadd.f32 %v6407, %v4216
    %v6551 = vadd.f32 %v6411, %v4217
    %v6552 = vadd.f32 %v6413, %v4218
    %v6553 = vadd.f32 %v6415, %v4219
    %v6554 = vadd.f32 %v6417, %v4220
    %v6555 = vadd.f32 %v6421, %v4221
    %v6556 = vadd.f32 %v6423, %v4222
    %v6557 = vadd.f32 %v6425, %v4223
    %v6558 = vadd.f32 %v6427, %v4224
    %v6559 = vadd.f32 %v6431, %v4225
    %v6560 = vadd.f32 %v6433, %v4226
    %v6561 = vadd.f32 %v6435, %v4227
    %v6562 = vadd.f32 %v6437, %v4228
    %v6563 = vadd.f32 %v6441, %v4229
    %v6564 = vadd.f32 %v6443, %v4230
    %v6565 = vadd.f32 %v6445, %v4231
    %v6566 = vadd.f32 %v6447, %v4232
    %v6567 = vadd.f32 %v6451, %v4233
    %v6568 = vadd.f32 %v6453, %v4234
    %v6569 = vadd.f32 %v6455, %v4235
    %v6570 = vadd.f32 %v6457, %v4236
    %v6571 = vadd.f32 %v6461, %v4237
    %v6572 = vadd.f32 %v6463, %v4238
    %v6573 = vadd.f32 %v6465, %v4239
    %v6574 = vadd.f32 %v6467, %v4240
    %v6575 = vadd.f32 %v6471, %v4241
    %v6576 = vadd.f32 %v6473, %v4242
    %v6577 = vadd.f32 %v6475, %v4243
    %v6578 = vadd.f32 %v6477, %v4244
    %v6579 = vadd.f32 %v6481, %v4245
    %v6580 = vadd.f32 %v6483, %v4246
    %v6581 = vadd.f32 %v6485, %v4247
    %v6582 = vadd.f32 %v6487, %v4248
    %v6583 = vadd.f32 %v6491, %v4249
    %v6584 = vadd.f32 %v6493, %v4250
    %v6585 = vadd.f32 %v6495, %v4251
    %v6586 = vadd.f32 %v6497, %v4252
    %v6587 = vadd.f32 %v6501, %v4253
    %v6588 = vadd.f32 %v6503, %v4254
    %v6589 = vadd.f32 %v6505, %v4255
    %v6590 = vadd.f32 %v6507, %v4256
    %v6591 = vadd.f32 %v6511, %v4257
    %v6592 = vadd.f32 %v6513, %v4258
    %v6593 = vadd.f32 %v6515, %v4259
    %v6594 = vadd.f32 %v6517, %v4260
    %v6595 = vadd.f32 %v6521, %v4261
    %v6596 = vadd.f32 %v6523, %v4262
    %v6597 = vadd.f32 %v6525, %v4263
    %v6598 = vadd.f32 %v6527, %v4264
    %v6599 = vadd.f32 %v6531, %v4265
    %v6600 = vadd.f32 %v6533, %v4266
    %v6601 = vadd.f32 %v6535, %v4267
    %v6602 = vadd.f32 %v6537, %v4268
    %v6603 = vmin.f32 %v6539, 8.0
    %v6604 = vmin.f32 %v6540, 8.0
    %v6605 = vmin.f32 %v6541, 8.0
    %v6606 = vmin.f32 %v6542, 8.0
    %v6607 = vmin.f32 %v6543, 8.0
    %v6608 = vmin.f32 %v6544, 8.0
    %v6609 = vmin.f32 %v6545, 8.0
    %v6610 = vmin.f32 %v6546, 8.0
    %v6611 = vmin.f32 %v6547, 8.0
    %v6612 = vmin.f32 %v6548, 8.0
    %v6613 = vmin.f32 %v6549, 8.0
    %v6614 = vmin.f32 %v6550, 8.0
    %v6615 = vmin.f32 %v6551, 8.0
    %v6616 = vmin.f32 %v6552, 8.0
    %v6617 = vmin.f32 %v6553, 8.0
    %v6618 = vmin.f32 %v6554, 8.0
    %v6619 = vmin.f32 %v6555, 8.0
    %v6620 = vmin.f32 %v6556, 8.0
    %v6621 = vmin.f32 %v6557, 8.0
    %v6622 = vmin.f32 %v6558, 8.0
    %v6623 = vmin.f32 %v6559, 8.0
    %v6624 = vmin.f32 %v6560, 8.0
    %v6625 = vmin.f32 %v6561, 8.0
    %v6626 = vmin.f32 %v6562, 8.0
    %v6627 = vmin.f32 %v6563, 8.0
    %v6628 = vmin.f32 %v6564, 8.0
    %v6629 = vmin.f32 %v6565, 8.0
    %v6630 = vmin.f32 %v6566, 8.0
    %v6631 = vmin.f32 %v6567, 8.0
    %v6632 = vmin.f32 %v6568, 8.0
    %v6633 = vmin.f32 %v6569, 8.0
    %v6634 = vmin.f32 %v6570, 8.0
    %v6635 = vmin.f32 %v6571, 8.0
    %v6636 = vmin.f32 %v6572, 8.0
    %v6637 = vmin.f32 %v6573, 8.0
    %v6638 = vmin.f32 %v6574, 8.0
    %v6639 = vmin.f32 %v6575, 8.0
    %v6640 = vmin.f32 %v6576, 8.0
    %v6641 = vmin.f32 %v6577, 8.0
    %v6642 = vmin.f32 %v6578, 8.0
    %v6643 = vmin.f32 %v6579, 8.0
    %v6644 = vmin.f32 %v6580, 8.0
    %v6645 = vmin.f32 %v6581, 8.0
    %v6646 = vmin.f32 %v6582, 8.0
    %v6647 = vmin.f32 %v6583, 8.0
    %v6648 = vmin.f32 %v6584, 8.0
    %v6649 = vmin.f32 %v6585, 8.0
    %v6650 = vmin.f32 %v6586, 8.0
    %v6651 = vmin.f32 %v6587, 8.0
    %v6652 = vmin.f32 %v6588, 8.0
    %v6653 = vmin.f32 %v6589, 8.0
    %v6654 = vmin.f32 %v6590, 8.0
    %v6655 = vmin.f32 %v6591, 8.0
    %v6656 = vmin.f32 %v6592, 8.0
    %v6657 = vmin.f32 %v6593, 8.0
    %v6658 = vmin.f32 %v6594, 8.0
    %v6659 = vmin.f32 %v6595, 8.0
    %v6660 = vmin.f32 %v6596, 8.0
    %v6661 = vmin.f32 %v6597, 8.0
    %v6662 = vmin.f32 %v6598, 8.0
    %v6663 = vmin.f32 %v6599, 8.0
    %v6664 = vmin.f32 %v6600, 8.0
    %v6665 = vmin.f32 %v6601, 8.0
    %v6666 = vmin.f32 %v6602, 8.0
    %v6667 = vmul.f32 %v6603, 1.442695
    %v6668 = vpow.pop %v6667
    %v6669 = vmul.f32 %v6604, 1.442695
    %v6670 = vpow.pop %v6669
    %v6671 = vmul.f32 %v6605, 1.442695
    %v6672 = vpow.pop %v6671
    %v6673 = vmul.f32 %v6606, 1.442695
    %v6674 = vpow.pop %v6673
    %v6675 = vmul.f32 %v6607, 1.442695
    %v6676 = vpow.pop %v6675
    %v6677 = vmul.f32 %v6608, 1.442695
    %v6678 = vpow.pop %v6677
    %v6679 = vmul.f32 %v6609, 1.442695
    %v6680 = vpow.pop %v6679
    %v6681 = vmul.f32 %v6610, 1.442695
    %v6682 = vpow.pop %v6681
    %v6683 = vmul.f32 %v6611, 1.442695
    %v6684 = vpow.pop %v6683
    %v6685 = vmul.f32 %v6612, 1.442695
    %v6686 = vpow.pop %v6685
    %v6687 = vmul.f32 %v6613, 1.442695
    %v6688 = vpow.pop %v6687
    %v6689 = vmul.f32 %v6614, 1.442695
    %v6690 = vpow.pop %v6689
    %v6691 = vmul.f32 %v6615, 1.442695
    %v6692 = vpow.pop %v6691
    %v6693 = vmul.f32 %v6616, 1.442695
    %v6694 = vpow.pop %v6693
    %v6695 = vmul.f32 %v6617, 1.442695
    %v6696 = vpow.pop %v6695
    %v6697 = vmul.f32 %v6618, 1.442695
    %v6698 = vpow.pop %v6697
    %v6699 = vmul.f32 %v6619, 1.442695
    %v6700 = vpow.pop %v6699
    %v6701 = vmul.f32 %v6620, 1.442695
    %v6702 = vpow.pop %v6701
    %v6703 = vmul.f32 %v6621, 1.442695
    %v6704 = vpow.pop %v6703
    %v6705 = vmul.f32 %v6622, 1.442695
    %v6706 = vpow.pop %v6705
    %v6707 = vmul.f32 %v6623, 1.442695
    %v6708 = vpow.pop %v6707
    %v6709 = vmul.f32 %v6624, 1.442695
    %v6710 = vpow.pop %v6709
    %v6711 = vmul.f32 %v6625, 1.442695
    %v6712 = vpow.pop %v6711
    %v6713 = vmul.f32 %v6626, 1.442695
    %v6714 = vpow.pop %v6713
    %v6715 = vmul.f32 %v6627, 1.442695
    %v6716 = vpow.pop %v6715
    %v6717 = vmul.f32 %v6628, 1.442695
    %v6718 = vpow.pop %v6717
    %v6719 = vmul.f32 %v6629, 1.442695
    %v6720 = vpow.pop %v6719
    %v6721 = vmul.f32 %v6630, 1.442695
    %v6722 = vpow.pop %v6721
    %v6723 = vmul.f32 %v6631, 1.442695
    %v6724 = vpow.pop %v6723
    %v6725 = vmul.f32 %v6632, 1.442695
    %v6726 = vpow.pop %v6725
    %v6727 = vmul.f32 %v6633, 1.442695
    %v6728 = vpow.pop %v6727
    %v6729 = vmul.f32 %v6634, 1.442695
    %v6730 = vpow.pop %v6729
    %v6731 = vmul.f32 %v6635, 1.442695
    %v6732 = vpow.pop %v6731
    %v6733 = vmul.f32 %v6636, 1.442695
    %v6734 = vpow.pop %v6733
    %v6735 = vmul.f32 %v6637, 1.442695
    %v6736 = vpow.pop %v6735
    %v6737 = vmul.f32 %v6638, 1.442695
    %v6738 = vpow.pop %v6737
    %v6739 = vmul.f32 %v6639, 1.442695
    %v6740 = vpow.pop %v6739
    %v6741 = vmul.f32 %v6640, 1.442695
    %v6742 = vpow.pop %v6741
    %v6743 = vmul.f32 %v6641, 1.442695
    %v6744 = vpow.pop %v6743
    %v6745 = vmul.f32 %v6642, 1.442695
    %v6746 = vpow.pop %v6745
    %v6747 = vmul.f32 %v6643, 1.442695
    %v6748 = vpow.pop %v6747
    %v6749 = vmul.f32 %v6644, 1.442695
    %v6750 = vpow.pop %v6749
    %v6751 = vmul.f32 %v6645, 1.442695
    %v6752 = vpow.pop %v6751
    %v6753 = vmul.f32 %v6646, 1.442695
    %v6754 = vpow.pop %v6753
    %v6755 = vmul.f32 %v6647, 1.442695
    %v6756 = vpow.pop %v6755
    %v6757 = vmul.f32 %v6648, 1.442695
    %v6758 = vpow.pop %v6757
    %v6759 = vmul.f32 %v6649, 1.442695
    %v6760 = vpow.pop %v6759
    %v6761 = vmul.f32 %v6650, 1.442695
    %v6762 = vpow.pop %v6761
    %v6763 = vmul.f32 %v6651, 1.442695
    %v6764 = vpow.pop %v6763
    %v6765 = vmul.f32 %v6652, 1.442695
    %v6766 = vpow.pop %v6765
    %v6767 = vmul.f32 %v6653, 1.442695
    %v6768 = vpow.pop %v6767
    %v6769 = vmul.f32 %v6654, 1.442695
    %v6770 = vpow.pop %v6769
    %v6771 = vmul.f32 %v6655, 1.442695
    %v6772 = vpow.pop %v6771
    %v6773 = vmul.f32 %v6656, 1.442695
    %v6774 = vpow.pop %v6773
    %v6775 = vmul.f32 %v6657, 1.442695
    %v6776 = vpow.pop %v6775
    %v6777 = vmul.f32 %v6658, 1.442695
    %v6778 = vpow.pop %v6777
    %v6779 = vmul.f32 %v6659, 1.442695
    %v6780 = vpow.pop %v6779
    %v6781 = vmul.f32 %v6660, 1.442695
    %v6782 = vpow.pop %v6781
    %v6783 = vmul.f32 %v6661, 1.442695
    %v6784 = vpow.pop %v6783
    %v6785 = vmul.f32 %v6662, 1.442695
    %v6786 = vpow.pop %v6785
    %v6787 = vmul.f32 %v6663, 1.442695
    %v6788 = vpow.pop %v6787
    %v6789 = vmul.f32 %v6664, 1.442695
    %v6790 = vpow.pop %v6789
    %v6791 = vmul.f32 %v6665, 1.442695
    %v6792 = vpow.pop %v6791
    %v6793 = vmul.f32 %v6666, 1.442695
    %v6794 = vpow.pop %v6793
    %v6795 = vadd.f32 %v6668, 2.0
    %v6796 = vadd.f32 %v6670, 2.0
    %v6797 = vadd.f32 %v6672, 2.0
    %v6798 = vadd.f32 %v6674, 2.0
    %v6799 = vadd.f32 %v6676, 2.0
    %v6800 = vadd.f32 %v6678, 2.0
    %v6801 = vadd.f32 %v6680, 2.0
    %v6802 = vadd.f32 %v6682, 2.0
    %v6803 = vadd.f32 %v6684, 2.0
    %v6804 = vadd.f32 %v6686, 2.0
    %v6805 = vadd.f32 %v6688, 2.0
    %v6806 = vadd.f32 %v6690, 2.0
    %v6807 = vadd.f32 %v6692, 2.0
    %v6808 = vadd.f32 %v6694, 2.0
    %v6809 = vadd.f32 %v6696, 2.0
    %v6810 = vadd.f32 %v6698, 2.0
    %v6811 = vadd.f32 %v6700, 2.0
    %v6812 = vadd.f32 %v6702, 2.0
    %v6813 = vadd.f32 %v6704, 2.0
    %v6814 = vadd.f32 %v6706, 2.0
    %v6815 = vadd.f32 %v6708, 2.0
    %v6816 = vadd.f32 %v6710, 2.0
    %v6817 = vadd.f32 %v6712, 2.0
    %v6818 = vadd.f32 %v6714, 2.0
    %v6819 = vadd.f32 %v6716, 2.0
    %v6820 = vadd.f32 %v6718, 2.0
    %v6821 = vadd.f32 %v6720, 2.0
    %v6822 = vadd.f32 %v6722, 2.0
    %v6823 = vadd.f32 %v6724, 2.0
    %v6824 = vadd.f32 %v6726, 2.0
    %v6825 = vadd.f32 %v6728, 2.0
    %v6826 = vadd.f32 %v6730, 2.0
    %v6827 = vadd.f32 %v6732, 2.0
    %v6828 = vadd.f32 %v6734, 2.0
    %v6829 = vadd.f32 %v6736, 2.0
    %v6830 = vadd.f32 %v6738, 2.0
    %v6831 = vadd.f32 %v6740, 2.0
    %v6832 = vadd.f32 %v6742, 2.0
    %v6833 = vadd.f32 %v6744, 2.0
    %v6834 = vadd.f32 %v6746, 2.0
    %v6835 = vadd.f32 %v6748, 2.0
    %v6836 = vadd.f32 %v6750, 2.0
    %v6837 = vadd.f32 %v6752, 2.0
    %v6838 = vadd.f32 %v6754, 2.0
    %v6839 = vadd.f32 %v6756, 2.0
    %v6840 = vadd.f32 %v6758, 2.0
    %v6841 = vadd.f32 %v6760, 2.0
    %v6842 = vadd.f32 %v6762, 2.0
    %v6843 = vadd.f32 %v6764, 2.0
    %v6844 = vadd.f32 %v6766, 2.0
    %v6845 = vadd.f32 %v6768, 2.0
    %v6846 = vadd.f32 %v6770, 2.0
    %v6847 = vadd.f32 %v6772, 2.0
    %v6848 = vadd.f32 %v6774, 2.0
    %v6849 = vadd.f32 %v6776, 2.0
    %v6850 = vadd.f32 %v6778, 2.0
    %v6851 = vadd.f32 %v6780, 2.0
    %v6852 = vadd.f32 %v6782, 2.0
    %v6853 = vadd.f32 %v6784, 2.0
    %v6854 = vadd.f32 %v6786, 2.0
    %v6855 = vadd.f32 %v6788, 2.0
    %v6856 = vadd.f32 %v6790, 2.0
    %v6857 = vadd.f32 %v6792, 2.0
    %v6858 = vadd.f32 %v6794, 2.0
    %v6859 = vmul.f32 %v6668, %v6795
    %v6860 = vmul.f32 %v6670, %v6796
    %v6861 = vmul.f32 %v6672, %v6797
    %v6862 = vmul.f32 %v6674, %v6798
    %v6863 = vmul.f32 %v6676, %v6799
    %v6864 = vmul.f32 %v6678, %v6800
    %v6865 = vmul.f32 %v6680, %v6801
    %v6866 = vmul.f32 %v6682, %v6802
    %v6867 = vmul.f32 %v6684, %v6803
    %v6868 = vmul.f32 %v6686, %v6804
    %v6869 = vmul.f32 %v6688, %v6805
    %v6870 = vmul.f32 %v6690, %v6806
    %v6871 = vmul.f32 %v6692, %v6807
    %v6872 = vmul.f32 %v6694, %v6808
    %v6873 = vmul.f32 %v6696, %v6809
    %v6874 = vmul.f32 %v6698, %v6810
    %v6875 = vmul.f32 %v6700, %v6811
    %v6876 = vmul.f32 %v6702, %v6812
    %v6877 = vmul.f32 %v6704, %v6813
    %v6878 = vmul.f32 %v6706, %v6814
    %v6879 = vmul.f32 %v6708, %v6815
    %v6880 = vmul.f32 %v6710, %v6816
    %v6881 = vmul.f32 %v6712, %v6817
    %v6882 = vmul.f32 %v6714, %v6818
    %v6883 = vmul.f32 %v6716, %v6819
    %v6884 = vmul.f32 %v6718, %v6820
    %v6885 = vmul.f32 %v6720, %v6821
    %v6886 = vmul.f32 %v6722, %v6822
    %v6887 = vmul.f32 %v6724, %v6823
    %v6888 = vmul.f32 %v6726, %v6824
    %v6889 = vmul.f32 %v6728, %v6825
    %v6890 = vmul.f32 %v6730, %v6826
    %v6891 = vmul.f32 %v6732, %v6827
    %v6892 = vmul.f32 %v6734, %v6828
    %v6893 = vmul.f32 %v6736, %v6829
    %v6894 = vmul.f32 %v6738, %v6830
    %v6895 = vmul.f32 %v6740, %v6831
    %v6896 = vmul.f32 %v6742, %v6832
    %v6897 = vmul.f32 %v6744, %v6833
    %v6898 = vmul.f32 %v6746, %v6834
    %v6899 = vmul.f32 %v6748, %v6835
    %v6900 = vmul.f32 %v6750, %v6836
    %v6901 = vmul.f32 %v6752, %v6837
    %v6902 = vmul.f32 %v6754, %v6838
    %v6903 = vmul.f32 %v6756, %v6839
    %v6904 = vmul.f32 %v6758, %v6840
    %v6905 = vmul.f32 %v6760, %v6841
    %v6906 = vmul.f32 %v6762, %v6842
    %v6907 = vmul.f32 %v6764, %v6843
    %v6908 = vmul.f32 %v6766, %v6844
    %v6909 = vmul.f32 %v6768, %v6845
    %v6910 = vmul.f32 %v6770, %v6846
    %v6911 = vmul.f32 %v6772, %v6847
    %v6912 = vmul.f32 %v6774, %v6848
    %v6913 = vmul.f32 %v6776, %v6849
    %v6914 = vmul.f32 %v6778, %v6850
    %v6915 = vmul.f32 %v6780, %v6851
    %v6916 = vmul.f32 %v6782, %v6852
    %v6917 = vmul.f32 %v6784, %v6853
    %v6918 = vmul.f32 %v6786, %v6854
    %v6919 = vmul.f32 %v6788, %v6855
    %v6920 = vmul.f32 %v6790, %v6856
    %v6921 = vmul.f32 %v6792, %v6857
    %v6922 = vmul.f32 %v6794, %v6858
    %v6923 = vadd.f32 %v6859, 2.0
    %v6924 = vadd.f32 %v6860, 2.0
    %v6925 = vadd.f32 %v6861, 2.0
    %v6926 = vadd.f32 %v6862, 2.0
    %v6927 = vadd.f32 %v6863, 2.0
    %v6928 = vadd.f32 %v6864, 2.0
    %v6929 = vadd.f32 %v6865, 2.0
    %v6930 = vadd.f32 %v6866, 2.0
    %v6931 = vadd.f32 %v6867, 2.0
    %v6932 = vadd.f32 %v6868, 2.0
    %v6933 = vadd.f32 %v6869, 2.0
    %v6934 = vadd.f32 %v6870, 2.0
    %v6935 = vadd.f32 %v6871, 2.0
    %v6936 = vadd.f32 %v6872, 2.0
    %v6937 = vadd.f32 %v6873, 2.0
    %v6938 = vadd.f32 %v6874, 2.0
    %v6939 = vadd.f32 %v6875, 2.0
    %v6940 = vadd.f32 %v6876, 2.0
    %v6941 = vadd.f32 %v6877, 2.0
    %v6942 = vadd.f32 %v6878, 2.0
    %v6943 = vadd.f32 %v6879, 2.0
    %v6944 = vadd.f32 %v6880, 2.0
    %v6945 = vadd.f32 %v6881, 2.0
    %v6946 = vadd.f32 %v6882, 2.0
    %v6947 = vadd.f32 %v6883, 2.0
    %v6948 = vadd.f32 %v6884, 2.0
    %v6949 = vadd.f32 %v6885, 2.0
    %v6950 = vadd.f32 %v6886, 2.0
    %v6951 = vadd.f32 %v6887, 2.0
    %v6952 = vadd.f32 %v6888, 2.0
    %v6953 = vadd.f32 %v6889, 2.0
    %v6954 = vadd.f32 %v6890, 2.0
    %v6955 = vadd.f32 %v6891, 2.0
    %v6956 = vadd.f32 %v6892, 2.0
    %v6957 = vadd.f32 %v6893, 2.0
    %v6958 = vadd.f32 %v6894, 2.0
    %v6959 = vadd.f32 %v6895, 2.0
    %v6960 = vadd.f32 %v6896, 2.0
    %v6961 = vadd.f32 %v6897, 2.0
    %v6962 = vadd.f32 %v6898, 2.0
    %v6963 = vadd.f32 %v6899, 2.0
    %v6964 = vadd.f32 %v6900, 2.0
    %v6965 = vadd.f32 %v6901, 2.0
    %v6966 = vadd.f32 %v6902, 2.0
    %v6967 = vadd.f32 %v6903, 2.0
    %v6968 = vadd.f32 %v6904, 2.0
    %v6969 = vadd.f32 %v6905, 2.0
    %v6970 = vadd.f32 %v6906, 2.0
    %v6971 = vadd.f32 %v6907, 2.0
    %v6972 = vadd.f32 %v6908, 2.0
    %v6973 = vadd.f32 %v6909, 2.0
    %v6974 = vadd.f32 %v6910, 2.0
    %v6975 = vadd.f32 %v6911, 2.0
    %v6976 = vadd.f32 %v6912, 2.0
    %v6977 = vadd.f32 %v6913, 2.0
    %v6978 = vadd.f32 %v6914, 2.0
    %v6979 = vadd.f32 %v6915, 2.0
    %v6980 = vadd.f32 %v6916, 2.0
    %v6981 = vadd.f32 %v6917, 2.0
    %v6982 = vadd.f32 %v6918, 2.0
    %v6983 = vadd.f32 %v6919, 2.0
    %v6984 = vadd.f32 %v6920, 2.0
    %v6985 = vadd.f32 %v6921, 2.0
    %v6986 = vadd.f32 %v6922, 2.0
    %v6987 = vrcp.pop %v6923
    %v6988 = vrcp.pop %v6924
    %v6989 = vrcp.pop %v6925
    %v6990 = vrcp.pop %v6926
    %v6991 = vrcp.pop %v6927
    %v6992 = vrcp.pop %v6928
    %v6993 = vrcp.pop %v6929
    %v6994 = vrcp.pop %v6930
    %v6995 = vrcp.pop %v6931
    %v6996 = vrcp.pop %v6932
    %v6997 = vrcp.pop %v6933
    %v6998 = vrcp.pop %v6934
    %v6999 = vrcp.pop %v6935
    %v7000 = vrcp.pop %v6936
    %v7001 = vrcp.pop %v6937
    %v7002 = vrcp.pop %v6938
    %v7003 = vrcp.pop %v6939
    %v7004 = vrcp.pop %v6940
    %v7005 = vrcp.pop %v6941
    %v7006 = vrcp.pop %v6942
    %v7007 = vrcp.pop %v6943
    %v7008 = vrcp.pop %v6944
    %v7009 = vrcp.pop %v6945
    %v7010 = vrcp.pop %v6946
    %v7011 = vrcp.pop %v6947
    %v7012 = vrcp.pop %v6948
    %v7013 = vrcp.pop %v6949
    %v7014 = vrcp.pop %v6950
    %v7015 = vrcp.pop %v6951
    %v7016 = vrcp.pop %v6952
    %v7017 = vrcp.pop %v6953
    %v7018 = vrcp.pop %v6954
    %v7019 = vrcp.pop %v6955
    %v7020 = vrcp.pop %v6956
    %v7021 = vrcp.pop %v6957
    %v7022 = vrcp.pop %v6958
    %v7023 = vrcp.pop %v6959
    %v7024 = vrcp.pop %v6960
    %v7025 = vrcp.pop %v6961
    %v7026 = vrcp.pop %v6962
    %v7027 = vrcp.pop %v6963
    %v7028 = vrcp.pop %v6964
    %v7029 = vrcp.pop %v6965
    %v7030 = vrcp.pop %v6966
    %v7031 = vrcp.pop %v6967
    %v7032 = vrcp.pop %v6968
    %v7033 = vrcp.pop %v6969
    %v7034 = vrcp.pop %v6970
    %v7035 = vrcp.pop %v6971
    %v7036 = vrcp.pop %v6972
    %v7037 = vrcp.pop %v6973
    %v7038 = vrcp.pop %v6974
    %v7039 = vrcp.pop %v6975
    %v7040 = vrcp.pop %v6976
    %v7041 = vrcp.pop %v6977
    %v7042 = vrcp.pop %v6978
    %v7043 = vrcp.pop %v6979
    %v7044 = vrcp.pop %v6980
    %v7045 = vrcp.pop %v6981
    %v7046 = vrcp.pop %v6982
    %v7047 = vrcp.pop %v6983
    %v7048 = vrcp.pop %v6984
    %v7049 = vrcp.pop %v6985
    %v7050 = vrcp.pop %v6986
    %v7051 = vmul.f32 %v6859, %v6987
    %v7052 = vmul.f32 %v6860, %v6988
    %v7053 = vmul.f32 %v6861, %v6989
    %v7054 = vmul.f32 %v6862, %v6990
    %v7055 = vmul.f32 %v6863, %v6991
    %v7056 = vmul.f32 %v6864, %v6992
    %v7057 = vmul.f32 %v6865, %v6993
    %v7058 = vmul.f32 %v6866, %v6994
    %v7059 = vmul.f32 %v6867, %v6995
    %v7060 = vmul.f32 %v6868, %v6996
    %v7061 = vmul.f32 %v6869, %v6997
    %v7062 = vmul.f32 %v6870, %v6998
    %v7063 = vmul.f32 %v6871, %v6999
    %v7064 = vmul.f32 %v6872, %v7000
    %v7065 = vmul.f32 %v6873, %v7001
    %v7066 = vmul.f32 %v6874, %v7002
    %v7067 = vmul.f32 %v6875, %v7003
    %v7068 = vmul.f32 %v6876, %v7004
    %v7069 = vmul.f32 %v6877, %v7005
    %v7070 = vmul.f32 %v6878, %v7006
    %v7071 = vmul.f32 %v6879, %v7007
    %v7072 = vmul.f32 %v6880, %v7008
    %v7073 = vmul.f32 %v6881, %v7009
    %v7074 = vmul.f32 %v6882, %v7010
    %v7075 = vmul.f32 %v6883, %v7011
    %v7076 = vmul.f32 %v6884, %v7012
    %v7077 = vmul.f32 %v6885, %v7013
    %v7078 = vmul.f32 %v6886, %v7014
    %v7079 = vmul.f32 %v6887, %v7015
    %v7080 = vmul.f32 %v6888, %v7016
    %v7081 = vmul.f32 %v6889, %v7017
    %v7082 = vmul.f32 %v6890, %v7018
    %v7083 = vmul.f32 %v6891, %v7019
    %v7084 = vmul.f32 %v6892, %v7020
    %v7085 = vmul.f32 %v6893, %v7021
    %v7086 = vmul.f32 %v6894, %v7022
    %v7087 = vmul.f32 %v6895, %v7023
    %v7088 = vmul.f32 %v6896, %v7024
    %v7089 = vmul.f32 %v6897, %v7025
    %v7090 = vmul.f32 %v6898, %v7026
    %v7091 = vmul.f32 %v6899, %v7027
    %v7092 = vmul.f32 %v6900, %v7028
    %v7093 = vmul.f32 %v6901, %v7029
    %v7094 = vmul.f32 %v6902, %v7030
    %v7095 = vmul.f32 %v6903, %v7031
    %v7096 = vmul.f32 %v6904, %v7032
    %v7097 = vmul.f32 %v6905, %v7033
    %v7098 = vmul.f32 %v6906, %v7034
    %v7099 = vmul.f32 %v6907, %v7035
    %v7100 = vmul.f32 %v6908, %v7036
    %v7101 = vmul.f32 %v6909, %v7037
    %v7102 = vmul.f32 %v6910, %v7038
    %v7103 = vmul.f32 %v6911, %v7039
    %v7104 = vmul.f32 %v6912, %v7040
    %v7105 = vmul.f32 %v6913, %v7041
    %v7106 = vmul.f32 %v6914, %v7042
    %v7107 = vmul.f32 %v6915, %v7043
    %v7108 = vmul.f32 %v6916, %v7044
    %v7109 = vmul.f32 %v6917, %v7045
    %v7110 = vmul.f32 %v6918, %v7046
    %v7111 = vmul.f32 %v6919, %v7047
    %v7112 = vmul.f32 %v6920, %v7048
    %v7113 = vmul.f32 %v6921, %v7049
    %v7114 = vmul.f32 %v6922, %v7050
    %vm7115 = vcmp.gt.f32.partialorder %v6539, 8.0
    %vm7116 = vcmp.gt.f32.partialorder %v6540, 8.0
    %vm7117 = vcmp.gt.f32.partialorder %v6541, 8.0
    %vm7118 = vcmp.gt.f32.partialorder %v6542, 8.0
    %vm7119 = vcmp.gt.f32.partialorder %v6543, 8.0
    %vm7120 = vcmp.gt.f32.partialorder %v6544, 8.0
    %vm7121 = vcmp.gt.f32.partialorder %v6545, 8.0
    %vm7122 = vcmp.gt.f32.partialorder %v6546, 8.0
    %vm7123 = vcmp.gt.f32.partialorder %v6547, 8.0
    %vm7124 = vcmp.gt.f32.partialorder %v6548, 8.0
    %vm7125 = vcmp.gt.f32.partialorder %v6549, 8.0
    %vm7126 = vcmp.gt.f32.partialorder %v6550, 8.0
    %vm7127 = vcmp.gt.f32.partialorder %v6551, 8.0
    %vm7128 = vcmp.gt.f32.partialorder %v6552, 8.0
    %vm7129 = vcmp.gt.f32.partialorder %v6553, 8.0
    %vm7130 = vcmp.gt.f32.partialorder %v6554, 8.0
    %vm7131 = vcmp.gt.f32.partialorder %v6555, 8.0
    %vm7132 = vcmp.gt.f32.partialorder %v6556, 8.0
    %vm7133 = vcmp.gt.f32.partialorder %v6557, 8.0
    %vm7134 = vcmp.gt.f32.partialorder %v6558, 8.0
    %vm7135 = vcmp.gt.f32.partialorder %v6559, 8.0
    %vm7136 = vcmp.gt.f32.partialorder %v6560, 8.0
    %vm7137 = vcmp.gt.f32.partialorder %v6561, 8.0
    %vm7138 = vcmp.gt.f32.partialorder %v6562, 8.0
    %vm7139 = vcmp.gt.f32.partialorder %v6563, 8.0
    %vm7140 = vcmp.gt.f32.partialorder %v6564, 8.0
    %vm7141 = vcmp.gt.f32.partialorder %v6565, 8.0
    %vm7142 = vcmp.gt.f32.partialorder %v6566, 8.0
    %vm7143 = vcmp.gt.f32.partialorder %v6567, 8.0
    %vm7144 = vcmp.gt.f32.partialorder %v6568, 8.0
    %vm7145 = vcmp.gt.f32.partialorder %v6569, 8.0
    %vm7146 = vcmp.gt.f32.partialorder %v6570, 8.0
    %vm7147 = vcmp.gt.f32.partialorder %v6571, 8.0
    %vm7148 = vcmp.gt.f32.partialorder %v6572, 8.0
    %vm7149 = vcmp.gt.f32.partialorder %v6573, 8.0
    %vm7150 = vcmp.gt.f32.partialorder %v6574, 8.0
    %vm7151 = vcmp.gt.f32.partialorder %v6575, 8.0
    %vm7152 = vcmp.gt.f32.partialorder %v6576, 8.0
    %vm7153 = vcmp.gt.f32.partialorder %v6577, 8.0
    %vm7154 = vcmp.gt.f32.partialorder %v6578, 8.0
    %vm7155 = vcmp.gt.f32.partialorder %v6579, 8.0
    %vm7156 = vcmp.gt.f32.partialorder %v6580, 8.0
    %vm7157 = vcmp.gt.f32.partialorder %v6581, 8.0
    %vm7158 = vcmp.gt.f32.partialorder %v6582, 8.0
    %vm7159 = vcmp.gt.f32.partialorder %v6583, 8.0
    %vm7160 = vcmp.gt.f32.partialorder %v6584, 8.0
    %vm7161 = vcmp.gt.f32.partialorder %v6585, 8.0
    %vm7162 = vcmp.gt.f32.partialorder %v6586, 8.0
    %vm7163 = vcmp.gt.f32.partialorder %v6587, 8.0
    %vm7164 = vcmp.gt.f32.partialorder %v6588, 8.0
    %vm7165 = vcmp.gt.f32.partialorder %v6589, 8.0
    %vm7166 = vcmp.gt.f32.partialorder %v6590, 8.0
    %vm7167 = vcmp.gt.f32.partialorder %v6591, 8.0
    %vm7168 = vcmp.gt.f32.partialorder %v6592, 8.0
    %vm7169 = vcmp.gt.f32.partialorder %v6593, 8.0
    %vm7170 = vcmp.gt.f32.partialorder %v6594, 8.0
    %vm7171 = vcmp.gt.f32.partialorder %v6595, 8.0
    %vm7172 = vcmp.gt.f32.partialorder %v6596, 8.0
    %vm7173 = vcmp.gt.f32.partialorder %v6597, 8.0
    %vm7174 = vcmp.gt.f32.partialorder %v6598, 8.0
    %vm7175 = vcmp.gt.f32.partialorder %v6599, 8.0
    %vm7176 = vcmp.gt.f32.partialorder %v6600, 8.0
    %vm7177 = vcmp.gt.f32.partialorder %v6601, 8.0
    %vm7178 = vcmp.gt.f32.partialorder %v6602, 8.0
    %v7179 = vmul.f32 %v6539, %v7051
    %v7180 = vmul.f32 %v6540, %v7052
    %v7181 = vmul.f32 %v6541, %v7053
    %v7182 = vmul.f32 %v6542, %v7054
    %v7183 = vmul.f32 %v6543, %v7055
    %v7184 = vmul.f32 %v6544, %v7056
    %v7185 = vmul.f32 %v6545, %v7057
    %v7186 = vmul.f32 %v6546, %v7058
    %v7187 = vmul.f32 %v6547, %v7059
    %v7188 = vmul.f32 %v6548, %v7060
    %v7189 = vmul.f32 %v6549, %v7061
    %v7190 = vmul.f32 %v6550, %v7062
    %v7191 = vmul.f32 %v6551, %v7063
    %v7192 = vmul.f32 %v6552, %v7064
    %v7193 = vmul.f32 %v6553, %v7065
    %v7194 = vmul.f32 %v6554, %v7066
    %v7195 = vmul.f32 %v6555, %v7067
    %v7196 = vmul.f32 %v6556, %v7068
    %v7197 = vmul.f32 %v6557, %v7069
    %v7198 = vmul.f32 %v6558, %v7070
    %v7199 = vmul.f32 %v6559, %v7071
    %v7200 = vmul.f32 %v6560, %v7072
    %v7201 = vmul.f32 %v6561, %v7073
    %v7202 = vmul.f32 %v6562, %v7074
    %v7203 = vmul.f32 %v6563, %v7075
    %v7204 = vmul.f32 %v6564, %v7076
    %v7205 = vmul.f32 %v6565, %v7077
    %v7206 = vmul.f32 %v6566, %v7078
    %v7207 = vmul.f32 %v6567, %v7079
    %v7208 = vmul.f32 %v6568, %v7080
    %v7209 = vmul.f32 %v6569, %v7081
    %v7210 = vmul.f32 %v6570, %v7082
    %v7211 = vmul.f32 %v6571, %v7083
    %v7212 = vmul.f32 %v6572, %v7084
    %v7213 = vmul.f32 %v6573, %v7085
    %v7214 = vmul.f32 %v6574, %v7086
    %v7215 = vmul.f32 %v6575, %v7087
    %v7216 = vmul.f32 %v6576, %v7088
    %v7217 = vmul.f32 %v6577, %v7089
    %v7218 = vmul.f32 %v6578, %v7090
    %v7219 = vmul.f32 %v6579, %v7091
    %v7220 = vmul.f32 %v6580, %v7092
    %v7221 = vmul.f32 %v6581, %v7093
    %v7222 = vmul.f32 %v6582, %v7094
    %v7223 = vmul.f32 %v6583, %v7095
    %v7224 = vmul.f32 %v6584, %v7096
    %v7225 = vmul.f32 %v6585, %v7097
    %v7226 = vmul.f32 %v6586, %v7098
    %v7227 = vmul.f32 %v6587, %v7099
    %v7228 = vmul.f32 %v6588, %v7100
    %v7229 = vmul.f32 %v6589, %v7101
    %v7230 = vmul.f32 %v6590, %v7102
    %v7231 = vmul.f32 %v6591, %v7103
    %v7232 = vmul.f32 %v6592, %v7104
    %v7233 = vmul.f32 %v6593, %v7105
    %v7234 = vmul.f32 %v6594, %v7106
    %v7235 = vmul.f32 %v6595, %v7107
    %v7236 = vmul.f32 %v6596, %v7108
    %v7237 = vmul.f32 %v6597, %v7109
    %v7238 = vmul.f32 %v6598, %v7110
    %v7239 = vmul.f32 %v6599, %v7111
    %v7240 = vmul.f32 %v6600, %v7112
    %v7241 = vmul.f32 %v6601, %v7113
    %v7242 = vmul.f32 %v6602, %v7114
    %v7243 = vsel %vm7115, %v6539, %v7179
    %v7244 = vsel %vm7116, %v6540, %v7180
    %v7245 = vsel %vm7117, %v6541, %v7181
    %v7246 = vsel %vm7118, %v6542, %v7182
    %v7247 = vsel %vm7119, %v6543, %v7183
    %v7248 = vsel %vm7120, %v6544, %v7184
    %v7249 = vsel %vm7121, %v6545, %v7185
    %v7250 = vsel %vm7122, %v6546, %v7186
    %v7251 = vsel %vm7123, %v6547, %v7187
    %v7252 = vsel %vm7124, %v6548, %v7188
    %v7253 = vsel %vm7125, %v6549, %v7189
    %v7254 = vsel %vm7126, %v6550, %v7190
    %v7255 = vsel %vm7127, %v6551, %v7191
    %v7256 = vsel %vm7128, %v6552, %v7192
    %v7257 = vsel %vm7129, %v6553, %v7193
    %v7258 = vsel %vm7130, %v6554, %v7194
    %v7259 = vsel %vm7131, %v6555, %v7195
    %v7260 = vsel %vm7132, %v6556, %v7196
    %v7261 = vsel %vm7133, %v6557, %v7197
    %v7262 = vsel %vm7134, %v6558, %v7198
    %v7263 = vsel %vm7135, %v6559, %v7199
    %v7264 = vsel %vm7136, %v6560, %v7200
    %v7265 = vsel %vm7137, %v6561, %v7201
    %v7266 = vsel %vm7138, %v6562, %v7202
    %v7267 = vsel %vm7139, %v6563, %v7203
    %v7268 = vsel %vm7140, %v6564, %v7204
    %v7269 = vsel %vm7141, %v6565, %v7205
    %v7270 = vsel %vm7142, %v6566, %v7206
    %v7271 = vsel %vm7143, %v6567, %v7207
    %v7272 = vsel %vm7144, %v6568, %v7208
    %v7273 = vsel %vm7145, %v6569, %v7209
    %v7274 = vsel %vm7146, %v6570, %v7210
    %v7275 = vsel %vm7147, %v6571, %v7211
    %v7276 = vsel %vm7148, %v6572, %v7212
    %v7277 = vsel %vm7149, %v6573, %v7213
    %v7278 = vsel %vm7150, %v6574, %v7214
    %v7279 = vsel %vm7151, %v6575, %v7215
    %v7280 = vsel %vm7152, %v6576, %v7216
    %v7281 = vsel %vm7153, %v6577, %v7217
    %v7282 = vsel %vm7154, %v6578, %v7218
    %v7283 = vsel %vm7155, %v6579, %v7219
    %v7284 = vsel %vm7156, %v6580, %v7220
    %v7285 = vsel %vm7157, %v6581, %v7221
    %v7286 = vsel %vm7158, %v6582, %v7222
    %v7287 = vsel %vm7159, %v6583, %v7223
    %v7288 = vsel %vm7160, %v6584, %v7224
    %v7289 = vsel %vm7161, %v6585, %v7225
    %v7290 = vsel %vm7162, %v6586, %v7226
    %v7291 = vsel %vm7163, %v6587, %v7227
    %v7292 = vsel %vm7164, %v6588, %v7228
    %v7293 = vsel %vm7165, %v6589, %v7229
    %v7294 = vsel %vm7166, %v6590, %v7230
    %v7295 = vsel %vm7167, %v6591, %v7231
    %v7296 = vsel %vm7168, %v6592, %v7232
    %v7297 = vsel %vm7169, %v6593, %v7233
    %v7298 = vsel %vm7170, %v6594, %v7234
    %v7299 = vsel %vm7171, %v6595, %v7235
    %v7300 = vsel %vm7172, %v6596, %v7236
    %v7301 = vsel %vm7173, %v6597, %v7237
    %v7302 = vsel %vm7174, %v6598, %v7238
    %v7303 = vsel %vm7175, %v6599, %v7239
    %v7304 = vsel %vm7176, %v6600, %v7240
    %v7305 = vsel %vm7177, %v6601, %v7241
    %v7306 = vsel %vm7178, %v6602, %v7242
    %v7307 = vpack.c.bf16 %v7245, %v7243
    %v7308 = vpack.c.bf16 %v7246, %v7244
    %v7309 = vpack.c.bf16 %v7249, %v7247
    %v7310 = vpack.c.bf16 %v7250, %v7248
    %v7311 = vpack.c.bf16 %v7253, %v7251
    %v7312 = vpack.c.bf16 %v7254, %v7252
    %v7313 = vpack.c.bf16 %v7257, %v7255
    %v7314 = vpack.c.bf16 %v7258, %v7256
    %v7315 = vpack.c.bf16 %v7261, %v7259
    %v7316 = vpack.c.bf16 %v7262, %v7260
    %v7317 = vpack.c.bf16 %v7265, %v7263
    %v7318 = vpack.c.bf16 %v7266, %v7264
    %v7319 = vpack.c.bf16 %v7269, %v7267
    %v7320 = vpack.c.bf16 %v7270, %v7268
    %v7321 = vpack.c.bf16 %v7273, %v7271
    %v7322 = vpack.c.bf16 %v7274, %v7272
    %v7323 = vpack.c.bf16 %v7277, %v7275
    %v7324 = vpack.c.bf16 %v7278, %v7276
    %v7325 = vpack.c.bf16 %v7281, %v7279
    %v7326 = vpack.c.bf16 %v7282, %v7280
    %v7327 = vpack.c.bf16 %v7285, %v7283
    %v7328 = vpack.c.bf16 %v7286, %v7284
    %v7329 = vpack.c.bf16 %v7289, %v7287
    %v7330 = vpack.c.bf16 %v7290, %v7288
    %v7331 = vpack.c.bf16 %v7293, %v7291
    %v7332 = vpack.c.bf16 %v7294, %v7292
    %v7333 = vpack.c.bf16 %v7297, %v7295
    %v7334 = vpack.c.bf16 %v7298, %v7296
    %v7335 = vpack.c.bf16 %v7301, %v7299
    %v7336 = vpack.c.bf16 %v7302, %v7300
    %v7337 = vpack.c.bf16 %v7305, %v7303
    %v7338 = vpack.c.bf16 %v7306, %v7304
    %s7339 = scalar_lea.vmem [#allocation2], 512
    %v7340 = vld [vmem:[%s7339] sm:$0xff]
    %v7341 = vld [vmem:[%s7339 + $0x8] sm:$0xff]
    %v7342 = vld [vmem:[%s7339 + $0x10] sm:$0xff]
    %v7343 = vld [vmem:[%s7339 + $0x18] sm:$0xff]
    %v7344 = vld [vmem:[%s7339 + $0x20] sm:$0xff]
    %v7345 = vld [vmem:[%s7339 + $0x28] sm:$0xff]
    %v7346 = vld [vmem:[%s7339 + $0x30] sm:$0xff]
    %v7347 = vld [vmem:[%s7339 + $0x38] sm:$0xff]
    %v7348 = vld [vmem:[%s7339 + $0x40] sm:$0xff]
    %v7349 = vld [vmem:[%s7339 + $0x48] sm:$0xff]
    %v7350 = vld [vmem:[%s7339 + $0x50] sm:$0xff]
    %v7351 = vld [vmem:[%s7339 + $0x58] sm:$0xff]
    %v7352 = vld [vmem:[%s7339 + $0x60] sm:$0xff]
    %v7353 = vld [vmem:[%s7339 + $0x68] sm:$0xff]
    %v7354 = vld [vmem:[%s7339 + $0x70] sm:$0xff]
    %v7355 = vld [vmem:[%s7339 + $0x78] sm:$0xff]
    %v7356 = vld [vmem:[%s7339 + $0x80] sm:$0xff]
    %v7357 = vld [vmem:[%s7339 + $0x88] sm:$0xff]
    %v7358 = vld [vmem:[%s7339 + $0x90] sm:$0xff]
    %v7359 = vld [vmem:[%s7339 + $0x98] sm:$0xff]
    %v7360 = vld [vmem:[%s7339 + $0xa0] sm:$0xff]
    %v7361 = vld [vmem:[%s7339 + $0xa8] sm:$0xff]
    %v7362 = vld [vmem:[%s7339 + $0xb0] sm:$0xff]
    %v7363 = vld [vmem:[%s7339 + $0xb8] sm:$0xff]
    %v7364 = vld [vmem:[%s7339 + $0xc0] sm:$0xff]
    %v7365 = vld [vmem:[%s7339 + $0xc8] sm:$0xff]
    %v7366 = vld [vmem:[%s7339 + $0xd0] sm:$0xff]
    %v7367 = vld [vmem:[%s7339 + $0xd8] sm:$0xff]
    %v7368 = vld [vmem:[%s7339 + $0xe0] sm:$0xff]
    %v7369 = vld [vmem:[%s7339 + $0xe8] sm:$0xff]
    %v7370 = vld [vmem:[%s7339 + $0xf0] sm:$0xff]
    %v7371 = vld [vmem:[%s7339 + $0xf8] sm:$0xff]
    %s7372 = scalar_lea.vmem %s4, 4
    %v7373 = vld [vmem:[%s7372] sm:$0x3]
    %v7375 = vlaneseq
    %v7376 = vshrl.u32 %v7375, 7
    %v7377 = vsub.s32 0, %v7376
    %v7378 = vrot.slane %v7373, %v7377
    %v7379 = vlaneseq
    %v7380 = vshrl.u32 %v7379, 7
    %v7381 = vsub.s32 1, %v7380
    %v7382 = vrot.slane %v7373, %v7381
    %v7417 = vunpack.c.l.b16 %v7340
    %v7418 = vunpack.c.h.b16 %v7340
    %v7419 = vunpack.c.l.b16 %v7341
    %v7420 = vunpack.c.h.b16 %v7341
    %v7421 = vunpack.c.l.b16 %v7342
    %v7422 = vunpack.c.h.b16 %v7342
    %v7423 = vunpack.c.l.b16 %v7343
    %v7424 = vunpack.c.h.b16 %v7343
    %v7425 = vunpack.c.l.b16 %v7344
    %v7426 = vunpack.c.h.b16 %v7344
    %v7427 = vunpack.c.l.b16 %v7345
    %v7428 = vunpack.c.h.b16 %v7345
    %v7429 = vunpack.c.l.b16 %v7346
    %v7430 = vunpack.c.h.b16 %v7346
    %v7431 = vunpack.c.l.b16 %v7347
    %v7432 = vunpack.c.h.b16 %v7347
    %v7433 = vunpack.c.l.b16 %v7348
    %v7434 = vunpack.c.h.b16 %v7348
    %v7435 = vunpack.c.l.b16 %v7349
    %v7436 = vunpack.c.h.b16 %v7349
    %v7437 = vunpack.c.l.b16 %v7350
    %v7438 = vunpack.c.h.b16 %v7350
    %v7439 = vunpack.c.l.b16 %v7351
    %v7440 = vunpack.c.h.b16 %v7351
    %v7441 = vunpack.c.l.b16 %v7352
    %v7442 = vunpack.c.h.b16 %v7352
    %v7443 = vunpack.c.l.b16 %v7353
    %v7444 = vunpack.c.h.b16 %v7353
    %v7445 = vunpack.c.l.b16 %v7354
    %v7446 = vunpack.c.h.b16 %v7354
    %v7447 = vunpack.c.l.b16 %v7355
    %v7448 = vunpack.c.h.b16 %v7355
    %v7449 = vunpack.c.l.b16 %v7356
    %v7450 = vunpack.c.h.b16 %v7356
    %v7451 = vunpack.c.l.b16 %v7357
    %v7452 = vunpack.c.h.b16 %v7357
    %v7453 = vunpack.c.l.b16 %v7358
    %v7454 = vunpack.c.h.b16 %v7358
    %v7455 = vunpack.c.l.b16 %v7359
    %v7456 = vunpack.c.h.b16 %v7359
    %v7457 = vunpack.c.l.b16 %v7360
    %v7458 = vunpack.c.h.b16 %v7360
    %v7459 = vunpack.c.l.b16 %v7361
    %v7460 = vunpack.c.h.b16 %v7361
    %v7461 = vunpack.c.l.b16 %v7362
    %v7462 = vunpack.c.h.b16 %v7362
    %v7463 = vunpack.c.l.b16 %v7363
    %v7464 = vunpack.c.h.b16 %v7363
    %v7465 = vunpack.c.l.b16 %v7364
    %v7466 = vunpack.c.h.b16 %v7364
    %v7467 = vunpack.c.l.b16 %v7365
    %v7468 = vunpack.c.h.b16 %v7365
    %v7469 = vunpack.c.l.b16 %v7366
    %v7470 = vunpack.c.h.b16 %v7366
    %v7471 = vunpack.c.l.b16 %v7367
    %v7472 = vunpack.c.h.b16 %v7367
    %v7473 = vunpack.c.l.b16 %v7368
    %v7474 = vunpack.c.h.b16 %v7368
    %v7475 = vunpack.c.l.b16 %v7369
    %v7476 = vunpack.c.h.b16 %v7369
    %v7477 = vunpack.c.l.b16 %v7370
    %v7478 = vunpack.c.h.b16 %v7370
    %v7479 = vunpack.c.l.b16 %v7371
    %v7480 = vunpack.c.h.b16 %v7371
    %v7481 = vpack.c.b16 %v7419, %v7417
    %v7482 = vpack.c.b16 %v7420, %v7418
    %v7483 = vpack.c.b16 %v7423, %v7421
    %v7484 = vpack.c.b16 %v7424, %v7422
    %v7485 = vpack.c.b16 %v7427, %v7425
    %v7486 = vpack.c.b16 %v7428, %v7426
    %v7487 = vpack.c.b16 %v7431, %v7429
    %v7488 = vpack.c.b16 %v7432, %v7430
    %v7489 = vpack.c.b16 %v7435, %v7433
    %v7490 = vpack.c.b16 %v7436, %v7434
    %v7491 = vpack.c.b16 %v7439, %v7437
    %v7492 = vpack.c.b16 %v7440, %v7438
    %v7493 = vpack.c.b16 %v7443, %v7441
    %v7494 = vpack.c.b16 %v7444, %v7442
    %v7495 = vpack.c.b16 %v7447, %v7445
    %v7496 = vpack.c.b16 %v7448, %v7446
    %v7497 = vpack.c.b16 %v7451, %v7449
    %v7498 = vpack.c.b16 %v7452, %v7450
    %v7499 = vpack.c.b16 %v7455, %v7453
    %v7500 = vpack.c.b16 %v7456, %v7454
    %v7501 = vpack.c.b16 %v7459, %v7457
    %v7502 = vpack.c.b16 %v7460, %v7458
    %v7503 = vpack.c.b16 %v7463, %v7461
    %v7504 = vpack.c.b16 %v7464, %v7462
    %v7505 = vpack.c.b16 %v7467, %v7465
    %v7506 = vpack.c.b16 %v7468, %v7466
    %v7507 = vpack.c.b16 %v7471, %v7469
    %v7508 = vpack.c.b16 %v7472, %v7470
    %v7509 = vpack.c.b16 %v7475, %v7473
    %v7510 = vpack.c.b16 %v7476, %v7474
    %v7511 = vpack.c.b16 %v7479, %v7477
    %v7512 = vpack.c.b16 %v7480, %v7478
    %7545 = vmatprep.subr.bf16.mxu0 %v7482
    %7546 = vmatpush1.bf16.msra.mxu0 %v7481
    %7547 = vmatprep.subr.bf16.mxu0 %v7484
    %7548 = vmatpush1.bf16.msra.mxu0 %v7483
    %7549 = vmatprep.subr.bf16.mxu0 %v7486
    %7550 = vmatpush1.bf16.msra.mxu0 %v7485
    %7551 = vmatprep.subr.bf16.mxu0 %v7488
    %7552 = vmatpush1.bf16.msra.mxu0 %v7487
    %7553 = vmatprep.subr.bf16.mxu0 %v7490
    %7554 = vmatpush1.bf16.msra.mxu0 %v7489
    %7555 = vmatprep.subr.bf16.mxu0 %v7492
    %7556 = vmatpush1.bf16.msra.mxu0 %v7491
    %7557 = vmatprep.subr.bf16.mxu0 %v7494
    %7558 = vmatpush1.bf16.msra.mxu0 %v7493
    %7559 = vmatprep.subr.bf16.mxu0 %v7496
    %7560 = vmatpush1.bf16.msra.mxu0 %v7495
    %7561 = vmatprep.subr.bf16.mxu0 %v7498
    %7562 = vmatpush1.bf16.msra.mxu0 %v7497
    %7563 = vmatprep.subr.bf16.mxu0 %v7500
    %7564 = vmatpush1.bf16.msra.mxu0 %v7499
    %7565 = vmatprep.subr.bf16.mxu0 %v7502
    %7566 = vmatpush1.bf16.msra.mxu0 %v7501
    %7567 = vmatprep.subr.bf16.mxu0 %v7504
    %7568 = vmatpush1.bf16.msra.mxu0 %v7503
    %7569 = vmatprep.subr.bf16.mxu0 %v7506
    %7570 = vmatpush1.bf16.msra.mxu0 %v7505
    %7571 = vmatprep.subr.bf16.mxu0 %v7508
    %7572 = vmatpush1.bf16.msra.mxu0 %v7507
    %7573 = vmatprep.subr.bf16.mxu0 %v7510
    %7574 = vmatpush1.bf16.msra.mxu0 %v7509
    %7575 = vmatprep.subr.bf16.mxu0 %v7512
    %7576 = vmatpush1.bf16.msra.mxu0 %v7511
    %7577 = vmatprep.mubr.bf16.mxu0 %v7308
    %7578 = vmatmul.mubr.bf16.gmra.mrb[0].mxu0 %v7307
    %v7579 = vpop.f32.mrb[0].mxu0
    %v7580 = vadd.f32 %v7378, %v7579
    %v7581 = vpop.f32.mrb[0].mxu0
    %v7582 = vadd.f32 %v7382, %v7581
    %v7583 = vpop.f32.mrb[0].mxu0
    %v7584 = vadd.f32 %v7378, %v7583
    %v7585 = vpop.f32.mrb[0].mxu0
    %v7586 = vadd.f32 %v7382, %v7585
    %7587 = vmatprep.mubr.bf16.mxu0 %v7310
    %7588 = vmatmul.mubr.bf16.gmra.mrb[0].mxu0 %v7309
    %v7589 = vpop.f32.mrb[0].mxu0
    %v7590 = vadd.f32 %v7378, %v7589
    %v7591 = vpop.f32.mrb[0].mxu0
    %v7592 = vadd.f32 %v7382, %v7591
    %v7593 = vpop.f32.mrb[0].mxu0
    %v7594 = vadd.f32 %v7378, %v7593
    %v7595 = vpop.f32.mrb[0].mxu0
    %v7596 = vadd.f32 %v7382, %v7595
    %7597 = vmatprep.mubr.bf16.mxu0 %v7312
    %7598 = vmatmul.mubr.bf16.gmra.mrb[0].mxu0 %v7311
    %v7599 = vpop.f32.mrb[0].mxu0
    %v7600 = vadd.f32 %v7378, %v7599
    %v7601 = vpop.f32.mrb[0].mxu0
    %v7602 = vadd.f32 %v7382, %v7601
    %v7603 = vpop.f32.mrb[0].mxu0
    %v7604 = vadd.f32 %v7378, %v7603
    %v7605 = vpop.f32.mrb[0].mxu0
    %v7606 = vadd.f32 %v7382, %v7605
    %7607 = vmatprep.mubr.bf16.mxu0 %v7314
    %7608 = vmatmul.mubr.bf16.gmra.mrb[0].mxu0 %v7313
    %v7609 = vpop.f32.mrb[0].mxu0
    %v7610 = vadd.f32 %v7378, %v7609
    %v7611 = vpop.f32.mrb[0].mxu0
    %v7612 = vadd.f32 %v7382, %v7611
    %v7613 = vpop.f32.mrb[0].mxu0
    %v7614 = vadd.f32 %v7378, %v7613
    %v7615 = vpop.f32.mrb[0].mxu0
    %v7616 = vadd.f32 %v7382, %v7615
    %7617 = vmatprep.mubr.bf16.mxu0 %v7316
    %7618 = vmatmul.mubr.bf16.gmra.mrb[0].mxu0 %v7315
    %v7619 = vpop.f32.mrb[0].mxu0
    %v7620 = vadd.f32 %v7378, %v7619
    %v7621 = vpop.f32.mrb[0].mxu0
    %v7622 = vadd.f32 %v7382, %v7621
    %v7623 = vpop.f32.mrb[0].mxu0
    %v7624 = vadd.f32 %v7378, %v7623
    %v7625 = vpop.f32.mrb[0].mxu0
    %v7626 = vadd.f32 %v7382, %v7625
    %7627 = vmatprep.mubr.bf16.mxu0 %v7318
    %7628 = vmatmul.mubr.bf16.gmra.mrb[0].mxu0 %v7317
    %v7629 = vpop.f32.mrb[0].mxu0
    %v7630 = vadd.f32 %v7378, %v7629
    %v7631 = vpop.f32.mrb[0].mxu0
    %v7632 = vadd.f32 %v7382, %v7631
    %v7633 = vpop.f32.mrb[0].mxu0
    %v7634 = vadd.f32 %v7378, %v7633
    %v7635 = vpop.f32.mrb[0].mxu0
    %v7636 = vadd.f32 %v7382, %v7635
    %7637 = vmatprep.mubr.bf16.mxu0 %v7320
    %7638 = vmatmul.mubr.bf16.gmra.mrb[0].mxu0 %v7319
    %v7639 = vpop.f32.mrb[0].mxu0
    %v7640 = vadd.f32 %v7378, %v7639
    %v7641 = vpop.f32.mrb[0].mxu0
    %v7642 = vadd.f32 %v7382, %v7641
    %v7643 = vpop.f32.mrb[0].mxu0
    %v7644 = vadd.f32 %v7378, %v7643
    %v7645 = vpop.f32.mrb[0].mxu0
    %v7646 = vadd.f32 %v7382, %v7645
    %7647 = vmatprep.mubr.bf16.mxu0 %v7322
    %7648 = vmatmul.mubr.bf16.gmra.mrb[0].mxu0 %v7321
    %v7649 = vpop.f32.mrb[0].mxu0
    %v7650 = vadd.f32 %v7378, %v7649
    %v7651 = vpop.f32.mrb[0].mxu0
    %v7652 = vadd.f32 %v7382, %v7651
    %v7653 = vpop.f32.mrb[0].mxu0
    %v7654 = vadd.f32 %v7378, %v7653
    %v7655 = vpop.f32.mrb[0].mxu0
    %v7656 = vadd.f32 %v7382, %v7655
    %7657 = vmatprep.mubr.bf16.mxu0 %v7324
    %7658 = vmatmul.mubr.bf16.gmra.mrb[0].mxu0 %v7323
    %v7659 = vpop.f32.mrb[0].mxu0
    %v7660 = vadd.f32 %v7378, %v7659
    %v7661 = vpop.f32.mrb[0].mxu0
    %v7662 = vadd.f32 %v7382, %v7661
    %v7663 = vpop.f32.mrb[0].mxu0
    %v7664 = vadd.f32 %v7378, %v7663
    %v7665 = vpop.f32.mrb[0].mxu0
    %v7666 = vadd.f32 %v7382, %v7665
    %7667 = vmatprep.mubr.bf16.mxu0 %v7326
    %7668 = vmatmul.mubr.bf16.gmra.mrb[0].mxu0 %v7325
    %v7669 = vpop.f32.mrb[0].mxu0
    %v7670 = vadd.f32 %v7378, %v7669
    %v7671 = vpop.f32.mrb[0].mxu0
    %v7672 = vadd.f32 %v7382, %v7671
    %v7673 = vpop.f32.mrb[0].mxu0
    %v7674 = vadd.f32 %v7378, %v7673
    %v7675 = vpop.f32.mrb[0].mxu0
    %v7676 = vadd.f32 %v7382, %v7675
    %7677 = vmatprep.mubr.bf16.mxu0 %v7328
    %7678 = vmatmul.mubr.bf16.gmra.mrb[0].mxu0 %v7327
    %v7679 = vpop.f32.mrb[0].mxu0
    %v7680 = vadd.f32 %v7378, %v7679
    %v7681 = vpop.f32.mrb[0].mxu0
    %v7682 = vadd.f32 %v7382, %v7681
    %v7683 = vpop.f32.mrb[0].mxu0
    %v7684 = vadd.f32 %v7378, %v7683
    %v7685 = vpop.f32.mrb[0].mxu0
    %v7686 = vadd.f32 %v7382, %v7685
    %7687 = vmatprep.mubr.bf16.mxu0 %v7330
    %7688 = vmatmul.mubr.bf16.gmra.mrb[0].mxu0 %v7329
    %v7689 = vpop.f32.mrb[0].mxu0
    %v7690 = vadd.f32 %v7378, %v7689
    %v7691 = vpop.f32.mrb[0].mxu0
    %v7692 = vadd.f32 %v7382, %v7691
    %v7693 = vpop.f32.mrb[0].mxu0
    %v7694 = vadd.f32 %v7378, %v7693
    %v7695 = vpop.f32.mrb[0].mxu0
    %v7696 = vadd.f32 %v7382, %v7695
    %7697 = vmatprep.mubr.bf16.mxu0 %v7332
    %7698 = vmatmul.mubr.bf16.gmra.mrb[0].mxu0 %v7331
    %v7699 = vpop.f32.mrb[0].mxu0
    %v7700 = vadd.f32 %v7378, %v7699
    %v7701 = vpop.f32.mrb[0].mxu0
    %v7702 = vadd.f32 %v7382, %v7701
    %v7703 = vpop.f32.mrb[0].mxu0
    %v7704 = vadd.f32 %v7378, %v7703
    %v7705 = vpop.f32.mrb[0].mxu0
    %v7706 = vadd.f32 %v7382, %v7705
    %7707 = vmatprep.mubr.bf16.mxu0 %v7334
    %7708 = vmatmul.mubr.bf16.gmra.mrb[0].mxu0 %v7333
    %v7709 = vpop.f32.mrb[0].mxu0
    %v7710 = vadd.f32 %v7378, %v7709
    %v7711 = vpop.f32.mrb[0].mxu0
    %v7712 = vadd.f32 %v7382, %v7711
    %v7713 = vpop.f32.mrb[0].mxu0
    %v7714 = vadd.f32 %v7378, %v7713
    %v7715 = vpop.f32.mrb[0].mxu0
    %v7716 = vadd.f32 %v7382, %v7715
    %7717 = vmatprep.mubr.bf16.mxu0 %v7336
    %7718 = vmatmul.mubr.bf16.gmra.mrb[0].mxu0 %v7335
    %v7719 = vpop.f32.mrb[0].mxu0
    %v7720 = vadd.f32 %v7378, %v7719
    %v7721 = vpop.f32.mrb[0].mxu0
    %v7722 = vadd.f32 %v7382, %v7721
    %v7723 = vpop.f32.mrb[0].mxu0
    %v7724 = vadd.f32 %v7378, %v7723
    %v7725 = vpop.f32.mrb[0].mxu0
    %v7726 = vadd.f32 %v7382, %v7725
    %7727 = vmatprep.mubr.bf16.mxu0 %v7338
    %7728 = vmatmul.mubr.bf16.gmra.mrb[0].mxu0 %v7337
    %v7729 = vpop.f32.mrb[0].mxu0
    %v7730 = vadd.f32 %v7378, %v7729
    %v7731 = vpop.f32.mrb[0].mxu0
    %v7732 = vadd.f32 %v7382, %v7731
    %v7733 = vpop.f32.mrb[0].mxu0
    %v7734 = vadd.f32 %v7378, %v7733
    %v7735 = vpop.f32.mrb[0].mxu0
    %v7736 = vadd.f32 %v7382, %v7735
    %7737 = vdwg.mxu0
    %v7738 = vmin.f32 %v7580, 8.0
    %v7739 = vmin.f32 %v7582, 8.0
    %v7740 = vmin.f32 %v7584, 8.0
    %v7741 = vmin.f32 %v7586, 8.0
    %v7742 = vmin.f32 %v7590, 8.0
    %v7743 = vmin.f32 %v7592, 8.0
    %v7744 = vmin.f32 %v7594, 8.0
    %v7745 = vmin.f32 %v7596, 8.0
    %v7746 = vmin.f32 %v7600, 8.0
    %v7747 = vmin.f32 %v7602, 8.0
    %v7748 = vmin.f32 %v7604, 8.0
    %v7749 = vmin.f32 %v7606, 8.0
    %v7750 = vmin.f32 %v7610, 8.0
    %v7751 = vmin.f32 %v7612, 8.0
    %v7752 = vmin.f32 %v7614, 8.0
    %v7753 = vmin.f32 %v7616, 8.0
    %v7754 = vmin.f32 %v7620, 8.0
    %v7755 = vmin.f32 %v7622, 8.0
    %v7756 = vmin.f32 %v7624, 8.0
    %v7757 = vmin.f32 %v7626, 8.0
    %v7758 = vmin.f32 %v7630, 8.0
    %v7759 = vmin.f32 %v7632, 8.0
    %v7760 = vmin.f32 %v7634, 8.0
    %v7761 = vmin.f32 %v7636, 8.0
    %v7762 = vmin.f32 %v7640, 8.0
    %v7763 = vmin.f32 %v7642, 8.0
    %v7764 = vmin.f32 %v7644, 8.0
    %v7765 = vmin.f32 %v7646, 8.0
    %v7766 = vmin.f32 %v7650, 8.0
    %v7767 = vmin.f32 %v7652, 8.0
    %v7768 = vmin.f32 %v7654, 8.0
    %v7769 = vmin.f32 %v7656, 8.0
    %v7770 = vmin.f32 %v7660, 8.0
    %v7771 = vmin.f32 %v7662, 8.0
    %v7772 = vmin.f32 %v7664, 8.0
    %v7773 = vmin.f32 %v7666, 8.0
    %v7774 = vmin.f32 %v7670, 8.0
    %v7775 = vmin.f32 %v7672, 8.0
    %v7776 = vmin.f32 %v7674, 8.0
    %v7777 = vmin.f32 %v7676, 8.0
    %v7778 = vmin.f32 %v7680, 8.0
    %v7779 = vmin.f32 %v7682, 8.0
    %v7780 = vmin.f32 %v7684, 8.0
    %v7781 = vmin.f32 %v7686, 8.0
    %v7782 = vmin.f32 %v7690, 8.0
    %v7783 = vmin.f32 %v7692, 8.0
    %v7784 = vmin.f32 %v7694, 8.0
    %v7785 = vmin.f32 %v7696, 8.0
    %v7786 = vmin.f32 %v7700, 8.0
    %v7787 = vmin.f32 %v7702, 8.0
    %v7788 = vmin.f32 %v7704, 8.0
    %v7789 = vmin.f32 %v7706, 8.0
    %v7790 = vmin.f32 %v7710, 8.0
    %v7791 = vmin.f32 %v7712, 8.0
    %v7792 = vmin.f32 %v7714, 8.0
    %v7793 = vmin.f32 %v7716, 8.0
    %v7794 = vmin.f32 %v7720, 8.0
    %v7795 = vmin.f32 %v7722, 8.0
    %v7796 = vmin.f32 %v7724, 8.0
    %v7797 = vmin.f32 %v7726, 8.0
    %v7798 = vmin.f32 %v7730, 8.0
    %v7799 = vmin.f32 %v7732, 8.0
    %v7800 = vmin.f32 %v7734, 8.0
    %v7801 = vmin.f32 %v7736, 8.0
    %v7802 = vmul.f32 %v7738, 1.442695
    %v7803 = vpow.pop %v7802
    %v7804 = vmul.f32 %v7739, 1.442695
    %v7805 = vpow.pop %v7804
    %v7806 = vmul.f32 %v7740, 1.442695
    %v7807 = vpow.pop %v7806
    %v7808 = vmul.f32 %v7741, 1.442695
    %v7809 = vpow.pop %v7808
    %v7810 = vmul.f32 %v7742, 1.442695
    %v7811 = vpow.pop %v7810
    %v7812 = vmul.f32 %v7743, 1.442695
    %v7813 = vpow.pop %v7812
    %v7814 = vmul.f32 %v7744, 1.442695
    %v7815 = vpow.pop %v7814
    %v7816 = vmul.f32 %v7745, 1.442695
    %v7817 = vpow.pop %v7816
    %v7818 = vmul.f32 %v7746, 1.442695
    %v7819 = vpow.pop %v7818
    %v7820 = vmul.f32 %v7747, 1.442695
    %v7821 = vpow.pop %v7820
    %v7822 = vmul.f32 %v7748, 1.442695
    %v7823 = vpow.pop %v7822
    %v7824 = vmul.f32 %v7749, 1.442695
    %v7825 = vpow.pop %v7824
    %v7826 = vmul.f32 %v7750, 1.442695
    %v7827 = vpow.pop %v7826
    %v7828 = vmul.f32 %v7751, 1.442695
    %v7829 = vpow.pop %v7828
    %v7830 = vmul.f32 %v7752, 1.442695
    %v7831 = vpow.pop %v7830
    %v7832 = vmul.f32 %v7753, 1.442695
    %v7833 = vpow.pop %v7832
    %v7834 = vmul.f32 %v7754, 1.442695
    %v7835 = vpow.pop %v7834
    %v7836 = vmul.f32 %v7755, 1.442695
    %v7837 = vpow.pop %v7836
    %v7838 = vmul.f32 %v7756, 1.442695
    %v7839 = vpow.pop %v7838
    %v7840 = vmul.f32 %v7757, 1.442695
    %v7841 = vpow.pop %v7840
    %v7842 = vmul.f32 %v7758, 1.442695
    %v7843 = vpow.pop %v7842
    %v7844 = vmul.f32 %v7759, 1.442695
    %v7845 = vpow.pop %v7844
    %v7846 = vmul.f32 %v7760, 1.442695
    %v7847 = vpow.pop %v7846
    %v7848 = vmul.f32 %v7761, 1.442695
    %v7849 = vpow.pop %v7848
    %v7850 = vmul.f32 %v7762, 1.442695
    %v7851 = vpow.pop %v7850
    %v7852 = vmul.f32 %v7763, 1.442695
    %v7853 = vpow.pop %v7852
    %v7854 = vmul.f32 %v7764, 1.442695
    %v7855 = vpow.pop %v7854
    %v7856 = vmul.f32 %v7765, 1.442695
    %v7857 = vpow.pop %v7856
    %v7858 = vmul.f32 %v7766, 1.442695
    %v7859 = vpow.pop %v7858
    %v7860 = vmul.f32 %v7767, 1.442695
    %v7861 = vpow.pop %v7860
    %v7862 = vmul.f32 %v7768, 1.442695
    %v7863 = vpow.pop %v7862
    %v7864 = vmul.f32 %v7769, 1.442695
    %v7865 = vpow.pop %v7864
    %v7866 = vmul.f32 %v7770, 1.442695
    %v7867 = vpow.pop %v7866
    %v7868 = vmul.f32 %v7771, 1.442695
    %v7869 = vpow.pop %v7868
    %v7870 = vmul.f32 %v7772, 1.442695
    %v7871 = vpow.pop %v7870
    %v7872 = vmul.f32 %v7773, 1.442695
    %v7873 = vpow.pop %v7872
    %v7874 = vmul.f32 %v7774, 1.442695
    %v7875 = vpow.pop %v7874
    %v7876 = vmul.f32 %v7775, 1.442695
    %v7877 = vpow.pop %v7876
    %v7878 = vmul.f32 %v7776, 1.442695
    %v7879 = vpow.pop %v7878
    %v7880 = vmul.f32 %v7777, 1.442695
    %v7881 = vpow.pop %v7880
    %v7882 = vmul.f32 %v7778, 1.442695
    %v7883 = vpow.pop %v7882
    %v7884 = vmul.f32 %v7779, 1.442695
    %v7885 = vpow.pop %v7884
    %v7886 = vmul.f32 %v7780, 1.442695
    %v7887 = vpow.pop %v7886
    %v7888 = vmul.f32 %v7781, 1.442695
    %v7889 = vpow.pop %v7888
    %v7890 = vmul.f32 %v7782, 1.442695
    %v7891 = vpow.pop %v7890
    %v7892 = vmul.f32 %v7783, 1.442695
    %v7893 = vpow.pop %v7892
    %v7894 = vmul.f32 %v7784, 1.442695
    %v7895 = vpow.pop %v7894
    %v7896 = vmul.f32 %v7785, 1.442695
    %v7897 = vpow.pop %v7896
    %v7898 = vmul.f32 %v7786, 1.442695
    %v7899 = vpow.pop %v7898
    %v7900 = vmul.f32 %v7787, 1.442695
    %v7901 = vpow.pop %v7900
    %v7902 = vmul.f32 %v7788, 1.442695
    %v7903 = vpow.pop %v7902
    %v7904 = vmul.f32 %v7789, 1.442695
    %v7905 = vpow.pop %v7904
    %v7906 = vmul.f32 %v7790, 1.442695
    %v7907 = vpow.pop %v7906
    %v7908 = vmul.f32 %v7791, 1.442695
    %v7909 = vpow.pop %v7908
    %v7910 = vmul.f32 %v7792, 1.442695
    %v7911 = vpow.pop %v7910
    %v7912 = vmul.f32 %v7793, 1.442695
    %v7913 = vpow.pop %v7912
    %v7914 = vmul.f32 %v7794, 1.442695
    %v7915 = vpow.pop %v7914
    %v7916 = vmul.f32 %v7795, 1.442695
    %v7917 = vpow.pop %v7916
    %v7918 = vmul.f32 %v7796, 1.442695
    %v7919 = vpow.pop %v7918
    %v7920 = vmul.f32 %v7797, 1.442695
    %v7921 = vpow.pop %v7920
    %v7922 = vmul.f32 %v7798, 1.442695
    %v7923 = vpow.pop %v7922
    %v7924 = vmul.f32 %v7799, 1.442695
    %v7925 = vpow.pop %v7924
    %v7926 = vmul.f32 %v7800, 1.442695
    %v7927 = vpow.pop %v7926
    %v7928 = vmul.f32 %v7801, 1.442695
    %v7929 = vpow.pop %v7928
    %v7930 = vadd.f32 %v7803, 2.0
    %v7931 = vadd.f32 %v7805, 2.0
    %v7932 = vadd.f32 %v7807, 2.0
    %v7933 = vadd.f32 %v7809, 2.0
    %v7934 = vadd.f32 %v7811, 2.0
    %v7935 = vadd.f32 %v7813, 2.0
    %v7936 = vadd.f32 %v7815, 2.0
    %v7937 = vadd.f32 %v7817, 2.0
    %v7938 = vadd.f32 %v7819, 2.0
    %v7939 = vadd.f32 %v7821, 2.0
    %v7940 = vadd.f32 %v7823, 2.0
    %v7941 = vadd.f32 %v7825, 2.0
    %v7942 = vadd.f32 %v7827, 2.0
    %v7943 = vadd.f32 %v7829, 2.0
    %v7944 = vadd.f32 %v7831, 2.0
    %v7945 = vadd.f32 %v7833, 2.0
    %v7946 = vadd.f32 %v7835, 2.0
    %v7947 = vadd.f32 %v7837, 2.0
    %v7948 = vadd.f32 %v7839, 2.0
    %v7949 = vadd.f32 %v7841, 2.0
    %v7950 = vadd.f32 %v7843, 2.0
    %v7951 = vadd.f32 %v7845, 2.0
    %v7952 = vadd.f32 %v7847, 2.0
    %v7953 = vadd.f32 %v7849, 2.0
    %v7954 = vadd.f32 %v7851, 2.0
    %v7955 = vadd.f32 %v7853, 2.0
    %v7956 = vadd.f32 %v7855, 2.0
    %v7957 = vadd.f32 %v7857, 2.0
    %v7958 = vadd.f32 %v7859, 2.0
    %v7959 = vadd.f32 %v7861, 2.0
    %v7960 = vadd.f32 %v7863, 2.0
    %v7961 = vadd.f32 %v7865, 2.0
    %v7962 = vadd.f32 %v7867, 2.0
    %v7963 = vadd.f32 %v7869, 2.0
    %v7964 = vadd.f32 %v7871, 2.0
    %v7965 = vadd.f32 %v7873, 2.0
    %v7966 = vadd.f32 %v7875, 2.0
    %v7967 = vadd.f32 %v7877, 2.0
    %v7968 = vadd.f32 %v7879, 2.0
    %v7969 = vadd.f32 %v7881, 2.0
    %v7970 = vadd.f32 %v7883, 2.0
    %v7971 = vadd.f32 %v7885, 2.0
    %v7972 = vadd.f32 %v7887, 2.0
    %v7973 = vadd.f32 %v7889, 2.0
    %v7974 = vadd.f32 %v7891, 2.0
    %v7975 = vadd.f32 %v7893, 2.0
    %v7976 = vadd.f32 %v7895, 2.0
    %v7977 = vadd.f32 %v7897, 2.0
    %v7978 = vadd.f32 %v7899, 2.0
    %v7979 = vadd.f32 %v7901, 2.0
    %v7980 = vadd.f32 %v7903, 2.0
    %v7981 = vadd.f32 %v7905, 2.0
    %v7982 = vadd.f32 %v7907, 2.0
    %v7983 = vadd.f32 %v7909, 2.0
    %v7984 = vadd.f32 %v7911, 2.0
    %v7985 = vadd.f32 %v7913, 2.0
    %v7986 = vadd.f32 %v7915, 2.0
    %v7987 = vadd.f32 %v7917, 2.0
    %v7988 = vadd.f32 %v7919, 2.0
    %v7989 = vadd.f32 %v7921, 2.0
    %v7990 = vadd.f32 %v7923, 2.0
    %v7991 = vadd.f32 %v7925, 2.0
    %v7992 = vadd.f32 %v7927, 2.0
    %v7993 = vadd.f32 %v7929, 2.0
    %v7994 = vmul.f32 %v7803, %v7930
    %v7995 = vmul.f32 %v7805, %v7931
    %v7996 = vmul.f32 %v7807, %v7932
    %v7997 = vmul.f32 %v7809, %v7933
    %v7998 = vmul.f32 %v7811, %v7934
    %v7999 = vmul.f32 %v7813, %v7935
    %v8000 = vmul.f32 %v7815, %v7936
    %v8001 = vmul.f32 %v7817, %v7937
    %v8002 = vmul.f32 %v7819, %v7938
    %v8003 = vmul.f32 %v7821, %v7939
    %v8004 = vmul.f32 %v7823, %v7940
    %v8005 = vmul.f32 %v7825, %v7941
    %v8006 = vmul.f32 %v7827, %v7942
    %v8007 = vmul.f32 %v7829, %v7943
    %v8008 = vmul.f32 %v7831, %v7944
    %v8009 = vmul.f32 %v7833, %v7945
    %v8010 = vmul.f32 %v7835, %v7946
    %v8011 = vmul.f32 %v7837, %v7947
    %v8012 = vmul.f32 %v7839, %v7948
    %v8013 = vmul.f32 %v7841, %v7949
    %v8014 = vmul.f32 %v7843, %v7950
    %v8015 = vmul.f32 %v7845, %v7951
    %v8016 = vmul.f32 %v7847, %v7952
    %v8017 = vmul.f32 %v7849, %v7953
    %v8018 = vmul.f32 %v7851, %v7954
    %v8019 = vmul.f32 %v7853, %v7955
    %v8020 = vmul.f32 %v7855, %v7956
    %v8021 = vmul.f32 %v7857, %v7957
    %v8022 = vmul.f32 %v7859, %v7958
    %v8023 = vmul.f32 %v7861, %v7959
    %v8024 = vmul.f32 %v7863, %v7960
    %v8025 = vmul.f32 %v7865, %v7961
    %v8026 = vmul.f32 %v7867, %v7962
    %v8027 = vmul.f32 %v7869, %v7963
    %v8028 = vmul.f32 %v7871, %v7964
    %v8029 = vmul.f32 %v7873, %v7965
    %v8030 = vmul.f32 %v7875, %v7966
    %v8031 = vmul.f32 %v7877, %v7967
    %v8032 = vmul.f32 %v7879, %v7968
    %v8033 = vmul.f32 %v7881, %v7969
    %v8034 = vmul.f32 %v7883, %v7970
    %v8035 = vmul.f32 %v7885, %v7971
    %v8036 = vmul.f32 %v7887, %v7972
    %v8037 = vmul.f32 %v7889, %v7973
    %v8038 = vmul.f32 %v7891, %v7974
    %v8039 = vmul.f32 %v7893, %v7975
    %v8040 = vmul.f32 %v7895, %v7976
    %v8041 = vmul.f32 %v7897, %v7977
    %v8042 = vmul.f32 %v7899, %v7978
    %v8043 = vmul.f32 %v7901, %v7979
    %v8044 = vmul.f32 %v7903, %v7980
    %v8045 = vmul.f32 %v7905, %v7981
    %v8046 = vmul.f32 %v7907, %v7982
    %v8047 = vmul.f32 %v7909, %v7983
    %v8048 = vmul.f32 %v7911, %v7984
    %v8049 = vmul.f32 %v7913, %v7985
    %v8050 = vmul.f32 %v7915, %v7986
    %v8051 = vmul.f32 %v7917, %v7987
    %v8052 = vmul.f32 %v7919, %v7988
    %v8053 = vmul.f32 %v7921, %v7989
    %v8054 = vmul.f32 %v7923, %v7990
    %v8055 = vmul.f32 %v7925, %v7991
    %v8056 = vmul.f32 %v7927, %v7992
    %v8057 = vmul.f32 %v7929, %v7993
    %v8058 = vadd.f32 %v7994, 2.0
    %v8059 = vadd.f32 %v7995, 2.0
    %v8060 = vadd.f32 %v7996, 2.0
    %v8061 = vadd.f32 %v7997, 2.0
    %v8062 = vadd.f32 %v7998, 2.0
    %v8063 = vadd.f32 %v7999, 2.0
    %v8064 = vadd.f32 %v8000, 2.0
    %v8065 = vadd.f32 %v8001, 2.0
    %v8066 = vadd.f32 %v8002, 2.0
    %v8067 = vadd.f32 %v8003, 2.0
    %v8068 = vadd.f32 %v8004, 2.0
    %v8069 = vadd.f32 %v8005, 2.0
    %v8070 = vadd.f32 %v8006, 2.0
    %v8071 = vadd.f32 %v8007, 2.0
    %v8072 = vadd.f32 %v8008, 2.0
    %v8073 = vadd.f32 %v8009, 2.0
    %v8074 = vadd.f32 %v8010, 2.0
    %v8075 = vadd.f32 %v8011, 2.0
    %v8076 = vadd.f32 %v8012, 2.0
    %v8077 = vadd.f32 %v8013, 2.0
    %v8078 = vadd.f32 %v8014, 2.0
    %v8079 = vadd.f32 %v8015, 2.0
    %v8080 = vadd.f32 %v8016, 2.0
    %v8081 = vadd.f32 %v8017, 2.0
    %v8082 = vadd.f32 %v8018, 2.0
    %v8083 = vadd.f32 %v8019, 2.0
    %v8084 = vadd.f32 %v8020, 2.0
    %v8085 = vadd.f32 %v8021, 2.0
    %v8086 = vadd.f32 %v8022, 2.0
    %v8087 = vadd.f32 %v8023, 2.0
    %v8088 = vadd.f32 %v8024, 2.0
    %v8089 = vadd.f32 %v8025, 2.0
    %v8090 = vadd.f32 %v8026, 2.0
    %v8091 = vadd.f32 %v8027, 2.0
    %v8092 = vadd.f32 %v8028, 2.0
    %v8093 = vadd.f32 %v8029, 2.0
    %v8094 = vadd.f32 %v8030, 2.0
    %v8095 = vadd.f32 %v8031, 2.0
    %v8096 = vadd.f32 %v8032, 2.0
    %v8097 = vadd.f32 %v8033, 2.0
    %v8098 = vadd.f32 %v8034, 2.0
    %v8099 = vadd.f32 %v8035, 2.0
    %v8100 = vadd.f32 %v8036, 2.0
    %v8101 = vadd.f32 %v8037, 2.0
    %v8102 = vadd.f32 %v8038, 2.0
    %v8103 = vadd.f32 %v8039, 2.0
    %v8104 = vadd.f32 %v8040, 2.0
    %v8105 = vadd.f32 %v8041, 2.0
    %v8106 = vadd.f32 %v8042, 2.0
    %v8107 = vadd.f32 %v8043, 2.0
    %v8108 = vadd.f32 %v8044, 2.0
    %v8109 = vadd.f32 %v8045, 2.0
    %v8110 = vadd.f32 %v8046, 2.0
    %v8111 = vadd.f32 %v8047, 2.0
    %v8112 = vadd.f32 %v8048, 2.0
    %v8113 = vadd.f32 %v8049, 2.0
    %v8114 = vadd.f32 %v8050, 2.0
    %v8115 = vadd.f32 %v8051, 2.0
    %v8116 = vadd.f32 %v8052, 2.0
    %v8117 = vadd.f32 %v8053, 2.0
    %v8118 = vadd.f32 %v8054, 2.0
    %v8119 = vadd.f32 %v8055, 2.0
    %v8120 = vadd.f32 %v8056, 2.0
    %v8121 = vadd.f32 %v8057, 2.0
    %v8122 = vrcp.pop %v8058
    %v8123 = vrcp.pop %v8059
    %v8124 = vrcp.pop %v8060
    %v8125 = vrcp.pop %v8061
    %v8126 = vrcp.pop %v8062
    %v8127 = vrcp.pop %v8063
    %v8128 = vrcp.pop %v8064
    %v8129 = vrcp.pop %v8065
    %v8130 = vrcp.pop %v8066
    %v8131 = vrcp.pop %v8067
    %v8132 = vrcp.pop %v8068
    %v8133 = vrcp.pop %v8069
    %v8134 = vrcp.pop %v8070
    %v8135 = vrcp.pop %v8071
    %v8136 = vrcp.pop %v8072
    %v8137 = vrcp.pop %v8073
    %v8138 = vrcp.pop %v8074
    %v8139 = vrcp.pop %v8075
    %v8140 = vrcp.pop %v8076
    %v8141 = vrcp.pop %v8077
    %v8142 = vrcp.pop %v8078
    %v8143 = vrcp.pop %v8079
    %v8144 = vrcp.pop %v8080
    %v8145 = vrcp.pop %v8081
    %v8146 = vrcp.pop %v8082
    %v8147 = vrcp.pop %v8083
    %v8148 = vrcp.pop %v8084
    %v8149 = vrcp.pop %v8085
    %v8150 = vrcp.pop %v8086
    %v8151 = vrcp.pop %v8087
    %v8152 = vrcp.pop %v8088
    %v8153 = vrcp.pop %v8089
    %v8154 = vrcp.pop %v8090
    %v8155 = vrcp.pop %v8091
    %v8156 = vrcp.pop %v8092
    %v8157 = vrcp.pop %v8093
    %v8158 = vrcp.pop %v8094
    %v8159 = vrcp.pop %v8095
    %v8160 = vrcp.pop %v8096
    %v8161 = vrcp.pop %v8097
    %v8162 = vrcp.pop %v8098
    %v8163 = vrcp.pop %v8099
    %v8164 = vrcp.pop %v8100
    %v8165 = vrcp.pop %v8101
    %v8166 = vrcp.pop %v8102
    %v8167 = vrcp.pop %v8103
    %v8168 = vrcp.pop %v8104
    %v8169 = vrcp.pop %v8105
    %v8170 = vrcp.pop %v8106
    %v8171 = vrcp.pop %v8107
    %v8172 = vrcp.pop %v8108
    %v8173 = vrcp.pop %v8109
    %v8174 = vrcp.pop %v8110
    %v8175 = vrcp.pop %v8111
    %v8176 = vrcp.pop %v8112
    %v8177 = vrcp.pop %v8113
    %v8178 = vrcp.pop %v8114
    %v8179 = vrcp.pop %v8115
    %v8180 = vrcp.pop %v8116
    %v8181 = vrcp.pop %v8117
    %v8182 = vrcp.pop %v8118
    %v8183 = vrcp.pop %v8119
    %v8184 = vrcp.pop %v8120
    %v8185 = vrcp.pop %v8121
    %v8186 = vmul.f32 %v7994, %v8122
    %v8187 = vmul.f32 %v7995, %v8123
    %v8188 = vmul.f32 %v7996, %v8124
    %v8189 = vmul.f32 %v7997, %v8125
    %v8190 = vmul.f32 %v7998, %v8126
    %v8191 = vmul.f32 %v7999, %v8127
    %v8192 = vmul.f32 %v8000, %v8128
    %v8193 = vmul.f32 %v8001, %v8129
    %v8194 = vmul.f32 %v8002, %v8130
    %v8195 = vmul.f32 %v8003, %v8131
    %v8196 = vmul.f32 %v8004, %v8132
    %v8197 = vmul.f32 %v8005, %v8133
    %v8198 = vmul.f32 %v8006, %v8134
    %v8199 = vmul.f32 %v8007, %v8135
    %v8200 = vmul.f32 %v8008, %v8136
    %v8201 = vmul.f32 %v8009, %v8137
    %v8202 = vmul.f32 %v8010, %v8138
    %v8203 = vmul.f32 %v8011, %v8139
    %v8204 = vmul.f32 %v8012, %v8140
    %v8205 = vmul.f32 %v8013, %v8141
    %v8206 = vmul.f32 %v8014, %v8142
    %v8207 = vmul.f32 %v8015, %v8143
    %v8208 = vmul.f32 %v8016, %v8144
    %v8209 = vmul.f32 %v8017, %v8145
    %v8210 = vmul.f32 %v8018, %v8146
    %v8211 = vmul.f32 %v8019, %v8147
    %v8212 = vmul.f32 %v8020, %v8148
    %v8213 = vmul.f32 %v8021, %v8149
    %v8214 = vmul.f32 %v8022, %v8150
    %v8215 = vmul.f32 %v8023, %v8151
    %v8216 = vmul.f32 %v8024, %v8152
    %v8217 = vmul.f32 %v8025, %v8153
    %v8218 = vmul.f32 %v8026, %v8154
    %v8219 = vmul.f32 %v8027, %v8155
    %v8220 = vmul.f32 %v8028, %v8156
    %v8221 = vmul.f32 %v8029, %v8157
    %v8222 = vmul.f32 %v8030, %v8158
    %v8223 = vmul.f32 %v8031, %v8159
    %v8224 = vmul.f32 %v8032, %v8160
    %v8225 = vmul.f32 %v8033, %v8161
    %v8226 = vmul.f32 %v8034, %v8162
    %v8227 = vmul.f32 %v8035, %v8163
    %v8228 = vmul.f32 %v8036, %v8164
    %v8229 = vmul.f32 %v8037, %v8165
    %v8230 = vmul.f32 %v8038, %v8166
    %v8231 = vmul.f32 %v8039, %v8167
    %v8232 = vmul.f32 %v8040, %v8168
    %v8233 = vmul.f32 %v8041, %v8169
    %v8234 = vmul.f32 %v8042, %v8170
    %v8235 = vmul.f32 %v8043, %v8171
    %v8236 = vmul.f32 %v8044, %v8172
    %v8237 = vmul.f32 %v8045, %v8173
    %v8238 = vmul.f32 %v8046, %v8174
    %v8239 = vmul.f32 %v8047, %v8175
    %v8240 = vmul.f32 %v8048, %v8176
    %v8241 = vmul.f32 %v8049, %v8177
    %v8242 = vmul.f32 %v8050, %v8178
    %v8243 = vmul.f32 %v8051, %v8179
    %v8244 = vmul.f32 %v8052, %v8180
    %v8245 = vmul.f32 %v8053, %v8181
    %v8246 = vmul.f32 %v8054, %v8182
    %v8247 = vmul.f32 %v8055, %v8183
    %v8248 = vmul.f32 %v8056, %v8184
    %v8249 = vmul.f32 %v8057, %v8185
    %vm8250 = vcmp.gt.f32.partialorder %v7580, 8.0
    %vm8251 = vcmp.gt.f32.partialorder %v7582, 8.0
    %vm8252 = vcmp.gt.f32.partialorder %v7584, 8.0
    %vm8253 = vcmp.gt.f32.partialorder %v7586, 8.0
    %vm8254 = vcmp.gt.f32.partialorder %v7590, 8.0
    %vm8255 = vcmp.gt.f32.partialorder %v7592, 8.0
    %vm8256 = vcmp.gt.f32.partialorder %v7594, 8.0
    %vm8257 = vcmp.gt.f32.partialorder %v7596, 8.0
    %vm8258 = vcmp.gt.f32.partialorder %v7600, 8.0
    %vm8259 = vcmp.gt.f32.partialorder %v7602, 8.0
    %vm8260 = vcmp.gt.f32.partialorder %v7604, 8.0
    %vm8261 = vcmp.gt.f32.partialorder %v7606, 8.0
    %vm8262 = vcmp.gt.f32.partialorder %v7610, 8.0
    %vm8263 = vcmp.gt.f32.partialorder %v7612, 8.0
    %vm8264 = vcmp.gt.f32.partialorder %v7614, 8.0
    %vm8265 = vcmp.gt.f32.partialorder %v7616, 8.0
    %vm8266 = vcmp.gt.f32.partialorder %v7620, 8.0
    %vm8267 = vcmp.gt.f32.partialorder %v7622, 8.0
    %vm8268 = vcmp.gt.f32.partialorder %v7624, 8.0
    %vm8269 = vcmp.gt.f32.partialorder %v7626, 8.0
    %vm8270 = vcmp.gt.f32.partialorder %v7630, 8.0
    %vm8271 = vcmp.gt.f32.partialorder %v7632, 8.0
    %vm8272 = vcmp.gt.f32.partialorder %v7634, 8.0
    %vm8273 = vcmp.gt.f32.partialorder %v7636, 8.0
    %vm8274 = vcmp.gt.f32.partialorder %v7640, 8.0
    %vm8275 = vcmp.gt.f32.partialorder %v7642, 8.0
    %vm8276 = vcmp.gt.f32.partialorder %v7644, 8.0
    %vm8277 = vcmp.gt.f32.partialorder %v7646, 8.0
    %vm8278 = vcmp.gt.f32.partialorder %v7650, 8.0
    %vm8279 = vcmp.gt.f32.partialorder %v7652, 8.0
    %vm8280 = vcmp.gt.f32.partialorder %v7654, 8.0
    %vm8281 = vcmp.gt.f32.partialorder %v7656, 8.0
    %vm8282 = vcmp.gt.f32.partialorder %v7660, 8.0
    %vm8283 = vcmp.gt.f32.partialorder %v7662, 8.0
    %vm8284 = vcmp.gt.f32.partialorder %v7664, 8.0
    %vm8285 = vcmp.gt.f32.partialorder %v7666, 8.0
    %vm8286 = vcmp.gt.f32.partialorder %v7670, 8.0
    %vm8287 = vcmp.gt.f32.partialorder %v7672, 8.0
    %vm8288 = vcmp.gt.f32.partialorder %v7674, 8.0
    %vm8289 = vcmp.gt.f32.partialorder %v7676, 8.0
    %vm8290 = vcmp.gt.f32.partialorder %v7680, 8.0
    %vm8291 = vcmp.gt.f32.partialorder %v7682, 8.0
    %vm8292 = vcmp.gt.f32.partialorder %v7684, 8.0
    %vm8293 = vcmp.gt.f32.partialorder %v7686, 8.0
    %vm8294 = vcmp.gt.f32.partialorder %v7690, 8.0
    %vm8295 = vcmp.gt.f32.partialorder %v7692, 8.0
    %vm8296 = vcmp.gt.f32.partialorder %v7694, 8.0
    %vm8297 = vcmp.gt.f32.partialorder %v7696, 8.0
    %vm8298 = vcmp.gt.f32.partialorder %v7700, 8.0
    %vm8299 = vcmp.gt.f32.partialorder %v7702, 8.0
    %vm8300 = vcmp.gt.f32.partialorder %v7704, 8.0
    %vm8301 = vcmp.gt.f32.partialorder %v7706, 8.0
    %vm8302 = vcmp.gt.f32.partialorder %v7710, 8.0
    %vm8303 = vcmp.gt.f32.partialorder %v7712, 8.0
    %vm8304 = vcmp.gt.f32.partialorder %v7714, 8.0
    %vm8305 = vcmp.gt.f32.partialorder %v7716, 8.0
    %vm8306 = vcmp.gt.f32.partialorder %v7720, 8.0
    %vm8307 = vcmp.gt.f32.partialorder %v7722, 8.0
    %vm8308 = vcmp.gt.f32.partialorder %v7724, 8.0
    %vm8309 = vcmp.gt.f32.partialorder %v7726, 8.0
    %vm8310 = vcmp.gt.f32.partialorder %v7730, 8.0
    %vm8311 = vcmp.gt.f32.partialorder %v7732, 8.0
    %vm8312 = vcmp.gt.f32.partialorder %v7734, 8.0
    %vm8313 = vcmp.gt.f32.partialorder %v7736, 8.0
    %v8314 = vmul.f32 %v7580, %v8186
    %v8315 = vmul.f32 %v7582, %v8187
    %v8316 = vmul.f32 %v7584, %v8188
    %v8317 = vmul.f32 %v7586, %v8189
    %v8318 = vmul.f32 %v7590, %v8190
    %v8319 = vmul.f32 %v7592, %v8191
    %v8320 = vmul.f32 %v7594, %v8192
    %v8321 = vmul.f32 %v7596, %v8193
    %v8322 = vmul.f32 %v7600, %v8194
    %v8323 = vmul.f32 %v7602, %v8195
    %v8324 = vmul.f32 %v7604, %v8196
    %v8325 = vmul.f32 %v7606, %v8197
    %v8326 = vmul.f32 %v7610, %v8198
    %v8327 = vmul.f32 %v7612, %v8199
    %v8328 = vmul.f32 %v7614, %v8200
    %v8329 = vmul.f32 %v7616, %v8201
    %v8330 = vmul.f32 %v7620, %v8202
    %v8331 = vmul.f32 %v7622, %v8203
    %v8332 = vmul.f32 %v7624, %v8204
    %v8333 = vmul.f32 %v7626, %v8205
    %v8334 = vmul.f32 %v7630, %v8206
    %v8335 = vmul.f32 %v7632, %v8207
    %v8336 = vmul.f32 %v7634, %v8208
    %v8337 = vmul.f32 %v7636, %v8209
    %v8338 = vmul.f32 %v7640, %v8210
    %v8339 = vmul.f32 %v7642, %v8211
    %v8340 = vmul.f32 %v7644, %v8212
    %v8341 = vmul.f32 %v7646, %v8213
    %v8342 = vmul.f32 %v7650, %v8214
    %v8343 = vmul.f32 %v7652, %v8215
    %v8344 = vmul.f32 %v7654, %v8216
    %v8345 = vmul.f32 %v7656, %v8217
    %v8346 = vmul.f32 %v7660, %v8218
    %v8347 = vmul.f32 %v7662, %v8219
    %v8348 = vmul.f32 %v7664, %v8220
    %v8349 = vmul.f32 %v7666, %v8221
    %v8350 = vmul.f32 %v7670, %v8222
    %v8351 = vmul.f32 %v7672, %v8223
    %v8352 = vmul.f32 %v7674, %v8224
    %v8353 = vmul.f32 %v7676, %v8225
    %v8354 = vmul.f32 %v7680, %v8226
    %v8355 = vmul.f32 %v7682, %v8227
    %v8356 = vmul.f32 %v7684, %v8228
    %v8357 = vmul.f32 %v7686, %v8229
    %v8358 = vmul.f32 %v7690, %v8230
    %v8359 = vmul.f32 %v7692, %v8231
    %v8360 = vmul.f32 %v7694, %v8232
    %v8361 = vmul.f32 %v7696, %v8233
    %v8362 = vmul.f32 %v7700, %v8234
    %v8363 = vmul.f32 %v7702, %v8235
    %v8364 = vmul.f32 %v7704, %v8236
    %v8365 = vmul.f32 %v7706, %v8237
    %v8366 = vmul.f32 %v7710, %v8238
    %v8367 = vmul.f32 %v7712, %v8239
    %v8368 = vmul.f32 %v7714, %v8240
    %v8369 = vmul.f32 %v7716, %v8241
    %v8370 = vmul.f32 %v7720, %v8242
    %v8371 = vmul.f32 %v7722, %v8243
    %v8372 = vmul.f32 %v7724, %v8244
    %v8373 = vmul.f32 %v7726, %v8245
    %v8374 = vmul.f32 %v7730, %v8246
    %v8375 = vmul.f32 %v7732, %v8247
    %v8376 = vmul.f32 %v7734, %v8248
    %v8377 = vmul.f32 %v7736, %v8249
    %v8378 = vsel %vm8250, %v7580, %v8314
    %v8379 = vsel %vm8251, %v7582, %v8315
    %v8380 = vsel %vm8252, %v7584, %v8316
    %v8381 = vsel %vm8253, %v7586, %v8317
    %v8382 = vsel %vm8254, %v7590, %v8318
    %v8383 = vsel %vm8255, %v7592, %v8319
    %v8384 = vsel %vm8256, %v7594, %v8320
    %v8385 = vsel %vm8257, %v7596, %v8321
    %v8386 = vsel %vm8258, %v7600, %v8322
    %v8387 = vsel %vm8259, %v7602, %v8323
    %v8388 = vsel %vm8260, %v7604, %v8324
    %v8389 = vsel %vm8261, %v7606, %v8325
    %v8390 = vsel %vm8262, %v7610, %v8326
    %v8391 = vsel %vm8263, %v7612, %v8327
    %v8392 = vsel %vm8264, %v7614, %v8328
    %v8393 = vsel %vm8265, %v7616, %v8329
    %v8394 = vsel %vm8266, %v7620, %v8330
    %v8395 = vsel %vm8267, %v7622, %v8331
    %v8396 = vsel %vm8268, %v7624, %v8332
    %v8397 = vsel %vm8269, %v7626, %v8333
    %v8398 = vsel %vm8270, %v7630, %v8334
    %v8399 = vsel %vm8271, %v7632, %v8335
    %v8400 = vsel %vm8272, %v7634, %v8336
    %v8401 = vsel %vm8273, %v7636, %v8337
    %v8402 = vsel %vm8274, %v7640, %v8338
    %v8403 = vsel %vm8275, %v7642, %v8339
    %v8404 = vsel %vm8276, %v7644, %v8340
    %v8405 = vsel %vm8277, %v7646, %v8341
    %v8406 = vsel %vm8278, %v7650, %v8342
    %v8407 = vsel %vm8279, %v7652, %v8343
    %v8408 = vsel %vm8280, %v7654, %v8344
    %v8409 = vsel %vm8281, %v7656, %v8345
    %v8410 = vsel %vm8282, %v7660, %v8346
    %v8411 = vsel %vm8283, %v7662, %v8347
    %v8412 = vsel %vm8284, %v7664, %v8348
    %v8413 = vsel %vm8285, %v7666, %v8349
    %v8414 = vsel %vm8286, %v7670, %v8350
    %v8415 = vsel %vm8287, %v7672, %v8351
    %v8416 = vsel %vm8288, %v7674, %v8352
    %v8417 = vsel %vm8289, %v7676, %v8353
    %v8418 = vsel %vm8290, %v7680, %v8354
    %v8419 = vsel %vm8291, %v7682, %v8355
    %v8420 = vsel %vm8292, %v7684, %v8356
    %v8421 = vsel %vm8293, %v7686, %v8357
    %v8422 = vsel %vm8294, %v7690, %v8358
    %v8423 = vsel %vm8295, %v7692, %v8359
    %v8424 = vsel %vm8296, %v7694, %v8360
    %v8425 = vsel %vm8297, %v7696, %v8361
    %v8426 = vsel %vm8298, %v7700, %v8362
    %v8427 = vsel %vm8299, %v7702, %v8363
    %v8428 = vsel %vm8300, %v7704, %v8364
    %v8429 = vsel %vm8301, %v7706, %v8365
    %v8430 = vsel %vm8302, %v7710, %v8366
    %v8431 = vsel %vm8303, %v7712, %v8367
    %v8432 = vsel %vm8304, %v7714, %v8368
    %v8433 = vsel %vm8305, %v7716, %v8369
    %v8434 = vsel %vm8306, %v7720, %v8370
    %v8435 = vsel %vm8307, %v7722, %v8371
    %v8436 = vsel %vm8308, %v7724, %v8372
    %v8437 = vsel %vm8309, %v7726, %v8373
    %v8438 = vsel %vm8310, %v7730, %v8374
    %v8439 = vsel %vm8311, %v7732, %v8375
    %v8440 = vsel %vm8312, %v7734, %v8376
    %v8441 = vsel %vm8313, %v7736, %v8377
    %v8442 = vpack.c.bf16 %v8380, %v8378
    %v8443 = vpack.c.bf16 %v8381, %v8379
    %v8444 = vpack.c.bf16 %v8384, %v8382
    %v8445 = vpack.c.bf16 %v8385, %v8383
    %v8446 = vpack.c.bf16 %v8388, %v8386
    %v8447 = vpack.c.bf16 %v8389, %v8387
    %v8448 = vpack.c.bf16 %v8392, %v8390
    %v8449 = vpack.c.bf16 %v8393, %v8391
    %v8450 = vpack.c.bf16 %v8396, %v8394
    %v8451 = vpack.c.bf16 %v8397, %v8395
    %v8452 = vpack.c.bf16 %v8400, %v8398
    %v8453 = vpack.c.bf16 %v8401, %v8399
    %v8454 = vpack.c.bf16 %v8404, %v8402
    %v8455 = vpack.c.bf16 %v8405, %v8403
    %v8456 = vpack.c.bf16 %v8408, %v8406
    %v8457 = vpack.c.bf16 %v8409, %v8407
    %v8458 = vpack.c.bf16 %v8412, %v8410
    %v8459 = vpack.c.bf16 %v8413, %v8411
    %v8460 = vpack.c.bf16 %v8416, %v8414
    %v8461 = vpack.c.bf16 %v8417, %v8415
    %v8462 = vpack.c.bf16 %v8420, %v8418
    %v8463 = vpack.c.bf16 %v8421, %v8419
    %v8464 = vpack.c.bf16 %v8424, %v8422
    %v8465 = vpack.c.bf16 %v8425, %v8423
    %v8466 = vpack.c.bf16 %v8428, %v8426
    %v8467 = vpack.c.bf16 %v8429, %v8427
    %v8468 = vpack.c.bf16 %v8432, %v8430
    %v8469 = vpack.c.bf16 %v8433, %v8431
    %v8470 = vpack.c.bf16 %v8436, %v8434
    %v8471 = vpack.c.bf16 %v8437, %v8435
    %v8472 = vpack.c.bf16 %v8440, %v8438
    %v8473 = vpack.c.bf16 %v8441, %v8439
    %s8474 = scalar_lea.vmem [#allocation4], 512
    %v8475 = vld [vmem:[%s8474] sm:$0xff]
    %v8476 = vld [vmem:[%s8474 + $0x8] sm:$0xff]
    %v8477 = vld [vmem:[%s8474 + $0x10] sm:$0xff]
    %v8478 = vld [vmem:[%s8474 + $0x18] sm:$0xff]
    %v8479 = vld [vmem:[%s8474 + $0x20] sm:$0xff]
    %v8480 = vld [vmem:[%s8474 + $0x28] sm:$0xff]
    %v8481 = vld [vmem:[%s8474 + $0x30] sm:$0xff]
    %v8482 = vld [vmem:[%s8474 + $0x38] sm:$0xff]
    %v8483 = vld [vmem:[%s8474 + $0x40] sm:$0xff]
    %v8484 = vld [vmem:[%s8474 + $0x48] sm:$0xff]
    %v8485 = vld [vmem:[%s8474 + $0x50] sm:$0xff]
    %v8486 = vld [vmem:[%s8474 + $0x58] sm:$0xff]
    %v8487 = vld [vmem:[%s8474 + $0x60] sm:$0xff]
    %v8488 = vld [vmem:[%s8474 + $0x68] sm:$0xff]
    %v8489 = vld [vmem:[%s8474 + $0x70] sm:$0xff]
    %v8490 = vld [vmem:[%s8474 + $0x78] sm:$0xff]
    %v8491 = vld [vmem:[%s8474 + $0x80] sm:$0xff]
    %v8492 = vld [vmem:[%s8474 + $0x88] sm:$0xff]
    %v8493 = vld [vmem:[%s8474 + $0x90] sm:$0xff]
    %v8494 = vld [vmem:[%s8474 + $0x98] sm:$0xff]
    %v8495 = vld [vmem:[%s8474 + $0xa0] sm:$0xff]
    %v8496 = vld [vmem:[%s8474 + $0xa8] sm:$0xff]
    %v8497 = vld [vmem:[%s8474 + $0xb0] sm:$0xff]
    %v8498 = vld [vmem:[%s8474 + $0xb8] sm:$0xff]
    %v8499 = vld [vmem:[%s8474 + $0xc0] sm:$0xff]
    %v8500 = vld [vmem:[%s8474 + $0xc8] sm:$0xff]
    %v8501 = vld [vmem:[%s8474 + $0xd0] sm:$0xff]
    %v8502 = vld [vmem:[%s8474 + $0xd8] sm:$0xff]
    %v8503 = vld [vmem:[%s8474 + $0xe0] sm:$0xff]
    %v8504 = vld [vmem:[%s8474 + $0xe8] sm:$0xff]
    %v8505 = vld [vmem:[%s8474 + $0xf0] sm:$0xff]
    %v8506 = vld [vmem:[%s8474 + $0xf8] sm:$0xff]
    %s8507 = scalar_lea.vmem %s6, 4
    %v8508 = vld [vmem:[%s8507] sm:$0x3]
    %v8510 = vlaneseq
    %v8511 = vshrl.u32 %v8510, 7
    %v8512 = vsub.s32 0, %v8511
    %v8513 = vrot.slane %v8508, %v8512
    %v8514 = vlaneseq
    %v8515 = vshrl.u32 %v8514, 7
    %v8516 = vsub.s32 1, %v8515
    %v8517 = vrot.slane %v8508, %v8516
    %v8552 = vunpack.c.l.b16 %v8475
    %v8553 = vunpack.c.h.b16 %v8475
    %v8554 = vunpack.c.l.b16 %v8476
    %v8555 = vunpack.c.h.b16 %v8476
    %v8556 = vunpack.c.l.b16 %v8477
    %v8557 = vunpack.c.h.b16 %v8477
    %v8558 = vunpack.c.l.b16 %v8478
    %v8559 = vunpack.c.h.b16 %v8478
    %v8560 = vunpack.c.l.b16 %v8479
    %v8561 = vunpack.c.h.b16 %v8479
    %v8562 = vunpack.c.l.b16 %v8480
    %v8563 = vunpack.c.h.b16 %v8480
    %v8564 = vunpack.c.l.b16 %v8481
    %v8565 = vunpack.c.h.b16 %v8481
    %v8566 = vunpack.c.l.b16 %v8482
    %v8567 = vunpack.c.h.b16 %v8482
    %v8568 = vunpack.c.l.b16 %v8483
    %v8569 = vunpack.c.h.b16 %v8483
    %v8570 = vunpack.c.l.b16 %v8484
    %v8571 = vunpack.c.h.b16 %v8484
    %v8572 = vunpack.c.l.b16 %v8485
    %v8573 = vunpack.c.h.b16 %v8485
    %v8574 = vunpack.c.l.b16 %v8486
    %v8575 = vunpack.c.h.b16 %v8486
    %v8576 = vunpack.c.l.b16 %v8487
    %v8577 = vunpack.c.h.b16 %v8487
    %v8578 = vunpack.c.l.b16 %v8488
    %v8579 = vunpack.c.h.b16 %v8488
    %v8580 = vunpack.c.l.b16 %v8489
    %v8581 = vunpack.c.h.b16 %v8489
    %v8582 = vunpack.c.l.b16 %v8490
    %v8583 = vunpack.c.h.b16 %v8490
    %v8584 = vunpack.c.l.b16 %v8491
    %v8585 = vunpack.c.h.b16 %v8491
    %v8586 = vunpack.c.l.b16 %v8492
    %v8587 = vunpack.c.h.b16 %v8492
    %v8588 = vunpack.c.l.b16 %v8493
    %v8589 = vunpack.c.h.b16 %v8493
    %v8590 = vunpack.c.l.b16 %v8494
    %v8591 = vunpack.c.h.b16 %v8494
    %v8592 = vunpack.c.l.b16 %v8495
    %v8593 = vunpack.c.h.b16 %v8495
    %v8594 = vunpack.c.l.b16 %v8496
    %v8595 = vunpack.c.h.b16 %v8496
    %v8596 = vunpack.c.l.b16 %v8497
    %v8597 = vunpack.c.h.b16 %v8497
    %v8598 = vunpack.c.l.b16 %v8498
    %v8599 = vunpack.c.h.b16 %v8498
    %v8600 = vunpack.c.l.b16 %v8499
    %v8601 = vunpack.c.h.b16 %v8499
    %v8602 = vunpack.c.l.b16 %v8500
    %v8603 = vunpack.c.h.b16 %v8500
    %v8604 = vunpack.c.l.b16 %v8501
    %v8605 = vunpack.c.h.b16 %v8501
    %v8606 = vunpack.c.l.b16 %v8502
    %v8607 = vunpack.c.h.b16 %v8502
    %v8608 = vunpack.c.l.b16 %v8503
    %v8609 = vunpack.c.h.b16 %v8503
    %v8610 = vunpack.c.l.b16 %v8504
    %v8611 = vunpack.c.h.b16 %v8504
    %v8612 = vunpack.c.l.b16 %v8505
    %v8613 = vunpack.c.h.b16 %v8505
    %v8614 = vunpack.c.l.b16 %v8506
    %v8615 = vunpack.c.h.b16 %v8506
    %v8616 = vpack.c.b16 %v8554, %v8552
    %v8617 = vpack.c.b16 %v8555, %v8553
    %v8618 = vpack.c.b16 %v8558, %v8556
    %v8619 = vpack.c.b16 %v8559, %v8557
    %v8620 = vpack.c.b16 %v8562, %v8560
    %v8621 = vpack.c.b16 %v8563, %v8561
    %v8622 = vpack.c.b16 %v8566, %v8564
    %v8623 = vpack.c.b16 %v8567, %v8565
    %v8624 = vpack.c.b16 %v8570, %v8568
    %v8625 = vpack.c.b16 %v8571, %v8569
    %v8626 = vpack.c.b16 %v8574, %v8572
    %v8627 = vpack.c.b16 %v8575, %v8573
    %v8628 = vpack.c.b16 %v8578, %v8576
    %v8629 = vpack.c.b16 %v8579, %v8577
    %v8630 = vpack.c.b16 %v8582, %v8580
    %v8631 = vpack.c.b16 %v8583, %v8581
    %v8632 = vpack.c.b16 %v8586, %v8584
    %v8633 = vpack.c.b16 %v8587, %v8585
    %v8634 = vpack.c.b16 %v8590, %v8588
    %v8635 = vpack.c.b16 %v8591, %v8589
    %v8636 = vpack.c.b16 %v8594, %v8592
    %v8637 = vpack.c.b16 %v8595, %v8593
    %v8638 = vpack.c.b16 %v8598, %v8596
    %v8639 = vpack.c.b16 %v8599, %v8597
    %v8640 = vpack.c.b16 %v8602, %v8600
    %v8641 = vpack.c.b16 %v8603, %v8601
    %v8642 = vpack.c.b16 %v8606, %v8604
    %v8643 = vpack.c.b16 %v8607, %v8605
    %v8644 = vpack.c.b16 %v8610, %v8608
    %v8645 = vpack.c.b16 %v8611, %v8609
    %v8646 = vpack.c.b16 %v8614, %v8612
    %v8647 = vpack.c.b16 %v8615, %v8613
    %8680 = vmatprep.subr.bf16.mxu0 %v8617
    %8681 = vmatpush1.bf16.msra.mxu0 %v8616
    %8682 = vmatprep.subr.bf16.mxu0 %v8619
    %8683 = vmatpush1.bf16.msra.mxu0 %v8618
    %8684 = vmatprep.subr.bf16.mxu0 %v8621
    %8685 = vmatpush1.bf16.msra.mxu0 %v8620
    %8686 = vmatprep.subr.bf16.mxu0 %v8623
    %8687 = vmatpush1.bf16.msra.mxu0 %v8622
    %8688 = vmatprep.subr.bf16.mxu0 %v8625
    %8689 = vmatpush1.bf16.msra.mxu0 %v8624
    %8690 = vmatprep.subr.bf16.mxu0 %v8627
    %8691 = vmatpush1.bf16.msra.mxu0 %v8626
    %8692 = vmatprep.subr.bf16.mxu0 %v8629
    %8693 = vmatpush1.bf16.msra.mxu0 %v8628
    %8694 = vmatprep.subr.bf16.mxu0 %v8631
    %8695 = vmatpush1.bf16.msra.mxu0 %v8630
    %8696 = vmatprep.subr.bf16.mxu0 %v8633
    %8697 = vmatpush1.bf16.msra.mxu0 %v8632
    %8698 = vmatprep.subr.bf16.mxu0 %v8635
    %8699 = vmatpush1.bf16.msra.mxu0 %v8634
    %8700 = vmatprep.subr.bf16.mxu0 %v8637
    %8701 = vmatpush1.bf16.msra.mxu0 %v8636
    %8702 = vmatprep.subr.bf16.mxu0 %v8639
    %8703 = vmatpush1.bf16.msra.mxu0 %v8638
    %8704 = vmatprep.subr.bf16.mxu0 %v8641
    %8705 = vmatpush1.bf16.msra.mxu0 %v8640
    %8706 = vmatprep.subr.bf16.mxu0 %v8643
    %8707 = vmatpush1.bf16.msra.mxu0 %v8642
    %8708 = vmatprep.subr.bf16.mxu0 %v8645
    %8709 = vmatpush1.bf16.msra.mxu0 %v8644
    %8710 = vmatprep.subr.bf16.mxu0 %v8647
    %8711 = vmatpush1.bf16.msra.mxu0 %v8646
    %8712 = vmatprep.mubr.bf16.mxu0 %v8443
    %8713 = vmatmul.mubr.bf16.gmra.mrb[0].mxu0 %v8442
    %v8714 = vpop.f32.mrb[0].mxu0
    %v8715 = vadd.f32 %v8513, %v8714
    %v8716 = vpop.f32.mrb[0].mxu0
    %v8717 = vadd.f32 %v8517, %v8716
    %v8718 = vpop.f32.mrb[0].mxu0
    %v8719 = vadd.f32 %v8513, %v8718
    %v8720 = vpop.f32.mrb[0].mxu0
    %v8721 = vadd.f32 %v8517, %v8720
    %8722 = vmatprep.mubr.bf16.mxu0 %v8445
    %8723 = vmatmul.mubr.bf16.gmra.mrb[0].mxu0 %v8444
    %v8724 = vpop.f32.mrb[0].mxu0
    %v8725 = vadd.f32 %v8513, %v8724
    %v8726 = vpop.f32.mrb[0].mxu0
    %v8727 = vadd.f32 %v8517, %v8726
    %v8728 = vpop.f32.mrb[0].mxu0
    %v8729 = vadd.f32 %v8513, %v8728
    %v8730 = vpop.f32.mrb[0].mxu0
    %v8731 = vadd.f32 %v8517, %v8730
    %8732 = vmatprep.mubr.bf16.mxu0 %v8447
    %8733 = vmatmul.mubr.bf16.gmra.mrb[0].mxu0 %v8446
    %v8734 = vpop.f32.mrb[0].mxu0
    %v8735 = vadd.f32 %v8513, %v8734
    %v8736 = vpop.f32.mrb[0].mxu0
    %v8737 = vadd.f32 %v8517, %v8736
    %v8738 = vpop.f32.mrb[0].mxu0
    %v8739 = vadd.f32 %v8513, %v8738
    %v8740 = vpop.f32.mrb[0].mxu0
    %v8741 = vadd.f32 %v8517, %v8740
    %8742 = vmatprep.mubr.bf16.mxu0 %v8449
    %8743 = vmatmul.mubr.bf16.gmra.mrb[0].mxu0 %v8448
    %v8744 = vpop.f32.mrb[0].mxu0
    %v8745 = vadd.f32 %v8513, %v8744
    %v8746 = vpop.f32.mrb[0].mxu0
    %v8747 = vadd.f32 %v8517, %v8746
    %v8748 = vpop.f32.mrb[0].mxu0
    %v8749 = vadd.f32 %v8513, %v8748
    %v8750 = vpop.f32.mrb[0].mxu0
    %v8751 = vadd.f32 %v8517, %v8750
    %8752 = vmatprep.mubr.bf16.mxu0 %v8451
    %8753 = vmatmul.mubr.bf16.gmra.mrb[0].mxu0 %v8450
    %v8754 = vpop.f32.mrb[0].mxu0
    %v8755 = vadd.f32 %v8513, %v8754
    %v8756 = vpop.f32.mrb[0].mxu0
    %v8757 = vadd.f32 %v8517, %v8756
    %v8758 = vpop.f32.mrb[0].mxu0
    %v8759 = vadd.f32 %v8513, %v8758
    %v8760 = vpop.f32.mrb[0].mxu0
    %v8761 = vadd.f32 %v8517, %v8760
    %8762 = vmatprep.mubr.bf16.mxu0 %v8453
    %8763 = vmatmul.mubr.bf16.gmra.mrb[0].mxu0 %v8452
    %v8764 = vpop.f32.mrb[0].mxu0
    %v8765 = vadd.f32 %v8513, %v8764
    %v8766 = vpop.f32.mrb[0].mxu0
    %v8767 = vadd.f32 %v8517, %v8766
    %v8768 = vpop.f32.mrb[0].mxu0
    %v8769 = vadd.f32 %v8513, %v8768
    %v8770 = vpop.f32.mrb[0].mxu0
    %v8771 = vadd.f32 %v8517, %v8770
    %8772 = vmatprep.mubr.bf16.mxu0 %v8455
    %8773 = vmatmul.mubr.bf16.gmra.mrb[0].mxu0 %v8454
    %v8774 = vpop.f32.mrb[0].mxu0
    %v8775 = vadd.f32 %v8513, %v8774
    %v8776 = vpop.f32.mrb[0].mxu0
    %v8777 = vadd.f32 %v8517, %v8776
    %v8778 = vpop.f32.mrb[0].mxu0
    %v8779 = vadd.f32 %v8513, %v8778
    %v8780 = vpop.f32.mrb[0].mxu0
    %v8781 = vadd.f32 %v8517, %v8780
    %8782 = vmatprep.mubr.bf16.mxu0 %v8457
    %8783 = vmatmul.mubr.bf16.gmra.mrb[0].mxu0 %v8456
    %v8784 = vpop.f32.mrb[0].mxu0
    %v8785 = vadd.f32 %v8513, %v8784
    %v8786 = vpop.f32.mrb[0].mxu0
    %v8787 = vadd.f32 %v8517, %v8786
    %v8788 = vpop.f32.mrb[0].mxu0
    %v8789 = vadd.f32 %v8513, %v8788
    %v8790 = vpop.f32.mrb[0].mxu0
    %v8791 = vadd.f32 %v8517, %v8790
    %8792 = vmatprep.mubr.bf16.mxu0 %v8459
    %8793 = vmatmul.mubr.bf16.gmra.mrb[0].mxu0 %v8458
    %v8794 = vpop.f32.mrb[0].mxu0
    %v8795 = vadd.f32 %v8513, %v8794
    %v8796 = vpop.f32.mrb[0].mxu0
    %v8797 = vadd.f32 %v8517, %v8796
    %v8798 = vpop.f32.mrb[0].mxu0
    %v8799 = vadd.f32 %v8513, %v8798
    %v8800 = vpop.f32.mrb[0].mxu0
    %v8801 = vadd.f32 %v8517, %v8800
    %8802 = vmatprep.mubr.bf16.mxu0 %v8461
    %8803 = vmatmul.mubr.bf16.gmra.mrb[0].mxu0 %v8460
    %v8804 = vpop.f32.mrb[0].mxu0
    %v8805 = vadd.f32 %v8513, %v8804
    %v8806 = vpop.f32.mrb[0].mxu0
    %v8807 = vadd.f32 %v8517, %v8806
    %v8808 = vpop.f32.mrb[0].mxu0
    %v8809 = vadd.f32 %v8513, %v8808
    %v8810 = vpop.f32.mrb[0].mxu0
    %v8811 = vadd.f32 %v8517, %v8810
    %8812 = vmatprep.mubr.bf16.mxu0 %v8463
    %8813 = vmatmul.mubr.bf16.gmra.mrb[0].mxu0 %v8462
    %v8814 = vpop.f32.mrb[0].mxu0
    %v8815 = vadd.f32 %v8513, %v8814
    %v8816 = vpop.f32.mrb[0].mxu0
    %v8817 = vadd.f32 %v8517, %v8816
    %v8818 = vpop.f32.mrb[0].mxu0
    %v8819 = vadd.f32 %v8513, %v8818
    %v8820 = vpop.f32.mrb[0].mxu0
    %v8821 = vadd.f32 %v8517, %v8820
    %8822 = vmatprep.mubr.bf16.mxu0 %v8465
    %8823 = vmatmul.mubr.bf16.gmra.mrb[0].mxu0 %v8464
    %v8824 = vpop.f32.mrb[0].mxu0
    %v8825 = vadd.f32 %v8513, %v8824
    %v8826 = vpop.f32.mrb[0].mxu0
    %v8827 = vadd.f32 %v8517, %v8826
    %v8828 = vpop.f32.mrb[0].mxu0
    %v8829 = vadd.f32 %v8513, %v8828
    %v8830 = vpop.f32.mrb[0].mxu0
    %v8831 = vadd.f32 %v8517, %v8830
    %8832 = vmatprep.mubr.bf16.mxu0 %v8467
    %8833 = vmatmul.mubr.bf16.gmra.mrb[0].mxu0 %v8466
    %v8834 = vpop.f32.mrb[0].mxu0
    %v8835 = vadd.f32 %v8513, %v8834
    %v8836 = vpop.f32.mrb[0].mxu0
    %v8837 = vadd.f32 %v8517, %v8836
    %v8838 = vpop.f32.mrb[0].mxu0
    %v8839 = vadd.f32 %v8513, %v8838
    %v8840 = vpop.f32.mrb[0].mxu0
    %v8841 = vadd.f32 %v8517, %v8840
    %8842 = vmatprep.mubr.bf16.mxu0 %v8469
    %8843 = vmatmul.mubr.bf16.gmra.mrb[0].mxu0 %v8468
    %v8844 = vpop.f32.mrb[0].mxu0
    %v8845 = vadd.f32 %v8513, %v8844
    %v8846 = vpop.f32.mrb[0].mxu0
    %v8847 = vadd.f32 %v8517, %v8846
    %v8848 = vpop.f32.mrb[0].mxu0
    %v8849 = vadd.f32 %v8513, %v8848
    %v8850 = vpop.f32.mrb[0].mxu0
    %v8851 = vadd.f32 %v8517, %v8850
    %8852 = vmatprep.mubr.bf16.mxu0 %v8471
    %8853 = vmatmul.mubr.bf16.gmra.mrb[0].mxu0 %v8470
    %v8854 = vpop.f32.mrb[0].mxu0
    %v8855 = vadd.f32 %v8513, %v8854
    %v8856 = vpop.f32.mrb[0].mxu0
    %v8857 = vadd.f32 %v8517, %v8856
    %v8858 = vpop.f32.mrb[0].mxu0
    %v8859 = vadd.f32 %v8513, %v8858
    %v8860 = vpop.f32.mrb[0].mxu0
    %v8861 = vadd.f32 %v8517, %v8860
    %8862 = vmatprep.mubr.bf16.mxu0 %v8473
    %8863 = vmatmul.mubr.bf16.gmra.mrb[0].mxu0 %v8472
    %v8864 = vpop.f32.mrb[0].mxu0
    %v8865 = vadd.f32 %v8513, %v8864
    %v8866 = vpop.f32.mrb[0].mxu0
    %v8867 = vadd.f32 %v8517, %v8866
    %v8868 = vpop.f32.mrb[0].mxu0
    %v8869 = vadd.f32 %v8513, %v8868
    %v8870 = vpop.f32.mrb[0].mxu0
    %v8871 = vadd.f32 %v8517, %v8870
    %8872 = vdwg.mxu0
    %v8873 = vadd.f32 %v8715, %v6539
    %v8874 = vadd.f32 %v8717, %v6540
    %v8875 = vadd.f32 %v8719, %v6541
    %v8876 = vadd.f32 %v8721, %v6542
    %v8877 = vadd.f32 %v8725, %v6543
    %v8878 = vadd.f32 %v8727, %v6544
    %v8879 = vadd.f32 %v8729, %v6545
    %v8880 = vadd.f32 %v8731, %v6546
    %v8881 = vadd.f32 %v8735, %v6547
    %v8882 = vadd.f32 %v8737, %v6548
    %v8883 = vadd.f32 %v8739, %v6549
    %v8884 = vadd.f32 %v8741, %v6550
    %v8885 = vadd.f32 %v8745, %v6551
    %v8886 = vadd.f32 %v8747, %v6552
    %v8887 = vadd.f32 %v8749, %v6553
    %v8888 = vadd.f32 %v8751, %v6554
    %v8889 = vadd.f32 %v8755, %v6555
    %v8890 = vadd.f32 %v8757, %v6556
    %v8891 = vadd.f32 %v8759, %v6557
    %v8892 = vadd.f32 %v8761, %v6558
    %v8893 = vadd.f32 %v8765, %v6559
    %v8894 = vadd.f32 %v8767, %v6560
    %v8895 = vadd.f32 %v8769, %v6561
    %v8896 = vadd.f32 %v8771, %v6562
    %v8897 = vadd.f32 %v8775, %v6563
    %v8898 = vadd.f32 %v8777, %v6564
    %v8899 = vadd.f32 %v8779, %v6565
    %v8900 = vadd.f32 %v8781, %v6566
    %v8901 = vadd.f32 %v8785, %v6567
    %v8902 = vadd.f32 %v8787, %v6568
    %v8903 = vadd.f32 %v8789, %v6569
    %v8904 = vadd.f32 %v8791, %v6570
    %v8905 = vadd.f32 %v8795, %v6571
    %v8906 = vadd.f32 %v8797, %v6572
    %v8907 = vadd.f32 %v8799, %v6573
    %v8908 = vadd.f32 %v8801, %v6574
    %v8909 = vadd.f32 %v8805, %v6575
    %v8910 = vadd.f32 %v8807, %v6576
    %v8911 = vadd.f32 %v8809, %v6577
    %v8912 = vadd.f32 %v8811, %v6578
    %v8913 = vadd.f32 %v8815, %v6579
    %v8914 = vadd.f32 %v8817, %v6580
    %v8915 = vadd.f32 %v8819, %v6581
    %v8916 = vadd.f32 %v8821, %v6582
    %v8917 = vadd.f32 %v8825, %v6583
    %v8918 = vadd.f32 %v8827, %v6584
    %v8919 = vadd.f32 %v8829, %v6585
    %v8920 = vadd.f32 %v8831, %v6586
    %v8921 = vadd.f32 %v8835, %v6587
    %v8922 = vadd.f32 %v8837, %v6588
    %v8923 = vadd.f32 %v8839, %v6589
    %v8924 = vadd.f32 %v8841, %v6590
    %v8925 = vadd.f32 %v8845, %v6591
    %v8926 = vadd.f32 %v8847, %v6592
    %v8927 = vadd.f32 %v8849, %v6593
    %v8928 = vadd.f32 %v8851, %v6594
    %v8929 = vadd.f32 %v8855, %v6595
    %v8930 = vadd.f32 %v8857, %v6596
    %v8931 = vadd.f32 %v8859, %v6597
    %v8932 = vadd.f32 %v8861, %v6598
    %v8933 = vadd.f32 %v8865, %v6599
    %v8934 = vadd.f32 %v8867, %v6600
    %v8935 = vadd.f32 %v8869, %v6601
    %v8936 = vadd.f32 %v8871, %v6602
    %v8937 = vpack.c.bf16 %v8875, %v8873
    %v8938 = vpack.c.bf16 %v8876, %v8874
    %v8939 = vpack.c.bf16 %v8879, %v8877
    %v8940 = vpack.c.bf16 %v8880, %v8878
    %v8941 = vpack.c.bf16 %v8883, %v8881
    %v8942 = vpack.c.bf16 %v8884, %v8882
    %v8943 = vpack.c.bf16 %v8887, %v8885
    %v8944 = vpack.c.bf16 %v8888, %v8886
    %v8945 = vpack.c.bf16 %v8891, %v8889
    %v8946 = vpack.c.bf16 %v8892, %v8890
    %v8947 = vpack.c.bf16 %v8895, %v8893
    %v8948 = vpack.c.bf16 %v8896, %v8894
    %v8949 = vpack.c.bf16 %v8899, %v8897
    %v8950 = vpack.c.bf16 %v8900, %v8898
    %v8951 = vpack.c.bf16 %v8903, %v8901
    %v8952 = vpack.c.bf16 %v8904, %v8902
    %v8953 = vpack.c.bf16 %v8907, %v8905
    %v8954 = vpack.c.bf16 %v8908, %v8906
    %v8955 = vpack.c.bf16 %v8911, %v8909
    %v8956 = vpack.c.bf16 %v8912, %v8910
    %v8957 = vpack.c.bf16 %v8915, %v8913
    %v8958 = vpack.c.bf16 %v8916, %v8914
    %v8959 = vpack.c.bf16 %v8919, %v8917
    %v8960 = vpack.c.bf16 %v8920, %v8918
    %v8961 = vpack.c.bf16 %v8923, %v8921
    %v8962 = vpack.c.bf16 %v8924, %v8922
    %v8963 = vpack.c.bf16 %v8927, %v8925
    %v8964 = vpack.c.bf16 %v8928, %v8926
    %v8965 = vpack.c.bf16 %v8931, %v8929
    %v8966 = vpack.c.bf16 %v8932, %v8930
    %v8967 = vpack.c.bf16 %v8935, %v8933
    %v8968 = vpack.c.bf16 %v8936, %v8934
    %v8969 = vld [vmem:[%s7] sm:$0xf]
    %v8970 = vld [vmem:[%s7 + $0x4] sm:$0xf]
    %v8971 = vld [vmem:[%s7 + $0x8] sm:$0xf]
    %v8972 = vld [vmem:[%s7 + $0xc] sm:$0xf]
    %v8973 = vld [vmem:[%s7 + $0x10] sm:$0xf]
    %v8974 = vld [vmem:[%s7 + $0x14] sm:$0xf]
    %v8975 = vld [vmem:[%s7 + $0x18] sm:$0xf]
    %v8976 = vld [vmem:[%s7 + $0x1c] sm:$0xf]
    %v8977 = vld [vmem:[%s7 + $0x20] sm:$0xf]
    %v8978 = vld [vmem:[%s7 + $0x24] sm:$0xf]
    %v8979 = vld [vmem:[%s7 + $0x28] sm:$0xf]
    %v8980 = vld [vmem:[%s7 + $0x2c] sm:$0xf]
    %v8981 = vld [vmem:[%s7 + $0x30] sm:$0xf]
    %v8982 = vld [vmem:[%s7 + $0x34] sm:$0xf]
    %v8983 = vld [vmem:[%s7 + $0x38] sm:$0xf]
    %v8984 = vld [vmem:[%s7 + $0x3c] sm:$0xf]
    %v8985 = vld [vmem:[%s7 + $0x40] sm:$0xf]
    %v8986 = vld [vmem:[%s7 + $0x44] sm:$0xf]
    %v8987 = vld [vmem:[%s7 + $0x48] sm:$0xf]
    %v8988 = vld [vmem:[%s7 + $0x4c] sm:$0xf]
    %v8989 = vld [vmem:[%s7 + $0x50] sm:$0xf]
    %v8990 = vld [vmem:[%s7 + $0x54] sm:$0xf]
    %v8991 = vld [vmem:[%s7 + $0x58] sm:$0xf]
    %v8992 = vld [vmem:[%s7 + $0x5c] sm:$0xf]
    %v8993 = vld [vmem:[%s7 + $0x60] sm:$0xf]
    %v8994 = vld [vmem:[%s7 + $0x64] sm:$0xf]
    %v8995 = vld [vmem:[%s7 + $0x68] sm:$0xf]
    %v8996 = vld [vmem:[%s7 + $0x6c] sm:$0xf]
    %v8997 = vld [vmem:[%s7 + $0x70] sm:$0xf]
    %v8998 = vld [vmem:[%s7 + $0x74] sm:$0xf]
    %v8999 = vld [vmem:[%s7 + $0x78] sm:$0xf]
    %v9000 = vld [vmem:[%s7 + $0x7c] sm:$0xf]
    %v9001 = vld [vmem:[%s8] sm:$0x1]
    %v9003 = vlaneseq
    %v9004 = vshrl.u32 %v9003, 7
    %v9005 = vsub.s32 0, %v9004
    %v9006 = vrot.slane %v9001, %v9005
    %v9040 = vunpack.c.l.b16 %v8969
    %v9041 = vunpack.c.l.b16 %v8970
    %v9042 = vunpack.c.l.b16 %v8971
    %v9043 = vunpack.c.l.b16 %v8972
    %v9044 = vunpack.c.l.b16 %v8973
    %v9045 = vunpack.c.l.b16 %v8974
    %v9046 = vunpack.c.l.b16 %v8975
    %v9047 = vunpack.c.l.b16 %v8976
    %v9048 = vunpack.c.l.b16 %v8977
    %v9049 = vunpack.c.l.b16 %v8978
    %v9050 = vunpack.c.l.b16 %v8979
    %v9051 = vunpack.c.l.b16 %v8980
    %v9052 = vunpack.c.l.b16 %v8981
    %v9053 = vunpack.c.l.b16 %v8982
    %v9054 = vunpack.c.l.b16 %v8983
    %v9055 = vunpack.c.l.b16 %v8984
    %v9056 = vunpack.c.l.b16 %v8985
    %v9057 = vunpack.c.l.b16 %v8986
    %v9058 = vunpack.c.l.b16 %v8987
    %v9059 = vunpack.c.l.b16 %v8988
    %v9060 = vunpack.c.l.b16 %v8989
    %v9061 = vunpack.c.l.b16 %v8990
    %v9062 = vunpack.c.l.b16 %v8991
    %v9063 = vunpack.c.l.b16 %v8992
    %v9064 = vunpack.c.l.b16 %v8993
    %v9065 = vunpack.c.l.b16 %v8994
    %v9066 = vunpack.c.l.b16 %v8995
    %v9067 = vunpack.c.l.b16 %v8996
    %v9068 = vunpack.c.l.b16 %v8997
    %v9069 = vunpack.c.l.b16 %v8998
    %v9070 = vunpack.c.l.b16 %v8999
    %v9071 = vunpack.c.l.b16 %v9000
    %v9072 = vpack.c.b16 %v9041, %v9040
    %v9073 = vpack.c.b16 %v9043, %v9042
    %v9074 = vpack.c.b16 %v9045, %v9044
    %v9075 = vpack.c.b16 %v9047, %v9046
    %v9076 = vpack.c.b16 %v9049, %v9048
    %v9077 = vpack.c.b16 %v9051, %v9050
    %v9078 = vpack.c.b16 %v9053, %v9052
    %v9079 = vpack.c.b16 %v9055, %v9054
    %v9080 = vpack.c.b16 %v9057, %v9056
    %v9081 = vpack.c.b16 %v9059, %v9058
    %v9082 = vpack.c.b16 %v9061, %v9060
    %v9083 = vpack.c.b16 %v9063, %v9062
    %v9084 = vpack.c.b16 %v9065, %v9064
    %v9085 = vpack.c.b16 %v9067, %v9066
    %v9086 = vpack.c.b16 %v9069, %v9068
    %v9087 = vpack.c.b16 %v9071, %v9070
    %9104 = vmatprep.subr.bf16.mxu0 0
    %9105 = vmatpush1.bf16.msra.mxu0 %v9072
    %9106 = vmatprep.subr.bf16.mxu0 0
    %9107 = vmatpush1.bf16.msra.mxu0 %v9073
    %9108 = vmatprep.subr.bf16.mxu0 0
    %9109 = vmatpush1.bf16.msra.mxu0 %v9074
    %9110 = vmatprep.subr.bf16.mxu0 0
    %9111 = vmatpush1.bf16.msra.mxu0 %v9075
    %9112 = vmatprep.subr.bf16.mxu0 0
    %9113 = vmatpush1.bf16.msra.mxu0 %v9076
    %9114 = vmatprep.subr.bf16.mxu0 0
    %9115 = vmatpush1.bf16.msra.mxu0 %v9077
    %9116 = vmatprep.subr.bf16.mxu0 0
    %9117 = vmatpush1.bf16.msra.mxu0 %v9078
    %9118 = vmatprep.subr.bf16.mxu0 0
    %9119 = vmatpush1.bf16.msra.mxu0 %v9079
    %9120 = vmatprep.subr.bf16.mxu0 0
    %9121 = vmatpush1.bf16.msra.mxu0 %v9080
    %9122 = vmatprep.subr.bf16.mxu0 0
    %9123 = vmatpush1.bf16.msra.mxu0 %v9081
    %9124 = vmatprep.subr.bf16.mxu0 0
    %9125 = vmatpush1.bf16.msra.mxu0 %v9082
    %9126 = vmatprep.subr.bf16.mxu0 0
    %9127 = vmatpush1.bf16.msra.mxu0 %v9083
    %9128 = vmatprep.subr.bf16.mxu0 0
    %9129 = vmatpush1.bf16.msra.mxu0 %v9084
    %9130 = vmatprep.subr.bf16.mxu0 0
    %9131 = vmatpush1.bf16.msra.mxu0 %v9085
    %9132 = vmatprep.subr.bf16.mxu0 0
    %9133 = vmatpush1.bf16.msra.mxu0 %v9086
    %9134 = vmatprep.subr.bf16.mxu0 0
    %9135 = vmatpush1.bf16.msra.mxu0 %v9087
    %9136 = vmatprep.mubr.bf16.mxu0 %v8938
    %9137 = vmatmul.mubr.bf16.gmra.mrb[0].mxu0 %v8937
    %v9138 = vpop.f32.mrb[0].mxu0
    %v9139 = vadd.f32 %v9006, %v9138
    %v9140 = vpop.f32.mrb[0].mxu0
    %v9141 = vpop.f32.mrb[0].mxu0
    %v9142 = vadd.f32 %v9006, %v9141
    %v9143 = vpop.f32.mrb[0].mxu0
    %9144 = vmatprep.mubr.bf16.mxu0 %v8940
    %9145 = vmatmul.mubr.bf16.gmra.mrb[0].mxu0 %v8939
    %v9146 = vpop.f32.mrb[0].mxu0
    %v9147 = vadd.f32 %v9006, %v9146
    %v9148 = vpop.f32.mrb[0].mxu0
    %v9149 = vpop.f32.mrb[0].mxu0
    %v9150 = vadd.f32 %v9006, %v9149
    %v9151 = vpop.f32.mrb[0].mxu0
    %9152 = vmatprep.mubr.bf16.mxu0 %v8942
    %9153 = vmatmul.mubr.bf16.gmra.mrb[0].mxu0 %v8941
    %v9154 = vpop.f32.mrb[0].mxu0
    %v9155 = vadd.f32 %v9006, %v9154
    %v9156 = vpop.f32.mrb[0].mxu0
    %v9157 = vpop.f32.mrb[0].mxu0
    %v9158 = vadd.f32 %v9006, %v9157
    %v9159 = vpop.f32.mrb[0].mxu0
    %9160 = vmatprep.mubr.bf16.mxu0 %v8944
    %9161 = vmatmul.mubr.bf16.gmra.mrb[0].mxu0 %v8943
    %v9162 = vpop.f32.mrb[0].mxu0
    %v9163 = vadd.f32 %v9006, %v9162
    %v9164 = vpop.f32.mrb[0].mxu0
    %v9165 = vpop.f32.mrb[0].mxu0
    %v9166 = vadd.f32 %v9006, %v9165
    %v9167 = vpop.f32.mrb[0].mxu0
    %9168 = vmatprep.mubr.bf16.mxu0 %v8946
    %9169 = vmatmul.mubr.bf16.gmra.mrb[0].mxu0 %v8945
    %v9170 = vpop.f32.mrb[0].mxu0
    %v9171 = vadd.f32 %v9006, %v9170
    %v9172 = vpop.f32.mrb[0].mxu0
    %v9173 = vpop.f32.mrb[0].mxu0
    %v9174 = vadd.f32 %v9006, %v9173
    %v9175 = vpop.f32.mrb[0].mxu0
    %9176 = vmatprep.mubr.bf16.mxu0 %v8948
    %9177 = vmatmul.mubr.bf16.gmra.mrb[0].mxu0 %v8947
    %v9178 = vpop.f32.mrb[0].mxu0
    %v9179 = vadd.f32 %v9006, %v9178
    %v9180 = vpop.f32.mrb[0].mxu0
    %v9181 = vpop.f32.mrb[0].mxu0
    %v9182 = vadd.f32 %v9006, %v9181
    %v9183 = vpop.f32.mrb[0].mxu0
    %9184 = vmatprep.mubr.bf16.mxu0 %v8950
    %9185 = vmatmul.mubr.bf16.gmra.mrb[0].mxu0 %v8949
    %v9186 = vpop.f32.mrb[0].mxu0
    %v9187 = vadd.f32 %v9006, %v9186
    %v9188 = vpop.f32.mrb[0].mxu0
    %v9189 = vpop.f32.mrb[0].mxu0
    %v9190 = vadd.f32 %v9006, %v9189
    %v9191 = vpop.f32.mrb[0].mxu0
    %9192 = vmatprep.mubr.bf16.mxu0 %v8952
    %9193 = vmatmul.mubr.bf16.gmra.mrb[0].mxu0 %v8951
    %v9194 = vpop.f32.mrb[0].mxu0
    %v9195 = vadd.f32 %v9006, %v9194
    %v9196 = vpop.f32.mrb[0].mxu0
    %v9197 = vpop.f32.mrb[0].mxu0
    %v9198 = vadd.f32 %v9006, %v9197
    %v9199 = vpop.f32.mrb[0].mxu0
    %9200 = vmatprep.mubr.bf16.mxu0 %v8954
    %9201 = vmatmul.mubr.bf16.gmra.mrb[0].mxu0 %v8953
    %v9202 = vpop.f32.mrb[0].mxu0
    %v9203 = vadd.f32 %v9006, %v9202
    %v9204 = vpop.f32.mrb[0].mxu0
    %v9205 = vpop.f32.mrb[0].mxu0
    %v9206 = vadd.f32 %v9006, %v9205
    %v9207 = vpop.f32.mrb[0].mxu0
    %9208 = vmatprep.mubr.bf16.mxu0 %v8956
    %9209 = vmatmul.mubr.bf16.gmra.mrb[0].mxu0 %v8955
    %v9210 = vpop.f32.mrb[0].mxu0
    %v9211 = vadd.f32 %v9006, %v9210
    %v9212 = vpop.f32.mrb[0].mxu0
    %v9213 = vpop.f32.mrb[0].mxu0
    %v9214 = vadd.f32 %v9006, %v9213
    %v9215 = vpop.f32.mrb[0].mxu0
    %9216 = vmatprep.mubr.bf16.mxu0 %v8958
    %9217 = vmatmul.mubr.bf16.gmra.mrb[0].mxu0 %v8957
    %v9218 = vpop.f32.mrb[0].mxu0
    %v9219 = vadd.f32 %v9006, %v9218
    %v9220 = vpop.f32.mrb[0].mxu0
    %v9221 = vpop.f32.mrb[0].mxu0
    %v9222 = vadd.f32 %v9006, %v9221
    %v9223 = vpop.f32.mrb[0].mxu0
    %9224 = vmatprep.mubr.bf16.mxu0 %v8960
    %9225 = vmatmul.mubr.bf16.gmra.mrb[0].mxu0 %v8959
    %v9226 = vpop.f32.mrb[0].mxu0
    %v9227 = vadd.f32 %v9006, %v9226
    %v9228 = vpop.f32.mrb[0].mxu0
    %v9229 = vpop.f32.mrb[0].mxu0
    %v9230 = vadd.f32 %v9006, %v9229
    %v9231 = vpop.f32.mrb[0].mxu0
    %9232 = vmatprep.mubr.bf16.mxu0 %v8962
    %9233 = vmatmul.mubr.bf16.gmra.mrb[0].mxu0 %v8961
    %v9234 = vpop.f32.mrb[0].mxu0
    %v9235 = vadd.f32 %v9006, %v9234
    %v9236 = vpop.f32.mrb[0].mxu0
    %v9237 = vpop.f32.mrb[0].mxu0
    %v9238 = vadd.f32 %v9006, %v9237
    %v9239 = vpop.f32.mrb[0].mxu0
    %9240 = vmatprep.mubr.bf16.mxu0 %v8964
    %9241 = vmatmul.mubr.bf16.gmra.mrb[0].mxu0 %v8963
    %v9242 = vpop.f32.mrb[0].mxu0
    %v9243 = vadd.f32 %v9006, %v9242
    %v9244 = vpop.f32.mrb[0].mxu0
    %v9245 = vpop.f32.mrb[0].mxu0
    %v9246 = vadd.f32 %v9006, %v9245
    %v9247 = vpop.f32.mrb[0].mxu0
    %9248 = vmatprep.mubr.bf16.mxu0 %v8966
    %9249 = vmatmul.mubr.bf16.gmra.mrb[0].mxu0 %v8965
    %v9250 = vpop.f32.mrb[0].mxu0
    %v9251 = vadd.f32 %v9006, %v9250
    %v9252 = vpop.f32.mrb[0].mxu0
    %v9253 = vpop.f32.mrb[0].mxu0
    %v9254 = vadd.f32 %v9006, %v9253
    %v9255 = vpop.f32.mrb[0].mxu0
    %9256 = vmatprep.mubr.bf16.mxu0 %v8968
    %9257 = vmatmul.mubr.bf16.gmra.mrb[0].mxu0 %v8967
    %v9258 = vpop.f32.mrb[0].mxu0
    %v9259 = vadd.f32 %v9006, %v9258
    %v9260 = vpop.f32.mrb[0].mxu0
    %v9261 = vpop.f32.mrb[0].mxu0
    %v9262 = vadd.f32 %v9006, %v9261
    %v9263 = vpop.f32.mrb[0].mxu0
    %9264 = vdwg.mxu0
    %9265 = vst [vmem:[%s9] sm:$0xff] %v9139
    %9266 = vst [vmem:[%s9 + $0x8] sm:$0xff] %v9142
    %9267 = vst [vmem:[%s9 + $0x10] sm:$0xff] %v9147
    %9268 = vst [vmem:[%s9 + $0x18] sm:$0xff] %v9150
    %9269 = vst [vmem:[%s9 + $0x20] sm:$0xff] %v9155
    %9270 = vst [vmem:[%s9 + $0x28] sm:$0xff] %v9158
    %9271 = vst [vmem:[%s9 + $0x30] sm:$0xff] %v9163
    %9272 = vst [vmem:[%s9 + $0x38] sm:$0xff] %v9166
    %9273 = vst [vmem:[%s9 + $0x40] sm:$0xff] %v9171
    %9274 = vst [vmem:[%s9 + $0x48] sm:$0xff] %v9174
    %9275 = vst [vmem:[%s9 + $0x50] sm:$0xff] %v9179
    %9276 = vst [vmem:[%s9 + $0x58] sm:$0xff] %v9182
    %9277 = vst [vmem:[%s9 + $0x60] sm:$0xff] %v9187
    %9278 = vst [vmem:[%s9 + $0x68] sm:$0xff] %v9190
    %9279 = vst [vmem:[%s9 + $0x70] sm:$0xff] %v9195
    %9280 = vst [vmem:[%s9 + $0x78] sm:$0xff] %v9198
    %9281 = vst [vmem:[%s9 + $0x80] sm:$0xff] %v9203
    %9282 = vst [vmem:[%s9 + $0x88] sm:$0xff] %v9206
    %9283 = vst [vmem:[%s9 + $0x90] sm:$0xff] %v9211
    %9284 = vst [vmem:[%s9 + $0x98] sm:$0xff] %v9214
    %9285 = vst [vmem:[%s9 + $0xa0] sm:$0xff] %v9219
    %9286 = vst [vmem:[%s9 + $0xa8] sm:$0xff] %v9222
    %9287 = vst [vmem:[%s9 + $0xb0] sm:$0xff] %v9227
    %9288 = vst [vmem:[%s9 + $0xb8] sm:$0xff] %v9230
    %9289 = vst [vmem:[%s9 + $0xc0] sm:$0xff] %v9235
    %9290 = vst [vmem:[%s9 + $0xc8] sm:$0xff] %v9238
    %9291 = vst [vmem:[%s9 + $0xd0] sm:$0xff] %v9243
    %9292 = vst [vmem:[%s9 + $0xd8] sm:$0xff] %v9246
    %9293 = vst [vmem:[%s9 + $0xe0] sm:$0xff] %v9251
    %9294 = vst [vmem:[%s9 + $0xe8] sm:$0xff] %v9254
    %9295 = vst [vmem:[%s9 + $0xf0] sm:$0xff] %v9259
    %9296 = vst [vmem:[%s9 + $0xf8] sm:$0xff] %v9262
    // Predicated region
    $region46: #{residual_mlp_forward.1} parent=1 // pred_check
      _
    $region47: #{residual_mlp_forward.1} parent=1 // pred_check_branch
      %9298 = sbr.rel (0) target = $region49
    $region48: #{residual_mlp_forward.1} parent=1 // pred_region
      _
    $region49: #{residual_mlp_forward.1} parent=1 // pred_fallthru
      _
    // Predicated region
    $region50: #{residual_mlp_forward.1} parent=1 // pred_check
      _
    $region51: #{residual_mlp_forward.1} parent=1 // pred_check_branch
      %9300 = sbr.rel (0) target = $region53
    $region52: #{residual_mlp_forward.1} parent=1 // pred_region
      _
    $region53: #{residual_mlp_forward.1} parent=1 // pred_fallthru
      _
    %9301 = vsyncpa [#allocation3], 1
    %9302 = vsyncpa [#allocation5], 1

</llo_original>
